<compile_context>
chip_gen: v5e
topology: v5e:2x2
jax: 0.10.0
libtpu: 0.0.40
codegen_flags: <defaults>
</compile_context>

<pallas_src>
import jax
import jax.numpy as jnp
from jax.experimental import pallas as pl
from jax.experimental.pallas import tpu as pltpu


# ---------------------------------------------------------------------------
# Pallas kernel: single-block matmul + bias + ReLU (conv layers, im2col'ed)
# ---------------------------------------------------------------------------
def _conv_mm_kernel(x_ref, w_ref, b_ref, o_ref):
    acc = jnp.dot(x_ref[...], w_ref[...], preferred_element_type=jnp.float32)
    acc = jnp.maximum(acc + b_ref[...], 0.0)          # f32 epilogue (v5e-safe)
    o_ref[...] = acc.astype(o_ref.dtype)               # bf16 activations out


def conv_matmul(x, w, b):
    """x: [M, K] bf16, w: [K, OC] bf16, b: [1, OC] f32 -> [M, OC] bf16."""
    M, K = x.shape
    K2, OC = w.shape
    assert K == K2
    return pl.pallas_call(
        _conv_mm_kernel,
        out_shape=jax.ShapeDtypeStruct((M, OC), jnp.bfloat16),
        grid=(1,),
        in_specs=[
            pl.BlockSpec((M, K), lambda i: (0, 0)),
            pl.BlockSpec((K, OC), lambda i: (0, 0)),
            pl.BlockSpec((1, OC), lambda i: (0, 0)),
        ],
        out_specs=pl.BlockSpec((M, OC), lambda i: (0, 0)),
        compiler_params=pltpu.CompilerParams(dimension_semantics=("arbitrary",)),
    )(x, w, b)


# ---------------------------------------------------------------------------
# Pallas kernel: fused fc4 (relu) + fc5, tiled over fc4's N for pipelining
# ---------------------------------------------------------------------------
def _fc_fused_kernel(x_ref, w4_ref, b4_ref, w5_ref, b5_ref, o_ref):
    j = pl.program_id(0)

    @pl.when(j == 0)
    def _():
        o_ref[...] = jnp.zeros_like(o_ref)

    # fc4 block: [B, K] x [K, tn] -> [B, tn], bias + ReLU in f32
    h = jnp.dot(x_ref[...], w4_ref[...], preferred_element_type=jnp.float32)
    h = jnp.maximum(h + b4_ref[...], 0.0)
    # fc5 partial: accumulate [B, tn] x [tn, A] into the resident output block
    o_ref[...] += jnp.dot(h.astype(w5_ref.dtype), w5_ref[...],
                          preferred_element_type=jnp.float32)

    @pl.when(j == pl.num_programs(0) - 1)
    def _():
        o_ref[...] += b5_ref[...]


def fc_fused(x, w4, b4, w5, b5, *, tn=128):
    """x: [B, 3136] bf16, w4: [3136, 512] bf16, w5: [512, A] bf16 -> [B, A] f32."""
    B, K = x.shape
    K2, N = w4.shape
    N2, A = w5.shape
    assert K == K2 and N == N2 and N % tn == 0
    flops = 2 * B * K * N + 2 * B * N * A
    bytes_accessed = (x.size + w4.size + w5.size) * 2 \
        + (b4.size + b5.size + B * A) * 4
    return pl.pallas_call(
        _fc_fused_kernel,
        out_shape=jax.ShapeDtypeStruct((B, A), jnp.float32),
        grid=(N // tn,),
        in_specs=[
            pl.BlockSpec((B, K), lambda j: (0, 0)),    # stays resident in VMEM
            pl.BlockSpec((K, tn), lambda j: (0, j)),   # streamed, double-buffered
            pl.BlockSpec((1, tn), lambda j: (0, j)),
            pl.BlockSpec((tn, A), lambda j: (j, 0)),
            pl.BlockSpec((1, A), lambda j: (0, 0)),
        ],
        out_specs=pl.BlockSpec((B, A), lambda j: (0, 0)),   # accumulator block
        compiler_params=pltpu.CompilerParams(dimension_semantics=("arbitrary",)),
        cost_estimate=pl.CostEstimate(flops=int(flops), transcendentals=0,
                                      bytes_accessed=int(bytes_accessed)),
    )(x, w4, b4, w5, b5)


# ---------------------------------------------------------------------------
# im2col on NHWC activations (XLA glue: static slices + one concat, no
# transposes).  Feature order is (kh, kw, c), matching the prepared weights.
# ---------------------------------------------------------------------------
def im2col_nhwc(x, kh, kw, stride):
    B, H, W, C = x.shape
    OH = (H - kh) // stride + 1
    OW = (W - kw) // stride + 1
    cols = []
    for i in range(kh):
        for j in range(kw):
            cols.append(x[:, i:i + stride * OH:stride,
                          j:j + stride * OW:stride, :])      # [B, OH, OW, C]
    patches = jnp.concatenate(cols, axis=-1)                  # [B, OH, OW, kh*kw*C]
    return patches.reshape(B * OH * OW, kh * kw * C), OH, OW


# ---------------------------------------------------------------------------
# Parameters: PyTorch layout init + one-time (outside jit) kernel-ready prep
# ---------------------------------------------------------------------------
def init_params(key):
    ks = jax.random.split(key, 10)

    def u(k, shape, fan_in):
        bound = 1.0 / jnp.sqrt(jnp.float32(fan_in))
        return jax.random.uniform(k, shape, jnp.float32, -bound, bound)

    return {
        "w1": u(ks[0], (32, 4, 8, 8), 4 * 8 * 8),
        "b1": u(ks[1], (32,), 4 * 8 * 8),
        "w2": u(ks[2], (64, 32, 4, 4), 32 * 4 * 4),
        "b2": u(ks[3], (64,), 32 * 4 * 4),
        "w3": u(ks[4], (64, 64, 3, 3), 64 * 3 * 3),
        "b3": u(ks[5], (64,), 64 * 3 * 3),
        "w4": u(ks[6], (7 * 7 * 64, 512), 7 * 7 * 64),  # rows in NCHW (c,h,w) order
        "b4": u(ks[7], (512,), 7 * 7 * 64),
        "w5": u(ks[8], (512, 2), 512),
        "b5": u(ks[9], (2,), 512),
    }


def prepare_params(p):
    """One-time weight prep (call OUTSIDE jit): bf16 MXU operands, matmul-ready
    layouts, fc4 rows permuted from NCHW-flatten to NHWC-flatten order."""
    def conv_w(w):                                   # [OC, IC, KH, KW] -> [KH*KW*IC, OC]
        OC, IC, KH, KW = w.shape
        return jnp.transpose(w, (2, 3, 1, 0)).reshape(KH * KW * IC, OC).astype(jnp.bfloat16)

    def bias(b):
        return b.reshape(1, -1).astype(jnp.float32)

    w4 = p["w4"].reshape(64, 7, 7, 512).transpose(1, 2, 0, 3).reshape(7 * 7 * 64, 512)
    return {
        "w1": conv_w(p["w1"]), "b1": bias(p["b1"]),
        "w2": conv_w(p["w2"]), "b2": bias(p["b2"]),
        "w3": conv_w(p["w3"]), "b3": bias(p["b3"]),
        "w4": w4.astype(jnp.bfloat16), "b4": bias(p["b4"]),
        "w5": p["w5"].astype(jnp.bfloat16), "b5": bias(p["b5"]),
    }


# ---------------------------------------------------------------------------
# Forward pass (Pallas) and pure-JAX reference
# ---------------------------------------------------------------------------
@jax.jit
def forward(prep, x):
    B = x.shape[0]
    x = jnp.transpose(x, (0, 2, 3, 1)).astype(jnp.bfloat16)    # NCHW -> NHWC, bf16

    p1, oh1, ow1 = im2col_nhwc(x, 8, 8, 4)                     # [B*20*20, 256]
    a1 = conv_matmul(p1, prep["w1"], prep["b1"]).reshape(B, oh1, ow1, 32)

    p2, oh2, ow2 = im2col_nhwc(a1, 4, 4, 2)                    # [B*9*9, 512]
    a2 = conv_matmul(p2, prep["w2"], prep["b2"]).reshape(B, oh2, ow2, 64)

    p3, oh3, ow3 = im2col_nhwc(a2, 3, 3, 1)                    # [B*7*7, 576]
    a3 = conv_matmul(p3, prep["w3"], prep["b3"])               # [B*49, 64]

    x_flat = a3.reshape(B, oh3 * ow3 * 64)                     # NHWC flatten (matches
                                                               # permuted w4 rows)
    return fc_fused(x_flat, prep["w4"], prep["b4"], prep["w5"], prep["b5"])


@jax.jit
def forward_ref(params, x):
    def conv(x, w, b, s):
        y = jax.lax.conv_general_dilated(
            x, w, (s, s), "VALID", dimension_numbers=("NCHW", "OIHW", "NCHW"))
        return jax.nn.relu(y + b[None, :, None, None])

    x = conv(x, params["w1"], params["b1"], 4)
    x = conv(x, params["w2"], params["b2"], 2)
    x = conv(x, params["w3"], params["b3"], 1)
    x = x.reshape(x.shape[0], -1)
    x = jax.nn.relu(x @ params["w4"] + params["b4"])
    return x @ params["w5"] + params["b5"]


if __name__ == "__main__":
    key = jax.random.PRNGKey(0)
    pkey, xkey = jax.random.split(key)
    params = init_params(pkey)
    prep = prepare_params(params)        # one-time, outside jit
    # fc4 = 7*7*64 implies the classic 84x84x4 DQN input.
    x = jax.random.normal(xkey, (2, 4, 84, 84), dtype=jnp.float32)

    out = jax.block_until_ready(forward(prep, x))
    assert out.shape == (2, 2), out.shape

    ref = jax.block_until_ready(forward_ref(params, x))
    assert jnp.allclose(out, ref, rtol=1e-2, atol=1e-2), (out, ref)

    print("KERNEL_OK")
</pallas_src>

<mosaic_0001>
module attributes {stable_mosaic.version = 11 : i64} {
  func.func @_conv_mm_kernel(%arg0: i32, %arg1: memref<800x256xbf16, #tpu.memory_space<vmem>>, %arg2: memref<256x32xbf16, #tpu.memory_space<vmem>>, %arg3: memref<1x32xf32, #tpu.memory_space<vmem>>, %arg4: memref<800x32xbf16, #tpu.memory_space<vmem>>) attributes {dimension_semantics = [#tpu.dimension_semantics<arbitrary>], iteration_bounds = array<i64: 1>, scalar_prefetch = 0 : i64, scratch_operands = 0 : i64, tpu.core_type = #tpu.core_type<tc>, window_params = [{pipeline_mode = #tpu.pipeline_mode<synchronous>, transform_indices = @transform_0, window_bounds = array<i64: 800, 256>}, {pipeline_mode = #tpu.pipeline_mode<synchronous>, transform_indices = @transform_1, window_bounds = array<i64: 256, 32>}, {pipeline_mode = #tpu.pipeline_mode<synchronous>, transform_indices = @transform_2, window_bounds = array<i64: 1, 32>}, {pipeline_mode = #tpu.pipeline_mode<synchronous>, transform_indices = @transform_3, window_bounds = array<i64: 800, 32>}]} {
    %c0 = arith.constant 0 : index
    %c0_0 = arith.constant 0 : index
    %0 = vector.load %arg1[%c0, %c0_0] : memref<800x256xbf16, #tpu.memory_space<vmem>>, vector<800x256xbf16>
    %c0_1 = arith.constant 0 : index
    %c0_2 = arith.constant 0 : index
    %1 = vector.load %arg2[%c0_1, %c0_2] : memref<256x32xbf16, #tpu.memory_space<vmem>>, vector<256x32xbf16>
    %cst = arith.constant dense<0.000000e+00> : vector<800x32xf32>
    %2 = tpu.matmul %0, %1, %cst {dimension_numbers = #tpu.dot_dimension_numbers<[1], [0], [0], [1], [0, 0, 1, 1], [], []>} : vector<800x256xbf16>, vector<256x32xbf16>, vector<800x32xf32> -> vector<800x32xf32>
    %c0_3 = arith.constant 0 : index
    %c0_4 = arith.constant 0 : index
    %3 = vector.load %arg3[%c0_3, %c0_4] : memref<1x32xf32, #tpu.memory_space<vmem>>, vector<1x32xf32>
    %4 = vector.broadcast %3 : vector<1x32xf32> to vector<800x32xf32>
    %5 = arith.addf %2, %4 : vector<800x32xf32>
    %cst_5 = arith.constant 0.000000e+00 : f32
    %6 = vector.broadcast %cst_5 : f32 to vector<800x32xf32>
    %7 = arith.maximumf %5, %6 : vector<800x32xf32>
    %8 = arith.truncf %7 : vector<800x32xf32> to vector<800x32xbf16>
    %c0_6 = arith.constant 0 : index
    %c0_7 = arith.constant 0 : index
    %9 = vector.load %arg4[%c0_6, %c0_7] : memref<800x32xbf16, #tpu.memory_space<vmem>>, vector<800x32xbf16>
    tpu.vector_store %arg4[%c0_6, %c0_7], %8 {strides = array<i32>} : memref<800x32xbf16, #tpu.memory_space<vmem>>, vector<800x32xbf16>,
    return
  }
  func.func @transform_0(%arg0: i32) -> (i32, i32) {
    %c0_i32 = arith.constant 0 : i32
    %c0_i32_0 = arith.constant 0 : i32
    %c0_i32_1 = arith.constant 0 : i32
    return %c0_i32, %c0_i32_0 : i32, i32
  }
  func.func @transform_1(%arg0: i32) -> (i32, i32) {
    %c0_i32 = arith.constant 0 : i32
    %c0_i32_0 = arith.constant 0 : i32
    %c0_i32_1 = arith.constant 0 : i32
    return %c0_i32, %c0_i32_0 : i32, i32
  }
  func.func @transform_2(%arg0: i32) -> (i32, i32) {
    %c0_i32 = arith.constant 0 : i32
    %c0_i32_0 = arith.constant 0 : i32
    %c0_i32_1 = arith.constant 0 : i32
    return %c0_i32, %c0_i32_0 : i32, i32
  }
  func.func @transform_3(%arg0: i32) -> (i32, i32) {
    %c0_i32 = arith.constant 0 : i32
    %c0_i32_0 = arith.constant 0 : i32
    %c0_i32_1 = arith.constant 0 : i32
    return %c0_i32, %c0_i32_0 : i32, i32
  }
}

module attributes {stable_mosaic.version = 11 : i64} {
  func.func @_conv_mm_kernel(%arg0: i32, %arg1: memref<162x512xbf16, #tpu.memory_space<vmem>>, %arg2: memref<512x64xbf16, #tpu.memory_space<vmem>>, %arg3: memref<1x64xf32, #tpu.memory_space<vmem>>, %arg4: memref<162x64xbf16, #tpu.memory_space<vmem>>) attributes {dimension_semantics = [#tpu.dimension_semantics<arbitrary>], iteration_bounds = array<i64: 1>, scalar_prefetch = 0 : i64, scratch_operands = 0 : i64, tpu.core_type = #tpu.core_type<tc>, window_params = [{pipeline_mode = #tpu.pipeline_mode<synchronous>, transform_indices = @transform_0, window_bounds = array<i64: 162, 512>}, {pipeline_mode = #tpu.pipeline_mode<synchronous>, transform_indices = @transform_1, window_bounds = array<i64: 512, 64>}, {pipeline_mode = #tpu.pipeline_mode<synchronous>, transform_indices = @transform_2, window_bounds = array<i64: 1, 64>}, {pipeline_mode = #tpu.pipeline_mode<synchronous>, transform_indices = @transform_3, window_bounds = array<i64: 162, 64>}]} {
    %c0 = arith.constant 0 : index
    %c0_0 = arith.constant 0 : index
    %0 = vector.load %arg1[%c0, %c0_0] : memref<162x512xbf16, #tpu.memory_space<vmem>>, vector<162x512xbf16>
    %c0_1 = arith.constant 0 : index
    %c0_2 = arith.constant 0 : index
    %1 = vector.load %arg2[%c0_1, %c0_2] : memref<512x64xbf16, #tpu.memory_space<vmem>>, vector<512x64xbf16>
    %cst = arith.constant dense<0.000000e+00> : vector<162x64xf32>
    %2 = tpu.matmul %0, %1, %cst {dimension_numbers = #tpu.dot_dimension_numbers<[1], [0], [0], [1], [0, 0, 1, 1], [], []>} : vector<162x512xbf16>, vector<512x64xbf16>, vector<162x64xf32> -> vector<162x64xf32>
    %c0_3 = arith.constant 0 : index
    %c0_4 = arith.constant 0 : index
    %3 = vector.load %arg3[%c0_3, %c0_4] : memref<1x64xf32, #tpu.memory_space<vmem>>, vector<1x64xf32>
    %4 = vector.broadcast %3 : vector<1x64xf32> to vector<162x64xf32>
    %5 = arith.addf %2, %4 : vector<162x64xf32>
    %cst_5 = arith.constant 0.000000e+00 : f32
    %6 = vector.broadcast %cst_5 : f32 to vector<162x64xf32>
    %7 = arith.maximumf %5, %6 : vector<162x64xf32>
    %8 = arith.truncf %7 : vector<162x64xf32> to vector<162x64xbf16>
    %c0_6 = arith.constant 0 : index
    %c0_7 = arith.constant 0 : index
    %9 = vector.load %arg4[%c0_6, %c0_7] : memref<162x64xbf16, #tpu.memory_space<vmem>>, vector<162x64xbf16>
    tpu.vector_store %arg4[%c0_6, %c0_7], %8 {strides = array<i32>} : memref<162x64xbf16, #tpu.memory_space<vmem>>, vector<162x64xbf16>,
    return
  }
  func.func @transform_0(%arg0: i32) -> (i32, i32) {
    %c0_i32 = arith.constant 0 : i32
    %c0_i32_0 = arith.constant 0 : i32
    %c0_i32_1 = arith.constant 0 : i32
    return %c0_i32, %c0_i32_0 : i32, i32
  }
  func.func @transform_1(%arg0: i32) -> (i32, i32) {
    %c0_i32 = arith.constant 0 : i32
    %c0_i32_0 = arith.constant 0 : i32
    %c0_i32_1 = arith.constant 0 : i32
    return %c0_i32, %c0_i32_0 : i32, i32
  }
  func.func @transform_2(%arg0: i32) -> (i32, i32) {
    %c0_i32 = arith.constant 0 : i32
    %c0_i32_0 = arith.constant 0 : i32
    %c0_i32_1 = arith.constant 0 : i32
    return %c0_i32, %c0_i32_0 : i32, i32
  }
  func.func @transform_3(%arg0: i32) -> (i32, i32) {
    %c0_i32 = arith.constant 0 : i32
    %c0_i32_0 = arith.constant 0 : i32
    %c0_i32_1 = arith.constant 0 : i32
    return %c0_i32, %c0_i32_0 : i32, i32
  }
}

module attributes {stable_mosaic.version = 11 : i64} {
  func.func @_conv_mm_kernel(%arg0: i32, %arg1: memref<98x576xbf16, #tpu.memory_space<vmem>>, %arg2: memref<576x64xbf16, #tpu.memory_space<vmem>>, %arg3: memref<1x64xf32, #tpu.memory_space<vmem>>, %arg4: memref<98x64xbf16, #tpu.memory_space<vmem>>) attributes {dimension_semantics = [#tpu.dimension_semantics<arbitrary>], iteration_bounds = array<i64: 1>, scalar_prefetch = 0 : i64, scratch_operands = 0 : i64, tpu.core_type = #tpu.core_type<tc>, window_params = [{pipeline_mode = #tpu.pipeline_mode<synchronous>, transform_indices = @transform_0, window_bounds = array<i64: 98, 576>}, {pipeline_mode = #tpu.pipeline_mode<synchronous>, transform_indices = @transform_1, window_bounds = array<i64: 576, 64>}, {pipeline_mode = #tpu.pipeline_mode<synchronous>, transform_indices = @transform_2, window_bounds = array<i64: 1, 64>}, {pipeline_mode = #tpu.pipeline_mode<synchronous>, transform_indices = @transform_3, window_bounds = array<i64: 98, 64>}]} {
    %c0 = arith.constant 0 : index
    %c0_0 = arith.constant 0 : index
    %0 = vector.load %arg1[%c0, %c0_0] : memref<98x576xbf16, #tpu.memory_space<vmem>>, vector<98x576xbf16>
    %c0_1 = arith.constant 0 : index
    %c0_2 = arith.constant 0 : index
    %1 = vector.load %arg2[%c0_1, %c0_2] : memref<576x64xbf16, #tpu.memory_space<vmem>>, vector<576x64xbf16>
    %cst = arith.constant dense<0.000000e+00> : vector<98x64xf32>
    %2 = tpu.matmul %0, %1, %cst {dimension_numbers = #tpu.dot_dimension_numbers<[1], [0], [0], [1], [0, 0, 1, 1], [], []>} : vector<98x576xbf16>, vector<576x64xbf16>, vector<98x64xf32> -> vector<98x64xf32>
    %c0_3 = arith.constant 0 : index
    %c0_4 = arith.constant 0 : index
    %3 = vector.load %arg3[%c0_3, %c0_4] : memref<1x64xf32, #tpu.memory_space<vmem>>, vector<1x64xf32>
    %4 = vector.broadcast %3 : vector<1x64xf32> to vector<98x64xf32>
    %5 = arith.addf %2, %4 : vector<98x64xf32>
    %cst_5 = arith.constant 0.000000e+00 : f32
    %6 = vector.broadcast %cst_5 : f32 to vector<98x64xf32>
    %7 = arith.maximumf %5, %6 : vector<98x64xf32>
    %8 = arith.truncf %7 : vector<98x64xf32> to vector<98x64xbf16>
    %c0_6 = arith.constant 0 : index
    %c0_7 = arith.constant 0 : index
    %9 = vector.load %arg4[%c0_6, %c0_7] : memref<98x64xbf16, #tpu.memory_space<vmem>>, vector<98x64xbf16>
    tpu.vector_store %arg4[%c0_6, %c0_7], %8 {strides = array<i32>} : memref<98x64xbf16, #tpu.memory_space<vmem>>, vector<98x64xbf16>,
    return
  }
  func.func @transform_0(%arg0: i32) -> (i32, i32) {
    %c0_i32 = arith.constant 0 : i32
    %c0_i32_0 = arith.constant 0 : i32
    %c0_i32_1 = arith.constant 0 : i32
    return %c0_i32, %c0_i32_0 : i32, i32
  }
  func.func @transform_1(%arg0: i32) -> (i32, i32) {
    %c0_i32 = arith.constant 0 : i32
    %c0_i32_0 = arith.constant 0 : i32
    %c0_i32_1 = arith.constant 0 : i32
    return %c0_i32, %c0_i32_0 : i32, i32
  }
  func.func @transform_2(%arg0: i32) -> (i32, i32) {
    %c0_i32 = arith.constant 0 : i32
    %c0_i32_0 = arith.constant 0 : i32
    %c0_i32_1 = arith.constant 0 : i32
    return %c0_i32, %c0_i32_0 : i32, i32
  }
  func.func @transform_3(%arg0: i32) -> (i32, i32) {
    %c0_i32 = arith.constant 0 : i32
    %c0_i32_0 = arith.constant 0 : i32
    %c0_i32_1 = arith.constant 0 : i32
    return %c0_i32, %c0_i32_0 : i32, i32
  }
}

module attributes {stable_mosaic.version = 11 : i64} {
  func.func @_fc_fused_kernel(%arg0: i32, %arg1: memref<2x3136xbf16, #tpu.memory_space<vmem>>, %arg2: memref<3136x128xbf16, #tpu.memory_space<vmem>>, %arg3: memref<1x128xf32, #tpu.memory_space<vmem>>, %arg4: memref<128x2xbf16, #tpu.memory_space<vmem>>, %arg5: memref<1x2xf32, #tpu.memory_space<vmem>>, %arg6: memref<2x2xf32, #tpu.memory_space<vmem>>) attributes {dimension_semantics = [#tpu.dimension_semantics<arbitrary>], iteration_bounds = array<i64: 4>, scalar_prefetch = 0 : i64, scratch_operands = 0 : i64, tpu.core_type = #tpu.core_type<tc>, window_params = [{pipeline_mode = #tpu.pipeline_mode<synchronous>, transform_indices = @transform_0, window_bounds = array<i64: 2, 3136>}, {transform_indices = @transform_1, window_bounds = array<i64: 3136, 128>}, {transform_indices = @transform_2, window_bounds = array<i64: 1, 128>}, {transform_indices = @transform_3, window_bounds = array<i64: 128, 2>}, {pipeline_mode = #tpu.pipeline_mode<synchronous>, transform_indices = @transform_4, window_bounds = array<i64: 1, 2>}, {pipeline_mode = #tpu.pipeline_mode<synchronous>, transform_indices = @transform_5, window_bounds = array<i64: 2, 2>}]} {
    %c0_i32 = arith.constant 0 : i32
    %0 = arith.cmpi eq, %arg0, %c0_i32 : i32
    %1 = arith.extui %0 : i1 to i32
    %c0_i32_0 = arith.constant 0 : i32
    %2 = arith.cmpi ne, %1, %c0_i32_0 : i32
    scf.if %2 {
      %cst_15 = arith.constant 0.000000e+00 : f32
      %20 = vector.broadcast %cst_15 : f32 to vector<2x2xf32>
      %c0_16 = arith.constant 0 : index
      %c0_17 = arith.constant 0 : index
      %21 = vector.load %arg6[%c0_16, %c0_17] : memref<2x2xf32, #tpu.memory_space<vmem>>, vector<2x2xf32>
      tpu.vector_store %arg6[%c0_16, %c0_17], %20 {strides = array<i32>} : memref<2x2xf32, #tpu.memory_space<vmem>>, vector<2x2xf32>,
    } else {
    }
    %c0 = arith.constant 0 : index
    %c0_1 = arith.constant 0 : index
    %3 = vector.load %arg1[%c0, %c0_1] : memref<2x3136xbf16, #tpu.memory_space<vmem>>, vector<2x3136xbf16>
    %c0_2 = arith.constant 0 : index
    %c0_3 = arith.constant 0 : index
    %4 = vector.load %arg2[%c0_2, %c0_3] : memref<3136x128xbf16, #tpu.memory_space<vmem>>, vector<3136x128xbf16>
    %cst = arith.constant dense<0.000000e+00> : vector<2x128xf32>
    %5 = tpu.matmul %3, %4, %cst {dimension_numbers = #tpu.dot_dimension_numbers<[1], [0], [0], [1], [0, 0, 1, 1], [], []>} : vector<2x3136xbf16>, vector<3136x128xbf16>, vector<2x128xf32> -> vector<2x128xf32>
    %c0_4 = arith.constant 0 : index
    %c0_5 = arith.constant 0 : index
    %6 = vector.load %arg3[%c0_4, %c0_5] : memref<1x128xf32, #tpu.memory_space<vmem>>, vector<1x128xf32>
    %7 = vector.broadcast %6 : vector<1x128xf32> to vector<2x128xf32>
    %8 = arith.addf %5, %7 : vector<2x128xf32>
    %cst_6 = arith.constant 0.000000e+00 : f32
    %9 = vector.broadcast %cst_6 : f32 to vector<2x128xf32>
    %10 = arith.maximumf %8, %9 : vector<2x128xf32>
    %c0_7 = arith.constant 0 : index
    %c0_8 = arith.constant 0 : index
    %11 = vector.load %arg6[%c0_7, %c0_8] : memref<2x2xf32, #tpu.memory_space<vmem>>, vector<2x2xf32>
    %12 = arith.truncf %10 : vector<2x128xf32> to vector<2x128xbf16>
    %c0_9 = arith.constant 0 : index
    %c0_10 = arith.constant 0 : index
    %13 = vector.load %arg4[%c0_9, %c0_10] : memref<128x2xbf16, #tpu.memory_space<vmem>>, vector<128x2xbf16>
    %cst_11 = arith.constant dense<0.000000e+00> : vector<2x2xf32>
    %14 = tpu.matmul %12, %13, %cst_11 {dimension_numbers = #tpu.dot_dimension_numbers<[1], [0], [0], [1], [0, 0, 1, 1], [], []>} : vector<2x128xbf16>, vector<128x2xbf16>, vector<2x2xf32> -> vector<2x2xf32>
    %15 = arith.addf %11, %14 : vector<2x2xf32>
    %c0_12 = arith.constant 0 : index
    %c0_13 = arith.constant 0 : index
    %16 = vector.load %arg6[%c0_12, %c0_13] : memref<2x2xf32, #tpu.memory_space<vmem>>, vector<2x2xf32>
    tpu.vector_store %arg6[%c0_12, %c0_13], %15 {strides = array<i32>} : memref<2x2xf32, #tpu.memory_space<vmem>>, vector<2x2xf32>,
    %c3_i32 = arith.constant 3 : i32
    %17 = arith.cmpi eq, %arg0, %c3_i32 : i32
    %18 = arith.extui %17 : i1 to i32
    %c0_i32_14 = arith.constant 0 : i32
    %19 = arith.cmpi ne, %18, %c0_i32_14 : i32
    scf.if %19 {
      %c0_15 = arith.constant 0 : index
      %c0_16 = arith.constant 0 : index
      %20 = vector.load %arg6[%c0_15, %c0_16] : memref<2x2xf32, #tpu.memory_space<vmem>>, vector<2x2xf32>
      %c0_17 = arith.constant 0 : index
      %c0_18 = arith.constant 0 : index
      %21 = vector.load %arg5[%c0_17, %c0_18] : memref<1x2xf32, #tpu.memory_space<vmem>>, vector<1x2xf32>
      %22 = vector.broadcast %21 : vector<1x2xf32> to vector<2x2xf32>
      %23 = arith.addf %20, %22 : vector<2x2xf32>
      %c0_19 = arith.constant 0 : index
      %c0_20 = arith.constant 0 : index
      %24 = vector.load %arg6[%c0_19, %c0_20] : memref<2x2xf32, #tpu.memory_space<vmem>>, vector<2x2xf32>
      tpu.vector_store %arg6[%c0_19, %c0_20], %23 {strides = array<i32>} : memref<2x2xf32, #tpu.memory_space<vmem>>, vector<2x2xf32>,
    } else {
    }
    return
  }
  func.func @transform_0(%arg0: i32) -> (i32, i32) {
    %c0_i32 = arith.constant 0 : i32
    %c0_i32_0 = arith.constant 0 : i32
    %c0_i32_1 = arith.constant 0 : i32
    return %c0_i32, %c0_i32_0 : i32, i32
  }
  func.func @transform_1(%arg0: i32) -> (i32, i32) {
    %c0_i32 = arith.constant 0 : i32
    %c0_i32_0 = arith.constant 0 : i32
    return %c0_i32, %arg0 : i32, i32
  }
  func.func @transform_2(%arg0: i32) -> (i32, i32) {
    %c0_i32 = arith.constant 0 : i32
    %c0_i32_0 = arith.constant 0 : i32
    return %c0_i32, %arg0 : i32, i32
  }
  func.func @transform_3(%arg0: i32) -> (i32, i32) {
    %c0_i32 = arith.constant 0 : i32
    %c0_i32_0 = arith.constant 0 : i32
    return %arg0, %c0_i32 : i32, i32
  }
  func.func @transform_4(%arg0: i32) -> (i32, i32) {
    %c0_i32 = arith.constant 0 : i32
    %c0_i32_0 = arith.constant 0 : i32
    %c0_i32_1 = arith.constant 0 : i32
    return %c0_i32, %c0_i32_0 : i32, i32
  }
  func.func @transform_5(%arg0: i32) -> (i32, i32) {
    %c0_i32 = arith.constant 0 : i32
    %c0_i32_0 = arith.constant 0 : i32
    %c0_i32_1 = arith.constant 0 : i32
    return %c0_i32, %c0_i32_0 : i32, i32
  }
}

</mosaic_0001>

<llo_original>
// kernel: forward.4
$region0: #{forward.4}
  #allocation0 [shape = 'u32[]', space=smem, size = 0x4, offset = 0x4, fixed_abs, tag = 'smem constant byte address 0x4 - core index']
  #allocation1 [shape = 'u32[72,128]{1,0:T(1,128)}', space=vmem, size = 0x9000, scoped, tag = 'internal scratch']
  %s0 = inlined_call_operand.vmem [shape: bf16[800,256], index: 0, kind: input, shape index: {}]
  %s1 = inlined_call_operand.vmem [shape: bf16[256,32], index: 1, kind: input, shape index: {}]
  %s2 = inlined_call_operand.vmem [shape: f32[1,32], index: 2, kind: input, shape index: {}]
  %s3 = inlined_call_operand.vmem [shape: bf16[800,32], index: 3, kind: output, shape index: {}]
  %s4 = sld [smem:[#allocation0]]
  $region22: #{forward.4} parent=0
    _
  %s6 = ssub.s32 1, %s4
  %s7 = scalar_select 0, %s6, %s4
  // Predicated region
  $region2: #{forward.4} parent=0 // pred_check
    _
  $region3: #{forward.4} parent=0 // pred_check_branch
    %9 = sbr.rel (0) target = $region5
  $region4: #{forward.4} parent=0 // pred_region
    _
  $region5: #{forward.4} parent=0 // pred_fallthru
    _
  // Predicated region
  $region6: #{forward.4} parent=0 // pred_check
    _
  $region7: #{forward.4} parent=0 // pred_check_branch
    %11 = sbr.rel (0) target = $region9
  $region8: #{forward.4} parent=0 // pred_region
    _
  $region9: #{forward.4} parent=0 // pred_fallthru
    _
  // Predicated region
  $region10: #{forward.4} parent=0 // pred_check
    _
  $region11: #{forward.4} parent=0 // pred_check_branch
    %13 = sbr.rel (0) target = $region13
  $region12: #{forward.4} parent=0 // pred_region
    _
  $region13: #{forward.4} parent=0 // pred_fallthru
    _
  %v14 = vld [vmem:[%s0] sm:$0xff]
  %v15 = vld [vmem:[%s0 + $0x8] sm:$0xff]
  %v16 = vld [vmem:[%s0 + $0x10] sm:$0xff]
  %v17 = vld [vmem:[%s0 + $0x18] sm:$0xff]
  %v18 = vld [vmem:[%s0 + $0x20] sm:$0xff]
  %v19 = vld [vmem:[%s0 + $0x28] sm:$0xff]
  %v20 = vld [vmem:[%s0 + $0x30] sm:$0xff]
  %v21 = vld [vmem:[%s0 + $0x38] sm:$0xff]
  %v22 = vld [vmem:[%s0 + $0x40] sm:$0xff]
  %v23 = vld [vmem:[%s0 + $0x48] sm:$0xff]
  %v24 = vld [vmem:[%s0 + $0x50] sm:$0xff]
  %v25 = vld [vmem:[%s0 + $0x58] sm:$0xff]
  %v26 = vld [vmem:[%s0 + $0x60] sm:$0xff]
  %v27 = vld [vmem:[%s0 + $0x68] sm:$0xff]
  %v28 = vld [vmem:[%s0 + $0x70] sm:$0xff]
  %v29 = vld [vmem:[%s0 + $0x78] sm:$0xff]
  %v30 = vld [vmem:[%s0 + $0x80] sm:$0xff]
  %v31 = vld [vmem:[%s0 + $0x88] sm:$0xff]
  %v32 = vld [vmem:[%s0 + $0x90] sm:$0xff]
  %v33 = vld [vmem:[%s0 + $0x98] sm:$0xff]
  %v34 = vld [vmem:[%s0 + $0xa0] sm:$0xff]
  %v35 = vld [vmem:[%s0 + $0xa8] sm:$0xff]
  %v36 = vld [vmem:[%s0 + $0xb0] sm:$0xff]
  %v37 = vld [vmem:[%s0 + $0xb8] sm:$0xff]
  %v38 = vld [vmem:[%s0 + $0xc0] sm:$0xff]
  %v39 = vld [vmem:[%s0 + $0xc8] sm:$0xff]
  %v40 = vld [vmem:[%s0 + $0xd0] sm:$0xff]
  %v41 = vld [vmem:[%s0 + $0xd8] sm:$0xff]
  %v42 = vld [vmem:[%s0 + $0xe0] sm:$0xff]
  %v43 = vld [vmem:[%s0 + $0xe8] sm:$0xff]
  %v44 = vld [vmem:[%s0 + $0xf0] sm:$0xff]
  %v45 = vld [vmem:[%s0 + $0xf8] sm:$0xff]
  %v46 = vld [vmem:[%s0 + $0x100] sm:$0xff]
  %v47 = vld [vmem:[%s0 + $0x108] sm:$0xff]
  %v48 = vld [vmem:[%s0 + $0x110] sm:$0xff]
  %v49 = vld [vmem:[%s0 + $0x118] sm:$0xff]
  %v50 = vld [vmem:[%s0 + $0x120] sm:$0xff]
  %v51 = vld [vmem:[%s0 + $0x128] sm:$0xff]
  %v52 = vld [vmem:[%s0 + $0x130] sm:$0xff]
  %v53 = vld [vmem:[%s0 + $0x138] sm:$0xff]
  %v54 = vld [vmem:[%s0 + $0x140] sm:$0xff]
  %v55 = vld [vmem:[%s0 + $0x148] sm:$0xff]
  %v56 = vld [vmem:[%s0 + $0x150] sm:$0xff]
  %v57 = vld [vmem:[%s0 + $0x158] sm:$0xff]
  %v58 = vld [vmem:[%s0 + $0x160] sm:$0xff]
  %v59 = vld [vmem:[%s0 + $0x168] sm:$0xff]
  %v60 = vld [vmem:[%s0 + $0x170] sm:$0xff]
  %v61 = vld [vmem:[%s0 + $0x178] sm:$0xff]
  %v62 = vld [vmem:[%s0 + $0x180] sm:$0xff]
  %v63 = vld [vmem:[%s0 + $0x188] sm:$0xff]
  %v64 = vld [vmem:[%s0 + $0x190] sm:$0xff]
  %v65 = vld [vmem:[%s0 + $0x198] sm:$0xff]
  %v66 = vld [vmem:[%s0 + $0x1a0] sm:$0xff]
  %v67 = vld [vmem:[%s0 + $0x1a8] sm:$0xff]
  %v68 = vld [vmem:[%s0 + $0x1b0] sm:$0xff]
  %v69 = vld [vmem:[%s0 + $0x1b8] sm:$0xff]
  %v70 = vld [vmem:[%s0 + $0x1c0] sm:$0xff]
  %v71 = vld [vmem:[%s0 + $0x1c8] sm:$0xff]
  %v72 = vld [vmem:[%s0 + $0x1d0] sm:$0xff]
  %v73 = vld [vmem:[%s0 + $0x1d8] sm:$0xff]
  %v74 = vld [vmem:[%s0 + $0x1e0] sm:$0xff]
  %v75 = vld [vmem:[%s0 + $0x1e8] sm:$0xff]
  %v76 = vld [vmem:[%s0 + $0x1f0] sm:$0xff]
  %v77 = vld [vmem:[%s0 + $0x1f8] sm:$0xff]
  %v78 = vld [vmem:[%s0 + $0x200] sm:$0xff]
  %v79 = vld [vmem:[%s0 + $0x208] sm:$0xff]
  %v80 = vld [vmem:[%s0 + $0x210] sm:$0xff]
  %v81 = vld [vmem:[%s0 + $0x218] sm:$0xff]
  %v82 = vld [vmem:[%s0 + $0x220] sm:$0xff]
  %v83 = vld [vmem:[%s0 + $0x228] sm:$0xff]
  %v84 = vld [vmem:[%s0 + $0x230] sm:$0xff]
  %v85 = vld [vmem:[%s0 + $0x238] sm:$0xff]
  %v86 = vld [vmem:[%s0 + $0x240] sm:$0xff]
  %v87 = vld [vmem:[%s0 + $0x248] sm:$0xff]
  %v88 = vld [vmem:[%s0 + $0x250] sm:$0xff]
  %v89 = vld [vmem:[%s0 + $0x258] sm:$0xff]
  %v90 = vld [vmem:[%s0 + $0x260] sm:$0xff]
  %v91 = vld [vmem:[%s0 + $0x268] sm:$0xff]
  %v92 = vld [vmem:[%s0 + $0x270] sm:$0xff]
  %v93 = vld [vmem:[%s0 + $0x278] sm:$0xff]
  %v94 = vld [vmem:[%s0 + $0x280] sm:$0xff]
  %v95 = vld [vmem:[%s0 + $0x288] sm:$0xff]
  %v96 = vld [vmem:[%s0 + $0x290] sm:$0xff]
  %v97 = vld [vmem:[%s0 + $0x298] sm:$0xff]
  %v98 = vld [vmem:[%s0 + $0x2a0] sm:$0xff]
  %v99 = vld [vmem:[%s0 + $0x2a8] sm:$0xff]
  %v100 = vld [vmem:[%s0 + $0x2b0] sm:$0xff]
  %v101 = vld [vmem:[%s0 + $0x2b8] sm:$0xff]
  %v102 = vld [vmem:[%s0 + $0x2c0] sm:$0xff]
  %v103 = vld [vmem:[%s0 + $0x2c8] sm:$0xff]
  %v104 = vld [vmem:[%s0 + $0x2d0] sm:$0xff]
  %v105 = vld [vmem:[%s0 + $0x2d8] sm:$0xff]
  %v106 = vld [vmem:[%s0 + $0x2e0] sm:$0xff]
  %v107 = vld [vmem:[%s0 + $0x2e8] sm:$0xff]
  %v108 = vld [vmem:[%s0 + $0x2f0] sm:$0xff]
  %v109 = vld [vmem:[%s0 + $0x2f8] sm:$0xff]
  %v110 = vld [vmem:[%s0 + $0x300] sm:$0xff]
  %v111 = vld [vmem:[%s0 + $0x308] sm:$0xff]
  %v112 = vld [vmem:[%s0 + $0x310] sm:$0xff]
  %v113 = vld [vmem:[%s0 + $0x318] sm:$0xff]
  %v114 = vld [vmem:[%s1] sm:$0xf]
  %v115 = vld [vmem:[%s1 + $0x4] sm:$0xf]
  %v116 = vld [vmem:[%s1 + $0x8] sm:$0xf]
  %v117 = vld [vmem:[%s1 + $0xc] sm:$0xf]
  %v118 = vld [vmem:[%s1 + $0x10] sm:$0xf]
  %v119 = vld [vmem:[%s1 + $0x14] sm:$0xf]
  %v120 = vld [vmem:[%s1 + $0x18] sm:$0xf]
  %v121 = vld [vmem:[%s1 + $0x1c] sm:$0xf]
  %v122 = vld [vmem:[%s1 + $0x20] sm:$0xf]
  %v123 = vld [vmem:[%s1 + $0x24] sm:$0xf]
  %v124 = vld [vmem:[%s1 + $0x28] sm:$0xf]
  %v125 = vld [vmem:[%s1 + $0x2c] sm:$0xf]
  %v126 = vld [vmem:[%s1 + $0x30] sm:$0xf]
  %v127 = vld [vmem:[%s1 + $0x34] sm:$0xf]
  %v128 = vld [vmem:[%s1 + $0x38] sm:$0xf]
  %v129 = vld [vmem:[%s1 + $0x3c] sm:$0xf]
  %v130 = vld [vmem:[%s1 + $0x40] sm:$0xf]
  %v131 = vld [vmem:[%s1 + $0x44] sm:$0xf]
  %v132 = vld [vmem:[%s1 + $0x48] sm:$0xf]
  %v133 = vld [vmem:[%s1 + $0x4c] sm:$0xf]
  %v134 = vld [vmem:[%s1 + $0x50] sm:$0xf]
  %v135 = vld [vmem:[%s1 + $0x54] sm:$0xf]
  %v136 = vld [vmem:[%s1 + $0x58] sm:$0xf]
  %v137 = vld [vmem:[%s1 + $0x5c] sm:$0xf]
  %v138 = vld [vmem:[%s1 + $0x60] sm:$0xf]
  %v139 = vld [vmem:[%s1 + $0x64] sm:$0xf]
  %v140 = vld [vmem:[%s1 + $0x68] sm:$0xf]
  %v141 = vld [vmem:[%s1 + $0x6c] sm:$0xf]
  %v142 = vld [vmem:[%s1 + $0x70] sm:$0xf]
  %v143 = vld [vmem:[%s1 + $0x74] sm:$0xf]
  %v144 = vld [vmem:[%s1 + $0x78] sm:$0xf]
  %v145 = vld [vmem:[%s1 + $0x7c] sm:$0xf]
  %v146 = vld [vmem:[%s2] sm:$0x1]
  %v148 = vperm.slane %v146, 0
  %v250 = vunpack.c.l.b16 %v14
  %v251 = vunpack.c.h.b16 %v14
  %v252 = vunpack.c.l.b16 %v15
  %v253 = vunpack.c.h.b16 %v15
  %v254 = vunpack.c.l.b16 %v16
  %v255 = vunpack.c.h.b16 %v16
  %v256 = vunpack.c.l.b16 %v17
  %v257 = vunpack.c.h.b16 %v17
  %v258 = vunpack.c.l.b16 %v18
  %v259 = vunpack.c.h.b16 %v18
  %v260 = vunpack.c.l.b16 %v19
  %v261 = vunpack.c.h.b16 %v19
  %v262 = vunpack.c.l.b16 %v20
  %v263 = vunpack.c.h.b16 %v20
  %v264 = vunpack.c.l.b16 %v21
  %v265 = vunpack.c.h.b16 %v21
  %v266 = vunpack.c.l.b16 %v22
  %v267 = vunpack.c.h.b16 %v22
  %v268 = vunpack.c.l.b16 %v23
  %v269 = vunpack.c.h.b16 %v23
  %v270 = vunpack.c.l.b16 %v24
  %v271 = vunpack.c.h.b16 %v24
  %v272 = vunpack.c.l.b16 %v25
  %v273 = vunpack.c.h.b16 %v25
  %v274 = vunpack.c.l.b16 %v26
  %v275 = vunpack.c.h.b16 %v26
  %v276 = vunpack.c.l.b16 %v27
  %v277 = vunpack.c.h.b16 %v27
  %v278 = vunpack.c.l.b16 %v28
  %v279 = vunpack.c.h.b16 %v28
  %v280 = vunpack.c.l.b16 %v29
  %v281 = vunpack.c.h.b16 %v29
  %v282 = vunpack.c.l.b16 %v30
  %v283 = vunpack.c.h.b16 %v30
  %v284 = vunpack.c.l.b16 %v31
  %v285 = vunpack.c.h.b16 %v31
  %v286 = vunpack.c.l.b16 %v32
  %v287 = vunpack.c.h.b16 %v32
  %v288 = vunpack.c.l.b16 %v33
  %v289 = vunpack.c.h.b16 %v33
  %v290 = vunpack.c.l.b16 %v34
  %v291 = vunpack.c.h.b16 %v34
  %v292 = vunpack.c.l.b16 %v35
  %v293 = vunpack.c.h.b16 %v35
  %v294 = vunpack.c.l.b16 %v36
  %v295 = vunpack.c.h.b16 %v36
  %v296 = vunpack.c.l.b16 %v37
  %v297 = vunpack.c.h.b16 %v37
  %v298 = vunpack.c.l.b16 %v38
  %v299 = vunpack.c.h.b16 %v38
  %v300 = vunpack.c.l.b16 %v39
  %v301 = vunpack.c.h.b16 %v39
  %v302 = vunpack.c.l.b16 %v40
  %v303 = vunpack.c.h.b16 %v40
  %v304 = vunpack.c.l.b16 %v41
  %v305 = vunpack.c.h.b16 %v41
  %v306 = vunpack.c.l.b16 %v42
  %v307 = vunpack.c.h.b16 %v42
  %v308 = vunpack.c.l.b16 %v43
  %v309 = vunpack.c.h.b16 %v43
  %v310 = vunpack.c.l.b16 %v44
  %v311 = vunpack.c.h.b16 %v44
  %v312 = vunpack.c.l.b16 %v45
  %v313 = vunpack.c.h.b16 %v45
  %v314 = vunpack.c.l.b16 %v46
  %v315 = vunpack.c.h.b16 %v46
  %v316 = vunpack.c.l.b16 %v47
  %v317 = vunpack.c.h.b16 %v47
  %v318 = vunpack.c.l.b16 %v48
  %v319 = vunpack.c.h.b16 %v48
  %v320 = vunpack.c.l.b16 %v49
  %v321 = vunpack.c.h.b16 %v49
  %v322 = vunpack.c.l.b16 %v50
  %v323 = vunpack.c.h.b16 %v50
  %v324 = vunpack.c.l.b16 %v51
  %v325 = vunpack.c.h.b16 %v51
  %v326 = vunpack.c.l.b16 %v52
  %v327 = vunpack.c.h.b16 %v52
  %v328 = vunpack.c.l.b16 %v53
  %v329 = vunpack.c.h.b16 %v53
  %v330 = vunpack.c.l.b16 %v54
  %v331 = vunpack.c.h.b16 %v54
  %v332 = vunpack.c.l.b16 %v55
  %v333 = vunpack.c.h.b16 %v55
  %v334 = vunpack.c.l.b16 %v56
  %v335 = vunpack.c.h.b16 %v56
  %v336 = vunpack.c.l.b16 %v57
  %v337 = vunpack.c.h.b16 %v57
  %v338 = vunpack.c.l.b16 %v58
  %v339 = vunpack.c.h.b16 %v58
  %v340 = vunpack.c.l.b16 %v59
  %v341 = vunpack.c.h.b16 %v59
  %v342 = vunpack.c.l.b16 %v60
  %v343 = vunpack.c.h.b16 %v60
  %v344 = vunpack.c.l.b16 %v61
  %v345 = vunpack.c.h.b16 %v61
  %v346 = vunpack.c.l.b16 %v62
  %v347 = vunpack.c.h.b16 %v62
  %v348 = vunpack.c.l.b16 %v63
  %v349 = vunpack.c.h.b16 %v63
  %v350 = vunpack.c.l.b16 %v64
  %v351 = vunpack.c.h.b16 %v64
  %v352 = vunpack.c.l.b16 %v65
  %v353 = vunpack.c.h.b16 %v65
  %v354 = vunpack.c.l.b16 %v66
  %v355 = vunpack.c.h.b16 %v66
  %v356 = vunpack.c.l.b16 %v67
  %v357 = vunpack.c.h.b16 %v67
  %v358 = vunpack.c.l.b16 %v68
  %v359 = vunpack.c.h.b16 %v68
  %v360 = vunpack.c.l.b16 %v69
  %v361 = vunpack.c.h.b16 %v69
  %v362 = vunpack.c.l.b16 %v70
  %v363 = vunpack.c.h.b16 %v70
  %v364 = vunpack.c.l.b16 %v71
  %v365 = vunpack.c.h.b16 %v71
  %v366 = vunpack.c.l.b16 %v72
  %v367 = vunpack.c.h.b16 %v72
  %v368 = vunpack.c.l.b16 %v73
  %v369 = vunpack.c.h.b16 %v73
  %v370 = vunpack.c.l.b16 %v74
  %v371 = vunpack.c.h.b16 %v74
  %v372 = vunpack.c.l.b16 %v75
  %v373 = vunpack.c.h.b16 %v75
  %v374 = vunpack.c.l.b16 %v76
  %v375 = vunpack.c.h.b16 %v76
  %v376 = vunpack.c.l.b16 %v77
  %v377 = vunpack.c.h.b16 %v77
  %v378 = vunpack.c.l.b16 %v78
  %v379 = vunpack.c.h.b16 %v78
  %v380 = vunpack.c.l.b16 %v79
  %v381 = vunpack.c.h.b16 %v79
  %v382 = vunpack.c.l.b16 %v80
  %v383 = vunpack.c.h.b16 %v80
  %v384 = vunpack.c.l.b16 %v81
  %v385 = vunpack.c.h.b16 %v81
  %v386 = vunpack.c.l.b16 %v82
  %v387 = vunpack.c.h.b16 %v82
  %v388 = vunpack.c.l.b16 %v83
  %v389 = vunpack.c.h.b16 %v83
  %v390 = vunpack.c.l.b16 %v84
  %v391 = vunpack.c.h.b16 %v84
  %v392 = vunpack.c.l.b16 %v85
  %v393 = vunpack.c.h.b16 %v85
  %v394 = vunpack.c.l.b16 %v86
  %v395 = vunpack.c.h.b16 %v86
  %v396 = vunpack.c.l.b16 %v87
  %v397 = vunpack.c.h.b16 %v87
  %v398 = vunpack.c.l.b16 %v88
  %v399 = vunpack.c.h.b16 %v88
  %v400 = vunpack.c.l.b16 %v89
  %v401 = vunpack.c.h.b16 %v89
  %v402 = vunpack.c.l.b16 %v90
  %v403 = vunpack.c.h.b16 %v90
  %v404 = vunpack.c.l.b16 %v91
  %v405 = vunpack.c.h.b16 %v91
  %v406 = vunpack.c.l.b16 %v92
  %v407 = vunpack.c.h.b16 %v92
  %v408 = vunpack.c.l.b16 %v93
  %v409 = vunpack.c.h.b16 %v93
  %v410 = vunpack.c.l.b16 %v94
  %v411 = vunpack.c.h.b16 %v94
  %v412 = vunpack.c.l.b16 %v95
  %v413 = vunpack.c.h.b16 %v95
  %v414 = vunpack.c.l.b16 %v96
  %v415 = vunpack.c.h.b16 %v96
  %v416 = vunpack.c.l.b16 %v97
  %v417 = vunpack.c.h.b16 %v97
  %v418 = vunpack.c.l.b16 %v98
  %v419 = vunpack.c.h.b16 %v98
  %v420 = vunpack.c.l.b16 %v99
  %v421 = vunpack.c.h.b16 %v99
  %v422 = vunpack.c.l.b16 %v100
  %v423 = vunpack.c.h.b16 %v100
  %v424 = vunpack.c.l.b16 %v101
  %v425 = vunpack.c.h.b16 %v101
  %v426 = vunpack.c.l.b16 %v102
  %v427 = vunpack.c.h.b16 %v102
  %v428 = vunpack.c.l.b16 %v103
  %v429 = vunpack.c.h.b16 %v103
  %v430 = vunpack.c.l.b16 %v104
  %v431 = vunpack.c.h.b16 %v104
  %v432 = vunpack.c.l.b16 %v105
  %v433 = vunpack.c.h.b16 %v105
  %v434 = vunpack.c.l.b16 %v106
  %v435 = vunpack.c.h.b16 %v106
  %v436 = vunpack.c.l.b16 %v107
  %v437 = vunpack.c.h.b16 %v107
  %v438 = vunpack.c.l.b16 %v108
  %v439 = vunpack.c.h.b16 %v108
  %v440 = vunpack.c.l.b16 %v109
  %v441 = vunpack.c.h.b16 %v109
  %v442 = vunpack.c.l.b16 %v110
  %v443 = vunpack.c.h.b16 %v110
  %v444 = vunpack.c.l.b16 %v111
  %v445 = vunpack.c.h.b16 %v111
  %v446 = vunpack.c.l.b16 %v112
  %v447 = vunpack.c.h.b16 %v112
  %v448 = vunpack.c.l.b16 %v113
  %v449 = vunpack.c.h.b16 %v113
  %v450 = vpack.c.b16 %v252, %v250
  %v451 = vpack.c.b16 %v253, %v251
  %v452 = vpack.c.b16 %v256, %v254
  %v453 = vpack.c.b16 %v257, %v255
  %v454 = vpack.c.b16 %v260, %v258
  %v455 = vpack.c.b16 %v261, %v259
  %v456 = vpack.c.b16 %v264, %v262
  %v457 = vpack.c.b16 %v265, %v263
  %v458 = vpack.c.b16 %v268, %v266
  %v459 = vpack.c.b16 %v269, %v267
  %v460 = vpack.c.b16 %v272, %v270
  %v461 = vpack.c.b16 %v273, %v271
  %v462 = vpack.c.b16 %v276, %v274
  %v463 = vpack.c.b16 %v277, %v275
  %v464 = vpack.c.b16 %v280, %v278
  %v465 = vpack.c.b16 %v281, %v279
  %v466 = vpack.c.b16 %v284, %v282
  %v467 = vpack.c.b16 %v285, %v283
  %v468 = vpack.c.b16 %v288, %v286
  %v469 = vpack.c.b16 %v289, %v287
  %v470 = vpack.c.b16 %v292, %v290
  %v471 = vpack.c.b16 %v293, %v291
  %v472 = vpack.c.b16 %v296, %v294
  %v473 = vpack.c.b16 %v297, %v295
  %v474 = vpack.c.b16 %v300, %v298
  %v475 = vpack.c.b16 %v301, %v299
  %v476 = vpack.c.b16 %v304, %v302
  %v477 = vpack.c.b16 %v305, %v303
  %v478 = vpack.c.b16 %v308, %v306
  %v479 = vpack.c.b16 %v309, %v307
  %v480 = vpack.c.b16 %v312, %v310
  %v481 = vpack.c.b16 %v313, %v311
  %v482 = vpack.c.b16 %v316, %v314
  %v483 = vpack.c.b16 %v317, %v315
  %v484 = vpack.c.b16 %v320, %v318
  %v485 = vpack.c.b16 %v321, %v319
  %v486 = vpack.c.b16 %v324, %v322
  %v487 = vpack.c.b16 %v325, %v323
  %v488 = vpack.c.b16 %v328, %v326
  %v489 = vpack.c.b16 %v329, %v327
  %v490 = vpack.c.b16 %v332, %v330
  %v491 = vpack.c.b16 %v333, %v331
  %v492 = vpack.c.b16 %v336, %v334
  %v493 = vpack.c.b16 %v337, %v335
  %v494 = vpack.c.b16 %v340, %v338
  %v495 = vpack.c.b16 %v341, %v339
  %v496 = vpack.c.b16 %v344, %v342
  %v497 = vpack.c.b16 %v345, %v343
  %v498 = vpack.c.b16 %v348, %v346
  %v499 = vpack.c.b16 %v349, %v347
  %v500 = vpack.c.b16 %v352, %v350
  %v501 = vpack.c.b16 %v353, %v351
  %v502 = vpack.c.b16 %v356, %v354
  %v503 = vpack.c.b16 %v357, %v355
  %v504 = vpack.c.b16 %v360, %v358
  %v505 = vpack.c.b16 %v361, %v359
  %v506 = vpack.c.b16 %v364, %v362
  %v507 = vpack.c.b16 %v365, %v363
  %v508 = vpack.c.b16 %v368, %v366
  %v509 = vpack.c.b16 %v369, %v367
  %v510 = vpack.c.b16 %v372, %v370
  %v511 = vpack.c.b16 %v373, %v371
  %v512 = vpack.c.b16 %v376, %v374
  %v513 = vpack.c.b16 %v377, %v375
  %v514 = vpack.c.b16 %v380, %v378
  %v515 = vpack.c.b16 %v381, %v379
  %v516 = vpack.c.b16 %v384, %v382
  %v517 = vpack.c.b16 %v385, %v383
  %v518 = vpack.c.b16 %v388, %v386
  %v519 = vpack.c.b16 %v389, %v387
  %v520 = vpack.c.b16 %v392, %v390
  %v521 = vpack.c.b16 %v393, %v391
  %v522 = vpack.c.b16 %v396, %v394
  %v523 = vpack.c.b16 %v397, %v395
  %v524 = vpack.c.b16 %v400, %v398
  %v525 = vpack.c.b16 %v401, %v399
  %v526 = vpack.c.b16 %v404, %v402
  %v527 = vpack.c.b16 %v405, %v403
  %v528 = vpack.c.b16 %v408, %v406
  %v529 = vpack.c.b16 %v409, %v407
  %v530 = vpack.c.b16 %v412, %v410
  %v531 = vpack.c.b16 %v413, %v411
  %v532 = vpack.c.b16 %v416, %v414
  %v533 = vpack.c.b16 %v417, %v415
  %v534 = vpack.c.b16 %v420, %v418
  %v535 = vpack.c.b16 %v421, %v419
  %v536 = vpack.c.b16 %v424, %v422
  %v537 = vpack.c.b16 %v425, %v423
  %v538 = vpack.c.b16 %v428, %v426
  %v539 = vpack.c.b16 %v429, %v427
  %v540 = vpack.c.b16 %v432, %v430
  %v541 = vpack.c.b16 %v433, %v431
  %v542 = vpack.c.b16 %v436, %v434
  %v543 = vpack.c.b16 %v437, %v435
  %v544 = vpack.c.b16 %v440, %v438
  %v545 = vpack.c.b16 %v441, %v439
  %v546 = vpack.c.b16 %v444, %v442
  %v547 = vpack.c.b16 %v445, %v443
  %v548 = vpack.c.b16 %v448, %v446
  %v549 = vpack.c.b16 %v449, %v447
  %v682 = vunpack.c.l.b16 %v114
  %v683 = vunpack.c.l.b16 %v115
  %v684 = vunpack.c.l.b16 %v116
  %v685 = vunpack.c.l.b16 %v117
  %v686 = vunpack.c.l.b16 %v118
  %v687 = vunpack.c.l.b16 %v119
  %v688 = vunpack.c.l.b16 %v120
  %v689 = vunpack.c.l.b16 %v121
  %v690 = vunpack.c.l.b16 %v122
  %v691 = vunpack.c.l.b16 %v123
  %v692 = vunpack.c.l.b16 %v124
  %v693 = vunpack.c.l.b16 %v125
  %v694 = vunpack.c.l.b16 %v126
  %v695 = vunpack.c.l.b16 %v127
  %v696 = vunpack.c.l.b16 %v128
  %v697 = vunpack.c.l.b16 %v129
  %v698 = vunpack.c.l.b16 %v130
  %v699 = vunpack.c.l.b16 %v131
  %v700 = vunpack.c.l.b16 %v132
  %v701 = vunpack.c.l.b16 %v133
  %v702 = vunpack.c.l.b16 %v134
  %v703 = vunpack.c.l.b16 %v135
  %v704 = vunpack.c.l.b16 %v136
  %v705 = vunpack.c.l.b16 %v137
  %v706 = vunpack.c.l.b16 %v138
  %v707 = vunpack.c.l.b16 %v139
  %v708 = vunpack.c.l.b16 %v140
  %v709 = vunpack.c.l.b16 %v141
  %v710 = vunpack.c.l.b16 %v142
  %v711 = vunpack.c.l.b16 %v143
  %v712 = vunpack.c.l.b16 %v144
  %v713 = vunpack.c.l.b16 %v145
  %v714 = vpack.c.b16 %v683, %v682
  %v715 = vpack.c.b16 %v685, %v684
  %v716 = vpack.c.b16 %v687, %v686
  %v717 = vpack.c.b16 %v689, %v688
  %v718 = vpack.c.b16 %v691, %v690
  %v719 = vpack.c.b16 %v693, %v692
  %v720 = vpack.c.b16 %v695, %v694
  %v721 = vpack.c.b16 %v697, %v696
  %v722 = vpack.c.b16 %v699, %v698
  %v723 = vpack.c.b16 %v701, %v700
  %v724 = vpack.c.b16 %v703, %v702
  %v725 = vpack.c.b16 %v705, %v704
  %v726 = vpack.c.b16 %v707, %v706
  %v727 = vpack.c.b16 %v709, %v708
  %v728 = vpack.c.b16 %v711, %v710
  %v729 = vpack.c.b16 %v713, %v712
  %746 = vmatpush.bf16.msra.mxu0 %v721
  %747 = vmatpush.bf16.msra.mxu0 %v720
  %748 = vmatpush.bf16.msra.mxu0 %v719
  %749 = vmatpush.bf16.msra.mxu0 %v718
  %750 = vmatpush.bf16.msra.mxu0 %v717
  %751 = vmatpush.bf16.msra.mxu0 %v716
  %752 = vmatpush.bf16.msra.mxu0 %v715
  %753 = vmatpush.bf16.msra.mxu0 %v714
  %754 = vmatmul.bf16.gmra.mxu0 %v450
  %v755 = vpop.f32.mrf.mxu0
  %v756 = vadd.f32 %v148, %v755
  %v757 = vpop.f32.mrf.mxu0
  %v758 = vadd.f32 %v148, %v757
  %759 = vmatmul.bf16.gmra.mxu0 %v452
  %v760 = vpop.f32.mrf.mxu0
  %v761 = vadd.f32 %v148, %v760
  %v762 = vpop.f32.mrf.mxu0
  %v763 = vadd.f32 %v148, %v762
  %764 = vmatmul.bf16.gmra.mxu0 %v454
  %v765 = vpop.f32.mrf.mxu0
  %v766 = vadd.f32 %v148, %v765
  %v767 = vpop.f32.mrf.mxu0
  %v768 = vadd.f32 %v148, %v767
  %769 = vmatmul.bf16.gmra.mxu0 %v456
  %v770 = vpop.f32.mrf.mxu0
  %v771 = vadd.f32 %v148, %v770
  %v772 = vpop.f32.mrf.mxu0
  %v773 = vadd.f32 %v148, %v772
  %774 = vmatmul.bf16.gmra.mxu0 %v458
  %v775 = vpop.f32.mrf.mxu0
  %v776 = vadd.f32 %v148, %v775
  %v777 = vpop.f32.mrf.mxu0
  %v778 = vadd.f32 %v148, %v777
  %779 = vmatmul.bf16.gmra.mxu0 %v460
  %v780 = vpop.f32.mrf.mxu0
  %v781 = vadd.f32 %v148, %v780
  %v782 = vpop.f32.mrf.mxu0
  %v783 = vadd.f32 %v148, %v782
  %784 = vmatmul.bf16.gmra.mxu0 %v462
  %v785 = vpop.f32.mrf.mxu0
  %v786 = vadd.f32 %v148, %v785
  %v787 = vpop.f32.mrf.mxu0
  %v788 = vadd.f32 %v148, %v787
  %789 = vmatmul.bf16.gmra.mxu0 %v464
  %v790 = vpop.f32.mrf.mxu0
  %v791 = vadd.f32 %v148, %v790
  %v792 = vpop.f32.mrf.mxu0
  %v793 = vadd.f32 %v148, %v792
  %794 = vmatmul.bf16.gmra.mxu0 %v466
  %v795 = vpop.f32.mrf.mxu0
  %v796 = vadd.f32 %v148, %v795
  %v797 = vpop.f32.mrf.mxu0
  %v798 = vadd.f32 %v148, %v797
  %799 = vmatmul.bf16.gmra.mxu0 %v468
  %v800 = vpop.f32.mrf.mxu0
  %v801 = vadd.f32 %v148, %v800
  %v802 = vpop.f32.mrf.mxu0
  %v803 = vadd.f32 %v148, %v802
  %804 = vmatmul.bf16.gmra.mxu0 %v470
  %v805 = vpop.f32.mrf.mxu0
  %v806 = vadd.f32 %v148, %v805
  %v807 = vpop.f32.mrf.mxu0
  %v808 = vadd.f32 %v148, %v807
  %809 = vmatmul.bf16.gmra.mxu0 %v472
  %v810 = vpop.f32.mrf.mxu0
  %v811 = vadd.f32 %v148, %v810
  %v812 = vpop.f32.mrf.mxu0
  %v813 = vadd.f32 %v148, %v812
  %814 = vmatmul.bf16.gmra.mxu0 %v474
  %v815 = vpop.f32.mrf.mxu0
  %v816 = vadd.f32 %v148, %v815
  %v817 = vpop.f32.mrf.mxu0
  %v818 = vadd.f32 %v148, %v817
  %819 = vmatmul.bf16.gmra.mxu0 %v476
  %v820 = vpop.f32.mrf.mxu0
  %v821 = vadd.f32 %v148, %v820
  %v822 = vpop.f32.mrf.mxu0
  %v823 = vadd.f32 %v148, %v822
  %824 = vmatmul.bf16.gmra.mxu0 %v478
  %v825 = vpop.f32.mrf.mxu0
  %v826 = vadd.f32 %v148, %v825
  %v827 = vpop.f32.mrf.mxu0
  %v828 = vadd.f32 %v148, %v827
  %829 = vmatmul.bf16.gmra.mxu0 %v480
  %v830 = vpop.f32.mrf.mxu0
  %v831 = vadd.f32 %v148, %v830
  %v832 = vpop.f32.mrf.mxu0
  %v833 = vadd.f32 %v148, %v832
  %834 = vmatmul.bf16.gmra.mxu0 %v482
  %v835 = vpop.f32.mrf.mxu0
  %v836 = vadd.f32 %v148, %v835
  %v837 = vpop.f32.mrf.mxu0
  %v838 = vadd.f32 %v148, %v837
  %839 = vmatmul.bf16.gmra.mxu0 %v484
  %v840 = vpop.f32.mrf.mxu0
  %v841 = vadd.f32 %v148, %v840
  %v842 = vpop.f32.mrf.mxu0
  %v843 = vadd.f32 %v148, %v842
  %844 = vmatmul.bf16.gmra.mxu0 %v486
  %v845 = vpop.f32.mrf.mxu0
  %v846 = vadd.f32 %v148, %v845
  %v847 = vpop.f32.mrf.mxu0
  %v848 = vadd.f32 %v148, %v847
  %849 = vmatmul.bf16.gmra.mxu0 %v488
  %v850 = vpop.f32.mrf.mxu0
  %v851 = vadd.f32 %v148, %v850
  %v852 = vpop.f32.mrf.mxu0
  %v853 = vadd.f32 %v148, %v852
  %854 = vmatmul.bf16.gmra.mxu0 %v490
  %v855 = vpop.f32.mrf.mxu0
  %v856 = vadd.f32 %v148, %v855
  %v857 = vpop.f32.mrf.mxu0
  %v858 = vadd.f32 %v148, %v857
  %859 = vmatmul.bf16.gmra.mxu0 %v492
  %v860 = vpop.f32.mrf.mxu0
  %v861 = vadd.f32 %v148, %v860
  %v862 = vpop.f32.mrf.mxu0
  %v863 = vadd.f32 %v148, %v862
  %864 = vmatmul.bf16.gmra.mxu0 %v494
  %v865 = vpop.f32.mrf.mxu0
  %v866 = vadd.f32 %v148, %v865
  %v867 = vpop.f32.mrf.mxu0
  %v868 = vadd.f32 %v148, %v867
  %869 = vmatmul.bf16.gmra.mxu0 %v496
  %v870 = vpop.f32.mrf.mxu0
  %v871 = vadd.f32 %v148, %v870
  %v872 = vpop.f32.mrf.mxu0
  %v873 = vadd.f32 %v148, %v872
  %874 = vmatmul.bf16.gmra.mxu0 %v498
  %v875 = vpop.f32.mrf.mxu0
  %v876 = vadd.f32 %v148, %v875
  %v877 = vpop.f32.mrf.mxu0
  %v878 = vadd.f32 %v148, %v877
  %879 = vmatmul.bf16.gmra.mxu0 %v500
  %v880 = vpop.f32.mrf.mxu0
  %v881 = vadd.f32 %v148, %v880
  %v882 = vpop.f32.mrf.mxu0
  %v883 = vadd.f32 %v148, %v882
  %884 = vmatmul.bf16.gmra.mxu0 %v502
  %v885 = vpop.f32.mrf.mxu0
  %v886 = vadd.f32 %v148, %v885
  %v887 = vpop.f32.mrf.mxu0
  %v888 = vadd.f32 %v148, %v887
  %889 = vmatmul.bf16.gmra.mxu0 %v504
  %v890 = vpop.f32.mrf.mxu0
  %v891 = vadd.f32 %v148, %v890
  %v892 = vpop.f32.mrf.mxu0
  %v893 = vadd.f32 %v148, %v892
  %894 = vmatmul.bf16.gmra.mxu0 %v506
  %v895 = vpop.f32.mrf.mxu0
  %v896 = vadd.f32 %v148, %v895
  %v897 = vpop.f32.mrf.mxu0
  %v898 = vadd.f32 %v148, %v897
  %899 = vmatmul.bf16.gmra.mxu0 %v508
  %v900 = vpop.f32.mrf.mxu0
  %v901 = vadd.f32 %v148, %v900
  %v902 = vpop.f32.mrf.mxu0
  %v903 = vadd.f32 %v148, %v902
  %904 = vmatmul.bf16.gmra.mxu0 %v510
  %v905 = vpop.f32.mrf.mxu0
  %v906 = vadd.f32 %v148, %v905
  %v907 = vpop.f32.mrf.mxu0
  %v908 = vadd.f32 %v148, %v907
  %909 = vmatmul.bf16.gmra.mxu0 %v512
  %v910 = vpop.f32.mrf.mxu0
  %v911 = vadd.f32 %v148, %v910
  %v912 = vpop.f32.mrf.mxu0
  %v913 = vadd.f32 %v148, %v912
  %914 = vmatmul.bf16.gmra.mxu0 %v514
  %v915 = vpop.f32.mrf.mxu0
  %v916 = vadd.f32 %v148, %v915
  %v917 = vpop.f32.mrf.mxu0
  %v918 = vadd.f32 %v148, %v917
  %919 = vmatmul.bf16.gmra.mxu0 %v516
  %v920 = vpop.f32.mrf.mxu0
  %v921 = vadd.f32 %v148, %v920
  %v922 = vpop.f32.mrf.mxu0
  %v923 = vadd.f32 %v148, %v922
  %924 = vmatmul.bf16.gmra.mxu0 %v518
  %v925 = vpop.f32.mrf.mxu0
  %v926 = vadd.f32 %v148, %v925
  %v927 = vpop.f32.mrf.mxu0
  %v928 = vadd.f32 %v148, %v927
  %929 = vmatmul.bf16.gmra.mxu0 %v520
  %v930 = vpop.f32.mrf.mxu0
  %v931 = vadd.f32 %v148, %v930
  %v932 = vpop.f32.mrf.mxu0
  %v933 = vadd.f32 %v148, %v932
  %934 = vmatmul.bf16.gmra.mxu0 %v522
  %v935 = vpop.f32.mrf.mxu0
  %v936 = vadd.f32 %v148, %v935
  %v937 = vpop.f32.mrf.mxu0
  %v938 = vadd.f32 %v148, %v937
  %939 = vmatmul.bf16.gmra.mxu0 %v524
  %v940 = vpop.f32.mrf.mxu0
  %v941 = vadd.f32 %v148, %v940
  %v942 = vpop.f32.mrf.mxu0
  %v943 = vadd.f32 %v148, %v942
  %944 = vmatmul.bf16.gmra.mxu0 %v526
  %v945 = vpop.f32.mrf.mxu0
  %v946 = vadd.f32 %v148, %v945
  %v947 = vpop.f32.mrf.mxu0
  %v948 = vadd.f32 %v148, %v947
  %949 = vmatmul.bf16.gmra.mxu0 %v528
  %v950 = vpop.f32.mrf.mxu0
  %v951 = vadd.f32 %v148, %v950
  %v952 = vpop.f32.mrf.mxu0
  %v953 = vadd.f32 %v148, %v952
  %954 = vmatmul.bf16.gmra.mxu0 %v530
  %v955 = vpop.f32.mrf.mxu0
  %v956 = vadd.f32 %v148, %v955
  %v957 = vpop.f32.mrf.mxu0
  %v958 = vadd.f32 %v148, %v957
  %959 = vmatmul.bf16.gmra.mxu0 %v532
  %v960 = vpop.f32.mrf.mxu0
  %v961 = vadd.f32 %v148, %v960
  %v962 = vpop.f32.mrf.mxu0
  %v963 = vadd.f32 %v148, %v962
  %964 = vmatmul.bf16.gmra.mxu0 %v534
  %v965 = vpop.f32.mrf.mxu0
  %v966 = vadd.f32 %v148, %v965
  %v967 = vpop.f32.mrf.mxu0
  %v968 = vadd.f32 %v148, %v967
  %969 = vmatmul.bf16.gmra.mxu0 %v536
  %v970 = vpop.f32.mrf.mxu0
  %v971 = vadd.f32 %v148, %v970
  %v972 = vpop.f32.mrf.mxu0
  %v973 = vadd.f32 %v148, %v972
  %974 = vmatmul.bf16.gmra.mxu0 %v538
  %v975 = vpop.f32.mrf.mxu0
  %v976 = vadd.f32 %v148, %v975
  %v977 = vpop.f32.mrf.mxu0
  %v978 = vadd.f32 %v148, %v977
  %979 = vmatmul.bf16.gmra.mxu0 %v540
  %v980 = vpop.f32.mrf.mxu0
  %v981 = vadd.f32 %v148, %v980
  %v982 = vpop.f32.mrf.mxu0
  %v983 = vadd.f32 %v148, %v982
  %984 = vmatmul.bf16.gmra.mxu0 %v542
  %v985 = vpop.f32.mrf.mxu0
  %v986 = vadd.f32 %v148, %v985
  %v987 = vpop.f32.mrf.mxu0
  %v988 = vadd.f32 %v148, %v987
  %989 = vmatmul.bf16.gmra.mxu0 %v544
  %v990 = vpop.f32.mrf.mxu0
  %v991 = vadd.f32 %v148, %v990
  %v992 = vpop.f32.mrf.mxu0
  %v993 = vadd.f32 %v148, %v992
  %994 = vmatmul.bf16.gmra.mxu0 %v546
  %v995 = vpop.f32.mrf.mxu0
  %v996 = vadd.f32 %v148, %v995
  %v997 = vpop.f32.mrf.mxu0
  %v998 = vadd.f32 %v148, %v997
  %999 = vmatmul.bf16.gmra.mxu0 %v548
  %v1000 = vpop.f32.mrf.mxu0
  %v1001 = vadd.f32 %v148, %v1000
  %v1002 = vpop.f32.mrf.mxu0
  %v1003 = vadd.f32 %v148, %v1002
  %1004 = vdwg.mxu0
  %1005 = vmatpush.bf16.msra.mxu0 %v729
  %1006 = vmatpush.bf16.msra.mxu0 %v728
  %1007 = vmatpush.bf16.msra.mxu0 %v727
  %1008 = vmatpush.bf16.msra.mxu0 %v726
  %1009 = vmatpush.bf16.msra.mxu0 %v725
  %1010 = vmatpush.bf16.msra.mxu0 %v724
  %1011 = vmatpush.bf16.msra.mxu0 %v723
  %1012 = vmatpush.bf16.msra.mxu0 %v722
  %1013 = vmatmul.bf16.gmra.mxu0 %v451
  %v1014 = vpop.f32.mrf.mxu0
  %v1015 = vadd.f32 %v756, %v1014
  %v1016 = vpop.f32.mrf.mxu0
  %v1017 = vadd.f32 %v758, %v1016
  %1018 = vmatmul.bf16.gmra.mxu0 %v453
  %v1019 = vpop.f32.mrf.mxu0
  %v1020 = vadd.f32 %v761, %v1019
  %v1021 = vpop.f32.mrf.mxu0
  %v1022 = vadd.f32 %v763, %v1021
  %1023 = vmatmul.bf16.gmra.mxu0 %v455
  %v1024 = vpop.f32.mrf.mxu0
  %v1025 = vadd.f32 %v766, %v1024
  %v1026 = vpop.f32.mrf.mxu0
  %v1027 = vadd.f32 %v768, %v1026
  %1028 = vmatmul.bf16.gmra.mxu0 %v457
  %v1029 = vpop.f32.mrf.mxu0
  %v1030 = vadd.f32 %v771, %v1029
  %v1031 = vpop.f32.mrf.mxu0
  %v1032 = vadd.f32 %v773, %v1031
  %1033 = vmatmul.bf16.gmra.mxu0 %v459
  %v1034 = vpop.f32.mrf.mxu0
  %v1035 = vadd.f32 %v776, %v1034
  %v1036 = vpop.f32.mrf.mxu0
  %v1037 = vadd.f32 %v778, %v1036
  %1038 = vmatmul.bf16.gmra.mxu0 %v461
  %v1039 = vpop.f32.mrf.mxu0
  %v1040 = vadd.f32 %v781, %v1039
  %v1041 = vpop.f32.mrf.mxu0
  %v1042 = vadd.f32 %v783, %v1041
  %1043 = vmatmul.bf16.gmra.mxu0 %v463
  %v1044 = vpop.f32.mrf.mxu0
  %v1045 = vadd.f32 %v786, %v1044
  %v1046 = vpop.f32.mrf.mxu0
  %v1047 = vadd.f32 %v788, %v1046
  %1048 = vmatmul.bf16.gmra.mxu0 %v465
  %v1049 = vpop.f32.mrf.mxu0
  %v1050 = vadd.f32 %v791, %v1049
  %v1051 = vpop.f32.mrf.mxu0
  %v1052 = vadd.f32 %v793, %v1051
  %1053 = vmatmul.bf16.gmra.mxu0 %v467
  %v1054 = vpop.f32.mrf.mxu0
  %v1055 = vadd.f32 %v796, %v1054
  %v1056 = vpop.f32.mrf.mxu0
  %v1057 = vadd.f32 %v798, %v1056
  %1058 = vmatmul.bf16.gmra.mxu0 %v469
  %v1059 = vpop.f32.mrf.mxu0
  %v1060 = vadd.f32 %v801, %v1059
  %v1061 = vpop.f32.mrf.mxu0
  %v1062 = vadd.f32 %v803, %v1061
  %1063 = vmatmul.bf16.gmra.mxu0 %v471
  %v1064 = vpop.f32.mrf.mxu0
  %v1065 = vadd.f32 %v806, %v1064
  %v1066 = vpop.f32.mrf.mxu0
  %v1067 = vadd.f32 %v808, %v1066
  %1068 = vmatmul.bf16.gmra.mxu0 %v473
  %v1069 = vpop.f32.mrf.mxu0
  %v1070 = vadd.f32 %v811, %v1069
  %v1071 = vpop.f32.mrf.mxu0
  %v1072 = vadd.f32 %v813, %v1071
  %1073 = vmatmul.bf16.gmra.mxu0 %v475
  %v1074 = vpop.f32.mrf.mxu0
  %v1075 = vadd.f32 %v816, %v1074
  %v1076 = vpop.f32.mrf.mxu0
  %v1077 = vadd.f32 %v818, %v1076
  %1078 = vmatmul.bf16.gmra.mxu0 %v477
  %v1079 = vpop.f32.mrf.mxu0
  %v1080 = vadd.f32 %v821, %v1079
  %v1081 = vpop.f32.mrf.mxu0
  %v1082 = vadd.f32 %v823, %v1081
  %1083 = vmatmul.bf16.gmra.mxu0 %v479
  %v1084 = vpop.f32.mrf.mxu0
  %v1085 = vadd.f32 %v826, %v1084
  %v1086 = vpop.f32.mrf.mxu0
  %v1087 = vadd.f32 %v828, %v1086
  %1088 = vmatmul.bf16.gmra.mxu0 %v481
  %v1089 = vpop.f32.mrf.mxu0
  %v1090 = vadd.f32 %v831, %v1089
  %v1091 = vpop.f32.mrf.mxu0
  %v1092 = vadd.f32 %v833, %v1091
  %1093 = vmatmul.bf16.gmra.mxu0 %v483
  %v1094 = vpop.f32.mrf.mxu0
  %v1095 = vadd.f32 %v836, %v1094
  %v1096 = vpop.f32.mrf.mxu0
  %v1097 = vadd.f32 %v838, %v1096
  %1098 = vmatmul.bf16.gmra.mxu0 %v485
  %v1099 = vpop.f32.mrf.mxu0
  %v1100 = vadd.f32 %v841, %v1099
  %v1101 = vpop.f32.mrf.mxu0
  %v1102 = vadd.f32 %v843, %v1101
  %1103 = vmatmul.bf16.gmra.mxu0 %v487
  %v1104 = vpop.f32.mrf.mxu0
  %v1105 = vadd.f32 %v846, %v1104
  %v1106 = vpop.f32.mrf.mxu0
  %v1107 = vadd.f32 %v848, %v1106
  %1108 = vmatmul.bf16.gmra.mxu0 %v489
  %v1109 = vpop.f32.mrf.mxu0
  %v1110 = vadd.f32 %v851, %v1109
  %v1111 = vpop.f32.mrf.mxu0
  %v1112 = vadd.f32 %v853, %v1111
  %1113 = vmatmul.bf16.gmra.mxu0 %v491
  %v1114 = vpop.f32.mrf.mxu0
  %v1115 = vadd.f32 %v856, %v1114
  %v1116 = vpop.f32.mrf.mxu0
  %v1117 = vadd.f32 %v858, %v1116
  %1118 = vmatmul.bf16.gmra.mxu0 %v493
  %v1119 = vpop.f32.mrf.mxu0
  %v1120 = vadd.f32 %v861, %v1119
  %v1121 = vpop.f32.mrf.mxu0
  %v1122 = vadd.f32 %v863, %v1121
  %1123 = vmatmul.bf16.gmra.mxu0 %v495
  %v1124 = vpop.f32.mrf.mxu0
  %v1125 = vadd.f32 %v866, %v1124
  %v1126 = vpop.f32.mrf.mxu0
  %v1127 = vadd.f32 %v868, %v1126
  %1128 = vmatmul.bf16.gmra.mxu0 %v497
  %v1129 = vpop.f32.mrf.mxu0
  %v1130 = vadd.f32 %v871, %v1129
  %v1131 = vpop.f32.mrf.mxu0
  %v1132 = vadd.f32 %v873, %v1131
  %1133 = vmatmul.bf16.gmra.mxu0 %v499
  %v1134 = vpop.f32.mrf.mxu0
  %v1135 = vadd.f32 %v876, %v1134
  %v1136 = vpop.f32.mrf.mxu0
  %v1137 = vadd.f32 %v878, %v1136
  %1138 = vmatmul.bf16.gmra.mxu0 %v501
  %v1139 = vpop.f32.mrf.mxu0
  %v1140 = vadd.f32 %v881, %v1139
  %v1141 = vpop.f32.mrf.mxu0
  %v1142 = vadd.f32 %v883, %v1141
  %1143 = vmatmul.bf16.gmra.mxu0 %v503
  %v1144 = vpop.f32.mrf.mxu0
  %v1145 = vadd.f32 %v886, %v1144
  %v1146 = vpop.f32.mrf.mxu0
  %v1147 = vadd.f32 %v888, %v1146
  %1148 = vmatmul.bf16.gmra.mxu0 %v505
  %v1149 = vpop.f32.mrf.mxu0
  %v1150 = vadd.f32 %v891, %v1149
  %v1151 = vpop.f32.mrf.mxu0
  %v1152 = vadd.f32 %v893, %v1151
  %1153 = vmatmul.bf16.gmra.mxu0 %v507
  %v1154 = vpop.f32.mrf.mxu0
  %v1155 = vadd.f32 %v896, %v1154
  %v1156 = vpop.f32.mrf.mxu0
  %v1157 = vadd.f32 %v898, %v1156
  %1158 = vmatmul.bf16.gmra.mxu0 %v509
  %v1159 = vpop.f32.mrf.mxu0
  %v1160 = vadd.f32 %v901, %v1159
  %v1161 = vpop.f32.mrf.mxu0
  %v1162 = vadd.f32 %v903, %v1161
  %1163 = vmatmul.bf16.gmra.mxu0 %v511
  %v1164 = vpop.f32.mrf.mxu0
  %v1165 = vadd.f32 %v906, %v1164
  %v1166 = vpop.f32.mrf.mxu0
  %v1167 = vadd.f32 %v908, %v1166
  %1168 = vmatmul.bf16.gmra.mxu0 %v513
  %v1169 = vpop.f32.mrf.mxu0
  %v1170 = vadd.f32 %v911, %v1169
  %v1171 = vpop.f32.mrf.mxu0
  %v1172 = vadd.f32 %v913, %v1171
  %1173 = vmatmul.bf16.gmra.mxu0 %v515
  %v1174 = vpop.f32.mrf.mxu0
  %v1175 = vadd.f32 %v916, %v1174
  %v1176 = vpop.f32.mrf.mxu0
  %v1177 = vadd.f32 %v918, %v1176
  %1178 = vmatmul.bf16.gmra.mxu0 %v517
  %v1179 = vpop.f32.mrf.mxu0
  %v1180 = vadd.f32 %v921, %v1179
  %v1181 = vpop.f32.mrf.mxu0
  %v1182 = vadd.f32 %v923, %v1181
  %1183 = vmatmul.bf16.gmra.mxu0 %v519
  %v1184 = vpop.f32.mrf.mxu0
  %v1185 = vadd.f32 %v926, %v1184
  %v1186 = vpop.f32.mrf.mxu0
  %v1187 = vadd.f32 %v928, %v1186
  %1188 = vmatmul.bf16.gmra.mxu0 %v521
  %v1189 = vpop.f32.mrf.mxu0
  %v1190 = vadd.f32 %v931, %v1189
  %v1191 = vpop.f32.mrf.mxu0
  %v1192 = vadd.f32 %v933, %v1191
  %1193 = vmatmul.bf16.gmra.mxu0 %v523
  %v1194 = vpop.f32.mrf.mxu0
  %v1195 = vadd.f32 %v936, %v1194
  %v1196 = vpop.f32.mrf.mxu0
  %v1197 = vadd.f32 %v938, %v1196
  %1198 = vmatmul.bf16.gmra.mxu0 %v525
  %v1199 = vpop.f32.mrf.mxu0
  %v1200 = vadd.f32 %v941, %v1199
  %v1201 = vpop.f32.mrf.mxu0
  %v1202 = vadd.f32 %v943, %v1201
  %1203 = vmatmul.bf16.gmra.mxu0 %v527
  %v1204 = vpop.f32.mrf.mxu0
  %v1205 = vadd.f32 %v946, %v1204
  %v1206 = vpop.f32.mrf.mxu0
  %v1207 = vadd.f32 %v948, %v1206
  %1208 = vmatmul.bf16.gmra.mxu0 %v529
  %v1209 = vpop.f32.mrf.mxu0
  %v1210 = vadd.f32 %v951, %v1209
  %v1211 = vpop.f32.mrf.mxu0
  %v1212 = vadd.f32 %v953, %v1211
  %1213 = vmatmul.bf16.gmra.mxu0 %v531
  %v1214 = vpop.f32.mrf.mxu0
  %v1215 = vadd.f32 %v956, %v1214
  %v1216 = vpop.f32.mrf.mxu0
  %v1217 = vadd.f32 %v958, %v1216
  %1218 = vmatmul.bf16.gmra.mxu0 %v533
  %v1219 = vpop.f32.mrf.mxu0
  %v1220 = vadd.f32 %v961, %v1219
  %v1221 = vpop.f32.mrf.mxu0
  %v1222 = vadd.f32 %v963, %v1221
  %1223 = vmatmul.bf16.gmra.mxu0 %v535
  %v1224 = vpop.f32.mrf.mxu0
  %v1225 = vadd.f32 %v966, %v1224
  %v1226 = vpop.f32.mrf.mxu0
  %v1227 = vadd.f32 %v968, %v1226
  %1228 = vmatmul.bf16.gmra.mxu0 %v537
  %v1229 = vpop.f32.mrf.mxu0
  %v1230 = vadd.f32 %v971, %v1229
  %v1231 = vpop.f32.mrf.mxu0
  %v1232 = vadd.f32 %v973, %v1231
  %1233 = vmatmul.bf16.gmra.mxu0 %v539
  %v1234 = vpop.f32.mrf.mxu0
  %v1235 = vadd.f32 %v976, %v1234
  %v1236 = vpop.f32.mrf.mxu0
  %v1237 = vadd.f32 %v978, %v1236
  %1238 = vmatmul.bf16.gmra.mxu0 %v541
  %v1239 = vpop.f32.mrf.mxu0
  %v1240 = vadd.f32 %v981, %v1239
  %v1241 = vpop.f32.mrf.mxu0
  %v1242 = vadd.f32 %v983, %v1241
  %1243 = vmatmul.bf16.gmra.mxu0 %v543
  %v1244 = vpop.f32.mrf.mxu0
  %v1245 = vadd.f32 %v986, %v1244
  %v1246 = vpop.f32.mrf.mxu0
  %v1247 = vadd.f32 %v988, %v1246
  %1248 = vmatmul.bf16.gmra.mxu0 %v545
  %v1249 = vpop.f32.mrf.mxu0
  %v1250 = vadd.f32 %v991, %v1249
  %v1251 = vpop.f32.mrf.mxu0
  %v1252 = vadd.f32 %v993, %v1251
  %1253 = vmatmul.bf16.gmra.mxu0 %v547
  %v1254 = vpop.f32.mrf.mxu0
  %v1255 = vadd.f32 %v996, %v1254
  %v1256 = vpop.f32.mrf.mxu0
  %v1257 = vadd.f32 %v998, %v1256
  %1258 = vmatmul.bf16.gmra.mxu0 %v549
  %v1259 = vpop.f32.mrf.mxu0
  %v1260 = vadd.f32 %v1001, %v1259
  %v1261 = vpop.f32.mrf.mxu0
  %v1262 = vadd.f32 %v1003, %v1261
  %1263 = vdwg.mxu0
  %v1264 = vmax.f32 %v1015, 0.0
  %v1265 = vmax.f32 %v1017, 0.0
  %v1266 = vmax.f32 %v1020, 0.0
  %v1267 = vmax.f32 %v1022, 0.0
  %v1268 = vmax.f32 %v1025, 0.0
  %v1269 = vmax.f32 %v1027, 0.0
  %v1270 = vmax.f32 %v1030, 0.0
  %v1271 = vmax.f32 %v1032, 0.0
  %v1272 = vmax.f32 %v1035, 0.0
  %v1273 = vmax.f32 %v1037, 0.0
  %v1274 = vmax.f32 %v1040, 0.0
  %v1275 = vmax.f32 %v1042, 0.0
  %v1276 = vmax.f32 %v1045, 0.0
  %v1277 = vmax.f32 %v1047, 0.0
  %v1278 = vmax.f32 %v1050, 0.0
  %v1279 = vmax.f32 %v1052, 0.0
  %v1280 = vmax.f32 %v1055, 0.0
  %v1281 = vmax.f32 %v1057, 0.0
  %v1282 = vmax.f32 %v1060, 0.0
  %v1283 = vmax.f32 %v1062, 0.0
  %v1284 = vmax.f32 %v1065, 0.0
  %v1285 = vmax.f32 %v1067, 0.0
  %v1286 = vmax.f32 %v1070, 0.0
  %v1287 = vmax.f32 %v1072, 0.0
  %v1288 = vmax.f32 %v1075, 0.0
  %v1289 = vmax.f32 %v1077, 0.0
  %v1290 = vmax.f32 %v1080, 0.0
  %v1291 = vmax.f32 %v1082, 0.0
  %v1292 = vmax.f32 %v1085, 0.0
  %v1293 = vmax.f32 %v1087, 0.0
  %v1294 = vmax.f32 %v1090, 0.0
  %v1295 = vmax.f32 %v1092, 0.0
  %v1296 = vmax.f32 %v1095, 0.0
  %v1297 = vmax.f32 %v1097, 0.0
  %v1298 = vmax.f32 %v1100, 0.0
  %v1299 = vmax.f32 %v1102, 0.0
  %v1300 = vmax.f32 %v1105, 0.0
  %v1301 = vmax.f32 %v1107, 0.0
  %v1302 = vmax.f32 %v1110, 0.0
  %v1303 = vmax.f32 %v1112, 0.0
  %v1304 = vmax.f32 %v1115, 0.0
  %v1305 = vmax.f32 %v1117, 0.0
  %v1306 = vmax.f32 %v1120, 0.0
  %v1307 = vmax.f32 %v1122, 0.0
  %v1308 = vmax.f32 %v1125, 0.0
  %v1309 = vmax.f32 %v1127, 0.0
  %v1310 = vmax.f32 %v1130, 0.0
  %v1311 = vmax.f32 %v1132, 0.0
  %v1312 = vmax.f32 %v1135, 0.0
  %v1313 = vmax.f32 %v1137, 0.0
  %v1314 = vmax.f32 %v1140, 0.0
  %v1315 = vmax.f32 %v1142, 0.0
  %v1316 = vmax.f32 %v1145, 0.0
  %v1317 = vmax.f32 %v1147, 0.0
  %v1318 = vmax.f32 %v1150, 0.0
  %v1319 = vmax.f32 %v1152, 0.0
  %v1320 = vmax.f32 %v1155, 0.0
  %v1321 = vmax.f32 %v1157, 0.0
  %v1322 = vmax.f32 %v1160, 0.0
  %v1323 = vmax.f32 %v1162, 0.0
  %v1324 = vmax.f32 %v1165, 0.0
  %v1325 = vmax.f32 %v1167, 0.0
  %v1326 = vmax.f32 %v1170, 0.0
  %v1327 = vmax.f32 %v1172, 0.0
  %v1328 = vmax.f32 %v1175, 0.0
  %v1329 = vmax.f32 %v1177, 0.0
  %v1330 = vmax.f32 %v1180, 0.0
  %v1331 = vmax.f32 %v1182, 0.0
  %v1332 = vmax.f32 %v1185, 0.0
  %v1333 = vmax.f32 %v1187, 0.0
  %v1334 = vmax.f32 %v1190, 0.0
  %v1335 = vmax.f32 %v1192, 0.0
  %v1336 = vmax.f32 %v1195, 0.0
  %v1337 = vmax.f32 %v1197, 0.0
  %v1338 = vmax.f32 %v1200, 0.0
  %v1339 = vmax.f32 %v1202, 0.0
  %v1340 = vmax.f32 %v1205, 0.0
  %v1341 = vmax.f32 %v1207, 0.0
  %v1342 = vmax.f32 %v1210, 0.0
  %v1343 = vmax.f32 %v1212, 0.0
  %v1344 = vmax.f32 %v1215, 0.0
  %v1345 = vmax.f32 %v1217, 0.0
  %v1346 = vmax.f32 %v1220, 0.0
  %v1347 = vmax.f32 %v1222, 0.0
  %v1348 = vmax.f32 %v1225, 0.0
  %v1349 = vmax.f32 %v1227, 0.0
  %v1350 = vmax.f32 %v1230, 0.0
  %v1351 = vmax.f32 %v1232, 0.0
  %v1352 = vmax.f32 %v1235, 0.0
  %v1353 = vmax.f32 %v1237, 0.0
  %v1354 = vmax.f32 %v1240, 0.0
  %v1355 = vmax.f32 %v1242, 0.0
  %v1356 = vmax.f32 %v1245, 0.0
  %v1357 = vmax.f32 %v1247, 0.0
  %v1358 = vmax.f32 %v1250, 0.0
  %v1359 = vmax.f32 %v1252, 0.0
  %v1360 = vmax.f32 %v1255, 0.0
  %v1361 = vmax.f32 %v1257, 0.0
  %v1362 = vmax.f32 %v1260, 0.0
  %v1363 = vmax.f32 %v1262, 0.0
  %v1364 = vpack.c.bf16 %v1264, %v1264
  %v1365 = vpack.c.bf16 %v1265, %v1265
  %v1366 = vpack.c.bf16 %v1266, %v1266
  %v1367 = vpack.c.bf16 %v1267, %v1267
  %v1368 = vpack.c.bf16 %v1268, %v1268
  %v1369 = vpack.c.bf16 %v1269, %v1269
  %v1370 = vpack.c.bf16 %v1270, %v1270
  %v1371 = vpack.c.bf16 %v1271, %v1271
  %v1372 = vpack.c.bf16 %v1272, %v1272
  %v1373 = vpack.c.bf16 %v1273, %v1273
  %v1374 = vpack.c.bf16 %v1274, %v1274
  %v1375 = vpack.c.bf16 %v1275, %v1275
  %v1376 = vpack.c.bf16 %v1276, %v1276
  %v1377 = vpack.c.bf16 %v1277, %v1277
  %v1378 = vpack.c.bf16 %v1278, %v1278
  %v1379 = vpack.c.bf16 %v1279, %v1279
  %v1380 = vpack.c.bf16 %v1280, %v1280
  %v1381 = vpack.c.bf16 %v1281, %v1281
  %v1382 = vpack.c.bf16 %v1282, %v1282
  %v1383 = vpack.c.bf16 %v1283, %v1283
  %v1384 = vpack.c.bf16 %v1284, %v1284
  %v1385 = vpack.c.bf16 %v1285, %v1285
  %v1386 = vpack.c.bf16 %v1286, %v1286
  %v1387 = vpack.c.bf16 %v1287, %v1287
  %v1388 = vpack.c.bf16 %v1288, %v1288
  %v1389 = vpack.c.bf16 %v1289, %v1289
  %v1390 = vpack.c.bf16 %v1290, %v1290
  %v1391 = vpack.c.bf16 %v1291, %v1291
  %v1392 = vpack.c.bf16 %v1292, %v1292
  %v1393 = vpack.c.bf16 %v1293, %v1293
  %v1394 = vpack.c.bf16 %v1294, %v1294
  %v1395 = vpack.c.bf16 %v1295, %v1295
  %v1396 = vpack.c.bf16 %v1296, %v1296
  %v1397 = vpack.c.bf16 %v1297, %v1297
  %v1398 = vpack.c.bf16 %v1298, %v1298
  %v1399 = vpack.c.bf16 %v1299, %v1299
  %v1400 = vpack.c.bf16 %v1300, %v1300
  %v1401 = vpack.c.bf16 %v1301, %v1301
  %v1402 = vpack.c.bf16 %v1302, %v1302
  %v1403 = vpack.c.bf16 %v1303, %v1303
  %v1404 = vpack.c.bf16 %v1304, %v1304
  %v1405 = vpack.c.bf16 %v1305, %v1305
  %v1406 = vpack.c.bf16 %v1306, %v1306
  %v1407 = vpack.c.bf16 %v1307, %v1307
  %v1408 = vpack.c.bf16 %v1308, %v1308
  %v1409 = vpack.c.bf16 %v1309, %v1309
  %v1410 = vpack.c.bf16 %v1310, %v1310
  %v1411 = vpack.c.bf16 %v1311, %v1311
  %v1412 = vpack.c.bf16 %v1312, %v1312
  %v1413 = vpack.c.bf16 %v1313, %v1313
  %v1414 = vpack.c.bf16 %v1314, %v1314
  %v1415 = vpack.c.bf16 %v1315, %v1315
  %v1416 = vpack.c.bf16 %v1316, %v1316
  %v1417 = vpack.c.bf16 %v1317, %v1317
  %v1418 = vpack.c.bf16 %v1318, %v1318
  %v1419 = vpack.c.bf16 %v1319, %v1319
  %v1420 = vpack.c.bf16 %v1320, %v1320
  %v1421 = vpack.c.bf16 %v1321, %v1321
  %v1422 = vpack.c.bf16 %v1322, %v1322
  %v1423 = vpack.c.bf16 %v1323, %v1323
  %v1424 = vpack.c.bf16 %v1324, %v1324
  %v1425 = vpack.c.bf16 %v1325, %v1325
  %v1426 = vpack.c.bf16 %v1326, %v1326
  %v1427 = vpack.c.bf16 %v1327, %v1327
  %v1428 = vpack.c.bf16 %v1328, %v1328
  %v1429 = vpack.c.bf16 %v1329, %v1329
  %v1430 = vpack.c.bf16 %v1330, %v1330
  %v1431 = vpack.c.bf16 %v1331, %v1331
  %v1432 = vpack.c.bf16 %v1332, %v1332
  %v1433 = vpack.c.bf16 %v1333, %v1333
  %v1434 = vpack.c.bf16 %v1334, %v1334
  %v1435 = vpack.c.bf16 %v1335, %v1335
  %v1436 = vpack.c.bf16 %v1336, %v1336
  %v1437 = vpack.c.bf16 %v1337, %v1337
  %v1438 = vpack.c.bf16 %v1338, %v1338
  %v1439 = vpack.c.bf16 %v1339, %v1339
  %v1440 = vpack.c.bf16 %v1340, %v1340
  %v1441 = vpack.c.bf16 %v1341, %v1341
  %v1442 = vpack.c.bf16 %v1342, %v1342
  %v1443 = vpack.c.bf16 %v1343, %v1343
  %v1444 = vpack.c.bf16 %v1344, %v1344
  %v1445 = vpack.c.bf16 %v1345, %v1345
  %v1446 = vpack.c.bf16 %v1346, %v1346
  %v1447 = vpack.c.bf16 %v1347, %v1347
  %v1448 = vpack.c.bf16 %v1348, %v1348
  %v1449 = vpack.c.bf16 %v1349, %v1349
  %v1450 = vpack.c.bf16 %v1350, %v1350
  %v1451 = vpack.c.bf16 %v1351, %v1351
  %v1452 = vpack.c.bf16 %v1352, %v1352
  %v1453 = vpack.c.bf16 %v1353, %v1353
  %v1454 = vpack.c.bf16 %v1354, %v1354
  %v1455 = vpack.c.bf16 %v1355, %v1355
  %v1456 = vpack.c.bf16 %v1356, %v1356
  %v1457 = vpack.c.bf16 %v1357, %v1357
  %v1458 = vpack.c.bf16 %v1358, %v1358
  %v1459 = vpack.c.bf16 %v1359, %v1359
  %v1460 = vpack.c.bf16 %v1360, %v1360
  %v1461 = vpack.c.bf16 %v1361, %v1361
  %v1462 = vpack.c.bf16 %v1362, %v1362
  %v1463 = vpack.c.bf16 %v1363, %v1363
  %vm1464 = vcmask 257024
  %1465 = vst.msk [vmem:[%s3] sm:$0xf] %vm1464, %v1364
  %1466 = vst.msk [vmem:[%s3 + $0x4] sm:$0xf] %vm1464, %v1365
  %1467 = vst.msk [vmem:[%s3 + $0x8] sm:$0xf] %vm1464, %v1366
  %1468 = vst.msk [vmem:[%s3 + $0xc] sm:$0xf] %vm1464, %v1367
  %1469 = vst.msk [vmem:[%s3 + $0x10] sm:$0xf] %vm1464, %v1368
  %1470 = vst.msk [vmem:[%s3 + $0x14] sm:$0xf] %vm1464, %v1369
  %1471 = vst.msk [vmem:[%s3 + $0x18] sm:$0xf] %vm1464, %v1370
  %1472 = vst.msk [vmem:[%s3 + $0x1c] sm:$0xf] %vm1464, %v1371
  %1473 = vst.msk [vmem:[%s3 + $0x20] sm:$0xf] %vm1464, %v1372
  %1474 = vst.msk [vmem:[%s3 + $0x24] sm:$0xf] %vm1464, %v1373
  %1475 = vst.msk [vmem:[%s3 + $0x28] sm:$0xf] %vm1464, %v1374
  %1476 = vst.msk [vmem:[%s3 + $0x2c] sm:$0xf] %vm1464, %v1375
  %1477 = vst.msk [vmem:[%s3 + $0x30] sm:$0xf] %vm1464, %v1376
  %1478 = vst.msk [vmem:[%s3 + $0x34] sm:$0xf] %vm1464, %v1377
  %1479 = vst.msk [vmem:[%s3 + $0x38] sm:$0xf] %vm1464, %v1378
  %1480 = vst.msk [vmem:[%s3 + $0x3c] sm:$0xf] %vm1464, %v1379
  %1481 = vst.msk [vmem:[%s3 + $0x40] sm:$0xf] %vm1464, %v1380
  %1482 = vst.msk [vmem:[%s3 + $0x44] sm:$0xf] %vm1464, %v1381
  %1483 = vst.msk [vmem:[%s3 + $0x48] sm:$0xf] %vm1464, %v1382
  %1484 = vst.msk [vmem:[%s3 + $0x4c] sm:$0xf] %vm1464, %v1383
  %1485 = vst.msk [vmem:[%s3 + $0x50] sm:$0xf] %vm1464, %v1384
  %1486 = vst.msk [vmem:[%s3 + $0x54] sm:$0xf] %vm1464, %v1385
  %1487 = vst.msk [vmem:[%s3 + $0x58] sm:$0xf] %vm1464, %v1386
  %1488 = vst.msk [vmem:[%s3 + $0x5c] sm:$0xf] %vm1464, %v1387
  %1489 = vst.msk [vmem:[%s3 + $0x60] sm:$0xf] %vm1464, %v1388
  %1490 = vst.msk [vmem:[%s3 + $0x64] sm:$0xf] %vm1464, %v1389
  %1491 = vst.msk [vmem:[%s3 + $0x68] sm:$0xf] %vm1464, %v1390
  %1492 = vst.msk [vmem:[%s3 + $0x6c] sm:$0xf] %vm1464, %v1391
  %1493 = vst.msk [vmem:[%s3 + $0x70] sm:$0xf] %vm1464, %v1392
  %1494 = vst.msk [vmem:[%s3 + $0x74] sm:$0xf] %vm1464, %v1393
  %1495 = vst.msk [vmem:[%s3 + $0x78] sm:$0xf] %vm1464, %v1394
  %1496 = vst.msk [vmem:[%s3 + $0x7c] sm:$0xf] %vm1464, %v1395
  %1497 = vst.msk [vmem:[%s3 + $0x80] sm:$0xf] %vm1464, %v1396
  %1498 = vst.msk [vmem:[%s3 + $0x84] sm:$0xf] %vm1464, %v1397
  %1499 = vst.msk [vmem:[%s3 + $0x88] sm:$0xf] %vm1464, %v1398
  %1500 = vst.msk [vmem:[%s3 + $0x8c] sm:$0xf] %vm1464, %v1399
  %1501 = vst.msk [vmem:[%s3 + $0x90] sm:$0xf] %vm1464, %v1400
  %1502 = vst.msk [vmem:[%s3 + $0x94] sm:$0xf] %vm1464, %v1401
  %1503 = vst.msk [vmem:[%s3 + $0x98] sm:$0xf] %vm1464, %v1402
  %1504 = vst.msk [vmem:[%s3 + $0x9c] sm:$0xf] %vm1464, %v1403
  %1505 = vst.msk [vmem:[%s3 + $0xa0] sm:$0xf] %vm1464, %v1404
  %1506 = vst.msk [vmem:[%s3 + $0xa4] sm:$0xf] %vm1464, %v1405
  %1507 = vst.msk [vmem:[%s3 + $0xa8] sm:$0xf] %vm1464, %v1406
  %1508 = vst.msk [vmem:[%s3 + $0xac] sm:$0xf] %vm1464, %v1407
  %1509 = vst.msk [vmem:[%s3 + $0xb0] sm:$0xf] %vm1464, %v1408
  %1510 = vst.msk [vmem:[%s3 + $0xb4] sm:$0xf] %vm1464, %v1409
  %1511 = vst.msk [vmem:[%s3 + $0xb8] sm:$0xf] %vm1464, %v1410
  %1512 = vst.msk [vmem:[%s3 + $0xbc] sm:$0xf] %vm1464, %v1411
  %1513 = vst.msk [vmem:[%s3 + $0xc0] sm:$0xf] %vm1464, %v1412
  %1514 = vst.msk [vmem:[%s3 + $0xc4] sm:$0xf] %vm1464, %v1413
  %1515 = vst.msk [vmem:[%s3 + $0xc8] sm:$0xf] %vm1464, %v1414
  %1516 = vst.msk [vmem:[%s3 + $0xcc] sm:$0xf] %vm1464, %v1415
  %1517 = vst.msk [vmem:[%s3 + $0xd0] sm:$0xf] %vm1464, %v1416
  %1518 = vst.msk [vmem:[%s3 + $0xd4] sm:$0xf] %vm1464, %v1417
  %1519 = vst.msk [vmem:[%s3 + $0xd8] sm:$0xf] %vm1464, %v1418
  %1520 = vst.msk [vmem:[%s3 + $0xdc] sm:$0xf] %vm1464, %v1419
  %1521 = vst.msk [vmem:[%s3 + $0xe0] sm:$0xf] %vm1464, %v1420
  %1522 = vst.msk [vmem:[%s3 + $0xe4] sm:$0xf] %vm1464, %v1421
  %1523 = vst.msk [vmem:[%s3 + $0xe8] sm:$0xf] %vm1464, %v1422
  %1524 = vst.msk [vmem:[%s3 + $0xec] sm:$0xf] %vm1464, %v1423
  %1525 = vst.msk [vmem:[%s3 + $0xf0] sm:$0xf] %vm1464, %v1424
  %1526 = vst.msk [vmem:[%s3 + $0xf4] sm:$0xf] %vm1464, %v1425
  %1527 = vst.msk [vmem:[%s3 + $0xf8] sm:$0xf] %vm1464, %v1426
  %1528 = vst.msk [vmem:[%s3 + $0xfc] sm:$0xf] %vm1464, %v1427
  %1529 = vst.msk [vmem:[%s3 + $0x100] sm:$0xf] %vm1464, %v1428
  %1530 = vst.msk [vmem:[%s3 + $0x104] sm:$0xf] %vm1464, %v1429
  %1531 = vst.msk [vmem:[%s3 + $0x108] sm:$0xf] %vm1464, %v1430
  %1532 = vst.msk [vmem:[%s3 + $0x10c] sm:$0xf] %vm1464, %v1431
  %1533 = vst.msk [vmem:[%s3 + $0x110] sm:$0xf] %vm1464, %v1432
  %1534 = vst.msk [vmem:[%s3 + $0x114] sm:$0xf] %vm1464, %v1433
  %1535 = vst.msk [vmem:[%s3 + $0x118] sm:$0xf] %vm1464, %v1434
  %1536 = vst.msk [vmem:[%s3 + $0x11c] sm:$0xf] %vm1464, %v1435
  %1537 = vst.msk [vmem:[%s3 + $0x120] sm:$0xf] %vm1464, %v1436
  %1538 = vst.msk [vmem:[%s3 + $0x124] sm:$0xf] %vm1464, %v1437
  %1539 = vst.msk [vmem:[%s3 + $0x128] sm:$0xf] %vm1464, %v1438
  %1540 = vst.msk [vmem:[%s3 + $0x12c] sm:$0xf] %vm1464, %v1439
  %1541 = vst.msk [vmem:[%s3 + $0x130] sm:$0xf] %vm1464, %v1440
  %1542 = vst.msk [vmem:[%s3 + $0x134] sm:$0xf] %vm1464, %v1441
  %1543 = vst.msk [vmem:[%s3 + $0x138] sm:$0xf] %vm1464, %v1442
  %1544 = vst.msk [vmem:[%s3 + $0x13c] sm:$0xf] %vm1464, %v1443
  %1545 = vst.msk [vmem:[%s3 + $0x140] sm:$0xf] %vm1464, %v1444
  %1546 = vst.msk [vmem:[%s3 + $0x144] sm:$0xf] %vm1464, %v1445
  %1547 = vst.msk [vmem:[%s3 + $0x148] sm:$0xf] %vm1464, %v1446
  %1548 = vst.msk [vmem:[%s3 + $0x14c] sm:$0xf] %vm1464, %v1447
  %1549 = vst.msk [vmem:[%s3 + $0x150] sm:$0xf] %vm1464, %v1448
  %1550 = vst.msk [vmem:[%s3 + $0x154] sm:$0xf] %vm1464, %v1449
  %1551 = vst.msk [vmem:[%s3 + $0x158] sm:$0xf] %vm1464, %v1450
  %1552 = vst.msk [vmem:[%s3 + $0x15c] sm:$0xf] %vm1464, %v1451
  %1553 = vst.msk [vmem:[%s3 + $0x160] sm:$0xf] %vm1464, %v1452
  %1554 = vst.msk [vmem:[%s3 + $0x164] sm:$0xf] %vm1464, %v1453
  %1555 = vst.msk [vmem:[%s3 + $0x168] sm:$0xf] %vm1464, %v1454
  %1556 = vst.msk [vmem:[%s3 + $0x16c] sm:$0xf] %vm1464, %v1455
  %1557 = vst.msk [vmem:[%s3 + $0x170] sm:$0xf] %vm1464, %v1456
  %1558 = vst.msk [vmem:[%s3 + $0x174] sm:$0xf] %vm1464, %v1457
  %1559 = vst.msk [vmem:[%s3 + $0x178] sm:$0xf] %vm1464, %v1458
  %1560 = vst.msk [vmem:[%s3 + $0x17c] sm:$0xf] %vm1464, %v1459
  %1561 = vst.msk [vmem:[%s3 + $0x180] sm:$0xf] %vm1464, %v1460
  %1562 = vst.msk [vmem:[%s3 + $0x184] sm:$0xf] %vm1464, %v1461
  %1563 = vst.msk [vmem:[%s3 + $0x188] sm:$0xf] %vm1464, %v1462
  %1564 = vst.msk [vmem:[%s3 + $0x18c] sm:$0xf] %vm1464, %v1463
  // Predicated region
  $region14: #{forward.4} parent=0 // pred_check
    _
  $region15: #{forward.4} parent=0 // pred_check_branch
    %1566 = sbr.rel (0) target = $region17
  $region16: #{forward.4} parent=0 // pred_region
    _
  $region17: #{forward.4} parent=0 // pred_fallthru
    _
  // Predicated region
  $region18: #{forward.4} parent=0 // pred_check
    _
  $region19: #{forward.4} parent=0 // pred_check_branch
    %1568 = sbr.rel (0) target = $region21
  $region20: #{forward.4} parent=0 // pred_region
    _
  $region21: #{forward.4} parent=0 // pred_fallthru
    _

// kernel: forward.5
$region0: #{forward.5}
  #allocation0 [shape = 'u32[]', space=smem, size = 0x4, offset = 0x4, fixed_abs, tag = 'smem constant byte address 0x4 - core index']
  #allocation1 [shape = 'u32[72,128]{1,0:T(1,128)}', space=vmem, size = 0x9000, scoped, tag = 'internal scratch']
  %s0 = inlined_call_operand.vmem [shape: bf16[162,512], index: 0, kind: input, shape index: {}]
  %s1 = inlined_call_operand.vmem [shape: bf16[512,64], index: 1, kind: input, shape index: {}]
  %s2 = inlined_call_operand.vmem [shape: f32[1,64], index: 2, kind: input, shape index: {}]
  %s3 = inlined_call_operand.vmem [shape: bf16[162,64], index: 3, kind: output, shape index: {}]
  %s4 = sld [smem:[#allocation0]]
  $region22: #{forward.5} parent=0
    _
  %s6 = ssub.s32 1, %s4
  %s7 = scalar_select 0, %s6, %s4
  // Predicated region
  $region2: #{forward.5} parent=0 // pred_check
    _
  $region3: #{forward.5} parent=0 // pred_check_branch
    %9 = sbr.rel (0) target = $region5
  $region4: #{forward.5} parent=0 // pred_region
    _
  $region5: #{forward.5} parent=0 // pred_fallthru
    _
  // Predicated region
  $region6: #{forward.5} parent=0 // pred_check
    _
  $region7: #{forward.5} parent=0 // pred_check_branch
    %11 = sbr.rel (0) target = $region9
  $region8: #{forward.5} parent=0 // pred_region
    _
  $region9: #{forward.5} parent=0 // pred_fallthru
    _
  // Predicated region
  $region10: #{forward.5} parent=0 // pred_check
    _
  $region11: #{forward.5} parent=0 // pred_check_branch
    %13 = sbr.rel (0) target = $region13
  $region12: #{forward.5} parent=0 // pred_region
    _
  $region13: #{forward.5} parent=0 // pred_fallthru
    _
  %v14 = vld [vmem:[%s0] sm:$0xff]
  %v15 = vld [vmem:[%s0 + $0x8] sm:$0xff]
  %v16 = vld [vmem:[%s0 + $0x10] sm:$0xff]
  %v17 = vld [vmem:[%s0 + $0x18] sm:$0xff]
  %v18 = vld [vmem:[%s0 + $0x20] sm:$0xff]
  %v19 = vld [vmem:[%s0 + $0x28] sm:$0xff]
  %v20 = vld [vmem:[%s0 + $0x30] sm:$0xff]
  %v21 = vld [vmem:[%s0 + $0x38] sm:$0xff]
  %v22 = vld [vmem:[%s0 + $0x40] sm:$0xff]
  %v23 = vld [vmem:[%s0 + $0x48] sm:$0xff]
  %v24 = vld [vmem:[%s0 + $0x50] sm:$0xff]
  %v25 = vld [vmem:[%s0 + $0x58] sm:$0xff]
  %v26 = vld [vmem:[%s0 + $0x60] sm:$0xff]
  %v27 = vld [vmem:[%s0 + $0x68] sm:$0xff]
  %v28 = vld [vmem:[%s0 + $0x70] sm:$0xff]
  %v29 = vld [vmem:[%s0 + $0x78] sm:$0xff]
  %v30 = vld [vmem:[%s0 + $0x80] sm:$0xff]
  %v31 = vld [vmem:[%s0 + $0x88] sm:$0xff]
  %v32 = vld [vmem:[%s0 + $0x90] sm:$0xff]
  %v33 = vld [vmem:[%s0 + $0x98] sm:$0xff]
  %v34 = vld [vmem:[%s0 + $0xa0] sm:$0xff]
  %v35 = vld [vmem:[%s0 + $0xa8] sm:$0xff]
  %v36 = vld [vmem:[%s0 + $0xb0] sm:$0xff]
  %v37 = vld [vmem:[%s0 + $0xb8] sm:$0xff]
  %v38 = vld [vmem:[%s0 + $0xc0] sm:$0xff]
  %v39 = vld [vmem:[%s0 + $0xc8] sm:$0xff]
  %v40 = vld [vmem:[%s0 + $0xd0] sm:$0xff]
  %v41 = vld [vmem:[%s0 + $0xd8] sm:$0xff]
  %v42 = vld [vmem:[%s0 + $0xe0] sm:$0xff]
  %v43 = vld [vmem:[%s0 + $0xe8] sm:$0xff]
  %v44 = vld [vmem:[%s0 + $0xf0] sm:$0xff]
  %v45 = vld [vmem:[%s0 + $0xf8] sm:$0xff]
  %v46 = vld [vmem:[%s0 + $0x100] sm:$0xff]
  %v47 = vld [vmem:[%s0 + $0x108] sm:$0xff]
  %v48 = vld [vmem:[%s0 + $0x110] sm:$0xff]
  %v49 = vld [vmem:[%s0 + $0x118] sm:$0xff]
  %v50 = vld [vmem:[%s0 + $0x120] sm:$0xff]
  %v51 = vld [vmem:[%s0 + $0x128] sm:$0xff]
  %v52 = vld [vmem:[%s0 + $0x130] sm:$0xff]
  %v53 = vld [vmem:[%s0 + $0x138] sm:$0xff]
  %v54 = vld [vmem:[%s0 + $0x140] sm:$0x11]
  %v55 = vld [vmem:[%s0 + $0x148] sm:$0x11]
  %v56 = vld [vmem:[%s1] sm:$0xf]
  %v57 = vld [vmem:[%s1 + $0x4] sm:$0xf]
  %v58 = vld [vmem:[%s1 + $0x8] sm:$0xf]
  %v59 = vld [vmem:[%s1 + $0xc] sm:$0xf]
  %v60 = vld [vmem:[%s1 + $0x10] sm:$0xf]
  %v61 = vld [vmem:[%s1 + $0x14] sm:$0xf]
  %v62 = vld [vmem:[%s1 + $0x18] sm:$0xf]
  %v63 = vld [vmem:[%s1 + $0x1c] sm:$0xf]
  %v64 = vld [vmem:[%s1 + $0x20] sm:$0xf]
  %v65 = vld [vmem:[%s1 + $0x24] sm:$0xf]
  %v66 = vld [vmem:[%s1 + $0x28] sm:$0xf]
  %v67 = vld [vmem:[%s1 + $0x2c] sm:$0xf]
  %v68 = vld [vmem:[%s1 + $0x30] sm:$0xf]
  %v69 = vld [vmem:[%s1 + $0x34] sm:$0xf]
  %v70 = vld [vmem:[%s1 + $0x38] sm:$0xf]
  %v71 = vld [vmem:[%s1 + $0x3c] sm:$0xf]
  %v72 = vld [vmem:[%s1 + $0x40] sm:$0xf]
  %v73 = vld [vmem:[%s1 + $0x44] sm:$0xf]
  %v74 = vld [vmem:[%s1 + $0x48] sm:$0xf]
  %v75 = vld [vmem:[%s1 + $0x4c] sm:$0xf]
  %v76 = vld [vmem:[%s1 + $0x50] sm:$0xf]
  %v77 = vld [vmem:[%s1 + $0x54] sm:$0xf]
  %v78 = vld [vmem:[%s1 + $0x58] sm:$0xf]
  %v79 = vld [vmem:[%s1 + $0x5c] sm:$0xf]
  %v80 = vld [vmem:[%s1 + $0x60] sm:$0xf]
  %v81 = vld [vmem:[%s1 + $0x64] sm:$0xf]
  %v82 = vld [vmem:[%s1 + $0x68] sm:$0xf]
  %v83 = vld [vmem:[%s1 + $0x6c] sm:$0xf]
  %v84 = vld [vmem:[%s1 + $0x70] sm:$0xf]
  %v85 = vld [vmem:[%s1 + $0x74] sm:$0xf]
  %v86 = vld [vmem:[%s1 + $0x78] sm:$0xf]
  %v87 = vld [vmem:[%s1 + $0x7c] sm:$0xf]
  %v88 = vld [vmem:[%s1 + $0x80] sm:$0xf]
  %v89 = vld [vmem:[%s1 + $0x84] sm:$0xf]
  %v90 = vld [vmem:[%s1 + $0x88] sm:$0xf]
  %v91 = vld [vmem:[%s1 + $0x8c] sm:$0xf]
  %v92 = vld [vmem:[%s1 + $0x90] sm:$0xf]
  %v93 = vld [vmem:[%s1 + $0x94] sm:$0xf]
  %v94 = vld [vmem:[%s1 + $0x98] sm:$0xf]
  %v95 = vld [vmem:[%s1 + $0x9c] sm:$0xf]
  %v96 = vld [vmem:[%s1 + $0xa0] sm:$0xf]
  %v97 = vld [vmem:[%s1 + $0xa4] sm:$0xf]
  %v98 = vld [vmem:[%s1 + $0xa8] sm:$0xf]
  %v99 = vld [vmem:[%s1 + $0xac] sm:$0xf]
  %v100 = vld [vmem:[%s1 + $0xb0] sm:$0xf]
  %v101 = vld [vmem:[%s1 + $0xb4] sm:$0xf]
  %v102 = vld [vmem:[%s1 + $0xb8] sm:$0xf]
  %v103 = vld [vmem:[%s1 + $0xbc] sm:$0xf]
  %v104 = vld [vmem:[%s1 + $0xc0] sm:$0xf]
  %v105 = vld [vmem:[%s1 + $0xc4] sm:$0xf]
  %v106 = vld [vmem:[%s1 + $0xc8] sm:$0xf]
  %v107 = vld [vmem:[%s1 + $0xcc] sm:$0xf]
  %v108 = vld [vmem:[%s1 + $0xd0] sm:$0xf]
  %v109 = vld [vmem:[%s1 + $0xd4] sm:$0xf]
  %v110 = vld [vmem:[%s1 + $0xd8] sm:$0xf]
  %v111 = vld [vmem:[%s1 + $0xdc] sm:$0xf]
  %v112 = vld [vmem:[%s1 + $0xe0] sm:$0xf]
  %v113 = vld [vmem:[%s1 + $0xe4] sm:$0xf]
  %v114 = vld [vmem:[%s1 + $0xe8] sm:$0xf]
  %v115 = vld [vmem:[%s1 + $0xec] sm:$0xf]
  %v116 = vld [vmem:[%s1 + $0xf0] sm:$0xf]
  %v117 = vld [vmem:[%s1 + $0xf4] sm:$0xf]
  %v118 = vld [vmem:[%s1 + $0xf8] sm:$0xf]
  %v119 = vld [vmem:[%s1 + $0xfc] sm:$0xf]
  %v120 = vld [vmem:[%s2] sm:$0x1]
  %v122 = vperm.slane %v120, 0
  %v166 = vunpack.c.l.b16 %v14
  %v167 = vunpack.c.h.b16 %v14
  %v168 = vunpack.c.l.b16 %v15
  %v169 = vunpack.c.h.b16 %v15
  %v170 = vunpack.c.l.b16 %v16
  %v171 = vunpack.c.h.b16 %v16
  %v172 = vunpack.c.l.b16 %v17
  %v173 = vunpack.c.h.b16 %v17
  %v174 = vunpack.c.l.b16 %v18
  %v175 = vunpack.c.h.b16 %v18
  %v176 = vunpack.c.l.b16 %v19
  %v177 = vunpack.c.h.b16 %v19
  %v178 = vunpack.c.l.b16 %v20
  %v179 = vunpack.c.h.b16 %v20
  %v180 = vunpack.c.l.b16 %v21
  %v181 = vunpack.c.h.b16 %v21
  %v182 = vunpack.c.l.b16 %v22
  %v183 = vunpack.c.h.b16 %v22
  %v184 = vunpack.c.l.b16 %v23
  %v185 = vunpack.c.h.b16 %v23
  %v186 = vunpack.c.l.b16 %v24
  %v187 = vunpack.c.h.b16 %v24
  %v188 = vunpack.c.l.b16 %v25
  %v189 = vunpack.c.h.b16 %v25
  %v190 = vunpack.c.l.b16 %v26
  %v191 = vunpack.c.h.b16 %v26
  %v192 = vunpack.c.l.b16 %v27
  %v193 = vunpack.c.h.b16 %v27
  %v194 = vunpack.c.l.b16 %v28
  %v195 = vunpack.c.h.b16 %v28
  %v196 = vunpack.c.l.b16 %v29
  %v197 = vunpack.c.h.b16 %v29
  %v198 = vunpack.c.l.b16 %v30
  %v199 = vunpack.c.h.b16 %v30
  %v200 = vunpack.c.l.b16 %v31
  %v201 = vunpack.c.h.b16 %v31
  %v202 = vunpack.c.l.b16 %v32
  %v203 = vunpack.c.h.b16 %v32
  %v204 = vunpack.c.l.b16 %v33
  %v205 = vunpack.c.h.b16 %v33
  %v206 = vunpack.c.l.b16 %v34
  %v207 = vunpack.c.h.b16 %v34
  %v208 = vunpack.c.l.b16 %v35
  %v209 = vunpack.c.h.b16 %v35
  %v210 = vunpack.c.l.b16 %v36
  %v211 = vunpack.c.h.b16 %v36
  %v212 = vunpack.c.l.b16 %v37
  %v213 = vunpack.c.h.b16 %v37
  %v214 = vunpack.c.l.b16 %v38
  %v215 = vunpack.c.h.b16 %v38
  %v216 = vunpack.c.l.b16 %v39
  %v217 = vunpack.c.h.b16 %v39
  %v218 = vunpack.c.l.b16 %v40
  %v219 = vunpack.c.h.b16 %v40
  %v220 = vunpack.c.l.b16 %v41
  %v221 = vunpack.c.h.b16 %v41
  %v222 = vunpack.c.l.b16 %v42
  %v223 = vunpack.c.h.b16 %v42
  %v224 = vunpack.c.l.b16 %v43
  %v225 = vunpack.c.h.b16 %v43
  %v226 = vunpack.c.l.b16 %v44
  %v227 = vunpack.c.h.b16 %v44
  %v228 = vunpack.c.l.b16 %v45
  %v229 = vunpack.c.h.b16 %v45
  %v230 = vunpack.c.l.b16 %v46
  %v231 = vunpack.c.h.b16 %v46
  %v232 = vunpack.c.l.b16 %v47
  %v233 = vunpack.c.h.b16 %v47
  %v234 = vunpack.c.l.b16 %v48
  %v235 = vunpack.c.h.b16 %v48
  %v236 = vunpack.c.l.b16 %v49
  %v237 = vunpack.c.h.b16 %v49
  %v238 = vunpack.c.l.b16 %v50
  %v239 = vunpack.c.h.b16 %v50
  %v240 = vunpack.c.l.b16 %v51
  %v241 = vunpack.c.h.b16 %v51
  %v242 = vunpack.c.l.b16 %v52
  %v243 = vunpack.c.h.b16 %v52
  %v244 = vunpack.c.l.b16 %v53
  %v245 = vunpack.c.h.b16 %v53
  %v246 = vunpack.c.l.b16 %v54
  %v247 = vunpack.c.h.b16 %v54
  %v248 = vunpack.c.l.b16 %v55
  %v249 = vunpack.c.h.b16 %v55
  %v250 = vpack.c.b16 %v170, %v166
  %v251 = vpack.c.b16 %v171, %v167
  %v252 = vpack.c.b16 %v172, %v168
  %v253 = vpack.c.b16 %v173, %v169
  %v254 = vpack.c.b16 %v178, %v174
  %v255 = vpack.c.b16 %v179, %v175
  %v256 = vpack.c.b16 %v180, %v176
  %v257 = vpack.c.b16 %v181, %v177
  %v258 = vpack.c.b16 %v186, %v182
  %v259 = vpack.c.b16 %v187, %v183
  %v260 = vpack.c.b16 %v188, %v184
  %v261 = vpack.c.b16 %v189, %v185
  %v262 = vpack.c.b16 %v194, %v190
  %v263 = vpack.c.b16 %v195, %v191
  %v264 = vpack.c.b16 %v196, %v192
  %v265 = vpack.c.b16 %v197, %v193
  %v266 = vpack.c.b16 %v202, %v198
  %v267 = vpack.c.b16 %v203, %v199
  %v268 = vpack.c.b16 %v204, %v200
  %v269 = vpack.c.b16 %v205, %v201
  %v270 = vpack.c.b16 %v210, %v206
  %v271 = vpack.c.b16 %v211, %v207
  %v272 = vpack.c.b16 %v212, %v208
  %v273 = vpack.c.b16 %v213, %v209
  %v274 = vpack.c.b16 %v218, %v214
  %v275 = vpack.c.b16 %v219, %v215
  %v276 = vpack.c.b16 %v220, %v216
  %v277 = vpack.c.b16 %v221, %v217
  %v278 = vpack.c.b16 %v226, %v222
  %v279 = vpack.c.b16 %v227, %v223
  %v280 = vpack.c.b16 %v228, %v224
  %v281 = vpack.c.b16 %v229, %v225
  %v282 = vpack.c.b16 %v234, %v230
  %v283 = vpack.c.b16 %v235, %v231
  %v284 = vpack.c.b16 %v236, %v232
  %v285 = vpack.c.b16 %v237, %v233
  %v286 = vpack.c.b16 %v242, %v238
  %v287 = vpack.c.b16 %v243, %v239
  %v288 = vpack.c.b16 %v244, %v240
  %v289 = vpack.c.b16 %v245, %v241
  %v290 = vpack.c.b16 %v246, %v246
  %v291 = vpack.c.b16 %v247, %v247
  %v292 = vpack.c.b16 %v248, %v248
  %v293 = vpack.c.b16 %v249, %v249
  %v402 = vunpack.c.l.b16 %v56
  %v403 = vunpack.c.l.b16 %v57
  %v404 = vunpack.c.l.b16 %v58
  %v405 = vunpack.c.l.b16 %v59
  %v406 = vunpack.c.l.b16 %v60
  %v407 = vunpack.c.l.b16 %v61
  %v408 = vunpack.c.l.b16 %v62
  %v409 = vunpack.c.l.b16 %v63
  %v410 = vunpack.c.l.b16 %v64
  %v411 = vunpack.c.l.b16 %v65
  %v412 = vunpack.c.l.b16 %v66
  %v413 = vunpack.c.l.b16 %v67
  %v414 = vunpack.c.l.b16 %v68
  %v415 = vunpack.c.l.b16 %v69
  %v416 = vunpack.c.l.b16 %v70
  %v417 = vunpack.c.l.b16 %v71
  %v418 = vunpack.c.l.b16 %v72
  %v419 = vunpack.c.l.b16 %v73
  %v420 = vunpack.c.l.b16 %v74
  %v421 = vunpack.c.l.b16 %v75
  %v422 = vunpack.c.l.b16 %v76
  %v423 = vunpack.c.l.b16 %v77
  %v424 = vunpack.c.l.b16 %v78
  %v425 = vunpack.c.l.b16 %v79
  %v426 = vunpack.c.l.b16 %v80
  %v427 = vunpack.c.l.b16 %v81
  %v428 = vunpack.c.l.b16 %v82
  %v429 = vunpack.c.l.b16 %v83
  %v430 = vunpack.c.l.b16 %v84
  %v431 = vunpack.c.l.b16 %v85
  %v432 = vunpack.c.l.b16 %v86
  %v433 = vunpack.c.l.b16 %v87
  %v434 = vunpack.c.l.b16 %v88
  %v435 = vunpack.c.l.b16 %v89
  %v436 = vunpack.c.l.b16 %v90
  %v437 = vunpack.c.l.b16 %v91
  %v438 = vunpack.c.l.b16 %v92
  %v439 = vunpack.c.l.b16 %v93
  %v440 = vunpack.c.l.b16 %v94
  %v441 = vunpack.c.l.b16 %v95
  %v442 = vunpack.c.l.b16 %v96
  %v443 = vunpack.c.l.b16 %v97
  %v444 = vunpack.c.l.b16 %v98
  %v445 = vunpack.c.l.b16 %v99
  %v446 = vunpack.c.l.b16 %v100
  %v447 = vunpack.c.l.b16 %v101
  %v448 = vunpack.c.l.b16 %v102
  %v449 = vunpack.c.l.b16 %v103
  %v450 = vunpack.c.l.b16 %v104
  %v451 = vunpack.c.l.b16 %v105
  %v452 = vunpack.c.l.b16 %v106
  %v453 = vunpack.c.l.b16 %v107
  %v454 = vunpack.c.l.b16 %v108
  %v455 = vunpack.c.l.b16 %v109
  %v456 = vunpack.c.l.b16 %v110
  %v457 = vunpack.c.l.b16 %v111
  %v458 = vunpack.c.l.b16 %v112
  %v459 = vunpack.c.l.b16 %v113
  %v460 = vunpack.c.l.b16 %v114
  %v461 = vunpack.c.l.b16 %v115
  %v462 = vunpack.c.l.b16 %v116
  %v463 = vunpack.c.l.b16 %v117
  %v464 = vunpack.c.l.b16 %v118
  %v465 = vunpack.c.l.b16 %v119
  %v466 = vpack.c.b16 %v403, %v402
  %v467 = vpack.c.b16 %v405, %v404
  %v468 = vpack.c.b16 %v407, %v406
  %v469 = vpack.c.b16 %v409, %v408
  %v470 = vpack.c.b16 %v411, %v410
  %v471 = vpack.c.b16 %v413, %v412
  %v472 = vpack.c.b16 %v415, %v414
  %v473 = vpack.c.b16 %v417, %v416
  %v474 = vpack.c.b16 %v419, %v418
  %v475 = vpack.c.b16 %v421, %v420
  %v476 = vpack.c.b16 %v423, %v422
  %v477 = vpack.c.b16 %v425, %v424
  %v478 = vpack.c.b16 %v427, %v426
  %v479 = vpack.c.b16 %v429, %v428
  %v480 = vpack.c.b16 %v431, %v430
  %v481 = vpack.c.b16 %v433, %v432
  %v482 = vpack.c.b16 %v435, %v434
  %v483 = vpack.c.b16 %v437, %v436
  %v484 = vpack.c.b16 %v439, %v438
  %v485 = vpack.c.b16 %v441, %v440
  %v486 = vpack.c.b16 %v443, %v442
  %v487 = vpack.c.b16 %v445, %v444
  %v488 = vpack.c.b16 %v447, %v446
  %v489 = vpack.c.b16 %v449, %v448
  %v490 = vpack.c.b16 %v451, %v450
  %v491 = vpack.c.b16 %v453, %v452
  %v492 = vpack.c.b16 %v455, %v454
  %v493 = vpack.c.b16 %v457, %v456
  %v494 = vpack.c.b16 %v459, %v458
  %v495 = vpack.c.b16 %v461, %v460
  %v496 = vpack.c.b16 %v463, %v462
  %v497 = vpack.c.b16 %v465, %v464
  %530 = vmatpush.bf16.msra.mxu0 %v473
  %531 = vmatpush.bf16.msra.mxu0 %v472
  %532 = vmatpush.bf16.msra.mxu0 %v471
  %533 = vmatpush.bf16.msra.mxu0 %v470
  %534 = vmatpush.bf16.msra.mxu0 %v469
  %535 = vmatpush.bf16.msra.mxu0 %v468
  %536 = vmatpush.bf16.msra.mxu0 %v467
  %537 = vmatpush.bf16.msra.mxu0 %v466
  %538 = vmatmul.bf16.gmra.mxu0 %v250
  %v539 = vpop.f32.mrf.mxu0
  %v540 = vadd.f32 %v122, %v539
  %v541 = vpop.f32.mrf.mxu0
  %v542 = vadd.f32 %v122, %v541
  %543 = vmatmul.bf16.gmra.mxu0 %v254
  %v544 = vpop.f32.mrf.mxu0
  %v545 = vadd.f32 %v122, %v544
  %v546 = vpop.f32.mrf.mxu0
  %v547 = vadd.f32 %v122, %v546
  %548 = vmatmul.bf16.gmra.mxu0 %v258
  %v549 = vpop.f32.mrf.mxu0
  %v550 = vadd.f32 %v122, %v549
  %v551 = vpop.f32.mrf.mxu0
  %v552 = vadd.f32 %v122, %v551
  %553 = vmatmul.bf16.gmra.mxu0 %v262
  %v554 = vpop.f32.mrf.mxu0
  %v555 = vadd.f32 %v122, %v554
  %v556 = vpop.f32.mrf.mxu0
  %v557 = vadd.f32 %v122, %v556
  %558 = vmatmul.bf16.gmra.mxu0 %v266
  %v559 = vpop.f32.mrf.mxu0
  %v560 = vadd.f32 %v122, %v559
  %v561 = vpop.f32.mrf.mxu0
  %v562 = vadd.f32 %v122, %v561
  %563 = vmatmul.bf16.gmra.mxu0 %v270
  %v564 = vpop.f32.mrf.mxu0
  %v565 = vadd.f32 %v122, %v564
  %v566 = vpop.f32.mrf.mxu0
  %v567 = vadd.f32 %v122, %v566
  %568 = vmatmul.bf16.gmra.mxu0 %v274
  %v569 = vpop.f32.mrf.mxu0
  %v570 = vadd.f32 %v122, %v569
  %v571 = vpop.f32.mrf.mxu0
  %v572 = vadd.f32 %v122, %v571
  %573 = vmatmul.bf16.gmra.mxu0 %v278
  %v574 = vpop.f32.mrf.mxu0
  %v575 = vadd.f32 %v122, %v574
  %v576 = vpop.f32.mrf.mxu0
  %v577 = vadd.f32 %v122, %v576
  %578 = vmatmul.bf16.gmra.mxu0 %v282
  %v579 = vpop.f32.mrf.mxu0
  %v580 = vadd.f32 %v122, %v579
  %v581 = vpop.f32.mrf.mxu0
  %v582 = vadd.f32 %v122, %v581
  %583 = vmatmul.bf16.gmra.mxu0 %v286
  %v584 = vpop.f32.mrf.mxu0
  %v585 = vadd.f32 %v122, %v584
  %v586 = vpop.f32.mrf.mxu0
  %v587 = vadd.f32 %v122, %v586
  %588 = vmatmul.bf16.gmra.mxu0 %v290
  %v589 = vpop.f32.mrf.mxu0
  %v590 = vadd.f32 %v122, %v589
  %v591 = vpop.f32.mrf.mxu0
  %592 = vdwg.mxu0
  %593 = vmatpush.bf16.msra.mxu0 %v481
  %594 = vmatpush.bf16.msra.mxu0 %v480
  %595 = vmatpush.bf16.msra.mxu0 %v479
  %596 = vmatpush.bf16.msra.mxu0 %v478
  %597 = vmatpush.bf16.msra.mxu0 %v477
  %598 = vmatpush.bf16.msra.mxu0 %v476
  %599 = vmatpush.bf16.msra.mxu0 %v475
  %600 = vmatpush.bf16.msra.mxu0 %v474
  %601 = vmatmul.bf16.gmra.mxu0 %v251
  %v602 = vpop.f32.mrf.mxu0
  %v603 = vadd.f32 %v540, %v602
  %v604 = vpop.f32.mrf.mxu0
  %v605 = vadd.f32 %v542, %v604
  %606 = vmatmul.bf16.gmra.mxu0 %v255
  %v607 = vpop.f32.mrf.mxu0
  %v608 = vadd.f32 %v545, %v607
  %v609 = vpop.f32.mrf.mxu0
  %v610 = vadd.f32 %v547, %v609
  %611 = vmatmul.bf16.gmra.mxu0 %v259
  %v612 = vpop.f32.mrf.mxu0
  %v613 = vadd.f32 %v550, %v612
  %v614 = vpop.f32.mrf.mxu0
  %v615 = vadd.f32 %v552, %v614
  %616 = vmatmul.bf16.gmra.mxu0 %v263
  %v617 = vpop.f32.mrf.mxu0
  %v618 = vadd.f32 %v555, %v617
  %v619 = vpop.f32.mrf.mxu0
  %v620 = vadd.f32 %v557, %v619
  %621 = vmatmul.bf16.gmra.mxu0 %v267
  %v622 = vpop.f32.mrf.mxu0
  %v623 = vadd.f32 %v560, %v622
  %v624 = vpop.f32.mrf.mxu0
  %v625 = vadd.f32 %v562, %v624
  %626 = vmatmul.bf16.gmra.mxu0 %v271
  %v627 = vpop.f32.mrf.mxu0
  %v628 = vadd.f32 %v565, %v627
  %v629 = vpop.f32.mrf.mxu0
  %v630 = vadd.f32 %v567, %v629
  %631 = vmatmul.bf16.gmra.mxu0 %v275
  %v632 = vpop.f32.mrf.mxu0
  %v633 = vadd.f32 %v570, %v632
  %v634 = vpop.f32.mrf.mxu0
  %v635 = vadd.f32 %v572, %v634
  %636 = vmatmul.bf16.gmra.mxu0 %v279
  %v637 = vpop.f32.mrf.mxu0
  %v638 = vadd.f32 %v575, %v637
  %v639 = vpop.f32.mrf.mxu0
  %v640 = vadd.f32 %v577, %v639
  %641 = vmatmul.bf16.gmra.mxu0 %v283
  %v642 = vpop.f32.mrf.mxu0
  %v643 = vadd.f32 %v580, %v642
  %v644 = vpop.f32.mrf.mxu0
  %v645 = vadd.f32 %v582, %v644
  %646 = vmatmul.bf16.gmra.mxu0 %v287
  %v647 = vpop.f32.mrf.mxu0
  %v648 = vadd.f32 %v585, %v647
  %v649 = vpop.f32.mrf.mxu0
  %v650 = vadd.f32 %v587, %v649
  %651 = vmatmul.bf16.gmra.mxu0 %v291
  %v652 = vpop.f32.mrf.mxu0
  %v653 = vadd.f32 %v590, %v652
  %v654 = vpop.f32.mrf.mxu0
  %655 = vdwg.mxu0
  %656 = vmatpush.bf16.msra.mxu0 %v489
  %657 = vmatpush.bf16.msra.mxu0 %v488
  %658 = vmatpush.bf16.msra.mxu0 %v487
  %659 = vmatpush.bf16.msra.mxu0 %v486
  %660 = vmatpush.bf16.msra.mxu0 %v485
  %661 = vmatpush.bf16.msra.mxu0 %v484
  %662 = vmatpush.bf16.msra.mxu0 %v483
  %663 = vmatpush.bf16.msra.mxu0 %v482
  %664 = vmatmul.bf16.gmra.mxu0 %v252
  %v665 = vpop.f32.mrf.mxu0
  %v666 = vadd.f32 %v603, %v665
  %v667 = vpop.f32.mrf.mxu0
  %v668 = vadd.f32 %v605, %v667
  %669 = vmatmul.bf16.gmra.mxu0 %v256
  %v670 = vpop.f32.mrf.mxu0
  %v671 = vadd.f32 %v608, %v670
  %v672 = vpop.f32.mrf.mxu0
  %v673 = vadd.f32 %v610, %v672
  %674 = vmatmul.bf16.gmra.mxu0 %v260
  %v675 = vpop.f32.mrf.mxu0
  %v676 = vadd.f32 %v613, %v675
  %v677 = vpop.f32.mrf.mxu0
  %v678 = vadd.f32 %v615, %v677
  %679 = vmatmul.bf16.gmra.mxu0 %v264
  %v680 = vpop.f32.mrf.mxu0
  %v681 = vadd.f32 %v618, %v680
  %v682 = vpop.f32.mrf.mxu0
  %v683 = vadd.f32 %v620, %v682
  %684 = vmatmul.bf16.gmra.mxu0 %v268
  %v685 = vpop.f32.mrf.mxu0
  %v686 = vadd.f32 %v623, %v685
  %v687 = vpop.f32.mrf.mxu0
  %v688 = vadd.f32 %v625, %v687
  %689 = vmatmul.bf16.gmra.mxu0 %v272
  %v690 = vpop.f32.mrf.mxu0
  %v691 = vadd.f32 %v628, %v690
  %v692 = vpop.f32.mrf.mxu0
  %v693 = vadd.f32 %v630, %v692
  %694 = vmatmul.bf16.gmra.mxu0 %v276
  %v695 = vpop.f32.mrf.mxu0
  %v696 = vadd.f32 %v633, %v695
  %v697 = vpop.f32.mrf.mxu0
  %v698 = vadd.f32 %v635, %v697
  %699 = vmatmul.bf16.gmra.mxu0 %v280
  %v700 = vpop.f32.mrf.mxu0
  %v701 = vadd.f32 %v638, %v700
  %v702 = vpop.f32.mrf.mxu0
  %v703 = vadd.f32 %v640, %v702
  %704 = vmatmul.bf16.gmra.mxu0 %v284
  %v705 = vpop.f32.mrf.mxu0
  %v706 = vadd.f32 %v643, %v705
  %v707 = vpop.f32.mrf.mxu0
  %v708 = vadd.f32 %v645, %v707
  %709 = vmatmul.bf16.gmra.mxu0 %v288
  %v710 = vpop.f32.mrf.mxu0
  %v711 = vadd.f32 %v648, %v710
  %v712 = vpop.f32.mrf.mxu0
  %v713 = vadd.f32 %v650, %v712
  %714 = vmatmul.bf16.gmra.mxu0 %v292
  %v715 = vpop.f32.mrf.mxu0
  %v716 = vadd.f32 %v653, %v715
  %v717 = vpop.f32.mrf.mxu0
  %718 = vdwg.mxu0
  %719 = vmatpush.bf16.msra.mxu0 %v497
  %720 = vmatpush.bf16.msra.mxu0 %v496
  %721 = vmatpush.bf16.msra.mxu0 %v495
  %722 = vmatpush.bf16.msra.mxu0 %v494
  %723 = vmatpush.bf16.msra.mxu0 %v493
  %724 = vmatpush.bf16.msra.mxu0 %v492
  %725 = vmatpush.bf16.msra.mxu0 %v491
  %726 = vmatpush.bf16.msra.mxu0 %v490
  %727 = vmatmul.bf16.gmra.mxu0 %v253
  %v728 = vpop.f32.mrf.mxu0
  %v729 = vadd.f32 %v666, %v728
  %v730 = vpop.f32.mrf.mxu0
  %v731 = vadd.f32 %v668, %v730
  %732 = vmatmul.bf16.gmra.mxu0 %v257
  %v733 = vpop.f32.mrf.mxu0
  %v734 = vadd.f32 %v671, %v733
  %v735 = vpop.f32.mrf.mxu0
  %v736 = vadd.f32 %v673, %v735
  %737 = vmatmul.bf16.gmra.mxu0 %v261
  %v738 = vpop.f32.mrf.mxu0
  %v739 = vadd.f32 %v676, %v738
  %v740 = vpop.f32.mrf.mxu0
  %v741 = vadd.f32 %v678, %v740
  %742 = vmatmul.bf16.gmra.mxu0 %v265
  %v743 = vpop.f32.mrf.mxu0
  %v744 = vadd.f32 %v681, %v743
  %v745 = vpop.f32.mrf.mxu0
  %v746 = vadd.f32 %v683, %v745
  %747 = vmatmul.bf16.gmra.mxu0 %v269
  %v748 = vpop.f32.mrf.mxu0
  %v749 = vadd.f32 %v686, %v748
  %v750 = vpop.f32.mrf.mxu0
  %v751 = vadd.f32 %v688, %v750
  %752 = vmatmul.bf16.gmra.mxu0 %v273
  %v753 = vpop.f32.mrf.mxu0
  %v754 = vadd.f32 %v691, %v753
  %v755 = vpop.f32.mrf.mxu0
  %v756 = vadd.f32 %v693, %v755
  %757 = vmatmul.bf16.gmra.mxu0 %v277
  %v758 = vpop.f32.mrf.mxu0
  %v759 = vadd.f32 %v696, %v758
  %v760 = vpop.f32.mrf.mxu0
  %v761 = vadd.f32 %v698, %v760
  %762 = vmatmul.bf16.gmra.mxu0 %v281
  %v763 = vpop.f32.mrf.mxu0
  %v764 = vadd.f32 %v701, %v763
  %v765 = vpop.f32.mrf.mxu0
  %v766 = vadd.f32 %v703, %v765
  %767 = vmatmul.bf16.gmra.mxu0 %v285
  %v768 = vpop.f32.mrf.mxu0
  %v769 = vadd.f32 %v706, %v768
  %v770 = vpop.f32.mrf.mxu0
  %v771 = vadd.f32 %v708, %v770
  %772 = vmatmul.bf16.gmra.mxu0 %v289
  %v773 = vpop.f32.mrf.mxu0
  %v774 = vadd.f32 %v711, %v773
  %v775 = vpop.f32.mrf.mxu0
  %v776 = vadd.f32 %v713, %v775
  %777 = vmatmul.bf16.gmra.mxu0 %v293
  %v778 = vpop.f32.mrf.mxu0
  %v779 = vadd.f32 %v716, %v778
  %v780 = vpop.f32.mrf.mxu0
  %781 = vdwg.mxu0
  %v782 = vmax.f32 %v729, 0.0
  %v783 = vmax.f32 %v731, 0.0
  %v784 = vmax.f32 %v734, 0.0
  %v785 = vmax.f32 %v736, 0.0
  %v786 = vmax.f32 %v739, 0.0
  %v787 = vmax.f32 %v741, 0.0
  %v788 = vmax.f32 %v744, 0.0
  %v789 = vmax.f32 %v746, 0.0
  %v790 = vmax.f32 %v749, 0.0
  %v791 = vmax.f32 %v751, 0.0
  %v792 = vmax.f32 %v754, 0.0
  %v793 = vmax.f32 %v756, 0.0
  %v794 = vmax.f32 %v759, 0.0
  %v795 = vmax.f32 %v761, 0.0
  %v796 = vmax.f32 %v764, 0.0
  %v797 = vmax.f32 %v766, 0.0
  %v798 = vmax.f32 %v769, 0.0
  %v799 = vmax.f32 %v771, 0.0
  %v800 = vmax.f32 %v774, 0.0
  %v801 = vmax.f32 %v776, 0.0
  %v802 = vmax.f32 %v779, 0.0
  %v803 = vpack.c.bf16 %v782, %v782
  %v804 = vpack.c.bf16 %v783, %v783
  %v805 = vpack.c.bf16 %v784, %v784
  %v806 = vpack.c.bf16 %v785, %v785
  %v807 = vpack.c.bf16 %v786, %v786
  %v808 = vpack.c.bf16 %v787, %v787
  %v809 = vpack.c.bf16 %v788, %v788
  %v810 = vpack.c.bf16 %v789, %v789
  %v811 = vpack.c.bf16 %v790, %v790
  %v812 = vpack.c.bf16 %v791, %v791
  %v813 = vpack.c.bf16 %v792, %v792
  %v814 = vpack.c.bf16 %v793, %v793
  %v815 = vpack.c.bf16 %v794, %v794
  %v816 = vpack.c.bf16 %v795, %v795
  %v817 = vpack.c.bf16 %v796, %v796
  %v818 = vpack.c.bf16 %v797, %v797
  %v819 = vpack.c.bf16 %v798, %v798
  %v820 = vpack.c.bf16 %v799, %v799
  %v821 = vpack.c.bf16 %v800, %v800
  %v822 = vpack.c.bf16 %v801, %v801
  %v823 = vpack.c.bf16 %v802, %v802
  %vm824 = vcmask 519168
  %825 = vst.msk [vmem:[%s3] sm:$0xf] %vm824, %v803
  %826 = vst.msk [vmem:[%s3 + $0x4] sm:$0xf] %vm824, %v804
  %827 = vst.msk [vmem:[%s3 + $0x8] sm:$0xf] %vm824, %v805
  %828 = vst.msk [vmem:[%s3 + $0xc] sm:$0xf] %vm824, %v806
  %829 = vst.msk [vmem:[%s3 + $0x10] sm:$0xf] %vm824, %v807
  %830 = vst.msk [vmem:[%s3 + $0x14] sm:$0xf] %vm824, %v808
  %831 = vst.msk [vmem:[%s3 + $0x18] sm:$0xf] %vm824, %v809
  %832 = vst.msk [vmem:[%s3 + $0x1c] sm:$0xf] %vm824, %v810
  %833 = vst.msk [vmem:[%s3 + $0x20] sm:$0xf] %vm824, %v811
  %834 = vst.msk [vmem:[%s3 + $0x24] sm:$0xf] %vm824, %v812
  %835 = vst.msk [vmem:[%s3 + $0x28] sm:$0xf] %vm824, %v813
  %836 = vst.msk [vmem:[%s3 + $0x2c] sm:$0xf] %vm824, %v814
  %837 = vst.msk [vmem:[%s3 + $0x30] sm:$0xf] %vm824, %v815
  %838 = vst.msk [vmem:[%s3 + $0x34] sm:$0xf] %vm824, %v816
  %839 = vst.msk [vmem:[%s3 + $0x38] sm:$0xf] %vm824, %v817
  %840 = vst.msk [vmem:[%s3 + $0x3c] sm:$0xf] %vm824, %v818
  %841 = vst.msk [vmem:[%s3 + $0x40] sm:$0xf] %vm824, %v819
  %842 = vst.msk [vmem:[%s3 + $0x44] sm:$0xf] %vm824, %v820
  %843 = vst.msk [vmem:[%s3 + $0x48] sm:$0xf] %vm824, %v821
  %844 = vst.msk [vmem:[%s3 + $0x4c] sm:$0xf] %vm824, %v822
  %vm845 = vcmask 516096
  %846 = vst.msk [vmem:[%s3 + $0x50] sm:$0x1] %vm845, %v823
  // Predicated region
  $region14: #{forward.5} parent=0 // pred_check
    _
  $region15: #{forward.5} parent=0 // pred_check_branch
    %848 = sbr.rel (0) target = $region17
  $region16: #{forward.5} parent=0 // pred_region
    _
  $region17: #{forward.5} parent=0 // pred_fallthru
    _
  // Predicated region
  $region18: #{forward.5} parent=0 // pred_check
    _
  $region19: #{forward.5} parent=0 // pred_check_branch
    %850 = sbr.rel (0) target = $region21
  $region20: #{forward.5} parent=0 // pred_region
    _
  $region21: #{forward.5} parent=0 // pred_fallthru
    _

// kernel: forward.6
$region0: #{forward.6}
  #allocation0 [shape = 'u32[]', space=smem, size = 0x4, offset = 0x4, fixed_abs, tag = 'smem constant byte address 0x4 - core index']
  #allocation1 [shape = 'u32[72,128]{1,0:T(1,128)}', space=vmem, size = 0x9000, scoped, tag = 'internal scratch']
  %s0 = inlined_call_operand.vmem [shape: bf16[98,576], index: 0, kind: input, shape index: {}]
  %s1 = inlined_call_operand.vmem [shape: bf16[576,64], index: 1, kind: input, shape index: {}]
  %s2 = inlined_call_operand.vmem [shape: f32[1,64], index: 2, kind: input, shape index: {}]
  %s3 = inlined_call_operand.vmem [shape: bf16[98,64], index: 3, kind: output, shape index: {}]
  %s4 = sld [smem:[#allocation0]]
  $region22: #{forward.6} parent=0
    _
  %s6 = ssub.s32 1, %s4
  %s7 = scalar_select 0, %s6, %s4
  // Predicated region
  $region2: #{forward.6} parent=0 // pred_check
    _
  $region3: #{forward.6} parent=0 // pred_check_branch
    %9 = sbr.rel (0) target = $region5
  $region4: #{forward.6} parent=0 // pred_region
    _
  $region5: #{forward.6} parent=0 // pred_fallthru
    _
  // Predicated region
  $region6: #{forward.6} parent=0 // pred_check
    _
  $region7: #{forward.6} parent=0 // pred_check_branch
    %11 = sbr.rel (0) target = $region9
  $region8: #{forward.6} parent=0 // pred_region
    _
  $region9: #{forward.6} parent=0 // pred_fallthru
    _
  // Predicated region
  $region10: #{forward.6} parent=0 // pred_check
    _
  $region11: #{forward.6} parent=0 // pred_check_branch
    %13 = sbr.rel (0) target = $region13
  $region12: #{forward.6} parent=0 // pred_region
    _
  $region13: #{forward.6} parent=0 // pred_fallthru
    _
  %v15 = vld [vmem:[%s0] sm:$0xff]
  %v16 = vld [vmem:[%s0 + $0x8] sm:$0xff]
  %v17 = vld [vmem:[%s0 + $0x10] sm:$0xf]
  %v18 = vld [vmem:[%s0 + $0x14] sm:$0xff]
  %v19 = vld [vmem:[%s0 + $0x1c] sm:$0xff]
  %v20 = vld [vmem:[%s0 + $0x24] sm:$0xf]
  %v21 = vld [vmem:[%s0 + $0x28] sm:$0xff]
  %v22 = vld [vmem:[%s0 + $0x30] sm:$0xff]
  %v23 = vld [vmem:[%s0 + $0x38] sm:$0xf]
  %v24 = vld [vmem:[%s0 + $0x3c] sm:$0xff]
  %v25 = vld [vmem:[%s0 + $0x44] sm:$0xff]
  %v26 = vld [vmem:[%s0 + $0x4c] sm:$0xf]
  %v27 = vld [vmem:[%s0 + $0x50] sm:$0xff]
  %v28 = vld [vmem:[%s0 + $0x58] sm:$0xff]
  %v29 = vld [vmem:[%s0 + $0x60] sm:$0xf]
  %v30 = vld [vmem:[%s0 + $0x64] sm:$0xff]
  %v31 = vld [vmem:[%s0 + $0x6c] sm:$0xff]
  %v32 = vld [vmem:[%s0 + $0x74] sm:$0xf]
  %v33 = vld [vmem:[%s0 + $0x78] sm:$0xff]
  %v34 = vld [vmem:[%s0 + $0x80] sm:$0xff]
  %v35 = vld [vmem:[%s0 + $0x88] sm:$0xf]
  %v36 = vld [vmem:[%s0 + $0x8c] sm:$0xff]
  %v37 = vld [vmem:[%s0 + $0x94] sm:$0xff]
  %v38 = vld [vmem:[%s0 + $0x9c] sm:$0xf]
  %v39 = vld [vmem:[%s0 + $0xa0] sm:$0xff]
  %v40 = vld [vmem:[%s0 + $0xa8] sm:$0xff]
  %v41 = vld [vmem:[%s0 + $0xb0] sm:$0xf]
  %v42 = vld [vmem:[%s0 + $0xb4] sm:$0xff]
  %v43 = vld [vmem:[%s0 + $0xbc] sm:$0xff]
  %v44 = vld [vmem:[%s0 + $0xc4] sm:$0xf]
  %v45 = vld [vmem:[%s0 + $0xc8] sm:$0xff]
  %v46 = vld [vmem:[%s0 + $0xd0] sm:$0xff]
  %v47 = vld [vmem:[%s0 + $0xd8] sm:$0xf]
  %v48 = vld [vmem:[%s0 + $0xdc] sm:$0xff]
  %v49 = vld [vmem:[%s0 + $0xe4] sm:$0xff]
  %v50 = vld [vmem:[%s0 + $0xec] sm:$0xf]
  %v51 = vld [vmem:[%s0 + $0xf0] sm:$0x11]
  %v52 = vld [vmem:[%s0 + $0xf8] sm:$0x11]
  %v53 = vld [vmem:[%s0 + $0x100] sm:$0x1]
  %v54 = vld [vmem:[%s1] sm:$0xf]
  %v55 = vld [vmem:[%s1 + $0x4] sm:$0xf]
  %v56 = vld [vmem:[%s1 + $0x8] sm:$0xf]
  %v57 = vld [vmem:[%s1 + $0xc] sm:$0xf]
  %v58 = vld [vmem:[%s1 + $0x10] sm:$0xf]
  %v59 = vld [vmem:[%s1 + $0x14] sm:$0xf]
  %v60 = vld [vmem:[%s1 + $0x18] sm:$0xf]
  %v61 = vld [vmem:[%s1 + $0x1c] sm:$0xf]
  %v62 = vld [vmem:[%s1 + $0x20] sm:$0xf]
  %v63 = vld [vmem:[%s1 + $0x24] sm:$0xf]
  %v64 = vld [vmem:[%s1 + $0x28] sm:$0xf]
  %v65 = vld [vmem:[%s1 + $0x2c] sm:$0xf]
  %v66 = vld [vmem:[%s1 + $0x30] sm:$0xf]
  %v67 = vld [vmem:[%s1 + $0x34] sm:$0xf]
  %v68 = vld [vmem:[%s1 + $0x38] sm:$0xf]
  %v69 = vld [vmem:[%s1 + $0x3c] sm:$0xf]
  %v70 = vld [vmem:[%s1 + $0x40] sm:$0xf]
  %v71 = vld [vmem:[%s1 + $0x44] sm:$0xf]
  %v72 = vld [vmem:[%s1 + $0x48] sm:$0xf]
  %v73 = vld [vmem:[%s1 + $0x4c] sm:$0xf]
  %v74 = vld [vmem:[%s1 + $0x50] sm:$0xf]
  %v75 = vld [vmem:[%s1 + $0x54] sm:$0xf]
  %v76 = vld [vmem:[%s1 + $0x58] sm:$0xf]
  %v77 = vld [vmem:[%s1 + $0x5c] sm:$0xf]
  %v78 = vld [vmem:[%s1 + $0x60] sm:$0xf]
  %v79 = vld [vmem:[%s1 + $0x64] sm:$0xf]
  %v80 = vld [vmem:[%s1 + $0x68] sm:$0xf]
  %v81 = vld [vmem:[%s1 + $0x6c] sm:$0xf]
  %v82 = vld [vmem:[%s1 + $0x70] sm:$0xf]
  %v83 = vld [vmem:[%s1 + $0x74] sm:$0xf]
  %v84 = vld [vmem:[%s1 + $0x78] sm:$0xf]
  %v85 = vld [vmem:[%s1 + $0x7c] sm:$0xf]
  %v86 = vld [vmem:[%s1 + $0x80] sm:$0xf]
  %v87 = vld [vmem:[%s1 + $0x84] sm:$0xf]
  %v88 = vld [vmem:[%s1 + $0x88] sm:$0xf]
  %v89 = vld [vmem:[%s1 + $0x8c] sm:$0xf]
  %v90 = vld [vmem:[%s1 + $0x90] sm:$0xf]
  %v91 = vld [vmem:[%s1 + $0x94] sm:$0xf]
  %v92 = vld [vmem:[%s1 + $0x98] sm:$0xf]
  %v93 = vld [vmem:[%s1 + $0x9c] sm:$0xf]
  %v94 = vld [vmem:[%s1 + $0xa0] sm:$0xf]
  %v95 = vld [vmem:[%s1 + $0xa4] sm:$0xf]
  %v96 = vld [vmem:[%s1 + $0xa8] sm:$0xf]
  %v97 = vld [vmem:[%s1 + $0xac] sm:$0xf]
  %v98 = vld [vmem:[%s1 + $0xb0] sm:$0xf]
  %v99 = vld [vmem:[%s1 + $0xb4] sm:$0xf]
  %v100 = vld [vmem:[%s1 + $0xb8] sm:$0xf]
  %v101 = vld [vmem:[%s1 + $0xbc] sm:$0xf]
  %v102 = vld [vmem:[%s1 + $0xc0] sm:$0xf]
  %v103 = vld [vmem:[%s1 + $0xc4] sm:$0xf]
  %v104 = vld [vmem:[%s1 + $0xc8] sm:$0xf]
  %v105 = vld [vmem:[%s1 + $0xcc] sm:$0xf]
  %v106 = vld [vmem:[%s1 + $0xd0] sm:$0xf]
  %v107 = vld [vmem:[%s1 + $0xd4] sm:$0xf]
  %v108 = vld [vmem:[%s1 + $0xd8] sm:$0xf]
  %v109 = vld [vmem:[%s1 + $0xdc] sm:$0xf]
  %v110 = vld [vmem:[%s1 + $0xe0] sm:$0xf]
  %v111 = vld [vmem:[%s1 + $0xe4] sm:$0xf]
  %v112 = vld [vmem:[%s1 + $0xe8] sm:$0xf]
  %v113 = vld [vmem:[%s1 + $0xec] sm:$0xf]
  %v114 = vld [vmem:[%s1 + $0xf0] sm:$0xf]
  %v115 = vld [vmem:[%s1 + $0xf4] sm:$0xf]
  %v116 = vld [vmem:[%s1 + $0xf8] sm:$0xf]
  %v117 = vld [vmem:[%s1 + $0xfc] sm:$0xf]
  %v118 = vld [vmem:[%s1 + $0x100] sm:$0xf]
  %v119 = vld [vmem:[%s1 + $0x104] sm:$0xf]
  %v120 = vld [vmem:[%s1 + $0x108] sm:$0xf]
  %v121 = vld [vmem:[%s1 + $0x10c] sm:$0xf]
  %v122 = vld [vmem:[%s1 + $0x110] sm:$0xf]
  %v123 = vld [vmem:[%s1 + $0x114] sm:$0xf]
  %v124 = vld [vmem:[%s1 + $0x118] sm:$0xf]
  %v125 = vld [vmem:[%s1 + $0x11c] sm:$0xf]
  %v126 = vld [vmem:[%s2] sm:$0x1]
  %v128 = vperm.slane %v126, 0
  %v169 = vunpack.c.l.b16 %v15
  %v170 = vunpack.c.h.b16 %v15
  %v171 = vunpack.c.l.b16 %v16
  %v172 = vunpack.c.h.b16 %v16
  %v173 = vunpack.c.l.b16 %v17
  %v174 = vunpack.c.l.b16 %v18
  %v175 = vunpack.c.h.b16 %v18
  %v176 = vunpack.c.l.b16 %v19
  %v177 = vunpack.c.h.b16 %v19
  %v178 = vunpack.c.l.b16 %v20
  %v179 = vunpack.c.l.b16 %v21
  %v180 = vunpack.c.h.b16 %v21
  %v181 = vunpack.c.l.b16 %v22
  %v182 = vunpack.c.h.b16 %v22
  %v183 = vunpack.c.l.b16 %v23
  %v184 = vunpack.c.l.b16 %v24
  %v185 = vunpack.c.h.b16 %v24
  %v186 = vunpack.c.l.b16 %v25
  %v187 = vunpack.c.h.b16 %v25
  %v188 = vunpack.c.l.b16 %v26
  %v189 = vunpack.c.l.b16 %v27
  %v190 = vunpack.c.h.b16 %v27
  %v191 = vunpack.c.l.b16 %v28
  %v192 = vunpack.c.h.b16 %v28
  %v193 = vunpack.c.l.b16 %v29
  %v194 = vunpack.c.l.b16 %v30
  %v195 = vunpack.c.h.b16 %v30
  %v196 = vunpack.c.l.b16 %v31
  %v197 = vunpack.c.h.b16 %v31
  %v198 = vunpack.c.l.b16 %v32
  %v199 = vunpack.c.l.b16 %v33
  %v200 = vunpack.c.h.b16 %v33
  %v201 = vunpack.c.l.b16 %v34
  %v202 = vunpack.c.h.b16 %v34
  %v203 = vunpack.c.l.b16 %v35
  %v204 = vunpack.c.l.b16 %v36
  %v205 = vunpack.c.h.b16 %v36
  %v206 = vunpack.c.l.b16 %v37
  %v207 = vunpack.c.h.b16 %v37
  %v208 = vunpack.c.l.b16 %v38
  %v209 = vunpack.c.l.b16 %v39
  %v210 = vunpack.c.h.b16 %v39
  %v211 = vunpack.c.l.b16 %v40
  %v212 = vunpack.c.h.b16 %v40
  %v213 = vunpack.c.l.b16 %v41
  %v214 = vunpack.c.l.b16 %v42
  %v215 = vunpack.c.h.b16 %v42
  %v216 = vunpack.c.l.b16 %v43
  %v217 = vunpack.c.h.b16 %v43
  %v218 = vunpack.c.l.b16 %v44
  %v219 = vunpack.c.l.b16 %v45
  %v220 = vunpack.c.h.b16 %v45
  %v221 = vunpack.c.l.b16 %v46
  %v222 = vunpack.c.h.b16 %v46
  %v223 = vunpack.c.l.b16 %v47
  %v224 = vunpack.c.l.b16 %v48
  %v225 = vunpack.c.h.b16 %v48
  %v226 = vunpack.c.l.b16 %v49
  %v227 = vunpack.c.h.b16 %v49
  %v228 = vunpack.c.l.b16 %v50
  %v229 = vunpack.c.l.b16 %v51
  %v230 = vunpack.c.h.b16 %v51
  %v231 = vunpack.c.l.b16 %v52
  %v232 = vunpack.c.h.b16 %v52
  %v233 = vunpack.c.l.b16 %v53
  %v234 = vpack.c.b16 %v174, %v169
  %v235 = vpack.c.b16 %v175, %v170
  %v236 = vpack.c.b16 %v176, %v171
  %v237 = vpack.c.b16 %v177, %v172
  %v238 = vpack.c.b16 %v178, %v173
  %v239 = vpack.c.b16 %v184, %v179
  %v240 = vpack.c.b16 %v185, %v180
  %v241 = vpack.c.b16 %v186, %v181
  %v242 = vpack.c.b16 %v187, %v182
  %v243 = vpack.c.b16 %v188, %v183
  %v244 = vpack.c.b16 %v194, %v189
  %v245 = vpack.c.b16 %v195, %v190
  %v246 = vpack.c.b16 %v196, %v191
  %v247 = vpack.c.b16 %v197, %v192
  %v248 = vpack.c.b16 %v198, %v193
  %v249 = vpack.c.b16 %v204, %v199
  %v250 = vpack.c.b16 %v205, %v200
  %v251 = vpack.c.b16 %v206, %v201
  %v252 = vpack.c.b16 %v207, %v202
  %v253 = vpack.c.b16 %v208, %v203
  %v254 = vpack.c.b16 %v214, %v209
  %v255 = vpack.c.b16 %v215, %v210
  %v256 = vpack.c.b16 %v216, %v211
  %v257 = vpack.c.b16 %v217, %v212
  %v258 = vpack.c.b16 %v218, %v213
  %v259 = vpack.c.b16 %v224, %v219
  %v260 = vpack.c.b16 %v225, %v220
  %v261 = vpack.c.b16 %v226, %v221
  %v262 = vpack.c.b16 %v227, %v222
  %v263 = vpack.c.b16 %v228, %v223
  %v264 = vpack.c.b16 %v229, %v229
  %v265 = vpack.c.b16 %v230, %v230
  %v266 = vpack.c.b16 %v231, %v231
  %v267 = vpack.c.b16 %v232, %v232
  %v268 = vpack.c.b16 %v233, %v233
  %v369 = vunpack.c.l.b16 %v54
  %v370 = vunpack.c.l.b16 %v55
  %v371 = vunpack.c.l.b16 %v56
  %v372 = vunpack.c.l.b16 %v57
  %v373 = vunpack.c.l.b16 %v58
  %v374 = vunpack.c.l.b16 %v59
  %v375 = vunpack.c.l.b16 %v60
  %v376 = vunpack.c.l.b16 %v61
  %v377 = vunpack.c.l.b16 %v62
  %v378 = vunpack.c.l.b16 %v63
  %v379 = vunpack.c.l.b16 %v64
  %v380 = vunpack.c.l.b16 %v65
  %v381 = vunpack.c.l.b16 %v66
  %v382 = vunpack.c.l.b16 %v67
  %v383 = vunpack.c.l.b16 %v68
  %v384 = vunpack.c.l.b16 %v69
  %v385 = vunpack.c.l.b16 %v70
  %v386 = vunpack.c.l.b16 %v71
  %v387 = vunpack.c.l.b16 %v72
  %v388 = vunpack.c.l.b16 %v73
  %v389 = vunpack.c.l.b16 %v74
  %v390 = vunpack.c.l.b16 %v75
  %v391 = vunpack.c.l.b16 %v76
  %v392 = vunpack.c.l.b16 %v77
  %v393 = vunpack.c.l.b16 %v78
  %v394 = vunpack.c.l.b16 %v79
  %v395 = vunpack.c.l.b16 %v80
  %v396 = vunpack.c.l.b16 %v81
  %v397 = vunpack.c.l.b16 %v82
  %v398 = vunpack.c.l.b16 %v83
  %v399 = vunpack.c.l.b16 %v84
  %v400 = vunpack.c.l.b16 %v85
  %v401 = vunpack.c.l.b16 %v86
  %v402 = vunpack.c.l.b16 %v87
  %v403 = vunpack.c.l.b16 %v88
  %v404 = vunpack.c.l.b16 %v89
  %v405 = vunpack.c.l.b16 %v90
  %v406 = vunpack.c.l.b16 %v91
  %v407 = vunpack.c.l.b16 %v92
  %v408 = vunpack.c.l.b16 %v93
  %v409 = vunpack.c.l.b16 %v94
  %v410 = vunpack.c.l.b16 %v95
  %v411 = vunpack.c.l.b16 %v96
  %v412 = vunpack.c.l.b16 %v97
  %v413 = vunpack.c.l.b16 %v98
  %v414 = vunpack.c.l.b16 %v99
  %v415 = vunpack.c.l.b16 %v100
  %v416 = vunpack.c.l.b16 %v101
  %v417 = vunpack.c.l.b16 %v102
  %v418 = vunpack.c.l.b16 %v103
  %v419 = vunpack.c.l.b16 %v104
  %v420 = vunpack.c.l.b16 %v105
  %v421 = vunpack.c.l.b16 %v106
  %v422 = vunpack.c.l.b16 %v107
  %v423 = vunpack.c.l.b16 %v108
  %v424 = vunpack.c.l.b16 %v109
  %v425 = vunpack.c.l.b16 %v110
  %v426 = vunpack.c.l.b16 %v111
  %v427 = vunpack.c.l.b16 %v112
  %v428 = vunpack.c.l.b16 %v113
  %v429 = vunpack.c.l.b16 %v114
  %v430 = vunpack.c.l.b16 %v115
  %v431 = vunpack.c.l.b16 %v116
  %v432 = vunpack.c.l.b16 %v117
  %v433 = vunpack.c.l.b16 %v118
  %v434 = vunpack.c.l.b16 %v119
  %v435 = vunpack.c.l.b16 %v120
  %v436 = vunpack.c.l.b16 %v121
  %v437 = vunpack.c.l.b16 %v122
  %v438 = vunpack.c.l.b16 %v123
  %v439 = vunpack.c.l.b16 %v124
  %v440 = vunpack.c.l.b16 %v125
  %v441 = vpack.c.b16 %v370, %v369
  %v442 = vpack.c.b16 %v372, %v371
  %v443 = vpack.c.b16 %v374, %v373
  %v444 = vpack.c.b16 %v376, %v375
  %v445 = vpack.c.b16 %v378, %v377
  %v446 = vpack.c.b16 %v380, %v379
  %v447 = vpack.c.b16 %v382, %v381
  %v448 = vpack.c.b16 %v384, %v383
  %v449 = vpack.c.b16 %v386, %v385
  %v450 = vpack.c.b16 %v388, %v387
  %v451 = vpack.c.b16 %v390, %v389
  %v452 = vpack.c.b16 %v392, %v391
  %v453 = vpack.c.b16 %v394, %v393
  %v454 = vpack.c.b16 %v396, %v395
  %v455 = vpack.c.b16 %v398, %v397
  %v456 = vpack.c.b16 %v400, %v399
  %v457 = vpack.c.b16 %v402, %v401
  %v458 = vpack.c.b16 %v404, %v403
  %v459 = vpack.c.b16 %v406, %v405
  %v460 = vpack.c.b16 %v408, %v407
  %v461 = vpack.c.b16 %v410, %v409
  %v462 = vpack.c.b16 %v412, %v411
  %v463 = vpack.c.b16 %v414, %v413
  %v464 = vpack.c.b16 %v416, %v415
  %v465 = vpack.c.b16 %v418, %v417
  %v466 = vpack.c.b16 %v420, %v419
  %v467 = vpack.c.b16 %v422, %v421
  %v468 = vpack.c.b16 %v424, %v423
  %v469 = vpack.c.b16 %v426, %v425
  %v470 = vpack.c.b16 %v428, %v427
  %v471 = vpack.c.b16 %v430, %v429
  %v472 = vpack.c.b16 %v432, %v431
  %v473 = vpack.c.b16 %v434, %v433
  %v474 = vpack.c.b16 %v436, %v435
  %v475 = vpack.c.b16 %v438, %v437
  %v476 = vpack.c.b16 %v440, %v439
  %vm513 = vcmask 523264
  %v515 = vsel %vm513, %v238, 0
  %v518 = vsel %vm513, %v243, 0
  %v521 = vsel %vm513, %v248, 0
  %v524 = vsel %vm513, %v253, 0
  %v527 = vsel %vm513, %v258, 0
  %v530 = vsel %vm513, %v263, 0
  %v533 = vsel %vm513, %v268, 0
  %535 = vmatpush.bf16.msra.mxu0 %v448
  %536 = vmatpush.bf16.msra.mxu0 %v447
  %537 = vmatpush.bf16.msra.mxu0 %v446
  %538 = vmatpush.bf16.msra.mxu0 %v445
  %539 = vmatpush.bf16.msra.mxu0 %v444
  %540 = vmatpush.bf16.msra.mxu0 %v443
  %541 = vmatpush.bf16.msra.mxu0 %v442
  %542 = vmatpush.bf16.msra.mxu0 %v441
  %543 = vmatmul.bf16.gmra.mxu0 %v234
  %v544 = vpop.f32.mrf.mxu0
  %v545 = vadd.f32 %v128, %v544
  %v546 = vpop.f32.mrf.mxu0
  %v547 = vadd.f32 %v128, %v546
  %548 = vmatmul.bf16.gmra.mxu0 %v239
  %v549 = vpop.f32.mrf.mxu0
  %v550 = vadd.f32 %v128, %v549
  %v551 = vpop.f32.mrf.mxu0
  %v552 = vadd.f32 %v128, %v551
  %553 = vmatmul.bf16.gmra.mxu0 %v244
  %v554 = vpop.f32.mrf.mxu0
  %v555 = vadd.f32 %v128, %v554
  %v556 = vpop.f32.mrf.mxu0
  %v557 = vadd.f32 %v128, %v556
  %558 = vmatmul.bf16.gmra.mxu0 %v249
  %v559 = vpop.f32.mrf.mxu0
  %v560 = vadd.f32 %v128, %v559
  %v561 = vpop.f32.mrf.mxu0
  %v562 = vadd.f32 %v128, %v561
  %563 = vmatmul.bf16.gmra.mxu0 %v254
  %v564 = vpop.f32.mrf.mxu0
  %v565 = vadd.f32 %v128, %v564
  %v566 = vpop.f32.mrf.mxu0
  %v567 = vadd.f32 %v128, %v566
  %568 = vmatmul.bf16.gmra.mxu0 %v259
  %v569 = vpop.f32.mrf.mxu0
  %v570 = vadd.f32 %v128, %v569
  %v571 = vpop.f32.mrf.mxu0
  %v572 = vadd.f32 %v128, %v571
  %573 = vmatmul.bf16.gmra.mxu0 %v264
  %v574 = vpop.f32.mrf.mxu0
  %v575 = vadd.f32 %v128, %v574
  %v576 = vpop.f32.mrf.mxu0
  %577 = vdwg.mxu0
  %578 = vmatpush.bf16.msra.mxu0 %v456
  %579 = vmatpush.bf16.msra.mxu0 %v455
  %580 = vmatpush.bf16.msra.mxu0 %v454
  %581 = vmatpush.bf16.msra.mxu0 %v453
  %582 = vmatpush.bf16.msra.mxu0 %v452
  %583 = vmatpush.bf16.msra.mxu0 %v451
  %584 = vmatpush.bf16.msra.mxu0 %v450
  %585 = vmatpush.bf16.msra.mxu0 %v449
  %586 = vmatmul.bf16.gmra.mxu0 %v235
  %v587 = vpop.f32.mrf.mxu0
  %v588 = vadd.f32 %v545, %v587
  %v589 = vpop.f32.mrf.mxu0
  %v590 = vadd.f32 %v547, %v589
  %591 = vmatmul.bf16.gmra.mxu0 %v240
  %v592 = vpop.f32.mrf.mxu0
  %v593 = vadd.f32 %v550, %v592
  %v594 = vpop.f32.mrf.mxu0
  %v595 = vadd.f32 %v552, %v594
  %596 = vmatmul.bf16.gmra.mxu0 %v245
  %v597 = vpop.f32.mrf.mxu0
  %v598 = vadd.f32 %v555, %v597
  %v599 = vpop.f32.mrf.mxu0
  %v600 = vadd.f32 %v557, %v599
  %601 = vmatmul.bf16.gmra.mxu0 %v250
  %v602 = vpop.f32.mrf.mxu0
  %v603 = vadd.f32 %v560, %v602
  %v604 = vpop.f32.mrf.mxu0
  %v605 = vadd.f32 %v562, %v604
  %606 = vmatmul.bf16.gmra.mxu0 %v255
  %v607 = vpop.f32.mrf.mxu0
  %v608 = vadd.f32 %v565, %v607
  %v609 = vpop.f32.mrf.mxu0
  %v610 = vadd.f32 %v567, %v609
  %611 = vmatmul.bf16.gmra.mxu0 %v260
  %v612 = vpop.f32.mrf.mxu0
  %v613 = vadd.f32 %v570, %v612
  %v614 = vpop.f32.mrf.mxu0
  %v615 = vadd.f32 %v572, %v614
  %616 = vmatmul.bf16.gmra.mxu0 %v265
  %v617 = vpop.f32.mrf.mxu0
  %v618 = vadd.f32 %v575, %v617
  %v619 = vpop.f32.mrf.mxu0
  %620 = vdwg.mxu0
  %621 = vmatpush.bf16.msra.mxu0 %v464
  %622 = vmatpush.bf16.msra.mxu0 %v463
  %623 = vmatpush.bf16.msra.mxu0 %v462
  %624 = vmatpush.bf16.msra.mxu0 %v461
  %625 = vmatpush.bf16.msra.mxu0 %v460
  %626 = vmatpush.bf16.msra.mxu0 %v459
  %627 = vmatpush.bf16.msra.mxu0 %v458
  %628 = vmatpush.bf16.msra.mxu0 %v457
  %629 = vmatmul.bf16.gmra.mxu0 %v236
  %v630 = vpop.f32.mrf.mxu0
  %v631 = vadd.f32 %v588, %v630
  %v632 = vpop.f32.mrf.mxu0
  %v633 = vadd.f32 %v590, %v632
  %634 = vmatmul.bf16.gmra.mxu0 %v241
  %v635 = vpop.f32.mrf.mxu0
  %v636 = vadd.f32 %v593, %v635
  %v637 = vpop.f32.mrf.mxu0
  %v638 = vadd.f32 %v595, %v637
  %639 = vmatmul.bf16.gmra.mxu0 %v246
  %v640 = vpop.f32.mrf.mxu0
  %v641 = vadd.f32 %v598, %v640
  %v642 = vpop.f32.mrf.mxu0
  %v643 = vadd.f32 %v600, %v642
  %644 = vmatmul.bf16.gmra.mxu0 %v251
  %v645 = vpop.f32.mrf.mxu0
  %v646 = vadd.f32 %v603, %v645
  %v647 = vpop.f32.mrf.mxu0
  %v648 = vadd.f32 %v605, %v647
  %649 = vmatmul.bf16.gmra.mxu0 %v256
  %v650 = vpop.f32.mrf.mxu0
  %v651 = vadd.f32 %v608, %v650
  %v652 = vpop.f32.mrf.mxu0
  %v653 = vadd.f32 %v610, %v652
  %654 = vmatmul.bf16.gmra.mxu0 %v261
  %v655 = vpop.f32.mrf.mxu0
  %v656 = vadd.f32 %v613, %v655
  %v657 = vpop.f32.mrf.mxu0
  %v658 = vadd.f32 %v615, %v657
  %659 = vmatmul.bf16.gmra.mxu0 %v266
  %v660 = vpop.f32.mrf.mxu0
  %v661 = vadd.f32 %v618, %v660
  %v662 = vpop.f32.mrf.mxu0
  %663 = vdwg.mxu0
  %664 = vmatpush.bf16.msra.mxu0 %v472
  %665 = vmatpush.bf16.msra.mxu0 %v471
  %666 = vmatpush.bf16.msra.mxu0 %v470
  %667 = vmatpush.bf16.msra.mxu0 %v469
  %668 = vmatpush.bf16.msra.mxu0 %v468
  %669 = vmatpush.bf16.msra.mxu0 %v467
  %670 = vmatpush.bf16.msra.mxu0 %v466
  %671 = vmatpush.bf16.msra.mxu0 %v465
  %672 = vmatmul.bf16.gmra.mxu0 %v237
  %v673 = vpop.f32.mrf.mxu0
  %v674 = vadd.f32 %v631, %v673
  %v675 = vpop.f32.mrf.mxu0
  %v676 = vadd.f32 %v633, %v675
  %677 = vmatmul.bf16.gmra.mxu0 %v242
  %v678 = vpop.f32.mrf.mxu0
  %v679 = vadd.f32 %v636, %v678
  %v680 = vpop.f32.mrf.mxu0
  %v681 = vadd.f32 %v638, %v680
  %682 = vmatmul.bf16.gmra.mxu0 %v247
  %v683 = vpop.f32.mrf.mxu0
  %v684 = vadd.f32 %v641, %v683
  %v685 = vpop.f32.mrf.mxu0
  %v686 = vadd.f32 %v643, %v685
  %687 = vmatmul.bf16.gmra.mxu0 %v252
  %v688 = vpop.f32.mrf.mxu0
  %v689 = vadd.f32 %v646, %v688
  %v690 = vpop.f32.mrf.mxu0
  %v691 = vadd.f32 %v648, %v690
  %692 = vmatmul.bf16.gmra.mxu0 %v257
  %v693 = vpop.f32.mrf.mxu0
  %v694 = vadd.f32 %v651, %v693
  %v695 = vpop.f32.mrf.mxu0
  %v696 = vadd.f32 %v653, %v695
  %697 = vmatmul.bf16.gmra.mxu0 %v262
  %v698 = vpop.f32.mrf.mxu0
  %v699 = vadd.f32 %v656, %v698
  %v700 = vpop.f32.mrf.mxu0
  %v701 = vadd.f32 %v658, %v700
  %702 = vmatmul.bf16.gmra.mxu0 %v267
  %v703 = vpop.f32.mrf.mxu0
  %v704 = vadd.f32 %v661, %v703
  %v705 = vpop.f32.mrf.mxu0
  %706 = vdwg.mxu0
  %707 = vmatpush.bf16.msra.mxu0 0
  %708 = vmatpush.bf16.msra.mxu0 0
  %709 = vmatpush.bf16.msra.mxu0 0
  %710 = vmatpush.bf16.msra.mxu0 0
  %711 = vmatpush.bf16.msra.mxu0 %v476
  %712 = vmatpush.bf16.msra.mxu0 %v475
  %713 = vmatpush.bf16.msra.mxu0 %v474
  %714 = vmatpush.bf16.msra.mxu0 %v473
  %715 = vmatmul.bf16.gmra.mxu0 %v515
  %v716 = vpop.f32.mrf.mxu0
  %v717 = vadd.f32 %v674, %v716
  %v718 = vpop.f32.mrf.mxu0
  %v719 = vadd.f32 %v676, %v718
  %720 = vmatmul.bf16.gmra.mxu0 %v518
  %v721 = vpop.f32.mrf.mxu0
  %v722 = vadd.f32 %v679, %v721
  %v723 = vpop.f32.mrf.mxu0
  %v724 = vadd.f32 %v681, %v723
  %725 = vmatmul.bf16.gmra.mxu0 %v521
  %v726 = vpop.f32.mrf.mxu0
  %v727 = vadd.f32 %v684, %v726
  %v728 = vpop.f32.mrf.mxu0
  %v729 = vadd.f32 %v686, %v728
  %730 = vmatmul.bf16.gmra.mxu0 %v524
  %v731 = vpop.f32.mrf.mxu0
  %v732 = vadd.f32 %v689, %v731
  %v733 = vpop.f32.mrf.mxu0
  %v734 = vadd.f32 %v691, %v733
  %735 = vmatmul.bf16.gmra.mxu0 %v527
  %v736 = vpop.f32.mrf.mxu0
  %v737 = vadd.f32 %v694, %v736
  %v738 = vpop.f32.mrf.mxu0
  %v739 = vadd.f32 %v696, %v738
  %740 = vmatmul.bf16.gmra.mxu0 %v530
  %v741 = vpop.f32.mrf.mxu0
  %v742 = vadd.f32 %v699, %v741
  %v743 = vpop.f32.mrf.mxu0
  %v744 = vadd.f32 %v701, %v743
  %745 = vmatmul.bf16.gmra.mxu0 %v533
  %v746 = vpop.f32.mrf.mxu0
  %v747 = vadd.f32 %v704, %v746
  %v748 = vpop.f32.mrf.mxu0
  %749 = vdwg.mxu0
  %v750 = vmax.f32 %v717, 0.0
  %v751 = vmax.f32 %v719, 0.0
  %v752 = vmax.f32 %v722, 0.0
  %v753 = vmax.f32 %v724, 0.0
  %v754 = vmax.f32 %v727, 0.0
  %v755 = vmax.f32 %v729, 0.0
  %v756 = vmax.f32 %v732, 0.0
  %v757 = vmax.f32 %v734, 0.0
  %v758 = vmax.f32 %v737, 0.0
  %v759 = vmax.f32 %v739, 0.0
  %v760 = vmax.f32 %v742, 0.0
  %v761 = vmax.f32 %v744, 0.0
  %v762 = vmax.f32 %v747, 0.0
  %v763 = vpack.c.bf16 %v750, %v750
  %v764 = vpack.c.bf16 %v751, %v751
  %v765 = vpack.c.bf16 %v752, %v752
  %v766 = vpack.c.bf16 %v753, %v753
  %v767 = vpack.c.bf16 %v754, %v754
  %v768 = vpack.c.bf16 %v755, %v755
  %v769 = vpack.c.bf16 %v756, %v756
  %v770 = vpack.c.bf16 %v757, %v757
  %v771 = vpack.c.bf16 %v758, %v758
  %v772 = vpack.c.bf16 %v759, %v759
  %v773 = vpack.c.bf16 %v760, %v760
  %v774 = vpack.c.bf16 %v761, %v761
  %v775 = vpack.c.bf16 %v762, %v762
  %vm776 = vcmask 519168
  %777 = vst.msk [vmem:[%s3] sm:$0xf] %vm776, %v763
  %778 = vst.msk [vmem:[%s3 + $0x4] sm:$0xf] %vm776, %v764
  %779 = vst.msk [vmem:[%s3 + $0x8] sm:$0xf] %vm776, %v765
  %780 = vst.msk [vmem:[%s3 + $0xc] sm:$0xf] %vm776, %v766
  %781 = vst.msk [vmem:[%s3 + $0x10] sm:$0xf] %vm776, %v767
  %782 = vst.msk [vmem:[%s3 + $0x14] sm:$0xf] %vm776, %v768
  %783 = vst.msk [vmem:[%s3 + $0x18] sm:$0xf] %vm776, %v769
  %784 = vst.msk [vmem:[%s3 + $0x1c] sm:$0xf] %vm776, %v770
  %785 = vst.msk [vmem:[%s3 + $0x20] sm:$0xf] %vm776, %v771
  %786 = vst.msk [vmem:[%s3 + $0x24] sm:$0xf] %vm776, %v772
  %787 = vst.msk [vmem:[%s3 + $0x28] sm:$0xf] %vm776, %v773
  %788 = vst.msk [vmem:[%s3 + $0x2c] sm:$0xf] %vm776, %v774
  %vm789 = vcmask 516096
  %790 = vst.msk [vmem:[%s3 + $0x30] sm:$0x1] %vm789, %v775
  // Predicated region
  $region14: #{forward.6} parent=0 // pred_check
    _
  $region15: #{forward.6} parent=0 // pred_check_branch
    %792 = sbr.rel (0) target = $region17
  $region16: #{forward.6} parent=0 // pred_region
    _
  $region17: #{forward.6} parent=0 // pred_fallthru
    _
  // Predicated region
  $region18: #{forward.6} parent=0 // pred_check
    _
  $region19: #{forward.6} parent=0 // pred_check_branch
    %794 = sbr.rel (0) target = $region21
  $region20: #{forward.6} parent=0 // pred_region
    _
  $region21: #{forward.6} parent=0 // pred_fallthru
    _

// kernel: forward.7
$region0: #{forward.7}
  #allocation0 [shape = 'u32[]', space=smem, size = 0x4, offset = 0x4, fixed_abs, tag = 'smem constant byte address 0x4 - core index']
  #allocation1 [shape = 'u32[72,128]{1,0:T(1,128)}', space=vmem, size = 0x9000, scoped, tag = 'internal scratch']
  %s0 = inlined_call_operand.vmem [shape: bf16[2,3136], index: 0, kind: input, shape index: {}]
  %s1 = inlined_call_operand.vmem [shape: bf16[3136,512], index: 1, kind: input, shape index: {}]
  %s2 = inlined_call_operand.vmem [shape: f32[1,512], index: 2, kind: input, shape index: {}]
  %s3 = inlined_call_operand.vmem [shape: bf16[512,2], index: 3, kind: input, shape index: {}]
  %s4 = inlined_call_operand.vmem [shape: f32[1,2], index: 4, kind: input, shape index: {}]
  %s5 = inlined_call_operand.hbm [shape: f32[2,2], index: 5, kind: output, shape index: {}]
  %s6 = sld [smem:[#allocation0]]
  $region113: #{forward.7} parent=0
    _
  %s8 = ssub.s32 1, %s6
  %s9 = scalar_select 0, %s8, %s6
  $region1: #{forward.7} parent=0
    #allocation2 [shape = 'u8[1605632]{0}', space=vmem, size = 0x188000, scoped, tag = 'input window, operand 1']
    #allocation3 [shape = 'u8[1024]{0}', space=vmem, size = 0x400, scoped, tag = 'output window, operand 0, single buffered']
    #allocation4 [shape = 's32[2]{0}', space=sflag, size = 0x8, scoped, tag = 'scoped memory for forward.7']
    %10 = vsyncpa [#allocation4], 0
    loop: start=0, step=1, limit=6
    $region2: #{forward.7} parent=1 // loop_pre_header
      _
    $region3: #{forward.7} parent=1 // loop_header
      %s12 = sphi 0, %s16
      %p13 = scmp.ge.s32.totalorder %s12, 6
      %s20 = sphi 0, %s20
      %s22 = sphi 0, %s20
      %s23 = sphi 0, %s22
      %s37 = sphi 0, %s23
      %s43 = sphi 0, %s45
      %s46 = sphi 0, %s43
      %s47 = sphi 0, %s46
      %s63 = sphi 0, %s47
      %s69 = sphi 0, %s71
      %s72 = sphi 0, %s69
      %s73 = sphi 0, %s72
      %s89 = sphi 0, %s73
      %s95 = sphi 0, %s97
      %s98 = sphi 0, %s95
      %s99 = sphi 0, %s98
      %s115 = sphi 0, %s99
      %s119 = sphi 0, %s119
      %s121 = sphi 0, %s119
      %s122 = sphi 0, %s121
      %s136 = sphi 0, %s122
      %s140 = sphi 0, %s140
      %s142 = sphi 0, %s140
      %s143 = sphi 0, %s142
      %s157 = sphi 0, %s143
    $region4: #{forward.7} parent=1 // loop_header_branch
      %15 = sbr.rel (%p13) target = $region8
    $region5: #{forward.7} parent=1 // loop_body
      %s17 = ssub.s32 %s12, 1
      %s18 = ssub.s32 %s12, 2
      %s19 = sadd.s32 %s12, 1
      %s21 = sadd.s32 %s20, 1
      %p24 = scmp.eq.s32.totalorder %s12, 3
      %p25 = scmp.ne.s32.totalorder %s20, %s22
      %p26 = scmp.eq.s32.totalorder %s12, 0
      %p27 = por %p25, %p26
      %p28 = scmp.ne.s32.totalorder %s20, %s22
      %p29 = scmp.eq.s32.totalorder %s17, 3
      %p30 = por %p28, %p29
      %p31 = scmp.ne.s32.totalorder %s22, %s23
      %p32 = scmp.eq.s32.totalorder %s17, 0
      %p33 = por %p31, %p32
      %p34 = scmp.ne.s32.totalorder %s22, %s23
      %p35 = scmp.eq.s32.totalorder %s18, 3
      %p36 = por %p34, %p35
      %p38 = scmp.ne.s32.totalorder %s23, %s37
      %p39 = scmp.eq.s32.totalorder %s18, 0
      %p40 = por %p38, %p39
      %s41 = ssub.s32 %s12, %s19
      %p42 = scmp.eq.s32.totalorder %s41, 0
      %s44 = sadd.s32 %s43, 1
      %s45 = scalar_select %p42, %s43, %s44
      %p48 = pneg %p42
      %p49 = scmp.eq.s32.totalorder %s12, 3
      %p50 = por %p48, %p49
      %p51 = scmp.ne.s32.totalorder %s43, %s46
      %p52 = scmp.eq.s32.totalorder %s12, 0
      %p53 = por %p51, %p52
      %p54 = scmp.ne.s32.totalorder %s43, %s46
      %p55 = scmp.eq.s32.totalorder %s17, 3
      %p56 = por %p54, %p55
      %p57 = scmp.ne.s32.totalorder %s46, %s47
      %p58 = scmp.eq.s32.totalorder %s17, 0
      %p59 = por %p57, %p58
      %p60 = scmp.ne.s32.totalorder %s46, %s47
      %p61 = scmp.eq.s32.totalorder %s18, 3
      %p62 = por %p60, %p61
      %p64 = scmp.ne.s32.totalorder %s47, %s63
      %p65 = scmp.eq.s32.totalorder %s18, 0
      %p66 = por %p64, %p65
      %s67 = ssub.s32 %s12, %s19
      %p68 = scmp.eq.s32.totalorder %s67, 0
      %s70 = sadd.s32 %s69, 1
      %s71 = scalar_select %p68, %s69, %s70
      %p74 = pneg %p68
      %p75 = scmp.eq.s32.totalorder %s12, 3
      %p76 = por %p74, %p75
      %p77 = scmp.ne.s32.totalorder %s69, %s72
      %p78 = scmp.eq.s32.totalorder %s12, 0
      %p79 = por %p77, %p78
      %p80 = scmp.ne.s32.totalorder %s69, %s72
      %p81 = scmp.eq.s32.totalorder %s17, 3
      %p82 = por %p80, %p81
      %p83 = scmp.ne.s32.totalorder %s72, %s73
      %p84 = scmp.eq.s32.totalorder %s17, 0
      %p85 = por %p83, %p84
      %p86 = scmp.ne.s32.totalorder %s72, %s73
      %p87 = scmp.eq.s32.totalorder %s18, 3
      %p88 = por %p86, %p87
      %p90 = scmp.ne.s32.totalorder %s73, %s89
      %p91 = scmp.eq.s32.totalorder %s18, 0
      %p92 = por %p90, %p91
      %s93 = ssub.s32 %s12, %s19
      %p94 = scmp.eq.s32.totalorder %s93, 0
      %s96 = sadd.s32 %s95, 1
      %s97 = scalar_select %p94, %s95, %s96
      %p100 = pneg %p94
      %p101 = scmp.eq.s32.totalorder %s12, 3
      %p102 = por %p100, %p101
      %p103 = scmp.ne.s32.totalorder %s95, %s98
      %p104 = scmp.eq.s32.totalorder %s12, 0
      %p105 = por %p103, %p104
      %p106 = scmp.ne.s32.totalorder %s95, %s98
      %p107 = scmp.eq.s32.totalorder %s17, 3
      %p108 = por %p106, %p107
      %p109 = scmp.ne.s32.totalorder %s98, %s99
      %p110 = scmp.eq.s32.totalorder %s17, 0
      %p111 = por %p109, %p110
      %p112 = scmp.ne.s32.totalorder %s98, %s99
      %p113 = scmp.eq.s32.totalorder %s18, 3
      %p114 = por %p112, %p113
      %p116 = scmp.ne.s32.totalorder %s99, %s115
      %p117 = scmp.eq.s32.totalorder %s18, 0
      %p118 = por %p116, %p117
      %s120 = sadd.s32 %s119, 1
      %p123 = scmp.eq.s32.totalorder %s12, 3
      %p124 = scmp.ne.s32.totalorder %s119, %s121
      %p125 = scmp.eq.s32.totalorder %s12, 0
      %p126 = por %p124, %p125
      %p127 = scmp.ne.s32.totalorder %s119, %s121
      %p128 = scmp.eq.s32.totalorder %s17, 3
      %p129 = por %p127, %p128
      %p130 = scmp.ne.s32.totalorder %s121, %s122
      %p131 = scmp.eq.s32.totalorder %s17, 0
      %p132 = por %p130, %p131
      %p133 = scmp.ne.s32.totalorder %s121, %s122
      %p134 = scmp.eq.s32.totalorder %s18, 3
      %p135 = por %p133, %p134
      %p137 = scmp.ne.s32.totalorder %s122, %s136
      %p138 = scmp.eq.s32.totalorder %s18, 0
      %p139 = por %p137, %p138
      %s141 = sadd.s32 %s140, 1
      %p144 = scmp.eq.s32.totalorder %s12, 3
      %p145 = scmp.ne.s32.totalorder %s140, %s142
      %p146 = scmp.eq.s32.totalorder %s12, 0
      %p147 = por %p145, %p146
      %p148 = scmp.ne.s32.totalorder %s140, %s142
      %p149 = scmp.eq.s32.totalorder %s17, 3
      %p150 = por %p148, %p149
      %p151 = scmp.ne.s32.totalorder %s142, %s143
      %p152 = scmp.eq.s32.totalorder %s17, 0
      %p153 = por %p151, %p152
      %p154 = scmp.ne.s32.totalorder %s142, %s143
      %p155 = scmp.eq.s32.totalorder %s18, 3
      %p156 = por %p154, %p155
      %p158 = scmp.ne.s32.totalorder %s143, %s157
      %p159 = scmp.eq.s32.totalorder %s18, 0
      %p160 = por %p158, %p159
      %p161 = scmp.le.s32.totalorder 1, %s12
      %p162 = scmp.lt.s32.totalorder %s12, 5
      %p163 = pnand %p161, %p162
      %p164 = pneg %p163
      // Predicated region
      $region9: #{forward.7} parent=5 // pred_check
        _
      $region10: #{forward.7} parent=5 // pred_check_branch
        %166 = sbr.rel (%p163) target = $region12
      $region11: #{forward.7} parent=5 // pred_region
        %s167 = ssub.s32 %s12, 1
        // Predicated region
        $region13: #{forward.7} parent=11 // pred_check
          %p168 = pneg %p33
        $region14: #{forward.7} parent=11 // pred_check_branch
          %170 = sbr.rel (%p168) target = $region16
        $region15: #{forward.7} parent=11 // pred_region
          _
        $region16: #{forward.7} parent=11 // pred_fallthru
          _
        // Predicated region
        $region17: #{forward.7} parent=11 // pred_check
          %p171 = pneg %p132
        $region18: #{forward.7} parent=11 // pred_check_branch
          %173 = sbr.rel (%p171) target = $region20
        $region19: #{forward.7} parent=11 // pred_region
          _
        $region20: #{forward.7} parent=11 // pred_fallthru
          _
      $region12: #{forward.7} parent=5 // pred_fallthru
        _
      %p174 = scmp.lt.s32.totalorder %s12, 4
      // Predicated region
      $region21: #{forward.7} parent=5 // pred_check
        %p175 = pneg %p174
      $region22: #{forward.7} parent=5 // pred_check_branch
        %177 = sbr.rel (%p175) target = $region24
      $region23: #{forward.7} parent=5 // pred_region
        // Predicated region
        $region25: #{forward.7} parent=23 // pred_check
          %p178 = pneg %p53
        $region26: #{forward.7} parent=23 // pred_check_branch
          %180 = sbr.rel (%p178) target = $region28
        $region27: #{forward.7} parent=23 // pred_region
          %s181 = sand.u32 %s43, 1
          %s182 = sand.u32 %s43, 1
          %s183 = smul.addr %s182, 1568
          %s184 = scalar_lea.vmem [#allocation2], %s183
          %s185 = smul.addr %s12, 4
          %s186 = scalar_lea.vmem %s1, %s185
          // Predicated region
          $region29: #{forward.7} parent=27 // pred_check
            _
          $region30: #{forward.7} parent=27 // pred_check_branch
            %188 = sbr.rel (0) target = $region32
          $region31: #{forward.7} parent=27 // pred_region
            // Predicated region
            $region33: #{forward.7} parent=31 // pred_check
              _
            $region34: #{forward.7} parent=31 // pred_check_branch
              %190 = sbr.rel target = $region36
            $region35: #{forward.7} parent=31 // pred_region
              // Predicated region
              $region48: #{forward.7} parent=35 // pred_check
                _
              $region49: #{forward.7} parent=35 // pred_check_branch
                %988 = sbr.rel target = $region51
              $region50: #{forward.7} parent=35 // pred_region
                loop: start=0, step=1, limit=0
                $region52: #{forward.7} parent=50 // loop_pre_header
                  _
                $region53: #{forward.7} parent=50 // loop_header
                  %s990 = sphi 0, %s994
                  %p991 = scmp.ge.s32.totalorder %s990, 0
                  %s995 = sphi 0, %s1784
                  %s996 = sphi %s186, %s1787
                  %s997 = sphi %s184, %s1788
                $region54: #{forward.7} parent=50 // loop_header_branch
                  %993 = sbr.rel (%p991) target = $region58
                $region55: #{forward.7} parent=50 // loop_body
                  %v998 = vld [vmem:[%s996] sm:$0xff]
                  %999 = vst [vmem:[%s997] sm:$0xff] %v998
                  %v1000 = vld [vmem:[%s996 + $0x10] sm:$0xff]
                  %1001 = vst [vmem:[%s997 + $0x4] sm:$0xff] %v1000
                  %v1002 = vld [vmem:[%s996 + $0x20] sm:$0xff]
                  %1003 = vst [vmem:[%s997 + $0x8] sm:$0xff] %v1002
                  %v1004 = vld [vmem:[%s996 + $0x30] sm:$0xff]
                  %1005 = vst [vmem:[%s997 + $0xc] sm:$0xff] %v1004
                  %v1006 = vld [vmem:[%s996 + $0x40] sm:$0xff]
                  %1007 = vst [vmem:[%s997 + $0x10] sm:$0xff] %v1006
                  %v1008 = vld [vmem:[%s996 + $0x50] sm:$0xff]
                  %1009 = vst [vmem:[%s997 + $0x14] sm:$0xff] %v1008
                  %v1010 = vld [vmem:[%s996 + $0x60] sm:$0xff]
                  %1011 = vst [vmem:[%s997 + $0x18] sm:$0xff] %v1010
                  %v1012 = vld [vmem:[%s996 + $0x70] sm:$0xff]
                  %1013 = vst [vmem:[%s997 + $0x1c] sm:$0xff] %v1012
                  %v1014 = vld [vmem:[%s996 + $0x80] sm:$0xff]
                  %1015 = vst [vmem:[%s997 + $0x20] sm:$0xff] %v1014
                  %v1016 = vld [vmem:[%s996 + $0x90] sm:$0xff]
                  %1017 = vst [vmem:[%s997 + $0x24] sm:$0xff] %v1016
                  %v1018 = vld [vmem:[%s996 + $0xa0] sm:$0xff]
                  %1019 = vst [vmem:[%s997 + $0x28] sm:$0xff] %v1018
                  %v1020 = vld [vmem:[%s996 + $0xb0] sm:$0xff]
                  %1021 = vst [vmem:[%s997 + $0x2c] sm:$0xff] %v1020
                  %v1022 = vld [vmem:[%s996 + $0xc0] sm:$0xff]
                  %1023 = vst [vmem:[%s997 + $0x30] sm:$0xff] %v1022
                  %v1024 = vld [vmem:[%s996 + $0xd0] sm:$0xff]
                  %1025 = vst [vmem:[%s997 + $0x34] sm:$0xff] %v1024
                  %v1026 = vld [vmem:[%s996 + $0xe0] sm:$0xff]
                  %1027 = vst [vmem:[%s997 + $0x38] sm:$0xff] %v1026
                  %v1028 = vld [vmem:[%s996 + $0xf0] sm:$0xff]
                  %1029 = vst [vmem:[%s997 + $0x3c] sm:$0xff] %v1028
                  %v1030 = vld [vmem:[%s996 + $0x100] sm:$0xff]
                  %1031 = vst [vmem:[%s997 + $0x40] sm:$0xff] %v1030
                  %v1032 = vld [vmem:[%s996 + $0x110] sm:$0xff]
                  %1033 = vst [vmem:[%s997 + $0x44] sm:$0xff] %v1032
                  %v1034 = vld [vmem:[%s996 + $0x120] sm:$0xff]
                  %1035 = vst [vmem:[%s997 + $0x48] sm:$0xff] %v1034
                  %v1036 = vld [vmem:[%s996 + $0x130] sm:$0xff]
                  %1037 = vst [vmem:[%s997 + $0x4c] sm:$0xff] %v1036
                  %v1038 = vld [vmem:[%s996 + $0x140] sm:$0xff]
                  %1039 = vst [vmem:[%s997 + $0x50] sm:$0xff] %v1038
                  %v1040 = vld [vmem:[%s996 + $0x150] sm:$0xff]
                  %1041 = vst [vmem:[%s997 + $0x54] sm:$0xff] %v1040
                  %v1042 = vld [vmem:[%s996 + $0x160] sm:$0xff]
                  %1043 = vst [vmem:[%s997 + $0x58] sm:$0xff] %v1042
                  %v1044 = vld [vmem:[%s996 + $0x170] sm:$0xff]
                  %1045 = vst [vmem:[%s997 + $0x5c] sm:$0xff] %v1044
                  %v1046 = vld [vmem:[%s996 + $0x180] sm:$0xff]
                  %1047 = vst [vmem:[%s997 + $0x60] sm:$0xff] %v1046
                  %v1048 = vld [vmem:[%s996 + $0x190] sm:$0xff]
                  %1049 = vst [vmem:[%s997 + $0x64] sm:$0xff] %v1048
                  %v1050 = vld [vmem:[%s996 + $0x1a0] sm:$0xff]
                  %1051 = vst [vmem:[%s997 + $0x68] sm:$0xff] %v1050
                  %v1052 = vld [vmem:[%s996 + $0x1b0] sm:$0xff]
                  %1053 = vst [vmem:[%s997 + $0x6c] sm:$0xff] %v1052
                  %v1054 = vld [vmem:[%s996 + $0x1c0] sm:$0xff]
                  %1055 = vst [vmem:[%s997 + $0x70] sm:$0xff] %v1054
                  %v1056 = vld [vmem:[%s996 + $0x1d0] sm:$0xff]
                  %1057 = vst [vmem:[%s997 + $0x74] sm:$0xff] %v1056
                  %v1058 = vld [vmem:[%s996 + $0x1e0] sm:$0xff]
                  %1059 = vst [vmem:[%s997 + $0x78] sm:$0xff] %v1058
                  %v1060 = vld [vmem:[%s996 + $0x1f0] sm:$0xff]
                  %1061 = vst [vmem:[%s997 + $0x7c] sm:$0xff] %v1060
                  %v1062 = vld [vmem:[%s996 + $0x200] sm:$0xff]
                  %1063 = vst [vmem:[%s997 + $0x80] sm:$0xff] %v1062
                  %v1064 = vld [vmem:[%s996 + $0x210] sm:$0xff]
                  %1065 = vst [vmem:[%s997 + $0x84] sm:$0xff] %v1064
                  %v1066 = vld [vmem:[%s996 + $0x220] sm:$0xff]
                  %1067 = vst [vmem:[%s997 + $0x88] sm:$0xff] %v1066
                  %v1068 = vld [vmem:[%s996 + $0x230] sm:$0xff]
                  %1069 = vst [vmem:[%s997 + $0x8c] sm:$0xff] %v1068
                  %v1070 = vld [vmem:[%s996 + $0x240] sm:$0xff]
                  %1071 = vst [vmem:[%s997 + $0x90] sm:$0xff] %v1070
                  %v1072 = vld [vmem:[%s996 + $0x250] sm:$0xff]
                  %1073 = vst [vmem:[%s997 + $0x94] sm:$0xff] %v1072
                  %v1074 = vld [vmem:[%s996 + $0x260] sm:$0xff]
                  %1075 = vst [vmem:[%s997 + $0x98] sm:$0xff] %v1074
                  %v1076 = vld [vmem:[%s996 + $0x270] sm:$0xff]
                  %1077 = vst [vmem:[%s997 + $0x9c] sm:$0xff] %v1076
                  %v1078 = vld [vmem:[%s996 + $0x280] sm:$0xff]
                  %1079 = vst [vmem:[%s997 + $0xa0] sm:$0xff] %v1078
                  %v1080 = vld [vmem:[%s996 + $0x290] sm:$0xff]
                  %1081 = vst [vmem:[%s997 + $0xa4] sm:$0xff] %v1080
                  %v1082 = vld [vmem:[%s996 + $0x2a0] sm:$0xff]
                  %1083 = vst [vmem:[%s997 + $0xa8] sm:$0xff] %v1082
                  %v1084 = vld [vmem:[%s996 + $0x2b0] sm:$0xff]
                  %1085 = vst [vmem:[%s997 + $0xac] sm:$0xff] %v1084
                  %v1086 = vld [vmem:[%s996 + $0x2c0] sm:$0xff]
                  %1087 = vst [vmem:[%s997 + $0xb0] sm:$0xff] %v1086
                  %v1088 = vld [vmem:[%s996 + $0x2d0] sm:$0xff]
                  %1089 = vst [vmem:[%s997 + $0xb4] sm:$0xff] %v1088
                  %v1090 = vld [vmem:[%s996 + $0x2e0] sm:$0xff]
                  %1091 = vst [vmem:[%s997 + $0xb8] sm:$0xff] %v1090
                  %v1092 = vld [vmem:[%s996 + $0x2f0] sm:$0xff]
                  %1093 = vst [vmem:[%s997 + $0xbc] sm:$0xff] %v1092
                  %v1094 = vld [vmem:[%s996 + $0x300] sm:$0xff]
                  %1095 = vst [vmem:[%s997 + $0xc0] sm:$0xff] %v1094
                  %v1096 = vld [vmem:[%s996 + $0x310] sm:$0xff]
                  %1097 = vst [vmem:[%s997 + $0xc4] sm:$0xff] %v1096
                  %v1098 = vld [vmem:[%s996 + $0x320] sm:$0xff]
                  %1099 = vst [vmem:[%s997 + $0xc8] sm:$0xff] %v1098
                  %v1100 = vld [vmem:[%s996 + $0x330] sm:$0xff]
                  %1101 = vst [vmem:[%s997 + $0xcc] sm:$0xff] %v1100
                  %v1102 = vld [vmem:[%s996 + $0x340] sm:$0xff]
                  %1103 = vst [vmem:[%s997 + $0xd0] sm:$0xff] %v1102
                  %v1104 = vld [vmem:[%s996 + $0x350] sm:$0xff]
                  %1105 = vst [vmem:[%s997 + $0xd4] sm:$0xff] %v1104
                  %v1106 = vld [vmem:[%s996 + $0x360] sm:$0xff]
                  %1107 = vst [vmem:[%s997 + $0xd8] sm:$0xff] %v1106
                  %v1108 = vld [vmem:[%s996 + $0x370] sm:$0xff]
                  %1109 = vst [vmem:[%s997 + $0xdc] sm:$0xff] %v1108
                  %v1110 = vld [vmem:[%s996 + $0x380] sm:$0xff]
                  %1111 = vst [vmem:[%s997 + $0xe0] sm:$0xff] %v1110
                  %v1112 = vld [vmem:[%s996 + $0x390] sm:$0xff]
                  %1113 = vst [vmem:[%s997 + $0xe4] sm:$0xff] %v1112
                  %v1114 = vld [vmem:[%s996 + $0x3a0] sm:$0xff]
                  %1115 = vst [vmem:[%s997 + $0xe8] sm:$0xff] %v1114
                  %v1116 = vld [vmem:[%s996 + $0x3b0] sm:$0xff]
                  %1117 = vst [vmem:[%s997 + $0xec] sm:$0xff] %v1116
                  %v1118 = vld [vmem:[%s996 + $0x3c0] sm:$0xff]
                  %1119 = vst [vmem:[%s997 + $0xf0] sm:$0xff] %v1118
                  %v1120 = vld [vmem:[%s996 + $0x3d0] sm:$0xff]
                  %1121 = vst [vmem:[%s997 + $0xf4] sm:$0xff] %v1120
                  %v1122 = vld [vmem:[%s996 + $0x3e0] sm:$0xff]
                  %1123 = vst [vmem:[%s997 + $0xf8] sm:$0xff] %v1122
                  %v1124 = vld [vmem:[%s996 + $0x3f0] sm:$0xff]
                  %1125 = vst [vmem:[%s997 + $0xfc] sm:$0xff] %v1124
                  %v1126 = vld [vmem:[%s996 + $0x400] sm:$0xff]
                  %1127 = vst [vmem:[%s997 + $0x100] sm:$0xff] %v1126
                  %v1128 = vld [vmem:[%s996 + $0x410] sm:$0xff]
                  %1129 = vst [vmem:[%s997 + $0x104] sm:$0xff] %v1128
                  %v1130 = vld [vmem:[%s996 + $0x420] sm:$0xff]
                  %1131 = vst [vmem:[%s997 + $0x108] sm:$0xff] %v1130
                  %v1132 = vld [vmem:[%s996 + $0x430] sm:$0xff]
                  %1133 = vst [vmem:[%s997 + $0x10c] sm:$0xff] %v1132
                  %v1134 = vld [vmem:[%s996 + $0x440] sm:$0xff]
                  %1135 = vst [vmem:[%s997 + $0x110] sm:$0xff] %v1134
                  %v1136 = vld [vmem:[%s996 + $0x450] sm:$0xff]
                  %1137 = vst [vmem:[%s997 + $0x114] sm:$0xff] %v1136
                  %v1138 = vld [vmem:[%s996 + $0x460] sm:$0xff]
                  %1139 = vst [vmem:[%s997 + $0x118] sm:$0xff] %v1138
                  %v1140 = vld [vmem:[%s996 + $0x470] sm:$0xff]
                  %1141 = vst [vmem:[%s997 + $0x11c] sm:$0xff] %v1140
                  %v1142 = vld [vmem:[%s996 + $0x480] sm:$0xff]
                  %1143 = vst [vmem:[%s997 + $0x120] sm:$0xff] %v1142
                  %v1144 = vld [vmem:[%s996 + $0x490] sm:$0xff]
                  %1145 = vst [vmem:[%s997 + $0x124] sm:$0xff] %v1144
                  %v1146 = vld [vmem:[%s996 + $0x4a0] sm:$0xff]
                  %1147 = vst [vmem:[%s997 + $0x128] sm:$0xff] %v1146
                  %v1148 = vld [vmem:[%s996 + $0x4b0] sm:$0xff]
                  %1149 = vst [vmem:[%s997 + $0x12c] sm:$0xff] %v1148
                  %v1150 = vld [vmem:[%s996 + $0x4c0] sm:$0xff]
                  %1151 = vst [vmem:[%s997 + $0x130] sm:$0xff] %v1150
                  %v1152 = vld [vmem:[%s996 + $0x4d0] sm:$0xff]
                  %1153 = vst [vmem:[%s997 + $0x134] sm:$0xff] %v1152
                  %v1154 = vld [vmem:[%s996 + $0x4e0] sm:$0xff]
                  %1155 = vst [vmem:[%s997 + $0x138] sm:$0xff] %v1154
                  %v1156 = vld [vmem:[%s996 + $0x4f0] sm:$0xff]
                  %1157 = vst [vmem:[%s997 + $0x13c] sm:$0xff] %v1156
                  %v1158 = vld [vmem:[%s996 + $0x500] sm:$0xff]
                  %1159 = vst [vmem:[%s997 + $0x140] sm:$0xff] %v1158
                  %v1160 = vld [vmem:[%s996 + $0x510] sm:$0xff]
                  %1161 = vst [vmem:[%s997 + $0x144] sm:$0xff] %v1160
                  %v1162 = vld [vmem:[%s996 + $0x520] sm:$0xff]
                  %1163 = vst [vmem:[%s997 + $0x148] sm:$0xff] %v1162
                  %v1164 = vld [vmem:[%s996 + $0x530] sm:$0xff]
                  %1165 = vst [vmem:[%s997 + $0x14c] sm:$0xff] %v1164
                  %v1166 = vld [vmem:[%s996 + $0x540] sm:$0xff]
                  %1167 = vst [vmem:[%s997 + $0x150] sm:$0xff] %v1166
                  %v1168 = vld [vmem:[%s996 + $0x550] sm:$0xff]
                  %1169 = vst [vmem:[%s997 + $0x154] sm:$0xff] %v1168
                  %v1170 = vld [vmem:[%s996 + $0x560] sm:$0xff]
                  %1171 = vst [vmem:[%s997 + $0x158] sm:$0xff] %v1170
                  %v1172 = vld [vmem:[%s996 + $0x570] sm:$0xff]
                  %1173 = vst [vmem:[%s997 + $0x15c] sm:$0xff] %v1172
                  %v1174 = vld [vmem:[%s996 + $0x580] sm:$0xff]
                  %1175 = vst [vmem:[%s997 + $0x160] sm:$0xff] %v1174
                  %v1176 = vld [vmem:[%s996 + $0x590] sm:$0xff]
                  %1177 = vst [vmem:[%s997 + $0x164] sm:$0xff] %v1176
                  %v1178 = vld [vmem:[%s996 + $0x5a0] sm:$0xff]
                  %1179 = vst [vmem:[%s997 + $0x168] sm:$0xff] %v1178
                  %v1180 = vld [vmem:[%s996 + $0x5b0] sm:$0xff]
                  %1181 = vst [vmem:[%s997 + $0x16c] sm:$0xff] %v1180
                  %v1182 = vld [vmem:[%s996 + $0x5c0] sm:$0xff]
                  %1183 = vst [vmem:[%s997 + $0x170] sm:$0xff] %v1182
                  %v1184 = vld [vmem:[%s996 + $0x5d0] sm:$0xff]
                  %1185 = vst [vmem:[%s997 + $0x174] sm:$0xff] %v1184
                  %v1186 = vld [vmem:[%s996 + $0x5e0] sm:$0xff]
                  %1187 = vst [vmem:[%s997 + $0x178] sm:$0xff] %v1186
                  %v1188 = vld [vmem:[%s996 + $0x5f0] sm:$0xff]
                  %1189 = vst [vmem:[%s997 + $0x17c] sm:$0xff] %v1188
                  %v1190 = vld [vmem:[%s996 + $0x600] sm:$0xff]
                  %1191 = vst [vmem:[%s997 + $0x180] sm:$0xff] %v1190
                  %v1192 = vld [vmem:[%s996 + $0x610] sm:$0xff]
                  %1193 = vst [vmem:[%s997 + $0x184] sm:$0xff] %v1192
                  %v1194 = vld [vmem:[%s996 + $0x620] sm:$0xff]
                  %1195 = vst [vmem:[%s997 + $0x188] sm:$0xff] %v1194
                  %v1196 = vld [vmem:[%s996 + $0x630] sm:$0xff]
                  %1197 = vst [vmem:[%s997 + $0x18c] sm:$0xff] %v1196
                  %v1198 = vld [vmem:[%s996 + $0x640] sm:$0xff]
                  %1199 = vst [vmem:[%s997 + $0x190] sm:$0xff] %v1198
                  %v1200 = vld [vmem:[%s996 + $0x650] sm:$0xff]
                  %1201 = vst [vmem:[%s997 + $0x194] sm:$0xff] %v1200
                  %v1202 = vld [vmem:[%s996 + $0x660] sm:$0xff]
                  %1203 = vst [vmem:[%s997 + $0x198] sm:$0xff] %v1202
                  %v1204 = vld [vmem:[%s996 + $0x670] sm:$0xff]
                  %1205 = vst [vmem:[%s997 + $0x19c] sm:$0xff] %v1204
                  %v1206 = vld [vmem:[%s996 + $0x680] sm:$0xff]
                  %1207 = vst [vmem:[%s997 + $0x1a0] sm:$0xff] %v1206
                  %v1208 = vld [vmem:[%s996 + $0x690] sm:$0xff]
                  %1209 = vst [vmem:[%s997 + $0x1a4] sm:$0xff] %v1208
                  %v1210 = vld [vmem:[%s996 + $0x6a0] sm:$0xff]
                  %1211 = vst [vmem:[%s997 + $0x1a8] sm:$0xff] %v1210
                  %v1212 = vld [vmem:[%s996 + $0x6b0] sm:$0xff]
                  %1213 = vst [vmem:[%s997 + $0x1ac] sm:$0xff] %v1212
                  %v1214 = vld [vmem:[%s996 + $0x6c0] sm:$0xff]
                  %1215 = vst [vmem:[%s997 + $0x1b0] sm:$0xff] %v1214
                  %v1216 = vld [vmem:[%s996 + $0x6d0] sm:$0xff]
                  %1217 = vst [vmem:[%s997 + $0x1b4] sm:$0xff] %v1216
                  %v1218 = vld [vmem:[%s996 + $0x6e0] sm:$0xff]
                  %1219 = vst [vmem:[%s997 + $0x1b8] sm:$0xff] %v1218
                  %v1220 = vld [vmem:[%s996 + $0x6f0] sm:$0xff]
                  %1221 = vst [vmem:[%s997 + $0x1bc] sm:$0xff] %v1220
                  %v1222 = vld [vmem:[%s996 + $0x700] sm:$0xff]
                  %1223 = vst [vmem:[%s997 + $0x1c0] sm:$0xff] %v1222
                  %v1224 = vld [vmem:[%s996 + $0x710] sm:$0xff]
                  %1225 = vst [vmem:[%s997 + $0x1c4] sm:$0xff] %v1224
                  %v1226 = vld [vmem:[%s996 + $0x720] sm:$0xff]
                  %1227 = vst [vmem:[%s997 + $0x1c8] sm:$0xff] %v1226
                  %v1228 = vld [vmem:[%s996 + $0x730] sm:$0xff]
                  %1229 = vst [vmem:[%s997 + $0x1cc] sm:$0xff] %v1228
                  %v1230 = vld [vmem:[%s996 + $0x740] sm:$0xff]
                  %1231 = vst [vmem:[%s997 + $0x1d0] sm:$0xff] %v1230
                  %v1232 = vld [vmem:[%s996 + $0x750] sm:$0xff]
                  %1233 = vst [vmem:[%s997 + $0x1d4] sm:$0xff] %v1232
                  %v1234 = vld [vmem:[%s996 + $0x760] sm:$0xff]
                  %1235 = vst [vmem:[%s997 + $0x1d8] sm:$0xff] %v1234
                  %v1236 = vld [vmem:[%s996 + $0x770] sm:$0xff]
                  %1237 = vst [vmem:[%s997 + $0x1dc] sm:$0xff] %v1236
                  %v1238 = vld [vmem:[%s996 + $0x780] sm:$0xff]
                  %1239 = vst [vmem:[%s997 + $0x1e0] sm:$0xff] %v1238
                  %v1240 = vld [vmem:[%s996 + $0x790] sm:$0xff]
                  %1241 = vst [vmem:[%s997 + $0x1e4] sm:$0xff] %v1240
                  %v1242 = vld [vmem:[%s996 + $0x7a0] sm:$0xff]
                  %1243 = vst [vmem:[%s997 + $0x1e8] sm:$0xff] %v1242
                  %v1244 = vld [vmem:[%s996 + $0x7b0] sm:$0xff]
                  %1245 = vst [vmem:[%s997 + $0x1ec] sm:$0xff] %v1244
                  %v1246 = vld [vmem:[%s996 + $0x7c0] sm:$0xff]
                  %1247 = vst [vmem:[%s997 + $0x1f0] sm:$0xff] %v1246
                  %v1248 = vld [vmem:[%s996 + $0x7d0] sm:$0xff]
                  %1249 = vst [vmem:[%s997 + $0x1f4] sm:$0xff] %v1248
                  %v1250 = vld [vmem:[%s996 + $0x7e0] sm:$0xff]
                  %1251 = vst [vmem:[%s997 + $0x1f8] sm:$0xff] %v1250
                  %v1252 = vld [vmem:[%s996 + $0x7f0] sm:$0xff]
                  %1253 = vst [vmem:[%s997 + $0x1fc] sm:$0xff] %v1252
                  %v1254 = vld [vmem:[%s996 + $0x800] sm:$0xff]
                  %1255 = vst [vmem:[%s997 + $0x200] sm:$0xff] %v1254
                  %v1256 = vld [vmem:[%s996 + $0x810] sm:$0xff]
                  %1257 = vst [vmem:[%s997 + $0x204] sm:$0xff] %v1256
                  %v1258 = vld [vmem:[%s996 + $0x820] sm:$0xff]
                  %1259 = vst [vmem:[%s997 + $0x208] sm:$0xff] %v1258
                  %v1260 = vld [vmem:[%s996 + $0x830] sm:$0xff]
                  %1261 = vst [vmem:[%s997 + $0x20c] sm:$0xff] %v1260
                  %v1262 = vld [vmem:[%s996 + $0x840] sm:$0xff]
                  %1263 = vst [vmem:[%s997 + $0x210] sm:$0xff] %v1262
                  %v1264 = vld [vmem:[%s996 + $0x850] sm:$0xff]
                  %1265 = vst [vmem:[%s997 + $0x214] sm:$0xff] %v1264
                  %v1266 = vld [vmem:[%s996 + $0x860] sm:$0xff]
                  %1267 = vst [vmem:[%s997 + $0x218] sm:$0xff] %v1266
                  %v1268 = vld [vmem:[%s996 + $0x870] sm:$0xff]
                  %1269 = vst [vmem:[%s997 + $0x21c] sm:$0xff] %v1268
                  %v1270 = vld [vmem:[%s996 + $0x880] sm:$0xff]
                  %1271 = vst [vmem:[%s997 + $0x220] sm:$0xff] %v1270
                  %v1272 = vld [vmem:[%s996 + $0x890] sm:$0xff]
                  %1273 = vst [vmem:[%s997 + $0x224] sm:$0xff] %v1272
                  %v1274 = vld [vmem:[%s996 + $0x8a0] sm:$0xff]
                  %1275 = vst [vmem:[%s997 + $0x228] sm:$0xff] %v1274
                  %v1276 = vld [vmem:[%s996 + $0x8b0] sm:$0xff]
                  %1277 = vst [vmem:[%s997 + $0x22c] sm:$0xff] %v1276
                  %v1278 = vld [vmem:[%s996 + $0x8c0] sm:$0xff]
                  %1279 = vst [vmem:[%s997 + $0x230] sm:$0xff] %v1278
                  %v1280 = vld [vmem:[%s996 + $0x8d0] sm:$0xff]
                  %1281 = vst [vmem:[%s997 + $0x234] sm:$0xff] %v1280
                  %v1282 = vld [vmem:[%s996 + $0x8e0] sm:$0xff]
                  %1283 = vst [vmem:[%s997 + $0x238] sm:$0xff] %v1282
                  %v1284 = vld [vmem:[%s996 + $0x8f0] sm:$0xff]
                  %1285 = vst [vmem:[%s997 + $0x23c] sm:$0xff] %v1284
                  %v1286 = vld [vmem:[%s996 + $0x900] sm:$0xff]
                  %1287 = vst [vmem:[%s997 + $0x240] sm:$0xff] %v1286
                  %v1288 = vld [vmem:[%s996 + $0x910] sm:$0xff]
                  %1289 = vst [vmem:[%s997 + $0x244] sm:$0xff] %v1288
                  %v1290 = vld [vmem:[%s996 + $0x920] sm:$0xff]
                  %1291 = vst [vmem:[%s997 + $0x248] sm:$0xff] %v1290
                  %v1292 = vld [vmem:[%s996 + $0x930] sm:$0xff]
                  %1293 = vst [vmem:[%s997 + $0x24c] sm:$0xff] %v1292
                  %v1294 = vld [vmem:[%s996 + $0x940] sm:$0xff]
                  %1295 = vst [vmem:[%s997 + $0x250] sm:$0xff] %v1294
                  %v1296 = vld [vmem:[%s996 + $0x950] sm:$0xff]
                  %1297 = vst [vmem:[%s997 + $0x254] sm:$0xff] %v1296
                  %v1298 = vld [vmem:[%s996 + $0x960] sm:$0xff]
                  %1299 = vst [vmem:[%s997 + $0x258] sm:$0xff] %v1298
                  %v1300 = vld [vmem:[%s996 + $0x970] sm:$0xff]
                  %1301 = vst [vmem:[%s997 + $0x25c] sm:$0xff] %v1300
                  %v1302 = vld [vmem:[%s996 + $0x980] sm:$0xff]
                  %1303 = vst [vmem:[%s997 + $0x260] sm:$0xff] %v1302
                  %v1304 = vld [vmem:[%s996 + $0x990] sm:$0xff]
                  %1305 = vst [vmem:[%s997 + $0x264] sm:$0xff] %v1304
                  %v1306 = vld [vmem:[%s996 + $0x9a0] sm:$0xff]
                  %1307 = vst [vmem:[%s997 + $0x268] sm:$0xff] %v1306
                  %v1308 = vld [vmem:[%s996 + $0x9b0] sm:$0xff]
                  %1309 = vst [vmem:[%s997 + $0x26c] sm:$0xff] %v1308
                  %v1310 = vld [vmem:[%s996 + $0x9c0] sm:$0xff]
                  %1311 = vst [vmem:[%s997 + $0x270] sm:$0xff] %v1310
                  %v1312 = vld [vmem:[%s996 + $0x9d0] sm:$0xff]
                  %1313 = vst [vmem:[%s997 + $0x274] sm:$0xff] %v1312
                  %v1314 = vld [vmem:[%s996 + $0x9e0] sm:$0xff]
                  %1315 = vst [vmem:[%s997 + $0x278] sm:$0xff] %v1314
                  %v1316 = vld [vmem:[%s996 + $0x9f0] sm:$0xff]
                  %1317 = vst [vmem:[%s997 + $0x27c] sm:$0xff] %v1316
                  %v1318 = vld [vmem:[%s996 + $0xa00] sm:$0xff]
                  %1319 = vst [vmem:[%s997 + $0x280] sm:$0xff] %v1318
                  %v1320 = vld [vmem:[%s996 + $0xa10] sm:$0xff]
                  %1321 = vst [vmem:[%s997 + $0x284] sm:$0xff] %v1320
                  %v1322 = vld [vmem:[%s996 + $0xa20] sm:$0xff]
                  %1323 = vst [vmem:[%s997 + $0x288] sm:$0xff] %v1322
                  %v1324 = vld [vmem:[%s996 + $0xa30] sm:$0xff]
                  %1325 = vst [vmem:[%s997 + $0x28c] sm:$0xff] %v1324
                  %v1326 = vld [vmem:[%s996 + $0xa40] sm:$0xff]
                  %1327 = vst [vmem:[%s997 + $0x290] sm:$0xff] %v1326
                  %v1328 = vld [vmem:[%s996 + $0xa50] sm:$0xff]
                  %1329 = vst [vmem:[%s997 + $0x294] sm:$0xff] %v1328
                  %v1330 = vld [vmem:[%s996 + $0xa60] sm:$0xff]
                  %1331 = vst [vmem:[%s997 + $0x298] sm:$0xff] %v1330
                  %v1332 = vld [vmem:[%s996 + $0xa70] sm:$0xff]
                  %1333 = vst [vmem:[%s997 + $0x29c] sm:$0xff] %v1332
                  %v1334 = vld [vmem:[%s996 + $0xa80] sm:$0xff]
                  %1335 = vst [vmem:[%s997 + $0x2a0] sm:$0xff] %v1334
                  %v1336 = vld [vmem:[%s996 + $0xa90] sm:$0xff]
                  %1337 = vst [vmem:[%s997 + $0x2a4] sm:$0xff] %v1336
                  %v1338 = vld [vmem:[%s996 + $0xaa0] sm:$0xff]
                  %1339 = vst [vmem:[%s997 + $0x2a8] sm:$0xff] %v1338
                  %v1340 = vld [vmem:[%s996 + $0xab0] sm:$0xff]
                  %1341 = vst [vmem:[%s997 + $0x2ac] sm:$0xff] %v1340
                  %v1342 = vld [vmem:[%s996 + $0xac0] sm:$0xff]
                  %1343 = vst [vmem:[%s997 + $0x2b0] sm:$0xff] %v1342
                  %v1344 = vld [vmem:[%s996 + $0xad0] sm:$0xff]
                  %1345 = vst [vmem:[%s997 + $0x2b4] sm:$0xff] %v1344
                  %v1346 = vld [vmem:[%s996 + $0xae0] sm:$0xff]
                  %1347 = vst [vmem:[%s997 + $0x2b8] sm:$0xff] %v1346
                  %v1348 = vld [vmem:[%s996 + $0xaf0] sm:$0xff]
                  %1349 = vst [vmem:[%s997 + $0x2bc] sm:$0xff] %v1348
                  %v1350 = vld [vmem:[%s996 + $0xb00] sm:$0xff]
                  %1351 = vst [vmem:[%s997 + $0x2c0] sm:$0xff] %v1350
                  %v1352 = vld [vmem:[%s996 + $0xb10] sm:$0xff]
                  %1353 = vst [vmem:[%s997 + $0x2c4] sm:$0xff] %v1352
                  %v1354 = vld [vmem:[%s996 + $0xb20] sm:$0xff]
                  %1355 = vst [vmem:[%s997 + $0x2c8] sm:$0xff] %v1354
                  %v1356 = vld [vmem:[%s996 + $0xb30] sm:$0xff]
                  %1357 = vst [vmem:[%s997 + $0x2cc] sm:$0xff] %v1356
                  %v1358 = vld [vmem:[%s996 + $0xb40] sm:$0xff]
                  %1359 = vst [vmem:[%s997 + $0x2d0] sm:$0xff] %v1358
                  %v1360 = vld [vmem:[%s996 + $0xb50] sm:$0xff]
                  %1361 = vst [vmem:[%s997 + $0x2d4] sm:$0xff] %v1360
                  %v1362 = vld [vmem:[%s996 + $0xb60] sm:$0xff]
                  %1363 = vst [vmem:[%s997 + $0x2d8] sm:$0xff] %v1362
                  %v1364 = vld [vmem:[%s996 + $0xb70] sm:$0xff]
                  %1365 = vst [vmem:[%s997 + $0x2dc] sm:$0xff] %v1364
                  %v1366 = vld [vmem:[%s996 + $0xb80] sm:$0xff]
                  %1367 = vst [vmem:[%s997 + $0x2e0] sm:$0xff] %v1366
                  %v1368 = vld [vmem:[%s996 + $0xb90] sm:$0xff]
                  %1369 = vst [vmem:[%s997 + $0x2e4] sm:$0xff] %v1368
                  %v1370 = vld [vmem:[%s996 + $0xba0] sm:$0xff]
                  %1371 = vst [vmem:[%s997 + $0x2e8] sm:$0xff] %v1370
                  %v1372 = vld [vmem:[%s996 + $0xbb0] sm:$0xff]
                  %1373 = vst [vmem:[%s997 + $0x2ec] sm:$0xff] %v1372
                  %v1374 = vld [vmem:[%s996 + $0xbc0] sm:$0xff]
                  %1375 = vst [vmem:[%s997 + $0x2f0] sm:$0xff] %v1374
                  %v1376 = vld [vmem:[%s996 + $0xbd0] sm:$0xff]
                  %1377 = vst [vmem:[%s997 + $0x2f4] sm:$0xff] %v1376
                  %v1378 = vld [vmem:[%s996 + $0xbe0] sm:$0xff]
                  %1379 = vst [vmem:[%s997 + $0x2f8] sm:$0xff] %v1378
                  %v1380 = vld [vmem:[%s996 + $0xbf0] sm:$0xff]
                  %1381 = vst [vmem:[%s997 + $0x2fc] sm:$0xff] %v1380
                  %v1382 = vld [vmem:[%s996 + $0xc00] sm:$0xff]
                  %1383 = vst [vmem:[%s997 + $0x300] sm:$0xff] %v1382
                  %v1384 = vld [vmem:[%s996 + $0xc10] sm:$0xff]
                  %1385 = vst [vmem:[%s997 + $0x304] sm:$0xff] %v1384
                  %v1386 = vld [vmem:[%s996 + $0xc20] sm:$0xff]
                  %1387 = vst [vmem:[%s997 + $0x308] sm:$0xff] %v1386
                  %v1388 = vld [vmem:[%s996 + $0xc30] sm:$0xff]
                  %1389 = vst [vmem:[%s997 + $0x30c] sm:$0xff] %v1388
                  %v1390 = vld [vmem:[%s996 + $0xc40] sm:$0xff]
                  %1391 = vst [vmem:[%s997 + $0x310] sm:$0xff] %v1390
                  %v1392 = vld [vmem:[%s996 + $0xc50] sm:$0xff]
                  %1393 = vst [vmem:[%s997 + $0x314] sm:$0xff] %v1392
                  %v1394 = vld [vmem:[%s996 + $0xc60] sm:$0xff]
                  %1395 = vst [vmem:[%s997 + $0x318] sm:$0xff] %v1394
                  %v1396 = vld [vmem:[%s996 + $0xc70] sm:$0xff]
                  %1397 = vst [vmem:[%s997 + $0x31c] sm:$0xff] %v1396
                  %v1398 = vld [vmem:[%s996 + $0xc80] sm:$0xff]
                  %1399 = vst [vmem:[%s997 + $0x320] sm:$0xff] %v1398
                  %v1400 = vld [vmem:[%s996 + $0xc90] sm:$0xff]
                  %1401 = vst [vmem:[%s997 + $0x324] sm:$0xff] %v1400
                  %v1402 = vld [vmem:[%s996 + $0xca0] sm:$0xff]
                  %1403 = vst [vmem:[%s997 + $0x328] sm:$0xff] %v1402
                  %v1404 = vld [vmem:[%s996 + $0xcb0] sm:$0xff]
                  %1405 = vst [vmem:[%s997 + $0x32c] sm:$0xff] %v1404
                  %v1406 = vld [vmem:[%s996 + $0xcc0] sm:$0xff]
                  %1407 = vst [vmem:[%s997 + $0x330] sm:$0xff] %v1406
                  %v1408 = vld [vmem:[%s996 + $0xcd0] sm:$0xff]
                  %1409 = vst [vmem:[%s997 + $0x334] sm:$0xff] %v1408
                  %v1410 = vld [vmem:[%s996 + $0xce0] sm:$0xff]
                  %1411 = vst [vmem:[%s997 + $0x338] sm:$0xff] %v1410
                  %v1412 = vld [vmem:[%s996 + $0xcf0] sm:$0xff]
                  %1413 = vst [vmem:[%s997 + $0x33c] sm:$0xff] %v1412
                  %v1414 = vld [vmem:[%s996 + $0xd00] sm:$0xff]
                  %1415 = vst [vmem:[%s997 + $0x340] sm:$0xff] %v1414
                  %v1416 = vld [vmem:[%s996 + $0xd10] sm:$0xff]
                  %1417 = vst [vmem:[%s997 + $0x344] sm:$0xff] %v1416
                  %v1418 = vld [vmem:[%s996 + $0xd20] sm:$0xff]
                  %1419 = vst [vmem:[%s997 + $0x348] sm:$0xff] %v1418
                  %v1420 = vld [vmem:[%s996 + $0xd30] sm:$0xff]
                  %1421 = vst [vmem:[%s997 + $0x34c] sm:$0xff] %v1420
                  %v1422 = vld [vmem:[%s996 + $0xd40] sm:$0xff]
                  %1423 = vst [vmem:[%s997 + $0x350] sm:$0xff] %v1422
                  %v1424 = vld [vmem:[%s996 + $0xd50] sm:$0xff]
                  %1425 = vst [vmem:[%s997 + $0x354] sm:$0xff] %v1424
                  %v1426 = vld [vmem:[%s996 + $0xd60] sm:$0xff]
                  %1427 = vst [vmem:[%s997 + $0x358] sm:$0xff] %v1426
                  %v1428 = vld [vmem:[%s996 + $0xd70] sm:$0xff]
                  %1429 = vst [vmem:[%s997 + $0x35c] sm:$0xff] %v1428
                  %v1430 = vld [vmem:[%s996 + $0xd80] sm:$0xff]
                  %1431 = vst [vmem:[%s997 + $0x360] sm:$0xff] %v1430
                  %v1432 = vld [vmem:[%s996 + $0xd90] sm:$0xff]
                  %1433 = vst [vmem:[%s997 + $0x364] sm:$0xff] %v1432
                  %v1434 = vld [vmem:[%s996 + $0xda0] sm:$0xff]
                  %1435 = vst [vmem:[%s997 + $0x368] sm:$0xff] %v1434
                  %v1436 = vld [vmem:[%s996 + $0xdb0] sm:$0xff]
                  %1437 = vst [vmem:[%s997 + $0x36c] sm:$0xff] %v1436
                  %v1438 = vld [vmem:[%s996 + $0xdc0] sm:$0xff]
                  %1439 = vst [vmem:[%s997 + $0x370] sm:$0xff] %v1438
                  %v1440 = vld [vmem:[%s996 + $0xdd0] sm:$0xff]
                  %1441 = vst [vmem:[%s997 + $0x374] sm:$0xff] %v1440
                  %v1442 = vld [vmem:[%s996 + $0xde0] sm:$0xff]
                  %1443 = vst [vmem:[%s997 + $0x378] sm:$0xff] %v1442
                  %v1444 = vld [vmem:[%s996 + $0xdf0] sm:$0xff]
                  %1445 = vst [vmem:[%s997 + $0x37c] sm:$0xff] %v1444
                  %v1446 = vld [vmem:[%s996 + $0xe00] sm:$0xff]
                  %1447 = vst [vmem:[%s997 + $0x380] sm:$0xff] %v1446
                  %v1448 = vld [vmem:[%s996 + $0xe10] sm:$0xff]
                  %1449 = vst [vmem:[%s997 + $0x384] sm:$0xff] %v1448
                  %v1450 = vld [vmem:[%s996 + $0xe20] sm:$0xff]
                  %1451 = vst [vmem:[%s997 + $0x388] sm:$0xff] %v1450
                  %v1452 = vld [vmem:[%s996 + $0xe30] sm:$0xff]
                  %1453 = vst [vmem:[%s997 + $0x38c] sm:$0xff] %v1452
                  %v1454 = vld [vmem:[%s996 + $0xe40] sm:$0xff]
                  %1455 = vst [vmem:[%s997 + $0x390] sm:$0xff] %v1454
                  %v1456 = vld [vmem:[%s996 + $0xe50] sm:$0xff]
                  %1457 = vst [vmem:[%s997 + $0x394] sm:$0xff] %v1456
                  %v1458 = vld [vmem:[%s996 + $0xe60] sm:$0xff]
                  %1459 = vst [vmem:[%s997 + $0x398] sm:$0xff] %v1458
                  %v1460 = vld [vmem:[%s996 + $0xe70] sm:$0xff]
                  %1461 = vst [vmem:[%s997 + $0x39c] sm:$0xff] %v1460
                  %v1462 = vld [vmem:[%s996 + $0xe80] sm:$0xff]
                  %1463 = vst [vmem:[%s997 + $0x3a0] sm:$0xff] %v1462
                  %v1464 = vld [vmem:[%s996 + $0xe90] sm:$0xff]
                  %1465 = vst [vmem:[%s997 + $0x3a4] sm:$0xff] %v1464
                  %v1466 = vld [vmem:[%s996 + $0xea0] sm:$0xff]
                  %1467 = vst [vmem:[%s997 + $0x3a8] sm:$0xff] %v1466
                  %v1468 = vld [vmem:[%s996 + $0xeb0] sm:$0xff]
                  %1469 = vst [vmem:[%s997 + $0x3ac] sm:$0xff] %v1468
                  %v1470 = vld [vmem:[%s996 + $0xec0] sm:$0xff]
                  %1471 = vst [vmem:[%s997 + $0x3b0] sm:$0xff] %v1470
                  %v1472 = vld [vmem:[%s996 + $0xed0] sm:$0xff]
                  %1473 = vst [vmem:[%s997 + $0x3b4] sm:$0xff] %v1472
                  %v1474 = vld [vmem:[%s996 + $0xee0] sm:$0xff]
                  %1475 = vst [vmem:[%s997 + $0x3b8] sm:$0xff] %v1474
                  %v1476 = vld [vmem:[%s996 + $0xef0] sm:$0xff]
                  %1477 = vst [vmem:[%s997 + $0x3bc] sm:$0xff] %v1476
                  %v1478 = vld [vmem:[%s996 + $0xf00] sm:$0xff]
                  %1479 = vst [vmem:[%s997 + $0x3c0] sm:$0xff] %v1478
                  %v1480 = vld [vmem:[%s996 + $0xf10] sm:$0xff]
                  %1481 = vst [vmem:[%s997 + $0x3c4] sm:$0xff] %v1480
                  %v1482 = vld [vmem:[%s996 + $0xf20] sm:$0xff]
                  %1483 = vst [vmem:[%s997 + $0x3c8] sm:$0xff] %v1482
                  %v1484 = vld [vmem:[%s996 + $0xf30] sm:$0xff]
                  %1485 = vst [vmem:[%s997 + $0x3cc] sm:$0xff] %v1484
                  %v1486 = vld [vmem:[%s996 + $0xf40] sm:$0xff]
                  %1487 = vst [vmem:[%s997 + $0x3d0] sm:$0xff] %v1486
                  %v1488 = vld [vmem:[%s996 + $0xf50] sm:$0xff]
                  %1489 = vst [vmem:[%s997 + $0x3d4] sm:$0xff] %v1488
                  %v1490 = vld [vmem:[%s996 + $0xf60] sm:$0xff]
                  %1491 = vst [vmem:[%s997 + $0x3d8] sm:$0xff] %v1490
                  %v1492 = vld [vmem:[%s996 + $0xf70] sm:$0xff]
                  %1493 = vst [vmem:[%s997 + $0x3dc] sm:$0xff] %v1492
                  %v1494 = vld [vmem:[%s996 + $0xf80] sm:$0xff]
                  %1495 = vst [vmem:[%s997 + $0x3e0] sm:$0xff] %v1494
                  %v1496 = vld [vmem:[%s996 + $0xf90] sm:$0xff]
                  %1497 = vst [vmem:[%s997 + $0x3e4] sm:$0xff] %v1496
                  %v1498 = vld [vmem:[%s996 + $0xfa0] sm:$0xff]
                  %1499 = vst [vmem:[%s997 + $0x3e8] sm:$0xff] %v1498
                  %v1500 = vld [vmem:[%s996 + $0xfb0] sm:$0xff]
                  %1501 = vst [vmem:[%s997 + $0x3ec] sm:$0xff] %v1500
                  %v1502 = vld [vmem:[%s996 + $0xfc0] sm:$0xff]
                  %1503 = vst [vmem:[%s997 + $0x3f0] sm:$0xff] %v1502
                  %v1504 = vld [vmem:[%s996 + $0xfd0] sm:$0xff]
                  %1505 = vst [vmem:[%s997 + $0x3f4] sm:$0xff] %v1504
                  %v1506 = vld [vmem:[%s996 + $0xfe0] sm:$0xff]
                  %1507 = vst [vmem:[%s997 + $0x3f8] sm:$0xff] %v1506
                  %v1508 = vld [vmem:[%s996 + $0xff0] sm:$0xff]
                  %1509 = vst [vmem:[%s997 + $0x3fc] sm:$0xff] %v1508
                  %v1510 = vld [vmem:[%s996 + $0x1000] sm:$0xff]
                  %1511 = vst [vmem:[%s997 + $0x400] sm:$0xff] %v1510
                  %v1512 = vld [vmem:[%s996 + $0x1010] sm:$0xff]
                  %1513 = vst [vmem:[%s997 + $0x404] sm:$0xff] %v1512
                  %v1514 = vld [vmem:[%s996 + $0x1020] sm:$0xff]
                  %1515 = vst [vmem:[%s997 + $0x408] sm:$0xff] %v1514
                  %v1516 = vld [vmem:[%s996 + $0x1030] sm:$0xff]
                  %1517 = vst [vmem:[%s997 + $0x40c] sm:$0xff] %v1516
                  %v1518 = vld [vmem:[%s996 + $0x1040] sm:$0xff]
                  %1519 = vst [vmem:[%s997 + $0x410] sm:$0xff] %v1518
                  %v1520 = vld [vmem:[%s996 + $0x1050] sm:$0xff]
                  %1521 = vst [vmem:[%s997 + $0x414] sm:$0xff] %v1520
                  %v1522 = vld [vmem:[%s996 + $0x1060] sm:$0xff]
                  %1523 = vst [vmem:[%s997 + $0x418] sm:$0xff] %v1522
                  %v1524 = vld [vmem:[%s996 + $0x1070] sm:$0xff]
                  %1525 = vst [vmem:[%s997 + $0x41c] sm:$0xff] %v1524
                  %v1526 = vld [vmem:[%s996 + $0x1080] sm:$0xff]
                  %1527 = vst [vmem:[%s997 + $0x420] sm:$0xff] %v1526
                  %v1528 = vld [vmem:[%s996 + $0x1090] sm:$0xff]
                  %1529 = vst [vmem:[%s997 + $0x424] sm:$0xff] %v1528
                  %v1530 = vld [vmem:[%s996 + $0x10a0] sm:$0xff]
                  %1531 = vst [vmem:[%s997 + $0x428] sm:$0xff] %v1530
                  %v1532 = vld [vmem:[%s996 + $0x10b0] sm:$0xff]
                  %1533 = vst [vmem:[%s997 + $0x42c] sm:$0xff] %v1532
                  %v1534 = vld [vmem:[%s996 + $0x10c0] sm:$0xff]
                  %1535 = vst [vmem:[%s997 + $0x430] sm:$0xff] %v1534
                  %v1536 = vld [vmem:[%s996 + $0x10d0] sm:$0xff]
                  %1537 = vst [vmem:[%s997 + $0x434] sm:$0xff] %v1536
                  %v1538 = vld [vmem:[%s996 + $0x10e0] sm:$0xff]
                  %1539 = vst [vmem:[%s997 + $0x438] sm:$0xff] %v1538
                  %v1540 = vld [vmem:[%s996 + $0x10f0] sm:$0xff]
                  %1541 = vst [vmem:[%s997 + $0x43c] sm:$0xff] %v1540
                  %v1542 = vld [vmem:[%s996 + $0x1100] sm:$0xff]
                  %1543 = vst [vmem:[%s997 + $0x440] sm:$0xff] %v1542
                  %v1544 = vld [vmem:[%s996 + $0x1110] sm:$0xff]
                  %1545 = vst [vmem:[%s997 + $0x444] sm:$0xff] %v1544
                  %v1546 = vld [vmem:[%s996 + $0x1120] sm:$0xff]
                  %1547 = vst [vmem:[%s997 + $0x448] sm:$0xff] %v1546
                  %v1548 = vld [vmem:[%s996 + $0x1130] sm:$0xff]
                  %1549 = vst [vmem:[%s997 + $0x44c] sm:$0xff] %v1548
                  %v1550 = vld [vmem:[%s996 + $0x1140] sm:$0xff]
                  %1551 = vst [vmem:[%s997 + $0x450] sm:$0xff] %v1550
                  %v1552 = vld [vmem:[%s996 + $0x1150] sm:$0xff]
                  %1553 = vst [vmem:[%s997 + $0x454] sm:$0xff] %v1552
                  %v1554 = vld [vmem:[%s996 + $0x1160] sm:$0xff]
                  %1555 = vst [vmem:[%s997 + $0x458] sm:$0xff] %v1554
                  %v1556 = vld [vmem:[%s996 + $0x1170] sm:$0xff]
                  %1557 = vst [vmem:[%s997 + $0x45c] sm:$0xff] %v1556
                  %v1558 = vld [vmem:[%s996 + $0x1180] sm:$0xff]
                  %1559 = vst [vmem:[%s997 + $0x460] sm:$0xff] %v1558
                  %v1560 = vld [vmem:[%s996 + $0x1190] sm:$0xff]
                  %1561 = vst [vmem:[%s997 + $0x464] sm:$0xff] %v1560
                  %v1562 = vld [vmem:[%s996 + $0x11a0] sm:$0xff]
                  %1563 = vst [vmem:[%s997 + $0x468] sm:$0xff] %v1562
                  %v1564 = vld [vmem:[%s996 + $0x11b0] sm:$0xff]
                  %1565 = vst [vmem:[%s997 + $0x46c] sm:$0xff] %v1564
                  %v1566 = vld [vmem:[%s996 + $0x11c0] sm:$0xff]
                  %1567 = vst [vmem:[%s997 + $0x470] sm:$0xff] %v1566
                  %v1568 = vld [vmem:[%s996 + $0x11d0] sm:$0xff]
                  %1569 = vst [vmem:[%s997 + $0x474] sm:$0xff] %v1568
                  %v1570 = vld [vmem:[%s996 + $0x11e0] sm:$0xff]
                  %1571 = vst [vmem:[%s997 + $0x478] sm:$0xff] %v1570
                  %v1572 = vld [vmem:[%s996 + $0x11f0] sm:$0xff]
                  %1573 = vst [vmem:[%s997 + $0x47c] sm:$0xff] %v1572
                  %v1574 = vld [vmem:[%s996 + $0x1200] sm:$0xff]
                  %1575 = vst [vmem:[%s997 + $0x480] sm:$0xff] %v1574
                  %v1576 = vld [vmem:[%s996 + $0x1210] sm:$0xff]
                  %1577 = vst [vmem:[%s997 + $0x484] sm:$0xff] %v1576
                  %v1578 = vld [vmem:[%s996 + $0x1220] sm:$0xff]
                  %1579 = vst [vmem:[%s997 + $0x488] sm:$0xff] %v1578
                  %v1580 = vld [vmem:[%s996 + $0x1230] sm:$0xff]
                  %1581 = vst [vmem:[%s997 + $0x48c] sm:$0xff] %v1580
                  %v1582 = vld [vmem:[%s996 + $0x1240] sm:$0xff]
                  %1583 = vst [vmem:[%s997 + $0x490] sm:$0xff] %v1582
                  %v1584 = vld [vmem:[%s996 + $0x1250] sm:$0xff]
                  %1585 = vst [vmem:[%s997 + $0x494] sm:$0xff] %v1584
                  %v1586 = vld [vmem:[%s996 + $0x1260] sm:$0xff]
                  %1587 = vst [vmem:[%s997 + $0x498] sm:$0xff] %v1586
                  %v1588 = vld [vmem:[%s996 + $0x1270] sm:$0xff]
                  %1589 = vst [vmem:[%s997 + $0x49c] sm:$0xff] %v1588
                  %v1590 = vld [vmem:[%s996 + $0x1280] sm:$0xff]
                  %1591 = vst [vmem:[%s997 + $0x4a0] sm:$0xff] %v1590
                  %v1592 = vld [vmem:[%s996 + $0x1290] sm:$0xff]
                  %1593 = vst [vmem:[%s997 + $0x4a4] sm:$0xff] %v1592
                  %v1594 = vld [vmem:[%s996 + $0x12a0] sm:$0xff]
                  %1595 = vst [vmem:[%s997 + $0x4a8] sm:$0xff] %v1594
                  %v1596 = vld [vmem:[%s996 + $0x12b0] sm:$0xff]
                  %1597 = vst [vmem:[%s997 + $0x4ac] sm:$0xff] %v1596
                  %v1598 = vld [vmem:[%s996 + $0x12c0] sm:$0xff]
                  %1599 = vst [vmem:[%s997 + $0x4b0] sm:$0xff] %v1598
                  %v1600 = vld [vmem:[%s996 + $0x12d0] sm:$0xff]
                  %1601 = vst [vmem:[%s997 + $0x4b4] sm:$0xff] %v1600
                  %v1602 = vld [vmem:[%s996 + $0x12e0] sm:$0xff]
                  %1603 = vst [vmem:[%s997 + $0x4b8] sm:$0xff] %v1602
                  %v1604 = vld [vmem:[%s996 + $0x12f0] sm:$0xff]
                  %1605 = vst [vmem:[%s997 + $0x4bc] sm:$0xff] %v1604
                  %v1606 = vld [vmem:[%s996 + $0x1300] sm:$0xff]
                  %1607 = vst [vmem:[%s997 + $0x4c0] sm:$0xff] %v1606
                  %v1608 = vld [vmem:[%s996 + $0x1310] sm:$0xff]
                  %1609 = vst [vmem:[%s997 + $0x4c4] sm:$0xff] %v1608
                  %v1610 = vld [vmem:[%s996 + $0x1320] sm:$0xff]
                  %1611 = vst [vmem:[%s997 + $0x4c8] sm:$0xff] %v1610
                  %v1612 = vld [vmem:[%s996 + $0x1330] sm:$0xff]
                  %1613 = vst [vmem:[%s997 + $0x4cc] sm:$0xff] %v1612
                  %v1614 = vld [vmem:[%s996 + $0x1340] sm:$0xff]
                  %1615 = vst [vmem:[%s997 + $0x4d0] sm:$0xff] %v1614
                  %v1616 = vld [vmem:[%s996 + $0x1350] sm:$0xff]
                  %1617 = vst [vmem:[%s997 + $0x4d4] sm:$0xff] %v1616
                  %v1618 = vld [vmem:[%s996 + $0x1360] sm:$0xff]
                  %1619 = vst [vmem:[%s997 + $0x4d8] sm:$0xff] %v1618
                  %v1620 = vld [vmem:[%s996 + $0x1370] sm:$0xff]
                  %1621 = vst [vmem:[%s997 + $0x4dc] sm:$0xff] %v1620
                  %v1622 = vld [vmem:[%s996 + $0x1380] sm:$0xff]
                  %1623 = vst [vmem:[%s997 + $0x4e0] sm:$0xff] %v1622
                  %v1624 = vld [vmem:[%s996 + $0x1390] sm:$0xff]
                  %1625 = vst [vmem:[%s997 + $0x4e4] sm:$0xff] %v1624
                  %v1626 = vld [vmem:[%s996 + $0x13a0] sm:$0xff]
                  %1627 = vst [vmem:[%s997 + $0x4e8] sm:$0xff] %v1626
                  %v1628 = vld [vmem:[%s996 + $0x13b0] sm:$0xff]
                  %1629 = vst [vmem:[%s997 + $0x4ec] sm:$0xff] %v1628
                  %v1630 = vld [vmem:[%s996 + $0x13c0] sm:$0xff]
                  %1631 = vst [vmem:[%s997 + $0x4f0] sm:$0xff] %v1630
                  %v1632 = vld [vmem:[%s996 + $0x13d0] sm:$0xff]
                  %1633 = vst [vmem:[%s997 + $0x4f4] sm:$0xff] %v1632
                  %v1634 = vld [vmem:[%s996 + $0x13e0] sm:$0xff]
                  %1635 = vst [vmem:[%s997 + $0x4f8] sm:$0xff] %v1634
                  %v1636 = vld [vmem:[%s996 + $0x13f0] sm:$0xff]
                  %1637 = vst [vmem:[%s997 + $0x4fc] sm:$0xff] %v1636
                  %v1638 = vld [vmem:[%s996 + $0x1400] sm:$0xff]
                  %1639 = vst [vmem:[%s997 + $0x500] sm:$0xff] %v1638
                  %v1640 = vld [vmem:[%s996 + $0x1410] sm:$0xff]
                  %1641 = vst [vmem:[%s997 + $0x504] sm:$0xff] %v1640
                  %v1642 = vld [vmem:[%s996 + $0x1420] sm:$0xff]
                  %1643 = vst [vmem:[%s997 + $0x508] sm:$0xff] %v1642
                  %v1644 = vld [vmem:[%s996 + $0x1430] sm:$0xff]
                  %1645 = vst [vmem:[%s997 + $0x50c] sm:$0xff] %v1644
                  %v1646 = vld [vmem:[%s996 + $0x1440] sm:$0xff]
                  %1647 = vst [vmem:[%s997 + $0x510] sm:$0xff] %v1646
                  %v1648 = vld [vmem:[%s996 + $0x1450] sm:$0xff]
                  %1649 = vst [vmem:[%s997 + $0x514] sm:$0xff] %v1648
                  %v1650 = vld [vmem:[%s996 + $0x1460] sm:$0xff]
                  %1651 = vst [vmem:[%s997 + $0x518] sm:$0xff] %v1650
                  %v1652 = vld [vmem:[%s996 + $0x1470] sm:$0xff]
                  %1653 = vst [vmem:[%s997 + $0x51c] sm:$0xff] %v1652
                  %v1654 = vld [vmem:[%s996 + $0x1480] sm:$0xff]
                  %1655 = vst [vmem:[%s997 + $0x520] sm:$0xff] %v1654
                  %v1656 = vld [vmem:[%s996 + $0x1490] sm:$0xff]
                  %1657 = vst [vmem:[%s997 + $0x524] sm:$0xff] %v1656
                  %v1658 = vld [vmem:[%s996 + $0x14a0] sm:$0xff]
                  %1659 = vst [vmem:[%s997 + $0x528] sm:$0xff] %v1658
                  %v1660 = vld [vmem:[%s996 + $0x14b0] sm:$0xff]
                  %1661 = vst [vmem:[%s997 + $0x52c] sm:$0xff] %v1660
                  %v1662 = vld [vmem:[%s996 + $0x14c0] sm:$0xff]
                  %1663 = vst [vmem:[%s997 + $0x530] sm:$0xff] %v1662
                  %v1664 = vld [vmem:[%s996 + $0x14d0] sm:$0xff]
                  %1665 = vst [vmem:[%s997 + $0x534] sm:$0xff] %v1664
                  %v1666 = vld [vmem:[%s996 + $0x14e0] sm:$0xff]
                  %1667 = vst [vmem:[%s997 + $0x538] sm:$0xff] %v1666
                  %v1668 = vld [vmem:[%s996 + $0x14f0] sm:$0xff]
                  %1669 = vst [vmem:[%s997 + $0x53c] sm:$0xff] %v1668
                  %v1670 = vld [vmem:[%s996 + $0x1500] sm:$0xff]
                  %1671 = vst [vmem:[%s997 + $0x540] sm:$0xff] %v1670
                  %v1672 = vld [vmem:[%s996 + $0x1510] sm:$0xff]
                  %1673 = vst [vmem:[%s997 + $0x544] sm:$0xff] %v1672
                  %v1674 = vld [vmem:[%s996 + $0x1520] sm:$0xff]
                  %1675 = vst [vmem:[%s997 + $0x548] sm:$0xff] %v1674
                  %v1676 = vld [vmem:[%s996 + $0x1530] sm:$0xff]
                  %1677 = vst [vmem:[%s997 + $0x54c] sm:$0xff] %v1676
                  %v1678 = vld [vmem:[%s996 + $0x1540] sm:$0xff]
                  %1679 = vst [vmem:[%s997 + $0x550] sm:$0xff] %v1678
                  %v1680 = vld [vmem:[%s996 + $0x1550] sm:$0xff]
                  %1681 = vst [vmem:[%s997 + $0x554] sm:$0xff] %v1680
                  %v1682 = vld [vmem:[%s996 + $0x1560] sm:$0xff]
                  %1683 = vst [vmem:[%s997 + $0x558] sm:$0xff] %v1682
                  %v1684 = vld [vmem:[%s996 + $0x1570] sm:$0xff]
                  %1685 = vst [vmem:[%s997 + $0x55c] sm:$0xff] %v1684
                  %v1686 = vld [vmem:[%s996 + $0x1580] sm:$0xff]
                  %1687 = vst [vmem:[%s997 + $0x560] sm:$0xff] %v1686
                  %v1688 = vld [vmem:[%s996 + $0x1590] sm:$0xff]
                  %1689 = vst [vmem:[%s997 + $0x564] sm:$0xff] %v1688
                  %v1690 = vld [vmem:[%s996 + $0x15a0] sm:$0xff]
                  %1691 = vst [vmem:[%s997 + $0x568] sm:$0xff] %v1690
                  %v1692 = vld [vmem:[%s996 + $0x15b0] sm:$0xff]
                  %1693 = vst [vmem:[%s997 + $0x56c] sm:$0xff] %v1692
                  %v1694 = vld [vmem:[%s996 + $0x15c0] sm:$0xff]
                  %1695 = vst [vmem:[%s997 + $0x570] sm:$0xff] %v1694
                  %v1696 = vld [vmem:[%s996 + $0x15d0] sm:$0xff]
                  %1697 = vst [vmem:[%s997 + $0x574] sm:$0xff] %v1696
                  %v1698 = vld [vmem:[%s996 + $0x15e0] sm:$0xff]
                  %1699 = vst [vmem:[%s997 + $0x578] sm:$0xff] %v1698
                  %v1700 = vld [vmem:[%s996 + $0x15f0] sm:$0xff]
                  %1701 = vst [vmem:[%s997 + $0x57c] sm:$0xff] %v1700
                  %v1702 = vld [vmem:[%s996 + $0x1600] sm:$0xff]
                  %1703 = vst [vmem:[%s997 + $0x580] sm:$0xff] %v1702
                  %v1704 = vld [vmem:[%s996 + $0x1610] sm:$0xff]
                  %1705 = vst [vmem:[%s997 + $0x584] sm:$0xff] %v1704
                  %v1706 = vld [vmem:[%s996 + $0x1620] sm:$0xff]
                  %1707 = vst [vmem:[%s997 + $0x588] sm:$0xff] %v1706
                  %v1708 = vld [vmem:[%s996 + $0x1630] sm:$0xff]
                  %1709 = vst [vmem:[%s997 + $0x58c] sm:$0xff] %v1708
                  %v1710 = vld [vmem:[%s996 + $0x1640] sm:$0xff]
                  %1711 = vst [vmem:[%s997 + $0x590] sm:$0xff] %v1710
                  %v1712 = vld [vmem:[%s996 + $0x1650] sm:$0xff]
                  %1713 = vst [vmem:[%s997 + $0x594] sm:$0xff] %v1712
                  %v1714 = vld [vmem:[%s996 + $0x1660] sm:$0xff]
                  %1715 = vst [vmem:[%s997 + $0x598] sm:$0xff] %v1714
                  %v1716 = vld [vmem:[%s996 + $0x1670] sm:$0xff]
                  %1717 = vst [vmem:[%s997 + $0x59c] sm:$0xff] %v1716
                  %v1718 = vld [vmem:[%s996 + $0x1680] sm:$0xff]
                  %1719 = vst [vmem:[%s997 + $0x5a0] sm:$0xff] %v1718
                  %v1720 = vld [vmem:[%s996 + $0x1690] sm:$0xff]
                  %1721 = vst [vmem:[%s997 + $0x5a4] sm:$0xff] %v1720
                  %v1722 = vld [vmem:[%s996 + $0x16a0] sm:$0xff]
                  %1723 = vst [vmem:[%s997 + $0x5a8] sm:$0xff] %v1722
                  %v1724 = vld [vmem:[%s996 + $0x16b0] sm:$0xff]
                  %1725 = vst [vmem:[%s997 + $0x5ac] sm:$0xff] %v1724
                  %v1726 = vld [vmem:[%s996 + $0x16c0] sm:$0xff]
                  %1727 = vst [vmem:[%s997 + $0x5b0] sm:$0xff] %v1726
                  %v1728 = vld [vmem:[%s996 + $0x16d0] sm:$0xff]
                  %1729 = vst [vmem:[%s997 + $0x5b4] sm:$0xff] %v1728
                  %v1730 = vld [vmem:[%s996 + $0x16e0] sm:$0xff]
                  %1731 = vst [vmem:[%s997 + $0x5b8] sm:$0xff] %v1730
                  %v1732 = vld [vmem:[%s996 + $0x16f0] sm:$0xff]
                  %1733 = vst [vmem:[%s997 + $0x5bc] sm:$0xff] %v1732
                  %v1734 = vld [vmem:[%s996 + $0x1700] sm:$0xff]
                  %1735 = vst [vmem:[%s997 + $0x5c0] sm:$0xff] %v1734
                  %v1736 = vld [vmem:[%s996 + $0x1710] sm:$0xff]
                  %1737 = vst [vmem:[%s997 + $0x5c4] sm:$0xff] %v1736
                  %v1738 = vld [vmem:[%s996 + $0x1720] sm:$0xff]
                  %1739 = vst [vmem:[%s997 + $0x5c8] sm:$0xff] %v1738
                  %v1740 = vld [vmem:[%s996 + $0x1730] sm:$0xff]
                  %1741 = vst [vmem:[%s997 + $0x5cc] sm:$0xff] %v1740
                  %v1742 = vld [vmem:[%s996 + $0x1740] sm:$0xff]
                  %1743 = vst [vmem:[%s997 + $0x5d0] sm:$0xff] %v1742
                  %v1744 = vld [vmem:[%s996 + $0x1750] sm:$0xff]
                  %1745 = vst [vmem:[%s997 + $0x5d4] sm:$0xff] %v1744
                  %v1746 = vld [vmem:[%s996 + $0x1760] sm:$0xff]
                  %1747 = vst [vmem:[%s997 + $0x5d8] sm:$0xff] %v1746
                  %v1748 = vld [vmem:[%s996 + $0x1770] sm:$0xff]
                  %1749 = vst [vmem:[%s997 + $0x5dc] sm:$0xff] %v1748
                  %v1750 = vld [vmem:[%s996 + $0x1780] sm:$0xff]
                  %1751 = vst [vmem:[%s997 + $0x5e0] sm:$0xff] %v1750
                  %v1752 = vld [vmem:[%s996 + $0x1790] sm:$0xff]
                  %1753 = vst [vmem:[%s997 + $0x5e4] sm:$0xff] %v1752
                  %v1754 = vld [vmem:[%s996 + $0x17a0] sm:$0xff]
                  %1755 = vst [vmem:[%s997 + $0x5e8] sm:$0xff] %v1754
                  %v1756 = vld [vmem:[%s996 + $0x17b0] sm:$0xff]
                  %1757 = vst [vmem:[%s997 + $0x5ec] sm:$0xff] %v1756
                  %v1758 = vld [vmem:[%s996 + $0x17c0] sm:$0xff]
                  %1759 = vst [vmem:[%s997 + $0x5f0] sm:$0xff] %v1758
                  %v1760 = vld [vmem:[%s996 + $0x17d0] sm:$0xff]
                  %1761 = vst [vmem:[%s997 + $0x5f4] sm:$0xff] %v1760
                  %v1762 = vld [vmem:[%s996 + $0x17e0] sm:$0xff]
                  %1763 = vst [vmem:[%s997 + $0x5f8] sm:$0xff] %v1762
                  %v1764 = vld [vmem:[%s996 + $0x17f0] sm:$0xff]
                  %1765 = vst [vmem:[%s997 + $0x5fc] sm:$0xff] %v1764
                  %v1766 = vld [vmem:[%s996 + $0x1800] sm:$0xff]
                  %1767 = vst [vmem:[%s997 + $0x600] sm:$0xff] %v1766
                  %v1768 = vld [vmem:[%s996 + $0x1810] sm:$0xff]
                  %1769 = vst [vmem:[%s997 + $0x604] sm:$0xff] %v1768
                  %v1770 = vld [vmem:[%s996 + $0x1820] sm:$0xff]
                  %1771 = vst [vmem:[%s997 + $0x608] sm:$0xff] %v1770
                  %v1772 = vld [vmem:[%s996 + $0x1830] sm:$0xff]
                  %1773 = vst [vmem:[%s997 + $0x60c] sm:$0xff] %v1772
                  %v1774 = vld [vmem:[%s996 + $0x1840] sm:$0xff]
                  %1775 = vst [vmem:[%s997 + $0x610] sm:$0xff] %v1774
                  %v1776 = vld [vmem:[%s996 + $0x1850] sm:$0xff]
                  %1777 = vst [vmem:[%s997 + $0x614] sm:$0xff] %v1776
                  %v1778 = vld [vmem:[%s996 + $0x1860] sm:$0xff]
                  %1779 = vst [vmem:[%s997 + $0x618] sm:$0xff] %v1778
                  %v1780 = vld [vmem:[%s996 + $0x1870] sm:$0xff]
                  %1781 = vst [vmem:[%s997 + $0x61c] sm:$0xff] %v1780
                  %s1782 = sadd.s32 1, %s995
                  %p1783 = scmp.ge.s32.totalorder %s1782, 0
                  %s1784 = scalar_select %p1783, 0, %s1782
                  %s1785 = smul.u32 %s1784, 8
                  %s1786 = smul.u32 %s1784, 8
                  %s1787 = scalar_lea.vmem %s186, %s1785
                  %s1788 = scalar_lea.vmem %s184, %s1786 [#allocation2]
                $region56: #{forward.7} parent=50 // loop_footer
                  %s994 = sadd.s32 1, %s990
                $region57: #{forward.7} parent=50 // loop_footer_branch
                  %989 = sbr.rel target = $region53
                $region58: #{forward.7} parent=50 // loop_exit
                  _
              $region51: #{forward.7} parent=35 // pred_fallthru
                _
              // Predicated region
              $region59: #{forward.7} parent=35 // pred_check
                _
              $region60: #{forward.7} parent=35 // pred_check_branch
                %1790 = sbr.rel (0) target = $region62
              $region61: #{forward.7} parent=35 // pred_region
                loop: start=0, step=1, limit=0
                $region63: #{forward.7} parent=61 // loop_pre_header
                  _
                $region64: #{forward.7} parent=61 // loop_header
                  %s1792 = sphi 0, %s1796
                  %p1793 = scmp.ge.s32.totalorder %s1792, 0
                  %s1797 = sphi 0, %s2586
                  %s1798 = sphi %s186, %s2589
                  %s1799 = sphi %s184, %s2590
                $region65: #{forward.7} parent=61 // loop_header_branch
                  %1795 = sbr.rel (%p1793) target = $region69
                $region66: #{forward.7} parent=61 // loop_body
                  %v1800 = vld [vmem:[%s1798] sm:$0xff]
                  %1801 = vst [vmem:[%s1799] sm:$0xff] %v1800
                  %v1802 = vld [vmem:[%s1798 + $0x10] sm:$0xff]
                  %1803 = vst [vmem:[%s1799 + $0x4] sm:$0xff] %v1802
                  %v1804 = vld [vmem:[%s1798 + $0x20] sm:$0xff]
                  %1805 = vst [vmem:[%s1799 + $0x8] sm:$0xff] %v1804
                  %v1806 = vld [vmem:[%s1798 + $0x30] sm:$0xff]
                  %1807 = vst [vmem:[%s1799 + $0xc] sm:$0xff] %v1806
                  %v1808 = vld [vmem:[%s1798 + $0x40] sm:$0xff]
                  %1809 = vst [vmem:[%s1799 + $0x10] sm:$0xff] %v1808
                  %v1810 = vld [vmem:[%s1798 + $0x50] sm:$0xff]
                  %1811 = vst [vmem:[%s1799 + $0x14] sm:$0xff] %v1810
                  %v1812 = vld [vmem:[%s1798 + $0x60] sm:$0xff]
                  %1813 = vst [vmem:[%s1799 + $0x18] sm:$0xff] %v1812
                  %v1814 = vld [vmem:[%s1798 + $0x70] sm:$0xff]
                  %1815 = vst [vmem:[%s1799 + $0x1c] sm:$0xff] %v1814
                  %v1816 = vld [vmem:[%s1798 + $0x80] sm:$0xff]
                  %1817 = vst [vmem:[%s1799 + $0x20] sm:$0xff] %v1816
                  %v1818 = vld [vmem:[%s1798 + $0x90] sm:$0xff]
                  %1819 = vst [vmem:[%s1799 + $0x24] sm:$0xff] %v1818
                  %v1820 = vld [vmem:[%s1798 + $0xa0] sm:$0xff]
                  %1821 = vst [vmem:[%s1799 + $0x28] sm:$0xff] %v1820
                  %v1822 = vld [vmem:[%s1798 + $0xb0] sm:$0xff]
                  %1823 = vst [vmem:[%s1799 + $0x2c] sm:$0xff] %v1822
                  %v1824 = vld [vmem:[%s1798 + $0xc0] sm:$0xff]
                  %1825 = vst [vmem:[%s1799 + $0x30] sm:$0xff] %v1824
                  %v1826 = vld [vmem:[%s1798 + $0xd0] sm:$0xff]
                  %1827 = vst [vmem:[%s1799 + $0x34] sm:$0xff] %v1826
                  %v1828 = vld [vmem:[%s1798 + $0xe0] sm:$0xff]
                  %1829 = vst [vmem:[%s1799 + $0x38] sm:$0xff] %v1828
                  %v1830 = vld [vmem:[%s1798 + $0xf0] sm:$0xff]
                  %1831 = vst [vmem:[%s1799 + $0x3c] sm:$0xff] %v1830
                  %v1832 = vld [vmem:[%s1798 + $0x100] sm:$0xff]
                  %1833 = vst [vmem:[%s1799 + $0x40] sm:$0xff] %v1832
                  %v1834 = vld [vmem:[%s1798 + $0x110] sm:$0xff]
                  %1835 = vst [vmem:[%s1799 + $0x44] sm:$0xff] %v1834
                  %v1836 = vld [vmem:[%s1798 + $0x120] sm:$0xff]
                  %1837 = vst [vmem:[%s1799 + $0x48] sm:$0xff] %v1836
                  %v1838 = vld [vmem:[%s1798 + $0x130] sm:$0xff]
                  %1839 = vst [vmem:[%s1799 + $0x4c] sm:$0xff] %v1838
                  %v1840 = vld [vmem:[%s1798 + $0x140] sm:$0xff]
                  %1841 = vst [vmem:[%s1799 + $0x50] sm:$0xff] %v1840
                  %v1842 = vld [vmem:[%s1798 + $0x150] sm:$0xff]
                  %1843 = vst [vmem:[%s1799 + $0x54] sm:$0xff] %v1842
                  %v1844 = vld [vmem:[%s1798 + $0x160] sm:$0xff]
                  %1845 = vst [vmem:[%s1799 + $0x58] sm:$0xff] %v1844
                  %v1846 = vld [vmem:[%s1798 + $0x170] sm:$0xff]
                  %1847 = vst [vmem:[%s1799 + $0x5c] sm:$0xff] %v1846
                  %v1848 = vld [vmem:[%s1798 + $0x180] sm:$0xff]
                  %1849 = vst [vmem:[%s1799 + $0x60] sm:$0xff] %v1848
                  %v1850 = vld [vmem:[%s1798 + $0x190] sm:$0xff]
                  %1851 = vst [vmem:[%s1799 + $0x64] sm:$0xff] %v1850
                  %v1852 = vld [vmem:[%s1798 + $0x1a0] sm:$0xff]
                  %1853 = vst [vmem:[%s1799 + $0x68] sm:$0xff] %v1852
                  %v1854 = vld [vmem:[%s1798 + $0x1b0] sm:$0xff]
                  %1855 = vst [vmem:[%s1799 + $0x6c] sm:$0xff] %v1854
                  %v1856 = vld [vmem:[%s1798 + $0x1c0] sm:$0xff]
                  %1857 = vst [vmem:[%s1799 + $0x70] sm:$0xff] %v1856
                  %v1858 = vld [vmem:[%s1798 + $0x1d0] sm:$0xff]
                  %1859 = vst [vmem:[%s1799 + $0x74] sm:$0xff] %v1858
                  %v1860 = vld [vmem:[%s1798 + $0x1e0] sm:$0xff]
                  %1861 = vst [vmem:[%s1799 + $0x78] sm:$0xff] %v1860
                  %v1862 = vld [vmem:[%s1798 + $0x1f0] sm:$0xff]
                  %1863 = vst [vmem:[%s1799 + $0x7c] sm:$0xff] %v1862
                  %v1864 = vld [vmem:[%s1798 + $0x200] sm:$0xff]
                  %1865 = vst [vmem:[%s1799 + $0x80] sm:$0xff] %v1864
                  %v1866 = vld [vmem:[%s1798 + $0x210] sm:$0xff]
                  %1867 = vst [vmem:[%s1799 + $0x84] sm:$0xff] %v1866
                  %v1868 = vld [vmem:[%s1798 + $0x220] sm:$0xff]
                  %1869 = vst [vmem:[%s1799 + $0x88] sm:$0xff] %v1868
                  %v1870 = vld [vmem:[%s1798 + $0x230] sm:$0xff]
                  %1871 = vst [vmem:[%s1799 + $0x8c] sm:$0xff] %v1870
                  %v1872 = vld [vmem:[%s1798 + $0x240] sm:$0xff]
                  %1873 = vst [vmem:[%s1799 + $0x90] sm:$0xff] %v1872
                  %v1874 = vld [vmem:[%s1798 + $0x250] sm:$0xff]
                  %1875 = vst [vmem:[%s1799 + $0x94] sm:$0xff] %v1874
                  %v1876 = vld [vmem:[%s1798 + $0x260] sm:$0xff]
                  %1877 = vst [vmem:[%s1799 + $0x98] sm:$0xff] %v1876
                  %v1878 = vld [vmem:[%s1798 + $0x270] sm:$0xff]
                  %1879 = vst [vmem:[%s1799 + $0x9c] sm:$0xff] %v1878
                  %v1880 = vld [vmem:[%s1798 + $0x280] sm:$0xff]
                  %1881 = vst [vmem:[%s1799 + $0xa0] sm:$0xff] %v1880
                  %v1882 = vld [vmem:[%s1798 + $0x290] sm:$0xff]
                  %1883 = vst [vmem:[%s1799 + $0xa4] sm:$0xff] %v1882
                  %v1884 = vld [vmem:[%s1798 + $0x2a0] sm:$0xff]
                  %1885 = vst [vmem:[%s1799 + $0xa8] sm:$0xff] %v1884
                  %v1886 = vld [vmem:[%s1798 + $0x2b0] sm:$0xff]
                  %1887 = vst [vmem:[%s1799 + $0xac] sm:$0xff] %v1886
                  %v1888 = vld [vmem:[%s1798 + $0x2c0] sm:$0xff]
                  %1889 = vst [vmem:[%s1799 + $0xb0] sm:$0xff] %v1888
                  %v1890 = vld [vmem:[%s1798 + $0x2d0] sm:$0xff]
                  %1891 = vst [vmem:[%s1799 + $0xb4] sm:$0xff] %v1890
                  %v1892 = vld [vmem:[%s1798 + $0x2e0] sm:$0xff]
                  %1893 = vst [vmem:[%s1799 + $0xb8] sm:$0xff] %v1892
                  %v1894 = vld [vmem:[%s1798 + $0x2f0] sm:$0xff]
                  %1895 = vst [vmem:[%s1799 + $0xbc] sm:$0xff] %v1894
                  %v1896 = vld [vmem:[%s1798 + $0x300] sm:$0xff]
                  %1897 = vst [vmem:[%s1799 + $0xc0] sm:$0xff] %v1896
                  %v1898 = vld [vmem:[%s1798 + $0x310] sm:$0xff]
                  %1899 = vst [vmem:[%s1799 + $0xc4] sm:$0xff] %v1898
                  %v1900 = vld [vmem:[%s1798 + $0x320] sm:$0xff]
                  %1901 = vst [vmem:[%s1799 + $0xc8] sm:$0xff] %v1900
                  %v1902 = vld [vmem:[%s1798 + $0x330] sm:$0xff]
                  %1903 = vst [vmem:[%s1799 + $0xcc] sm:$0xff] %v1902
                  %v1904 = vld [vmem:[%s1798 + $0x340] sm:$0xff]
                  %1905 = vst [vmem:[%s1799 + $0xd0] sm:$0xff] %v1904
                  %v1906 = vld [vmem:[%s1798 + $0x350] sm:$0xff]
                  %1907 = vst [vmem:[%s1799 + $0xd4] sm:$0xff] %v1906
                  %v1908 = vld [vmem:[%s1798 + $0x360] sm:$0xff]
                  %1909 = vst [vmem:[%s1799 + $0xd8] sm:$0xff] %v1908
                  %v1910 = vld [vmem:[%s1798 + $0x370] sm:$0xff]
                  %1911 = vst [vmem:[%s1799 + $0xdc] sm:$0xff] %v1910
                  %v1912 = vld [vmem:[%s1798 + $0x380] sm:$0xff]
                  %1913 = vst [vmem:[%s1799 + $0xe0] sm:$0xff] %v1912
                  %v1914 = vld [vmem:[%s1798 + $0x390] sm:$0xff]
                  %1915 = vst [vmem:[%s1799 + $0xe4] sm:$0xff] %v1914
                  %v1916 = vld [vmem:[%s1798 + $0x3a0] sm:$0xff]
                  %1917 = vst [vmem:[%s1799 + $0xe8] sm:$0xff] %v1916
                  %v1918 = vld [vmem:[%s1798 + $0x3b0] sm:$0xff]
                  %1919 = vst [vmem:[%s1799 + $0xec] sm:$0xff] %v1918
                  %v1920 = vld [vmem:[%s1798 + $0x3c0] sm:$0xff]
                  %1921 = vst [vmem:[%s1799 + $0xf0] sm:$0xff] %v1920
                  %v1922 = vld [vmem:[%s1798 + $0x3d0] sm:$0xff]
                  %1923 = vst [vmem:[%s1799 + $0xf4] sm:$0xff] %v1922
                  %v1924 = vld [vmem:[%s1798 + $0x3e0] sm:$0xff]
                  %1925 = vst [vmem:[%s1799 + $0xf8] sm:$0xff] %v1924
                  %v1926 = vld [vmem:[%s1798 + $0x3f0] sm:$0xff]
                  %1927 = vst [vmem:[%s1799 + $0xfc] sm:$0xff] %v1926
                  %v1928 = vld [vmem:[%s1798 + $0x400] sm:$0xff]
                  %1929 = vst [vmem:[%s1799 + $0x100] sm:$0xff] %v1928
                  %v1930 = vld [vmem:[%s1798 + $0x410] sm:$0xff]
                  %1931 = vst [vmem:[%s1799 + $0x104] sm:$0xff] %v1930
                  %v1932 = vld [vmem:[%s1798 + $0x420] sm:$0xff]
                  %1933 = vst [vmem:[%s1799 + $0x108] sm:$0xff] %v1932
                  %v1934 = vld [vmem:[%s1798 + $0x430] sm:$0xff]
                  %1935 = vst [vmem:[%s1799 + $0x10c] sm:$0xff] %v1934
                  %v1936 = vld [vmem:[%s1798 + $0x440] sm:$0xff]
                  %1937 = vst [vmem:[%s1799 + $0x110] sm:$0xff] %v1936
                  %v1938 = vld [vmem:[%s1798 + $0x450] sm:$0xff]
                  %1939 = vst [vmem:[%s1799 + $0x114] sm:$0xff] %v1938
                  %v1940 = vld [vmem:[%s1798 + $0x460] sm:$0xff]
                  %1941 = vst [vmem:[%s1799 + $0x118] sm:$0xff] %v1940
                  %v1942 = vld [vmem:[%s1798 + $0x470] sm:$0xff]
                  %1943 = vst [vmem:[%s1799 + $0x11c] sm:$0xff] %v1942
                  %v1944 = vld [vmem:[%s1798 + $0x480] sm:$0xff]
                  %1945 = vst [vmem:[%s1799 + $0x120] sm:$0xff] %v1944
                  %v1946 = vld [vmem:[%s1798 + $0x490] sm:$0xff]
                  %1947 = vst [vmem:[%s1799 + $0x124] sm:$0xff] %v1946
                  %v1948 = vld [vmem:[%s1798 + $0x4a0] sm:$0xff]
                  %1949 = vst [vmem:[%s1799 + $0x128] sm:$0xff] %v1948
                  %v1950 = vld [vmem:[%s1798 + $0x4b0] sm:$0xff]
                  %1951 = vst [vmem:[%s1799 + $0x12c] sm:$0xff] %v1950
                  %v1952 = vld [vmem:[%s1798 + $0x4c0] sm:$0xff]
                  %1953 = vst [vmem:[%s1799 + $0x130] sm:$0xff] %v1952
                  %v1954 = vld [vmem:[%s1798 + $0x4d0] sm:$0xff]
                  %1955 = vst [vmem:[%s1799 + $0x134] sm:$0xff] %v1954
                  %v1956 = vld [vmem:[%s1798 + $0x4e0] sm:$0xff]
                  %1957 = vst [vmem:[%s1799 + $0x138] sm:$0xff] %v1956
                  %v1958 = vld [vmem:[%s1798 + $0x4f0] sm:$0xff]
                  %1959 = vst [vmem:[%s1799 + $0x13c] sm:$0xff] %v1958
                  %v1960 = vld [vmem:[%s1798 + $0x500] sm:$0xff]
                  %1961 = vst [vmem:[%s1799 + $0x140] sm:$0xff] %v1960
                  %v1962 = vld [vmem:[%s1798 + $0x510] sm:$0xff]
                  %1963 = vst [vmem:[%s1799 + $0x144] sm:$0xff] %v1962
                  %v1964 = vld [vmem:[%s1798 + $0x520] sm:$0xff]
                  %1965 = vst [vmem:[%s1799 + $0x148] sm:$0xff] %v1964
                  %v1966 = vld [vmem:[%s1798 + $0x530] sm:$0xff]
                  %1967 = vst [vmem:[%s1799 + $0x14c] sm:$0xff] %v1966
                  %v1968 = vld [vmem:[%s1798 + $0x540] sm:$0xff]
                  %1969 = vst [vmem:[%s1799 + $0x150] sm:$0xff] %v1968
                  %v1970 = vld [vmem:[%s1798 + $0x550] sm:$0xff]
                  %1971 = vst [vmem:[%s1799 + $0x154] sm:$0xff] %v1970
                  %v1972 = vld [vmem:[%s1798 + $0x560] sm:$0xff]
                  %1973 = vst [vmem:[%s1799 + $0x158] sm:$0xff] %v1972
                  %v1974 = vld [vmem:[%s1798 + $0x570] sm:$0xff]
                  %1975 = vst [vmem:[%s1799 + $0x15c] sm:$0xff] %v1974
                  %v1976 = vld [vmem:[%s1798 + $0x580] sm:$0xff]
                  %1977 = vst [vmem:[%s1799 + $0x160] sm:$0xff] %v1976
                  %v1978 = vld [vmem:[%s1798 + $0x590] sm:$0xff]
                  %1979 = vst [vmem:[%s1799 + $0x164] sm:$0xff] %v1978
                  %v1980 = vld [vmem:[%s1798 + $0x5a0] sm:$0xff]
                  %1981 = vst [vmem:[%s1799 + $0x168] sm:$0xff] %v1980
                  %v1982 = vld [vmem:[%s1798 + $0x5b0] sm:$0xff]
                  %1983 = vst [vmem:[%s1799 + $0x16c] sm:$0xff] %v1982
                  %v1984 = vld [vmem:[%s1798 + $0x5c0] sm:$0xff]
                  %1985 = vst [vmem:[%s1799 + $0x170] sm:$0xff] %v1984
                  %v1986 = vld [vmem:[%s1798 + $0x5d0] sm:$0xff]
                  %1987 = vst [vmem:[%s1799 + $0x174] sm:$0xff] %v1986
                  %v1988 = vld [vmem:[%s1798 + $0x5e0] sm:$0xff]
                  %1989 = vst [vmem:[%s1799 + $0x178] sm:$0xff] %v1988
                  %v1990 = vld [vmem:[%s1798 + $0x5f0] sm:$0xff]
                  %1991 = vst [vmem:[%s1799 + $0x17c] sm:$0xff] %v1990
                  %v1992 = vld [vmem:[%s1798 + $0x600] sm:$0xff]
                  %1993 = vst [vmem:[%s1799 + $0x180] sm:$0xff] %v1992
                  %v1994 = vld [vmem:[%s1798 + $0x610] sm:$0xff]
                  %1995 = vst [vmem:[%s1799 + $0x184] sm:$0xff] %v1994
                  %v1996 = vld [vmem:[%s1798 + $0x620] sm:$0xff]
                  %1997 = vst [vmem:[%s1799 + $0x188] sm:$0xff] %v1996
                  %v1998 = vld [vmem:[%s1798 + $0x630] sm:$0xff]
                  %1999 = vst [vmem:[%s1799 + $0x18c] sm:$0xff] %v1998
                  %v2000 = vld [vmem:[%s1798 + $0x640] sm:$0xff]
                  %2001 = vst [vmem:[%s1799 + $0x190] sm:$0xff] %v2000
                  %v2002 = vld [vmem:[%s1798 + $0x650] sm:$0xff]
                  %2003 = vst [vmem:[%s1799 + $0x194] sm:$0xff] %v2002
                  %v2004 = vld [vmem:[%s1798 + $0x660] sm:$0xff]
                  %2005 = vst [vmem:[%s1799 + $0x198] sm:$0xff] %v2004
                  %v2006 = vld [vmem:[%s1798 + $0x670] sm:$0xff]
                  %2007 = vst [vmem:[%s1799 + $0x19c] sm:$0xff] %v2006
                  %v2008 = vld [vmem:[%s1798 + $0x680] sm:$0xff]
                  %2009 = vst [vmem:[%s1799 + $0x1a0] sm:$0xff] %v2008
                  %v2010 = vld [vmem:[%s1798 + $0x690] sm:$0xff]
                  %2011 = vst [vmem:[%s1799 + $0x1a4] sm:$0xff] %v2010
                  %v2012 = vld [vmem:[%s1798 + $0x6a0] sm:$0xff]
                  %2013 = vst [vmem:[%s1799 + $0x1a8] sm:$0xff] %v2012
                  %v2014 = vld [vmem:[%s1798 + $0x6b0] sm:$0xff]
                  %2015 = vst [vmem:[%s1799 + $0x1ac] sm:$0xff] %v2014
                  %v2016 = vld [vmem:[%s1798 + $0x6c0] sm:$0xff]
                  %2017 = vst [vmem:[%s1799 + $0x1b0] sm:$0xff] %v2016
                  %v2018 = vld [vmem:[%s1798 + $0x6d0] sm:$0xff]
                  %2019 = vst [vmem:[%s1799 + $0x1b4] sm:$0xff] %v2018
                  %v2020 = vld [vmem:[%s1798 + $0x6e0] sm:$0xff]
                  %2021 = vst [vmem:[%s1799 + $0x1b8] sm:$0xff] %v2020
                  %v2022 = vld [vmem:[%s1798 + $0x6f0] sm:$0xff]
                  %2023 = vst [vmem:[%s1799 + $0x1bc] sm:$0xff] %v2022
                  %v2024 = vld [vmem:[%s1798 + $0x700] sm:$0xff]
                  %2025 = vst [vmem:[%s1799 + $0x1c0] sm:$0xff] %v2024
                  %v2026 = vld [vmem:[%s1798 + $0x710] sm:$0xff]
                  %2027 = vst [vmem:[%s1799 + $0x1c4] sm:$0xff] %v2026
                  %v2028 = vld [vmem:[%s1798 + $0x720] sm:$0xff]
                  %2029 = vst [vmem:[%s1799 + $0x1c8] sm:$0xff] %v2028
                  %v2030 = vld [vmem:[%s1798 + $0x730] sm:$0xff]
                  %2031 = vst [vmem:[%s1799 + $0x1cc] sm:$0xff] %v2030
                  %v2032 = vld [vmem:[%s1798 + $0x740] sm:$0xff]
                  %2033 = vst [vmem:[%s1799 + $0x1d0] sm:$0xff] %v2032
                  %v2034 = vld [vmem:[%s1798 + $0x750] sm:$0xff]
                  %2035 = vst [vmem:[%s1799 + $0x1d4] sm:$0xff] %v2034
                  %v2036 = vld [vmem:[%s1798 + $0x760] sm:$0xff]
                  %2037 = vst [vmem:[%s1799 + $0x1d8] sm:$0xff] %v2036
                  %v2038 = vld [vmem:[%s1798 + $0x770] sm:$0xff]
                  %2039 = vst [vmem:[%s1799 + $0x1dc] sm:$0xff] %v2038
                  %v2040 = vld [vmem:[%s1798 + $0x780] sm:$0xff]
                  %2041 = vst [vmem:[%s1799 + $0x1e0] sm:$0xff] %v2040
                  %v2042 = vld [vmem:[%s1798 + $0x790] sm:$0xff]
                  %2043 = vst [vmem:[%s1799 + $0x1e4] sm:$0xff] %v2042
                  %v2044 = vld [vmem:[%s1798 + $0x7a0] sm:$0xff]
                  %2045 = vst [vmem:[%s1799 + $0x1e8] sm:$0xff] %v2044
                  %v2046 = vld [vmem:[%s1798 + $0x7b0] sm:$0xff]
                  %2047 = vst [vmem:[%s1799 + $0x1ec] sm:$0xff] %v2046
                  %v2048 = vld [vmem:[%s1798 + $0x7c0] sm:$0xff]
                  %2049 = vst [vmem:[%s1799 + $0x1f0] sm:$0xff] %v2048
                  %v2050 = vld [vmem:[%s1798 + $0x7d0] sm:$0xff]
                  %2051 = vst [vmem:[%s1799 + $0x1f4] sm:$0xff] %v2050
                  %v2052 = vld [vmem:[%s1798 + $0x7e0] sm:$0xff]
                  %2053 = vst [vmem:[%s1799 + $0x1f8] sm:$0xff] %v2052
                  %v2054 = vld [vmem:[%s1798 + $0x7f0] sm:$0xff]
                  %2055 = vst [vmem:[%s1799 + $0x1fc] sm:$0xff] %v2054
                  %v2056 = vld [vmem:[%s1798 + $0x800] sm:$0xff]
                  %2057 = vst [vmem:[%s1799 + $0x200] sm:$0xff] %v2056
                  %v2058 = vld [vmem:[%s1798 + $0x810] sm:$0xff]
                  %2059 = vst [vmem:[%s1799 + $0x204] sm:$0xff] %v2058
                  %v2060 = vld [vmem:[%s1798 + $0x820] sm:$0xff]
                  %2061 = vst [vmem:[%s1799 + $0x208] sm:$0xff] %v2060
                  %v2062 = vld [vmem:[%s1798 + $0x830] sm:$0xff]
                  %2063 = vst [vmem:[%s1799 + $0x20c] sm:$0xff] %v2062
                  %v2064 = vld [vmem:[%s1798 + $0x840] sm:$0xff]
                  %2065 = vst [vmem:[%s1799 + $0x210] sm:$0xff] %v2064
                  %v2066 = vld [vmem:[%s1798 + $0x850] sm:$0xff]
                  %2067 = vst [vmem:[%s1799 + $0x214] sm:$0xff] %v2066
                  %v2068 = vld [vmem:[%s1798 + $0x860] sm:$0xff]
                  %2069 = vst [vmem:[%s1799 + $0x218] sm:$0xff] %v2068
                  %v2070 = vld [vmem:[%s1798 + $0x870] sm:$0xff]
                  %2071 = vst [vmem:[%s1799 + $0x21c] sm:$0xff] %v2070
                  %v2072 = vld [vmem:[%s1798 + $0x880] sm:$0xff]
                  %2073 = vst [vmem:[%s1799 + $0x220] sm:$0xff] %v2072
                  %v2074 = vld [vmem:[%s1798 + $0x890] sm:$0xff]
                  %2075 = vst [vmem:[%s1799 + $0x224] sm:$0xff] %v2074
                  %v2076 = vld [vmem:[%s1798 + $0x8a0] sm:$0xff]
                  %2077 = vst [vmem:[%s1799 + $0x228] sm:$0xff] %v2076
                  %v2078 = vld [vmem:[%s1798 + $0x8b0] sm:$0xff]
                  %2079 = vst [vmem:[%s1799 + $0x22c] sm:$0xff] %v2078
                  %v2080 = vld [vmem:[%s1798 + $0x8c0] sm:$0xff]
                  %2081 = vst [vmem:[%s1799 + $0x230] sm:$0xff] %v2080
                  %v2082 = vld [vmem:[%s1798 + $0x8d0] sm:$0xff]
                  %2083 = vst [vmem:[%s1799 + $0x234] sm:$0xff] %v2082
                  %v2084 = vld [vmem:[%s1798 + $0x8e0] sm:$0xff]
                  %2085 = vst [vmem:[%s1799 + $0x238] sm:$0xff] %v2084
                  %v2086 = vld [vmem:[%s1798 + $0x8f0] sm:$0xff]
                  %2087 = vst [vmem:[%s1799 + $0x23c] sm:$0xff] %v2086
                  %v2088 = vld [vmem:[%s1798 + $0x900] sm:$0xff]
                  %2089 = vst [vmem:[%s1799 + $0x240] sm:$0xff] %v2088
                  %v2090 = vld [vmem:[%s1798 + $0x910] sm:$0xff]
                  %2091 = vst [vmem:[%s1799 + $0x244] sm:$0xff] %v2090
                  %v2092 = vld [vmem:[%s1798 + $0x920] sm:$0xff]
                  %2093 = vst [vmem:[%s1799 + $0x248] sm:$0xff] %v2092
                  %v2094 = vld [vmem:[%s1798 + $0x930] sm:$0xff]
                  %2095 = vst [vmem:[%s1799 + $0x24c] sm:$0xff] %v2094
                  %v2096 = vld [vmem:[%s1798 + $0x940] sm:$0xff]
                  %2097 = vst [vmem:[%s1799 + $0x250] sm:$0xff] %v2096
                  %v2098 = vld [vmem:[%s1798 + $0x950] sm:$0xff]
                  %2099 = vst [vmem:[%s1799 + $0x254] sm:$0xff] %v2098
                  %v2100 = vld [vmem:[%s1798 + $0x960] sm:$0xff]
                  %2101 = vst [vmem:[%s1799 + $0x258] sm:$0xff] %v2100
                  %v2102 = vld [vmem:[%s1798 + $0x970] sm:$0xff]
                  %2103 = vst [vmem:[%s1799 + $0x25c] sm:$0xff] %v2102
                  %v2104 = vld [vmem:[%s1798 + $0x980] sm:$0xff]
                  %2105 = vst [vmem:[%s1799 + $0x260] sm:$0xff] %v2104
                  %v2106 = vld [vmem:[%s1798 + $0x990] sm:$0xff]
                  %2107 = vst [vmem:[%s1799 + $0x264] sm:$0xff] %v2106
                  %v2108 = vld [vmem:[%s1798 + $0x9a0] sm:$0xff]
                  %2109 = vst [vmem:[%s1799 + $0x268] sm:$0xff] %v2108
                  %v2110 = vld [vmem:[%s1798 + $0x9b0] sm:$0xff]
                  %2111 = vst [vmem:[%s1799 + $0x26c] sm:$0xff] %v2110
                  %v2112 = vld [vmem:[%s1798 + $0x9c0] sm:$0xff]
                  %2113 = vst [vmem:[%s1799 + $0x270] sm:$0xff] %v2112
                  %v2114 = vld [vmem:[%s1798 + $0x9d0] sm:$0xff]
                  %2115 = vst [vmem:[%s1799 + $0x274] sm:$0xff] %v2114
                  %v2116 = vld [vmem:[%s1798 + $0x9e0] sm:$0xff]
                  %2117 = vst [vmem:[%s1799 + $0x278] sm:$0xff] %v2116
                  %v2118 = vld [vmem:[%s1798 + $0x9f0] sm:$0xff]
                  %2119 = vst [vmem:[%s1799 + $0x27c] sm:$0xff] %v2118
                  %v2120 = vld [vmem:[%s1798 + $0xa00] sm:$0xff]
                  %2121 = vst [vmem:[%s1799 + $0x280] sm:$0xff] %v2120
                  %v2122 = vld [vmem:[%s1798 + $0xa10] sm:$0xff]
                  %2123 = vst [vmem:[%s1799 + $0x284] sm:$0xff] %v2122
                  %v2124 = vld [vmem:[%s1798 + $0xa20] sm:$0xff]
                  %2125 = vst [vmem:[%s1799 + $0x288] sm:$0xff] %v2124
                  %v2126 = vld [vmem:[%s1798 + $0xa30] sm:$0xff]
                  %2127 = vst [vmem:[%s1799 + $0x28c] sm:$0xff] %v2126
                  %v2128 = vld [vmem:[%s1798 + $0xa40] sm:$0xff]
                  %2129 = vst [vmem:[%s1799 + $0x290] sm:$0xff] %v2128
                  %v2130 = vld [vmem:[%s1798 + $0xa50] sm:$0xff]
                  %2131 = vst [vmem:[%s1799 + $0x294] sm:$0xff] %v2130
                  %v2132 = vld [vmem:[%s1798 + $0xa60] sm:$0xff]
                  %2133 = vst [vmem:[%s1799 + $0x298] sm:$0xff] %v2132
                  %v2134 = vld [vmem:[%s1798 + $0xa70] sm:$0xff]
                  %2135 = vst [vmem:[%s1799 + $0x29c] sm:$0xff] %v2134
                  %v2136 = vld [vmem:[%s1798 + $0xa80] sm:$0xff]
                  %2137 = vst [vmem:[%s1799 + $0x2a0] sm:$0xff] %v2136
                  %v2138 = vld [vmem:[%s1798 + $0xa90] sm:$0xff]
                  %2139 = vst [vmem:[%s1799 + $0x2a4] sm:$0xff] %v2138
                  %v2140 = vld [vmem:[%s1798 + $0xaa0] sm:$0xff]
                  %2141 = vst [vmem:[%s1799 + $0x2a8] sm:$0xff] %v2140
                  %v2142 = vld [vmem:[%s1798 + $0xab0] sm:$0xff]
                  %2143 = vst [vmem:[%s1799 + $0x2ac] sm:$0xff] %v2142
                  %v2144 = vld [vmem:[%s1798 + $0xac0] sm:$0xff]
                  %2145 = vst [vmem:[%s1799 + $0x2b0] sm:$0xff] %v2144
                  %v2146 = vld [vmem:[%s1798 + $0xad0] sm:$0xff]
                  %2147 = vst [vmem:[%s1799 + $0x2b4] sm:$0xff] %v2146
                  %v2148 = vld [vmem:[%s1798 + $0xae0] sm:$0xff]
                  %2149 = vst [vmem:[%s1799 + $0x2b8] sm:$0xff] %v2148
                  %v2150 = vld [vmem:[%s1798 + $0xaf0] sm:$0xff]
                  %2151 = vst [vmem:[%s1799 + $0x2bc] sm:$0xff] %v2150
                  %v2152 = vld [vmem:[%s1798 + $0xb00] sm:$0xff]
                  %2153 = vst [vmem:[%s1799 + $0x2c0] sm:$0xff] %v2152
                  %v2154 = vld [vmem:[%s1798 + $0xb10] sm:$0xff]
                  %2155 = vst [vmem:[%s1799 + $0x2c4] sm:$0xff] %v2154
                  %v2156 = vld [vmem:[%s1798 + $0xb20] sm:$0xff]
                  %2157 = vst [vmem:[%s1799 + $0x2c8] sm:$0xff] %v2156
                  %v2158 = vld [vmem:[%s1798 + $0xb30] sm:$0xff]
                  %2159 = vst [vmem:[%s1799 + $0x2cc] sm:$0xff] %v2158
                  %v2160 = vld [vmem:[%s1798 + $0xb40] sm:$0xff]
                  %2161 = vst [vmem:[%s1799 + $0x2d0] sm:$0xff] %v2160
                  %v2162 = vld [vmem:[%s1798 + $0xb50] sm:$0xff]
                  %2163 = vst [vmem:[%s1799 + $0x2d4] sm:$0xff] %v2162
                  %v2164 = vld [vmem:[%s1798 + $0xb60] sm:$0xff]
                  %2165 = vst [vmem:[%s1799 + $0x2d8] sm:$0xff] %v2164
                  %v2166 = vld [vmem:[%s1798 + $0xb70] sm:$0xff]
                  %2167 = vst [vmem:[%s1799 + $0x2dc] sm:$0xff] %v2166
                  %v2168 = vld [vmem:[%s1798 + $0xb80] sm:$0xff]
                  %2169 = vst [vmem:[%s1799 + $0x2e0] sm:$0xff] %v2168
                  %v2170 = vld [vmem:[%s1798 + $0xb90] sm:$0xff]
                  %2171 = vst [vmem:[%s1799 + $0x2e4] sm:$0xff] %v2170
                  %v2172 = vld [vmem:[%s1798 + $0xba0] sm:$0xff]
                  %2173 = vst [vmem:[%s1799 + $0x2e8] sm:$0xff] %v2172
                  %v2174 = vld [vmem:[%s1798 + $0xbb0] sm:$0xff]
                  %2175 = vst [vmem:[%s1799 + $0x2ec] sm:$0xff] %v2174
                  %v2176 = vld [vmem:[%s1798 + $0xbc0] sm:$0xff]
                  %2177 = vst [vmem:[%s1799 + $0x2f0] sm:$0xff] %v2176
                  %v2178 = vld [vmem:[%s1798 + $0xbd0] sm:$0xff]
                  %2179 = vst [vmem:[%s1799 + $0x2f4] sm:$0xff] %v2178
                  %v2180 = vld [vmem:[%s1798 + $0xbe0] sm:$0xff]
                  %2181 = vst [vmem:[%s1799 + $0x2f8] sm:$0xff] %v2180
                  %v2182 = vld [vmem:[%s1798 + $0xbf0] sm:$0xff]
                  %2183 = vst [vmem:[%s1799 + $0x2fc] sm:$0xff] %v2182
                  %v2184 = vld [vmem:[%s1798 + $0xc00] sm:$0xff]
                  %2185 = vst [vmem:[%s1799 + $0x300] sm:$0xff] %v2184
                  %v2186 = vld [vmem:[%s1798 + $0xc10] sm:$0xff]
                  %2187 = vst [vmem:[%s1799 + $0x304] sm:$0xff] %v2186
                  %v2188 = vld [vmem:[%s1798 + $0xc20] sm:$0xff]
                  %2189 = vst [vmem:[%s1799 + $0x308] sm:$0xff] %v2188
                  %v2190 = vld [vmem:[%s1798 + $0xc30] sm:$0xff]
                  %2191 = vst [vmem:[%s1799 + $0x30c] sm:$0xff] %v2190
                  %v2192 = vld [vmem:[%s1798 + $0xc40] sm:$0xff]
                  %2193 = vst [vmem:[%s1799 + $0x310] sm:$0xff] %v2192
                  %v2194 = vld [vmem:[%s1798 + $0xc50] sm:$0xff]
                  %2195 = vst [vmem:[%s1799 + $0x314] sm:$0xff] %v2194
                  %v2196 = vld [vmem:[%s1798 + $0xc60] sm:$0xff]
                  %2197 = vst [vmem:[%s1799 + $0x318] sm:$0xff] %v2196
                  %v2198 = vld [vmem:[%s1798 + $0xc70] sm:$0xff]
                  %2199 = vst [vmem:[%s1799 + $0x31c] sm:$0xff] %v2198
                  %v2200 = vld [vmem:[%s1798 + $0xc80] sm:$0xff]
                  %2201 = vst [vmem:[%s1799 + $0x320] sm:$0xff] %v2200
                  %v2202 = vld [vmem:[%s1798 + $0xc90] sm:$0xff]
                  %2203 = vst [vmem:[%s1799 + $0x324] sm:$0xff] %v2202
                  %v2204 = vld [vmem:[%s1798 + $0xca0] sm:$0xff]
                  %2205 = vst [vmem:[%s1799 + $0x328] sm:$0xff] %v2204
                  %v2206 = vld [vmem:[%s1798 + $0xcb0] sm:$0xff]
                  %2207 = vst [vmem:[%s1799 + $0x32c] sm:$0xff] %v2206
                  %v2208 = vld [vmem:[%s1798 + $0xcc0] sm:$0xff]
                  %2209 = vst [vmem:[%s1799 + $0x330] sm:$0xff] %v2208
                  %v2210 = vld [vmem:[%s1798 + $0xcd0] sm:$0xff]
                  %2211 = vst [vmem:[%s1799 + $0x334] sm:$0xff] %v2210
                  %v2212 = vld [vmem:[%s1798 + $0xce0] sm:$0xff]
                  %2213 = vst [vmem:[%s1799 + $0x338] sm:$0xff] %v2212
                  %v2214 = vld [vmem:[%s1798 + $0xcf0] sm:$0xff]
                  %2215 = vst [vmem:[%s1799 + $0x33c] sm:$0xff] %v2214
                  %v2216 = vld [vmem:[%s1798 + $0xd00] sm:$0xff]
                  %2217 = vst [vmem:[%s1799 + $0x340] sm:$0xff] %v2216
                  %v2218 = vld [vmem:[%s1798 + $0xd10] sm:$0xff]
                  %2219 = vst [vmem:[%s1799 + $0x344] sm:$0xff] %v2218
                  %v2220 = vld [vmem:[%s1798 + $0xd20] sm:$0xff]
                  %2221 = vst [vmem:[%s1799 + $0x348] sm:$0xff] %v2220
                  %v2222 = vld [vmem:[%s1798 + $0xd30] sm:$0xff]
                  %2223 = vst [vmem:[%s1799 + $0x34c] sm:$0xff] %v2222
                  %v2224 = vld [vmem:[%s1798 + $0xd40] sm:$0xff]
                  %2225 = vst [vmem:[%s1799 + $0x350] sm:$0xff] %v2224
                  %v2226 = vld [vmem:[%s1798 + $0xd50] sm:$0xff]
                  %2227 = vst [vmem:[%s1799 + $0x354] sm:$0xff] %v2226
                  %v2228 = vld [vmem:[%s1798 + $0xd60] sm:$0xff]
                  %2229 = vst [vmem:[%s1799 + $0x358] sm:$0xff] %v2228
                  %v2230 = vld [vmem:[%s1798 + $0xd70] sm:$0xff]
                  %2231 = vst [vmem:[%s1799 + $0x35c] sm:$0xff] %v2230
                  %v2232 = vld [vmem:[%s1798 + $0xd80] sm:$0xff]
                  %2233 = vst [vmem:[%s1799 + $0x360] sm:$0xff] %v2232
                  %v2234 = vld [vmem:[%s1798 + $0xd90] sm:$0xff]
                  %2235 = vst [vmem:[%s1799 + $0x364] sm:$0xff] %v2234
                  %v2236 = vld [vmem:[%s1798 + $0xda0] sm:$0xff]
                  %2237 = vst [vmem:[%s1799 + $0x368] sm:$0xff] %v2236
                  %v2238 = vld [vmem:[%s1798 + $0xdb0] sm:$0xff]
                  %2239 = vst [vmem:[%s1799 + $0x36c] sm:$0xff] %v2238
                  %v2240 = vld [vmem:[%s1798 + $0xdc0] sm:$0xff]
                  %2241 = vst [vmem:[%s1799 + $0x370] sm:$0xff] %v2240
                  %v2242 = vld [vmem:[%s1798 + $0xdd0] sm:$0xff]
                  %2243 = vst [vmem:[%s1799 + $0x374] sm:$0xff] %v2242
                  %v2244 = vld [vmem:[%s1798 + $0xde0] sm:$0xff]
                  %2245 = vst [vmem:[%s1799 + $0x378] sm:$0xff] %v2244
                  %v2246 = vld [vmem:[%s1798 + $0xdf0] sm:$0xff]
                  %2247 = vst [vmem:[%s1799 + $0x37c] sm:$0xff] %v2246
                  %v2248 = vld [vmem:[%s1798 + $0xe00] sm:$0xff]
                  %2249 = vst [vmem:[%s1799 + $0x380] sm:$0xff] %v2248
                  %v2250 = vld [vmem:[%s1798 + $0xe10] sm:$0xff]
                  %2251 = vst [vmem:[%s1799 + $0x384] sm:$0xff] %v2250
                  %v2252 = vld [vmem:[%s1798 + $0xe20] sm:$0xff]
                  %2253 = vst [vmem:[%s1799 + $0x388] sm:$0xff] %v2252
                  %v2254 = vld [vmem:[%s1798 + $0xe30] sm:$0xff]
                  %2255 = vst [vmem:[%s1799 + $0x38c] sm:$0xff] %v2254
                  %v2256 = vld [vmem:[%s1798 + $0xe40] sm:$0xff]
                  %2257 = vst [vmem:[%s1799 + $0x390] sm:$0xff] %v2256
                  %v2258 = vld [vmem:[%s1798 + $0xe50] sm:$0xff]
                  %2259 = vst [vmem:[%s1799 + $0x394] sm:$0xff] %v2258
                  %v2260 = vld [vmem:[%s1798 + $0xe60] sm:$0xff]
                  %2261 = vst [vmem:[%s1799 + $0x398] sm:$0xff] %v2260
                  %v2262 = vld [vmem:[%s1798 + $0xe70] sm:$0xff]
                  %2263 = vst [vmem:[%s1799 + $0x39c] sm:$0xff] %v2262
                  %v2264 = vld [vmem:[%s1798 + $0xe80] sm:$0xff]
                  %2265 = vst [vmem:[%s1799 + $0x3a0] sm:$0xff] %v2264
                  %v2266 = vld [vmem:[%s1798 + $0xe90] sm:$0xff]
                  %2267 = vst [vmem:[%s1799 + $0x3a4] sm:$0xff] %v2266
                  %v2268 = vld [vmem:[%s1798 + $0xea0] sm:$0xff]
                  %2269 = vst [vmem:[%s1799 + $0x3a8] sm:$0xff] %v2268
                  %v2270 = vld [vmem:[%s1798 + $0xeb0] sm:$0xff]
                  %2271 = vst [vmem:[%s1799 + $0x3ac] sm:$0xff] %v2270
                  %v2272 = vld [vmem:[%s1798 + $0xec0] sm:$0xff]
                  %2273 = vst [vmem:[%s1799 + $0x3b0] sm:$0xff] %v2272
                  %v2274 = vld [vmem:[%s1798 + $0xed0] sm:$0xff]
                  %2275 = vst [vmem:[%s1799 + $0x3b4] sm:$0xff] %v2274
                  %v2276 = vld [vmem:[%s1798 + $0xee0] sm:$0xff]
                  %2277 = vst [vmem:[%s1799 + $0x3b8] sm:$0xff] %v2276
                  %v2278 = vld [vmem:[%s1798 + $0xef0] sm:$0xff]
                  %2279 = vst [vmem:[%s1799 + $0x3bc] sm:$0xff] %v2278
                  %v2280 = vld [vmem:[%s1798 + $0xf00] sm:$0xff]
                  %2281 = vst [vmem:[%s1799 + $0x3c0] sm:$0xff] %v2280
                  %v2282 = vld [vmem:[%s1798 + $0xf10] sm:$0xff]
                  %2283 = vst [vmem:[%s1799 + $0x3c4] sm:$0xff] %v2282
                  %v2284 = vld [vmem:[%s1798 + $0xf20] sm:$0xff]
                  %2285 = vst [vmem:[%s1799 + $0x3c8] sm:$0xff] %v2284
                  %v2286 = vld [vmem:[%s1798 + $0xf30] sm:$0xff]
                  %2287 = vst [vmem:[%s1799 + $0x3cc] sm:$0xff] %v2286
                  %v2288 = vld [vmem:[%s1798 + $0xf40] sm:$0xff]
                  %2289 = vst [vmem:[%s1799 + $0x3d0] sm:$0xff] %v2288
                  %v2290 = vld [vmem:[%s1798 + $0xf50] sm:$0xff]
                  %2291 = vst [vmem:[%s1799 + $0x3d4] sm:$0xff] %v2290
                  %v2292 = vld [vmem:[%s1798 + $0xf60] sm:$0xff]
                  %2293 = vst [vmem:[%s1799 + $0x3d8] sm:$0xff] %v2292
                  %v2294 = vld [vmem:[%s1798 + $0xf70] sm:$0xff]
                  %2295 = vst [vmem:[%s1799 + $0x3dc] sm:$0xff] %v2294
                  %v2296 = vld [vmem:[%s1798 + $0xf80] sm:$0xff]
                  %2297 = vst [vmem:[%s1799 + $0x3e0] sm:$0xff] %v2296
                  %v2298 = vld [vmem:[%s1798 + $0xf90] sm:$0xff]
                  %2299 = vst [vmem:[%s1799 + $0x3e4] sm:$0xff] %v2298
                  %v2300 = vld [vmem:[%s1798 + $0xfa0] sm:$0xff]
                  %2301 = vst [vmem:[%s1799 + $0x3e8] sm:$0xff] %v2300
                  %v2302 = vld [vmem:[%s1798 + $0xfb0] sm:$0xff]
                  %2303 = vst [vmem:[%s1799 + $0x3ec] sm:$0xff] %v2302
                  %v2304 = vld [vmem:[%s1798 + $0xfc0] sm:$0xff]
                  %2305 = vst [vmem:[%s1799 + $0x3f0] sm:$0xff] %v2304
                  %v2306 = vld [vmem:[%s1798 + $0xfd0] sm:$0xff]
                  %2307 = vst [vmem:[%s1799 + $0x3f4] sm:$0xff] %v2306
                  %v2308 = vld [vmem:[%s1798 + $0xfe0] sm:$0xff]
                  %2309 = vst [vmem:[%s1799 + $0x3f8] sm:$0xff] %v2308
                  %v2310 = vld [vmem:[%s1798 + $0xff0] sm:$0xff]
                  %2311 = vst [vmem:[%s1799 + $0x3fc] sm:$0xff] %v2310
                  %v2312 = vld [vmem:[%s1798 + $0x1000] sm:$0xff]
                  %2313 = vst [vmem:[%s1799 + $0x400] sm:$0xff] %v2312
                  %v2314 = vld [vmem:[%s1798 + $0x1010] sm:$0xff]
                  %2315 = vst [vmem:[%s1799 + $0x404] sm:$0xff] %v2314
                  %v2316 = vld [vmem:[%s1798 + $0x1020] sm:$0xff]
                  %2317 = vst [vmem:[%s1799 + $0x408] sm:$0xff] %v2316
                  %v2318 = vld [vmem:[%s1798 + $0x1030] sm:$0xff]
                  %2319 = vst [vmem:[%s1799 + $0x40c] sm:$0xff] %v2318
                  %v2320 = vld [vmem:[%s1798 + $0x1040] sm:$0xff]
                  %2321 = vst [vmem:[%s1799 + $0x410] sm:$0xff] %v2320
                  %v2322 = vld [vmem:[%s1798 + $0x1050] sm:$0xff]
                  %2323 = vst [vmem:[%s1799 + $0x414] sm:$0xff] %v2322
                  %v2324 = vld [vmem:[%s1798 + $0x1060] sm:$0xff]
                  %2325 = vst [vmem:[%s1799 + $0x418] sm:$0xff] %v2324
                  %v2326 = vld [vmem:[%s1798 + $0x1070] sm:$0xff]
                  %2327 = vst [vmem:[%s1799 + $0x41c] sm:$0xff] %v2326
                  %v2328 = vld [vmem:[%s1798 + $0x1080] sm:$0xff]
                  %2329 = vst [vmem:[%s1799 + $0x420] sm:$0xff] %v2328
                  %v2330 = vld [vmem:[%s1798 + $0x1090] sm:$0xff]
                  %2331 = vst [vmem:[%s1799 + $0x424] sm:$0xff] %v2330
                  %v2332 = vld [vmem:[%s1798 + $0x10a0] sm:$0xff]
                  %2333 = vst [vmem:[%s1799 + $0x428] sm:$0xff] %v2332
                  %v2334 = vld [vmem:[%s1798 + $0x10b0] sm:$0xff]
                  %2335 = vst [vmem:[%s1799 + $0x42c] sm:$0xff] %v2334
                  %v2336 = vld [vmem:[%s1798 + $0x10c0] sm:$0xff]
                  %2337 = vst [vmem:[%s1799 + $0x430] sm:$0xff] %v2336
                  %v2338 = vld [vmem:[%s1798 + $0x10d0] sm:$0xff]
                  %2339 = vst [vmem:[%s1799 + $0x434] sm:$0xff] %v2338
                  %v2340 = vld [vmem:[%s1798 + $0x10e0] sm:$0xff]
                  %2341 = vst [vmem:[%s1799 + $0x438] sm:$0xff] %v2340
                  %v2342 = vld [vmem:[%s1798 + $0x10f0] sm:$0xff]
                  %2343 = vst [vmem:[%s1799 + $0x43c] sm:$0xff] %v2342
                  %v2344 = vld [vmem:[%s1798 + $0x1100] sm:$0xff]
                  %2345 = vst [vmem:[%s1799 + $0x440] sm:$0xff] %v2344
                  %v2346 = vld [vmem:[%s1798 + $0x1110] sm:$0xff]
                  %2347 = vst [vmem:[%s1799 + $0x444] sm:$0xff] %v2346
                  %v2348 = vld [vmem:[%s1798 + $0x1120] sm:$0xff]
                  %2349 = vst [vmem:[%s1799 + $0x448] sm:$0xff] %v2348
                  %v2350 = vld [vmem:[%s1798 + $0x1130] sm:$0xff]
                  %2351 = vst [vmem:[%s1799 + $0x44c] sm:$0xff] %v2350
                  %v2352 = vld [vmem:[%s1798 + $0x1140] sm:$0xff]
                  %2353 = vst [vmem:[%s1799 + $0x450] sm:$0xff] %v2352
                  %v2354 = vld [vmem:[%s1798 + $0x1150] sm:$0xff]
                  %2355 = vst [vmem:[%s1799 + $0x454] sm:$0xff] %v2354
                  %v2356 = vld [vmem:[%s1798 + $0x1160] sm:$0xff]
                  %2357 = vst [vmem:[%s1799 + $0x458] sm:$0xff] %v2356
                  %v2358 = vld [vmem:[%s1798 + $0x1170] sm:$0xff]
                  %2359 = vst [vmem:[%s1799 + $0x45c] sm:$0xff] %v2358
                  %v2360 = vld [vmem:[%s1798 + $0x1180] sm:$0xff]
                  %2361 = vst [vmem:[%s1799 + $0x460] sm:$0xff] %v2360
                  %v2362 = vld [vmem:[%s1798 + $0x1190] sm:$0xff]
                  %2363 = vst [vmem:[%s1799 + $0x464] sm:$0xff] %v2362
                  %v2364 = vld [vmem:[%s1798 + $0x11a0] sm:$0xff]
                  %2365 = vst [vmem:[%s1799 + $0x468] sm:$0xff] %v2364
                  %v2366 = vld [vmem:[%s1798 + $0x11b0] sm:$0xff]
                  %2367 = vst [vmem:[%s1799 + $0x46c] sm:$0xff] %v2366
                  %v2368 = vld [vmem:[%s1798 + $0x11c0] sm:$0xff]
                  %2369 = vst [vmem:[%s1799 + $0x470] sm:$0xff] %v2368
                  %v2370 = vld [vmem:[%s1798 + $0x11d0] sm:$0xff]
                  %2371 = vst [vmem:[%s1799 + $0x474] sm:$0xff] %v2370
                  %v2372 = vld [vmem:[%s1798 + $0x11e0] sm:$0xff]
                  %2373 = vst [vmem:[%s1799 + $0x478] sm:$0xff] %v2372
                  %v2374 = vld [vmem:[%s1798 + $0x11f0] sm:$0xff]
                  %2375 = vst [vmem:[%s1799 + $0x47c] sm:$0xff] %v2374
                  %v2376 = vld [vmem:[%s1798 + $0x1200] sm:$0xff]
                  %2377 = vst [vmem:[%s1799 + $0x480] sm:$0xff] %v2376
                  %v2378 = vld [vmem:[%s1798 + $0x1210] sm:$0xff]
                  %2379 = vst [vmem:[%s1799 + $0x484] sm:$0xff] %v2378
                  %v2380 = vld [vmem:[%s1798 + $0x1220] sm:$0xff]
                  %2381 = vst [vmem:[%s1799 + $0x488] sm:$0xff] %v2380
                  %v2382 = vld [vmem:[%s1798 + $0x1230] sm:$0xff]
                  %2383 = vst [vmem:[%s1799 + $0x48c] sm:$0xff] %v2382
                  %v2384 = vld [vmem:[%s1798 + $0x1240] sm:$0xff]
                  %2385 = vst [vmem:[%s1799 + $0x490] sm:$0xff] %v2384
                  %v2386 = vld [vmem:[%s1798 + $0x1250] sm:$0xff]
                  %2387 = vst [vmem:[%s1799 + $0x494] sm:$0xff] %v2386
                  %v2388 = vld [vmem:[%s1798 + $0x1260] sm:$0xff]
                  %2389 = vst [vmem:[%s1799 + $0x498] sm:$0xff] %v2388
                  %v2390 = vld [vmem:[%s1798 + $0x1270] sm:$0xff]
                  %2391 = vst [vmem:[%s1799 + $0x49c] sm:$0xff] %v2390
                  %v2392 = vld [vmem:[%s1798 + $0x1280] sm:$0xff]
                  %2393 = vst [vmem:[%s1799 + $0x4a0] sm:$0xff] %v2392
                  %v2394 = vld [vmem:[%s1798 + $0x1290] sm:$0xff]
                  %2395 = vst [vmem:[%s1799 + $0x4a4] sm:$0xff] %v2394
                  %v2396 = vld [vmem:[%s1798 + $0x12a0] sm:$0xff]
                  %2397 = vst [vmem:[%s1799 + $0x4a8] sm:$0xff] %v2396
                  %v2398 = vld [vmem:[%s1798 + $0x12b0] sm:$0xff]
                  %2399 = vst [vmem:[%s1799 + $0x4ac] sm:$0xff] %v2398
                  %v2400 = vld [vmem:[%s1798 + $0x12c0] sm:$0xff]
                  %2401 = vst [vmem:[%s1799 + $0x4b0] sm:$0xff] %v2400
                  %v2402 = vld [vmem:[%s1798 + $0x12d0] sm:$0xff]
                  %2403 = vst [vmem:[%s1799 + $0x4b4] sm:$0xff] %v2402
                  %v2404 = vld [vmem:[%s1798 + $0x12e0] sm:$0xff]
                  %2405 = vst [vmem:[%s1799 + $0x4b8] sm:$0xff] %v2404
                  %v2406 = vld [vmem:[%s1798 + $0x12f0] sm:$0xff]
                  %2407 = vst [vmem:[%s1799 + $0x4bc] sm:$0xff] %v2406
                  %v2408 = vld [vmem:[%s1798 + $0x1300] sm:$0xff]
                  %2409 = vst [vmem:[%s1799 + $0x4c0] sm:$0xff] %v2408
                  %v2410 = vld [vmem:[%s1798 + $0x1310] sm:$0xff]
                  %2411 = vst [vmem:[%s1799 + $0x4c4] sm:$0xff] %v2410
                  %v2412 = vld [vmem:[%s1798 + $0x1320] sm:$0xff]
                  %2413 = vst [vmem:[%s1799 + $0x4c8] sm:$0xff] %v2412
                  %v2414 = vld [vmem:[%s1798 + $0x1330] sm:$0xff]
                  %2415 = vst [vmem:[%s1799 + $0x4cc] sm:$0xff] %v2414
                  %v2416 = vld [vmem:[%s1798 + $0x1340] sm:$0xff]
                  %2417 = vst [vmem:[%s1799 + $0x4d0] sm:$0xff] %v2416
                  %v2418 = vld [vmem:[%s1798 + $0x1350] sm:$0xff]
                  %2419 = vst [vmem:[%s1799 + $0x4d4] sm:$0xff] %v2418
                  %v2420 = vld [vmem:[%s1798 + $0x1360] sm:$0xff]
                  %2421 = vst [vmem:[%s1799 + $0x4d8] sm:$0xff] %v2420
                  %v2422 = vld [vmem:[%s1798 + $0x1370] sm:$0xff]
                  %2423 = vst [vmem:[%s1799 + $0x4dc] sm:$0xff] %v2422
                  %v2424 = vld [vmem:[%s1798 + $0x1380] sm:$0xff]
                  %2425 = vst [vmem:[%s1799 + $0x4e0] sm:$0xff] %v2424
                  %v2426 = vld [vmem:[%s1798 + $0x1390] sm:$0xff]
                  %2427 = vst [vmem:[%s1799 + $0x4e4] sm:$0xff] %v2426
                  %v2428 = vld [vmem:[%s1798 + $0x13a0] sm:$0xff]
                  %2429 = vst [vmem:[%s1799 + $0x4e8] sm:$0xff] %v2428
                  %v2430 = vld [vmem:[%s1798 + $0x13b0] sm:$0xff]
                  %2431 = vst [vmem:[%s1799 + $0x4ec] sm:$0xff] %v2430
                  %v2432 = vld [vmem:[%s1798 + $0x13c0] sm:$0xff]
                  %2433 = vst [vmem:[%s1799 + $0x4f0] sm:$0xff] %v2432
                  %v2434 = vld [vmem:[%s1798 + $0x13d0] sm:$0xff]
                  %2435 = vst [vmem:[%s1799 + $0x4f4] sm:$0xff] %v2434
                  %v2436 = vld [vmem:[%s1798 + $0x13e0] sm:$0xff]
                  %2437 = vst [vmem:[%s1799 + $0x4f8] sm:$0xff] %v2436
                  %v2438 = vld [vmem:[%s1798 + $0x13f0] sm:$0xff]
                  %2439 = vst [vmem:[%s1799 + $0x4fc] sm:$0xff] %v2438
                  %v2440 = vld [vmem:[%s1798 + $0x1400] sm:$0xff]
                  %2441 = vst [vmem:[%s1799 + $0x500] sm:$0xff] %v2440
                  %v2442 = vld [vmem:[%s1798 + $0x1410] sm:$0xff]
                  %2443 = vst [vmem:[%s1799 + $0x504] sm:$0xff] %v2442
                  %v2444 = vld [vmem:[%s1798 + $0x1420] sm:$0xff]
                  %2445 = vst [vmem:[%s1799 + $0x508] sm:$0xff] %v2444
                  %v2446 = vld [vmem:[%s1798 + $0x1430] sm:$0xff]
                  %2447 = vst [vmem:[%s1799 + $0x50c] sm:$0xff] %v2446
                  %v2448 = vld [vmem:[%s1798 + $0x1440] sm:$0xff]
                  %2449 = vst [vmem:[%s1799 + $0x510] sm:$0xff] %v2448
                  %v2450 = vld [vmem:[%s1798 + $0x1450] sm:$0xff]
                  %2451 = vst [vmem:[%s1799 + $0x514] sm:$0xff] %v2450
                  %v2452 = vld [vmem:[%s1798 + $0x1460] sm:$0xff]
                  %2453 = vst [vmem:[%s1799 + $0x518] sm:$0xff] %v2452
                  %v2454 = vld [vmem:[%s1798 + $0x1470] sm:$0xff]
                  %2455 = vst [vmem:[%s1799 + $0x51c] sm:$0xff] %v2454
                  %v2456 = vld [vmem:[%s1798 + $0x1480] sm:$0xff]
                  %2457 = vst [vmem:[%s1799 + $0x520] sm:$0xff] %v2456
                  %v2458 = vld [vmem:[%s1798 + $0x1490] sm:$0xff]
                  %2459 = vst [vmem:[%s1799 + $0x524] sm:$0xff] %v2458
                  %v2460 = vld [vmem:[%s1798 + $0x14a0] sm:$0xff]
                  %2461 = vst [vmem:[%s1799 + $0x528] sm:$0xff] %v2460
                  %v2462 = vld [vmem:[%s1798 + $0x14b0] sm:$0xff]
                  %2463 = vst [vmem:[%s1799 + $0x52c] sm:$0xff] %v2462
                  %v2464 = vld [vmem:[%s1798 + $0x14c0] sm:$0xff]
                  %2465 = vst [vmem:[%s1799 + $0x530] sm:$0xff] %v2464
                  %v2466 = vld [vmem:[%s1798 + $0x14d0] sm:$0xff]
                  %2467 = vst [vmem:[%s1799 + $0x534] sm:$0xff] %v2466
                  %v2468 = vld [vmem:[%s1798 + $0x14e0] sm:$0xff]
                  %2469 = vst [vmem:[%s1799 + $0x538] sm:$0xff] %v2468
                  %v2470 = vld [vmem:[%s1798 + $0x14f0] sm:$0xff]
                  %2471 = vst [vmem:[%s1799 + $0x53c] sm:$0xff] %v2470
                  %v2472 = vld [vmem:[%s1798 + $0x1500] sm:$0xff]
                  %2473 = vst [vmem:[%s1799 + $0x540] sm:$0xff] %v2472
                  %v2474 = vld [vmem:[%s1798 + $0x1510] sm:$0xff]
                  %2475 = vst [vmem:[%s1799 + $0x544] sm:$0xff] %v2474
                  %v2476 = vld [vmem:[%s1798 + $0x1520] sm:$0xff]
                  %2477 = vst [vmem:[%s1799 + $0x548] sm:$0xff] %v2476
                  %v2478 = vld [vmem:[%s1798 + $0x1530] sm:$0xff]
                  %2479 = vst [vmem:[%s1799 + $0x54c] sm:$0xff] %v2478
                  %v2480 = vld [vmem:[%s1798 + $0x1540] sm:$0xff]
                  %2481 = vst [vmem:[%s1799 + $0x550] sm:$0xff] %v2480
                  %v2482 = vld [vmem:[%s1798 + $0x1550] sm:$0xff]
                  %2483 = vst [vmem:[%s1799 + $0x554] sm:$0xff] %v2482
                  %v2484 = vld [vmem:[%s1798 + $0x1560] sm:$0xff]
                  %2485 = vst [vmem:[%s1799 + $0x558] sm:$0xff] %v2484
                  %v2486 = vld [vmem:[%s1798 + $0x1570] sm:$0xff]
                  %2487 = vst [vmem:[%s1799 + $0x55c] sm:$0xff] %v2486
                  %v2488 = vld [vmem:[%s1798 + $0x1580] sm:$0xff]
                  %2489 = vst [vmem:[%s1799 + $0x560] sm:$0xff] %v2488
                  %v2490 = vld [vmem:[%s1798 + $0x1590] sm:$0xff]
                  %2491 = vst [vmem:[%s1799 + $0x564] sm:$0xff] %v2490
                  %v2492 = vld [vmem:[%s1798 + $0x15a0] sm:$0xff]
                  %2493 = vst [vmem:[%s1799 + $0x568] sm:$0xff] %v2492
                  %v2494 = vld [vmem:[%s1798 + $0x15b0] sm:$0xff]
                  %2495 = vst [vmem:[%s1799 + $0x56c] sm:$0xff] %v2494
                  %v2496 = vld [vmem:[%s1798 + $0x15c0] sm:$0xff]
                  %2497 = vst [vmem:[%s1799 + $0x570] sm:$0xff] %v2496
                  %v2498 = vld [vmem:[%s1798 + $0x15d0] sm:$0xff]
                  %2499 = vst [vmem:[%s1799 + $0x574] sm:$0xff] %v2498
                  %v2500 = vld [vmem:[%s1798 + $0x15e0] sm:$0xff]
                  %2501 = vst [vmem:[%s1799 + $0x578] sm:$0xff] %v2500
                  %v2502 = vld [vmem:[%s1798 + $0x15f0] sm:$0xff]
                  %2503 = vst [vmem:[%s1799 + $0x57c] sm:$0xff] %v2502
                  %v2504 = vld [vmem:[%s1798 + $0x1600] sm:$0xff]
                  %2505 = vst [vmem:[%s1799 + $0x580] sm:$0xff] %v2504
                  %v2506 = vld [vmem:[%s1798 + $0x1610] sm:$0xff]
                  %2507 = vst [vmem:[%s1799 + $0x584] sm:$0xff] %v2506
                  %v2508 = vld [vmem:[%s1798 + $0x1620] sm:$0xff]
                  %2509 = vst [vmem:[%s1799 + $0x588] sm:$0xff] %v2508
                  %v2510 = vld [vmem:[%s1798 + $0x1630] sm:$0xff]
                  %2511 = vst [vmem:[%s1799 + $0x58c] sm:$0xff] %v2510
                  %v2512 = vld [vmem:[%s1798 + $0x1640] sm:$0xff]
                  %2513 = vst [vmem:[%s1799 + $0x590] sm:$0xff] %v2512
                  %v2514 = vld [vmem:[%s1798 + $0x1650] sm:$0xff]
                  %2515 = vst [vmem:[%s1799 + $0x594] sm:$0xff] %v2514
                  %v2516 = vld [vmem:[%s1798 + $0x1660] sm:$0xff]
                  %2517 = vst [vmem:[%s1799 + $0x598] sm:$0xff] %v2516
                  %v2518 = vld [vmem:[%s1798 + $0x1670] sm:$0xff]
                  %2519 = vst [vmem:[%s1799 + $0x59c] sm:$0xff] %v2518
                  %v2520 = vld [vmem:[%s1798 + $0x1680] sm:$0xff]
                  %2521 = vst [vmem:[%s1799 + $0x5a0] sm:$0xff] %v2520
                  %v2522 = vld [vmem:[%s1798 + $0x1690] sm:$0xff]
                  %2523 = vst [vmem:[%s1799 + $0x5a4] sm:$0xff] %v2522
                  %v2524 = vld [vmem:[%s1798 + $0x16a0] sm:$0xff]
                  %2525 = vst [vmem:[%s1799 + $0x5a8] sm:$0xff] %v2524
                  %v2526 = vld [vmem:[%s1798 + $0x16b0] sm:$0xff]
                  %2527 = vst [vmem:[%s1799 + $0x5ac] sm:$0xff] %v2526
                  %v2528 = vld [vmem:[%s1798 + $0x16c0] sm:$0xff]
                  %2529 = vst [vmem:[%s1799 + $0x5b0] sm:$0xff] %v2528
                  %v2530 = vld [vmem:[%s1798 + $0x16d0] sm:$0xff]
                  %2531 = vst [vmem:[%s1799 + $0x5b4] sm:$0xff] %v2530
                  %v2532 = vld [vmem:[%s1798 + $0x16e0] sm:$0xff]
                  %2533 = vst [vmem:[%s1799 + $0x5b8] sm:$0xff] %v2532
                  %v2534 = vld [vmem:[%s1798 + $0x16f0] sm:$0xff]
                  %2535 = vst [vmem:[%s1799 + $0x5bc] sm:$0xff] %v2534
                  %v2536 = vld [vmem:[%s1798 + $0x1700] sm:$0xff]
                  %2537 = vst [vmem:[%s1799 + $0x5c0] sm:$0xff] %v2536
                  %v2538 = vld [vmem:[%s1798 + $0x1710] sm:$0xff]
                  %2539 = vst [vmem:[%s1799 + $0x5c4] sm:$0xff] %v2538
                  %v2540 = vld [vmem:[%s1798 + $0x1720] sm:$0xff]
                  %2541 = vst [vmem:[%s1799 + $0x5c8] sm:$0xff] %v2540
                  %v2542 = vld [vmem:[%s1798 + $0x1730] sm:$0xff]
                  %2543 = vst [vmem:[%s1799 + $0x5cc] sm:$0xff] %v2542
                  %v2544 = vld [vmem:[%s1798 + $0x1740] sm:$0xff]
                  %2545 = vst [vmem:[%s1799 + $0x5d0] sm:$0xff] %v2544
                  %v2546 = vld [vmem:[%s1798 + $0x1750] sm:$0xff]
                  %2547 = vst [vmem:[%s1799 + $0x5d4] sm:$0xff] %v2546
                  %v2548 = vld [vmem:[%s1798 + $0x1760] sm:$0xff]
                  %2549 = vst [vmem:[%s1799 + $0x5d8] sm:$0xff] %v2548
                  %v2550 = vld [vmem:[%s1798 + $0x1770] sm:$0xff]
                  %2551 = vst [vmem:[%s1799 + $0x5dc] sm:$0xff] %v2550
                  %v2552 = vld [vmem:[%s1798 + $0x1780] sm:$0xff]
                  %2553 = vst [vmem:[%s1799 + $0x5e0] sm:$0xff] %v2552
                  %v2554 = vld [vmem:[%s1798 + $0x1790] sm:$0xff]
                  %2555 = vst [vmem:[%s1799 + $0x5e4] sm:$0xff] %v2554
                  %v2556 = vld [vmem:[%s1798 + $0x17a0] sm:$0xff]
                  %2557 = vst [vmem:[%s1799 + $0x5e8] sm:$0xff] %v2556
                  %v2558 = vld [vmem:[%s1798 + $0x17b0] sm:$0xff]
                  %2559 = vst [vmem:[%s1799 + $0x5ec] sm:$0xff] %v2558
                  %v2560 = vld [vmem:[%s1798 + $0x17c0] sm:$0xff]
                  %2561 = vst [vmem:[%s1799 + $0x5f0] sm:$0xff] %v2560
                  %v2562 = vld [vmem:[%s1798 + $0x17d0] sm:$0xff]
                  %2563 = vst [vmem:[%s1799 + $0x5f4] sm:$0xff] %v2562
                  %v2564 = vld [vmem:[%s1798 + $0x17e0] sm:$0xff]
                  %2565 = vst [vmem:[%s1799 + $0x5f8] sm:$0xff] %v2564
                  %v2566 = vld [vmem:[%s1798 + $0x17f0] sm:$0xff]
                  %2567 = vst [vmem:[%s1799 + $0x5fc] sm:$0xff] %v2566
                  %v2568 = vld [vmem:[%s1798 + $0x1800] sm:$0xff]
                  %2569 = vst [vmem:[%s1799 + $0x600] sm:$0xff] %v2568
                  %v2570 = vld [vmem:[%s1798 + $0x1810] sm:$0xff]
                  %2571 = vst [vmem:[%s1799 + $0x604] sm:$0xff] %v2570
                  %v2572 = vld [vmem:[%s1798 + $0x1820] sm:$0xff]
                  %2573 = vst [vmem:[%s1799 + $0x608] sm:$0xff] %v2572
                  %v2574 = vld [vmem:[%s1798 + $0x1830] sm:$0xff]
                  %2575 = vst [vmem:[%s1799 + $0x60c] sm:$0xff] %v2574
                  %v2576 = vld [vmem:[%s1798 + $0x1840] sm:$0xff]
                  %2577 = vst [vmem:[%s1799 + $0x610] sm:$0xff] %v2576
                  %v2578 = vld [vmem:[%s1798 + $0x1850] sm:$0xff]
                  %2579 = vst [vmem:[%s1799 + $0x614] sm:$0xff] %v2578
                  %v2580 = vld [vmem:[%s1798 + $0x1860] sm:$0xff]
                  %2581 = vst [vmem:[%s1799 + $0x618] sm:$0xff] %v2580
                  %v2582 = vld [vmem:[%s1798 + $0x1870] sm:$0xff]
                  %2583 = vst [vmem:[%s1799 + $0x61c] sm:$0xff] %v2582
                  %s2584 = sadd.s32 1, %s1797
                  %p2585 = scmp.ge.s32.totalorder %s2584, 0
                  %s2586 = scalar_select %p2585, 0, %s2584
                  %s2587 = smul.u32 %s2586, 8
                  %s2588 = smul.u32 %s2586, 8
                  %s2589 = scalar_lea.vmem %s186, %s2587
                  %s2590 = scalar_lea.vmem %s184, %s2588 [#allocation2]
                $region67: #{forward.7} parent=61 // loop_footer
                  %s1796 = sadd.s32 1, %s1792
                $region68: #{forward.7} parent=61 // loop_footer_branch
                  %1791 = sbr.rel target = $region64
                $region69: #{forward.7} parent=61 // loop_exit
                  _
                %s2592 = ssub.s32 16, 1
                loop: start=0, step=1, limit=1
                $region70: #{forward.7} parent=61 // loop_pre_header
                  _
                $region71: #{forward.7} parent=61 // loop_header
                  %s2594 = sphi 0, %s2598
                  %p2595 = scmp.ge.s32.totalorder %s2594, 1
                  %s2599 = sphi %s186, %s186
                  %s2600 = sphi %s184, %s184
                $region72: #{forward.7} parent=61 // loop_header_branch
                  %2597 = sbr.rel (%p2595) target = $region76
                $region73: #{forward.7} parent=61 // loop_body
                  %v2601 = vld [vmem:[%s2599] sm:%s2592]
                  %2602 = vst [vmem:[%s2600] sm:%s2592] %v2601
                  %v2603 = vld [vmem:[%s2599 + $0x10] sm:%s2592]
                  %2604 = vst [vmem:[%s2600 + $0x4] sm:%s2592] %v2603
                  %v2605 = vld [vmem:[%s2599 + $0x20] sm:%s2592]
                  %2606 = vst [vmem:[%s2600 + $0x8] sm:%s2592] %v2605
                  %v2607 = vld [vmem:[%s2599 + $0x30] sm:%s2592]
                  %2608 = vst [vmem:[%s2600 + $0xc] sm:%s2592] %v2607
                  %v2609 = vld [vmem:[%s2599 + $0x40] sm:%s2592]
                  %2610 = vst [vmem:[%s2600 + $0x10] sm:%s2592] %v2609
                  %v2611 = vld [vmem:[%s2599 + $0x50] sm:%s2592]
                  %2612 = vst [vmem:[%s2600 + $0x14] sm:%s2592] %v2611
                  %v2613 = vld [vmem:[%s2599 + $0x60] sm:%s2592]
                  %2614 = vst [vmem:[%s2600 + $0x18] sm:%s2592] %v2613
                  %v2615 = vld [vmem:[%s2599 + $0x70] sm:%s2592]
                  %2616 = vst [vmem:[%s2600 + $0x1c] sm:%s2592] %v2615
                  %v2617 = vld [vmem:[%s2599 + $0x80] sm:%s2592]
                  %2618 = vst [vmem:[%s2600 + $0x20] sm:%s2592] %v2617
                  %v2619 = vld [vmem:[%s2599 + $0x90] sm:%s2592]
                  %2620 = vst [vmem:[%s2600 + $0x24] sm:%s2592] %v2619
                  %v2621 = vld [vmem:[%s2599 + $0xa0] sm:%s2592]
                  %2622 = vst [vmem:[%s2600 + $0x28] sm:%s2592] %v2621
                  %v2623 = vld [vmem:[%s2599 + $0xb0] sm:%s2592]
                  %2624 = vst [vmem:[%s2600 + $0x2c] sm:%s2592] %v2623
                  %v2625 = vld [vmem:[%s2599 + $0xc0] sm:%s2592]
                  %2626 = vst [vmem:[%s2600 + $0x30] sm:%s2592] %v2625
                  %v2627 = vld [vmem:[%s2599 + $0xd0] sm:%s2592]
                  %2628 = vst [vmem:[%s2600 + $0x34] sm:%s2592] %v2627
                  %v2629 = vld [vmem:[%s2599 + $0xe0] sm:%s2592]
                  %2630 = vst [vmem:[%s2600 + $0x38] sm:%s2592] %v2629
                  %v2631 = vld [vmem:[%s2599 + $0xf0] sm:%s2592]
                  %2632 = vst [vmem:[%s2600 + $0x3c] sm:%s2592] %v2631
                  %v2633 = vld [vmem:[%s2599 + $0x100] sm:%s2592]
                  %2634 = vst [vmem:[%s2600 + $0x40] sm:%s2592] %v2633
                  %v2635 = vld [vmem:[%s2599 + $0x110] sm:%s2592]
                  %2636 = vst [vmem:[%s2600 + $0x44] sm:%s2592] %v2635
                  %v2637 = vld [vmem:[%s2599 + $0x120] sm:%s2592]
                  %2638 = vst [vmem:[%s2600 + $0x48] sm:%s2592] %v2637
                  %v2639 = vld [vmem:[%s2599 + $0x130] sm:%s2592]
                  %2640 = vst [vmem:[%s2600 + $0x4c] sm:%s2592] %v2639
                  %v2641 = vld [vmem:[%s2599 + $0x140] sm:%s2592]
                  %2642 = vst [vmem:[%s2600 + $0x50] sm:%s2592] %v2641
                  %v2643 = vld [vmem:[%s2599 + $0x150] sm:%s2592]
                  %2644 = vst [vmem:[%s2600 + $0x54] sm:%s2592] %v2643
                  %v2645 = vld [vmem:[%s2599 + $0x160] sm:%s2592]
                  %2646 = vst [vmem:[%s2600 + $0x58] sm:%s2592] %v2645
                  %v2647 = vld [vmem:[%s2599 + $0x170] sm:%s2592]
                  %2648 = vst [vmem:[%s2600 + $0x5c] sm:%s2592] %v2647
                  %v2649 = vld [vmem:[%s2599 + $0x180] sm:%s2592]
                  %2650 = vst [vmem:[%s2600 + $0x60] sm:%s2592] %v2649
                  %v2651 = vld [vmem:[%s2599 + $0x190] sm:%s2592]
                  %2652 = vst [vmem:[%s2600 + $0x64] sm:%s2592] %v2651
                  %v2653 = vld [vmem:[%s2599 + $0x1a0] sm:%s2592]
                  %2654 = vst [vmem:[%s2600 + $0x68] sm:%s2592] %v2653
                  %v2655 = vld [vmem:[%s2599 + $0x1b0] sm:%s2592]
                  %2656 = vst [vmem:[%s2600 + $0x6c] sm:%s2592] %v2655
                  %v2657 = vld [vmem:[%s2599 + $0x1c0] sm:%s2592]
                  %2658 = vst [vmem:[%s2600 + $0x70] sm:%s2592] %v2657
                  %v2659 = vld [vmem:[%s2599 + $0x1d0] sm:%s2592]
                  %2660 = vst [vmem:[%s2600 + $0x74] sm:%s2592] %v2659
                  %v2661 = vld [vmem:[%s2599 + $0x1e0] sm:%s2592]
                  %2662 = vst [vmem:[%s2600 + $0x78] sm:%s2592] %v2661
                  %v2663 = vld [vmem:[%s2599 + $0x1f0] sm:%s2592]
                  %2664 = vst [vmem:[%s2600 + $0x7c] sm:%s2592] %v2663
                  %v2665 = vld [vmem:[%s2599 + $0x200] sm:%s2592]
                  %2666 = vst [vmem:[%s2600 + $0x80] sm:%s2592] %v2665
                  %v2667 = vld [vmem:[%s2599 + $0x210] sm:%s2592]
                  %2668 = vst [vmem:[%s2600 + $0x84] sm:%s2592] %v2667
                  %v2669 = vld [vmem:[%s2599 + $0x220] sm:%s2592]
                  %2670 = vst [vmem:[%s2600 + $0x88] sm:%s2592] %v2669
                  %v2671 = vld [vmem:[%s2599 + $0x230] sm:%s2592]
                  %2672 = vst [vmem:[%s2600 + $0x8c] sm:%s2592] %v2671
                  %v2673 = vld [vmem:[%s2599 + $0x240] sm:%s2592]
                  %2674 = vst [vmem:[%s2600 + $0x90] sm:%s2592] %v2673
                  %v2675 = vld [vmem:[%s2599 + $0x250] sm:%s2592]
                  %2676 = vst [vmem:[%s2600 + $0x94] sm:%s2592] %v2675
                  %v2677 = vld [vmem:[%s2599 + $0x260] sm:%s2592]
                  %2678 = vst [vmem:[%s2600 + $0x98] sm:%s2592] %v2677
                  %v2679 = vld [vmem:[%s2599 + $0x270] sm:%s2592]
                  %2680 = vst [vmem:[%s2600 + $0x9c] sm:%s2592] %v2679
                  %v2681 = vld [vmem:[%s2599 + $0x280] sm:%s2592]
                  %2682 = vst [vmem:[%s2600 + $0xa0] sm:%s2592] %v2681
                  %v2683 = vld [vmem:[%s2599 + $0x290] sm:%s2592]
                  %2684 = vst [vmem:[%s2600 + $0xa4] sm:%s2592] %v2683
                  %v2685 = vld [vmem:[%s2599 + $0x2a0] sm:%s2592]
                  %2686 = vst [vmem:[%s2600 + $0xa8] sm:%s2592] %v2685
                  %v2687 = vld [vmem:[%s2599 + $0x2b0] sm:%s2592]
                  %2688 = vst [vmem:[%s2600 + $0xac] sm:%s2592] %v2687
                  %v2689 = vld [vmem:[%s2599 + $0x2c0] sm:%s2592]
                  %2690 = vst [vmem:[%s2600 + $0xb0] sm:%s2592] %v2689
                  %v2691 = vld [vmem:[%s2599 + $0x2d0] sm:%s2592]
                  %2692 = vst [vmem:[%s2600 + $0xb4] sm:%s2592] %v2691
                  %v2693 = vld [vmem:[%s2599 + $0x2e0] sm:%s2592]
                  %2694 = vst [vmem:[%s2600 + $0xb8] sm:%s2592] %v2693
                  %v2695 = vld [vmem:[%s2599 + $0x2f0] sm:%s2592]
                  %2696 = vst [vmem:[%s2600 + $0xbc] sm:%s2592] %v2695
                  %v2697 = vld [vmem:[%s2599 + $0x300] sm:%s2592]
                  %2698 = vst [vmem:[%s2600 + $0xc0] sm:%s2592] %v2697
                  %v2699 = vld [vmem:[%s2599 + $0x310] sm:%s2592]
                  %2700 = vst [vmem:[%s2600 + $0xc4] sm:%s2592] %v2699
                  %v2701 = vld [vmem:[%s2599 + $0x320] sm:%s2592]
                  %2702 = vst [vmem:[%s2600 + $0xc8] sm:%s2592] %v2701
                  %v2703 = vld [vmem:[%s2599 + $0x330] sm:%s2592]
                  %2704 = vst [vmem:[%s2600 + $0xcc] sm:%s2592] %v2703
                  %v2705 = vld [vmem:[%s2599 + $0x340] sm:%s2592]
                  %2706 = vst [vmem:[%s2600 + $0xd0] sm:%s2592] %v2705
                  %v2707 = vld [vmem:[%s2599 + $0x350] sm:%s2592]
                  %2708 = vst [vmem:[%s2600 + $0xd4] sm:%s2592] %v2707
                  %v2709 = vld [vmem:[%s2599 + $0x360] sm:%s2592]
                  %2710 = vst [vmem:[%s2600 + $0xd8] sm:%s2592] %v2709
                  %v2711 = vld [vmem:[%s2599 + $0x370] sm:%s2592]
                  %2712 = vst [vmem:[%s2600 + $0xdc] sm:%s2592] %v2711
                  %v2713 = vld [vmem:[%s2599 + $0x380] sm:%s2592]
                  %2714 = vst [vmem:[%s2600 + $0xe0] sm:%s2592] %v2713
                  %v2715 = vld [vmem:[%s2599 + $0x390] sm:%s2592]
                  %2716 = vst [vmem:[%s2600 + $0xe4] sm:%s2592] %v2715
                  %v2717 = vld [vmem:[%s2599 + $0x3a0] sm:%s2592]
                  %2718 = vst [vmem:[%s2600 + $0xe8] sm:%s2592] %v2717
                  %v2719 = vld [vmem:[%s2599 + $0x3b0] sm:%s2592]
                  %2720 = vst [vmem:[%s2600 + $0xec] sm:%s2592] %v2719
                  %v2721 = vld [vmem:[%s2599 + $0x3c0] sm:%s2592]
                  %2722 = vst [vmem:[%s2600 + $0xf0] sm:%s2592] %v2721
                  %v2723 = vld [vmem:[%s2599 + $0x3d0] sm:%s2592]
                  %2724 = vst [vmem:[%s2600 + $0xf4] sm:%s2592] %v2723
                  %v2725 = vld [vmem:[%s2599 + $0x3e0] sm:%s2592]
                  %2726 = vst [vmem:[%s2600 + $0xf8] sm:%s2592] %v2725
                  %v2727 = vld [vmem:[%s2599 + $0x3f0] sm:%s2592]
                  %2728 = vst [vmem:[%s2600 + $0xfc] sm:%s2592] %v2727
                  %v2729 = vld [vmem:[%s2599 + $0x400] sm:%s2592]
                  %2730 = vst [vmem:[%s2600 + $0x100] sm:%s2592] %v2729
                  %v2731 = vld [vmem:[%s2599 + $0x410] sm:%s2592]
                  %2732 = vst [vmem:[%s2600 + $0x104] sm:%s2592] %v2731
                  %v2733 = vld [vmem:[%s2599 + $0x420] sm:%s2592]
                  %2734 = vst [vmem:[%s2600 + $0x108] sm:%s2592] %v2733
                  %v2735 = vld [vmem:[%s2599 + $0x430] sm:%s2592]
                  %2736 = vst [vmem:[%s2600 + $0x10c] sm:%s2592] %v2735
                  %v2737 = vld [vmem:[%s2599 + $0x440] sm:%s2592]
                  %2738 = vst [vmem:[%s2600 + $0x110] sm:%s2592] %v2737
                  %v2739 = vld [vmem:[%s2599 + $0x450] sm:%s2592]
                  %2740 = vst [vmem:[%s2600 + $0x114] sm:%s2592] %v2739
                  %v2741 = vld [vmem:[%s2599 + $0x460] sm:%s2592]
                  %2742 = vst [vmem:[%s2600 + $0x118] sm:%s2592] %v2741
                  %v2743 = vld [vmem:[%s2599 + $0x470] sm:%s2592]
                  %2744 = vst [vmem:[%s2600 + $0x11c] sm:%s2592] %v2743
                  %v2745 = vld [vmem:[%s2599 + $0x480] sm:%s2592]
                  %2746 = vst [vmem:[%s2600 + $0x120] sm:%s2592] %v2745
                  %v2747 = vld [vmem:[%s2599 + $0x490] sm:%s2592]
                  %2748 = vst [vmem:[%s2600 + $0x124] sm:%s2592] %v2747
                  %v2749 = vld [vmem:[%s2599 + $0x4a0] sm:%s2592]
                  %2750 = vst [vmem:[%s2600 + $0x128] sm:%s2592] %v2749
                  %v2751 = vld [vmem:[%s2599 + $0x4b0] sm:%s2592]
                  %2752 = vst [vmem:[%s2600 + $0x12c] sm:%s2592] %v2751
                  %v2753 = vld [vmem:[%s2599 + $0x4c0] sm:%s2592]
                  %2754 = vst [vmem:[%s2600 + $0x130] sm:%s2592] %v2753
                  %v2755 = vld [vmem:[%s2599 + $0x4d0] sm:%s2592]
                  %2756 = vst [vmem:[%s2600 + $0x134] sm:%s2592] %v2755
                  %v2757 = vld [vmem:[%s2599 + $0x4e0] sm:%s2592]
                  %2758 = vst [vmem:[%s2600 + $0x138] sm:%s2592] %v2757
                  %v2759 = vld [vmem:[%s2599 + $0x4f0] sm:%s2592]
                  %2760 = vst [vmem:[%s2600 + $0x13c] sm:%s2592] %v2759
                  %v2761 = vld [vmem:[%s2599 + $0x500] sm:%s2592]
                  %2762 = vst [vmem:[%s2600 + $0x140] sm:%s2592] %v2761
                  %v2763 = vld [vmem:[%s2599 + $0x510] sm:%s2592]
                  %2764 = vst [vmem:[%s2600 + $0x144] sm:%s2592] %v2763
                  %v2765 = vld [vmem:[%s2599 + $0x520] sm:%s2592]
                  %2766 = vst [vmem:[%s2600 + $0x148] sm:%s2592] %v2765
                  %v2767 = vld [vmem:[%s2599 + $0x530] sm:%s2592]
                  %2768 = vst [vmem:[%s2600 + $0x14c] sm:%s2592] %v2767
                  %v2769 = vld [vmem:[%s2599 + $0x540] sm:%s2592]
                  %2770 = vst [vmem:[%s2600 + $0x150] sm:%s2592] %v2769
                  %v2771 = vld [vmem:[%s2599 + $0x550] sm:%s2592]
                  %2772 = vst [vmem:[%s2600 + $0x154] sm:%s2592] %v2771
                  %v2773 = vld [vmem:[%s2599 + $0x560] sm:%s2592]
                  %2774 = vst [vmem:[%s2600 + $0x158] sm:%s2592] %v2773
                  %v2775 = vld [vmem:[%s2599 + $0x570] sm:%s2592]
                  %2776 = vst [vmem:[%s2600 + $0x15c] sm:%s2592] %v2775
                  %v2777 = vld [vmem:[%s2599 + $0x580] sm:%s2592]
                  %2778 = vst [vmem:[%s2600 + $0x160] sm:%s2592] %v2777
                  %v2779 = vld [vmem:[%s2599 + $0x590] sm:%s2592]
                  %2780 = vst [vmem:[%s2600 + $0x164] sm:%s2592] %v2779
                  %v2781 = vld [vmem:[%s2599 + $0x5a0] sm:%s2592]
                  %2782 = vst [vmem:[%s2600 + $0x168] sm:%s2592] %v2781
                  %v2783 = vld [vmem:[%s2599 + $0x5b0] sm:%s2592]
                  %2784 = vst [vmem:[%s2600 + $0x16c] sm:%s2592] %v2783
                  %v2785 = vld [vmem:[%s2599 + $0x5c0] sm:%s2592]
                  %2786 = vst [vmem:[%s2600 + $0x170] sm:%s2592] %v2785
                  %v2787 = vld [vmem:[%s2599 + $0x5d0] sm:%s2592]
                  %2788 = vst [vmem:[%s2600 + $0x174] sm:%s2592] %v2787
                  %v2789 = vld [vmem:[%s2599 + $0x5e0] sm:%s2592]
                  %2790 = vst [vmem:[%s2600 + $0x178] sm:%s2592] %v2789
                  %v2791 = vld [vmem:[%s2599 + $0x5f0] sm:%s2592]
                  %2792 = vst [vmem:[%s2600 + $0x17c] sm:%s2592] %v2791
                  %v2793 = vld [vmem:[%s2599 + $0x600] sm:%s2592]
                  %2794 = vst [vmem:[%s2600 + $0x180] sm:%s2592] %v2793
                  %v2795 = vld [vmem:[%s2599 + $0x610] sm:%s2592]
                  %2796 = vst [vmem:[%s2600 + $0x184] sm:%s2592] %v2795
                  %v2797 = vld [vmem:[%s2599 + $0x620] sm:%s2592]
                  %2798 = vst [vmem:[%s2600 + $0x188] sm:%s2592] %v2797
                  %v2799 = vld [vmem:[%s2599 + $0x630] sm:%s2592]
                  %2800 = vst [vmem:[%s2600 + $0x18c] sm:%s2592] %v2799
                  %v2801 = vld [vmem:[%s2599 + $0x640] sm:%s2592]
                  %2802 = vst [vmem:[%s2600 + $0x190] sm:%s2592] %v2801
                  %v2803 = vld [vmem:[%s2599 + $0x650] sm:%s2592]
                  %2804 = vst [vmem:[%s2600 + $0x194] sm:%s2592] %v2803
                  %v2805 = vld [vmem:[%s2599 + $0x660] sm:%s2592]
                  %2806 = vst [vmem:[%s2600 + $0x198] sm:%s2592] %v2805
                  %v2807 = vld [vmem:[%s2599 + $0x670] sm:%s2592]
                  %2808 = vst [vmem:[%s2600 + $0x19c] sm:%s2592] %v2807
                  %v2809 = vld [vmem:[%s2599 + $0x680] sm:%s2592]
                  %2810 = vst [vmem:[%s2600 + $0x1a0] sm:%s2592] %v2809
                  %v2811 = vld [vmem:[%s2599 + $0x690] sm:%s2592]
                  %2812 = vst [vmem:[%s2600 + $0x1a4] sm:%s2592] %v2811
                  %v2813 = vld [vmem:[%s2599 + $0x6a0] sm:%s2592]
                  %2814 = vst [vmem:[%s2600 + $0x1a8] sm:%s2592] %v2813
                  %v2815 = vld [vmem:[%s2599 + $0x6b0] sm:%s2592]
                  %2816 = vst [vmem:[%s2600 + $0x1ac] sm:%s2592] %v2815
                  %v2817 = vld [vmem:[%s2599 + $0x6c0] sm:%s2592]
                  %2818 = vst [vmem:[%s2600 + $0x1b0] sm:%s2592] %v2817
                  %v2819 = vld [vmem:[%s2599 + $0x6d0] sm:%s2592]
                  %2820 = vst [vmem:[%s2600 + $0x1b4] sm:%s2592] %v2819
                  %v2821 = vld [vmem:[%s2599 + $0x6e0] sm:%s2592]
                  %2822 = vst [vmem:[%s2600 + $0x1b8] sm:%s2592] %v2821
                  %v2823 = vld [vmem:[%s2599 + $0x6f0] sm:%s2592]
                  %2824 = vst [vmem:[%s2600 + $0x1bc] sm:%s2592] %v2823
                  %v2825 = vld [vmem:[%s2599 + $0x700] sm:%s2592]
                  %2826 = vst [vmem:[%s2600 + $0x1c0] sm:%s2592] %v2825
                  %v2827 = vld [vmem:[%s2599 + $0x710] sm:%s2592]
                  %2828 = vst [vmem:[%s2600 + $0x1c4] sm:%s2592] %v2827
                  %v2829 = vld [vmem:[%s2599 + $0x720] sm:%s2592]
                  %2830 = vst [vmem:[%s2600 + $0x1c8] sm:%s2592] %v2829
                  %v2831 = vld [vmem:[%s2599 + $0x730] sm:%s2592]
                  %2832 = vst [vmem:[%s2600 + $0x1cc] sm:%s2592] %v2831
                  %v2833 = vld [vmem:[%s2599 + $0x740] sm:%s2592]
                  %2834 = vst [vmem:[%s2600 + $0x1d0] sm:%s2592] %v2833
                  %v2835 = vld [vmem:[%s2599 + $0x750] sm:%s2592]
                  %2836 = vst [vmem:[%s2600 + $0x1d4] sm:%s2592] %v2835
                  %v2837 = vld [vmem:[%s2599 + $0x760] sm:%s2592]
                  %2838 = vst [vmem:[%s2600 + $0x1d8] sm:%s2592] %v2837
                  %v2839 = vld [vmem:[%s2599 + $0x770] sm:%s2592]
                  %2840 = vst [vmem:[%s2600 + $0x1dc] sm:%s2592] %v2839
                  %v2841 = vld [vmem:[%s2599 + $0x780] sm:%s2592]
                  %2842 = vst [vmem:[%s2600 + $0x1e0] sm:%s2592] %v2841
                  %v2843 = vld [vmem:[%s2599 + $0x790] sm:%s2592]
                  %2844 = vst [vmem:[%s2600 + $0x1e4] sm:%s2592] %v2843
                  %v2845 = vld [vmem:[%s2599 + $0x7a0] sm:%s2592]
                  %2846 = vst [vmem:[%s2600 + $0x1e8] sm:%s2592] %v2845
                  %v2847 = vld [vmem:[%s2599 + $0x7b0] sm:%s2592]
                  %2848 = vst [vmem:[%s2600 + $0x1ec] sm:%s2592] %v2847
                  %v2849 = vld [vmem:[%s2599 + $0x7c0] sm:%s2592]
                  %2850 = vst [vmem:[%s2600 + $0x1f0] sm:%s2592] %v2849
                  %v2851 = vld [vmem:[%s2599 + $0x7d0] sm:%s2592]
                  %2852 = vst [vmem:[%s2600 + $0x1f4] sm:%s2592] %v2851
                  %v2853 = vld [vmem:[%s2599 + $0x7e0] sm:%s2592]
                  %2854 = vst [vmem:[%s2600 + $0x1f8] sm:%s2592] %v2853
                  %v2855 = vld [vmem:[%s2599 + $0x7f0] sm:%s2592]
                  %2856 = vst [vmem:[%s2600 + $0x1fc] sm:%s2592] %v2855
                  %v2857 = vld [vmem:[%s2599 + $0x800] sm:%s2592]
                  %2858 = vst [vmem:[%s2600 + $0x200] sm:%s2592] %v2857
                  %v2859 = vld [vmem:[%s2599 + $0x810] sm:%s2592]
                  %2860 = vst [vmem:[%s2600 + $0x204] sm:%s2592] %v2859
                  %v2861 = vld [vmem:[%s2599 + $0x820] sm:%s2592]
                  %2862 = vst [vmem:[%s2600 + $0x208] sm:%s2592] %v2861
                  %v2863 = vld [vmem:[%s2599 + $0x830] sm:%s2592]
                  %2864 = vst [vmem:[%s2600 + $0x20c] sm:%s2592] %v2863
                  %v2865 = vld [vmem:[%s2599 + $0x840] sm:%s2592]
                  %2866 = vst [vmem:[%s2600 + $0x210] sm:%s2592] %v2865
                  %v2867 = vld [vmem:[%s2599 + $0x850] sm:%s2592]
                  %2868 = vst [vmem:[%s2600 + $0x214] sm:%s2592] %v2867
                  %v2869 = vld [vmem:[%s2599 + $0x860] sm:%s2592]
                  %2870 = vst [vmem:[%s2600 + $0x218] sm:%s2592] %v2869
                  %v2871 = vld [vmem:[%s2599 + $0x870] sm:%s2592]
                  %2872 = vst [vmem:[%s2600 + $0x21c] sm:%s2592] %v2871
                  %v2873 = vld [vmem:[%s2599 + $0x880] sm:%s2592]
                  %2874 = vst [vmem:[%s2600 + $0x220] sm:%s2592] %v2873
                  %v2875 = vld [vmem:[%s2599 + $0x890] sm:%s2592]
                  %2876 = vst [vmem:[%s2600 + $0x224] sm:%s2592] %v2875
                  %v2877 = vld [vmem:[%s2599 + $0x8a0] sm:%s2592]
                  %2878 = vst [vmem:[%s2600 + $0x228] sm:%s2592] %v2877
                  %v2879 = vld [vmem:[%s2599 + $0x8b0] sm:%s2592]
                  %2880 = vst [vmem:[%s2600 + $0x22c] sm:%s2592] %v2879
                  %v2881 = vld [vmem:[%s2599 + $0x8c0] sm:%s2592]
                  %2882 = vst [vmem:[%s2600 + $0x230] sm:%s2592] %v2881
                  %v2883 = vld [vmem:[%s2599 + $0x8d0] sm:%s2592]
                  %2884 = vst [vmem:[%s2600 + $0x234] sm:%s2592] %v2883
                  %v2885 = vld [vmem:[%s2599 + $0x8e0] sm:%s2592]
                  %2886 = vst [vmem:[%s2600 + $0x238] sm:%s2592] %v2885
                  %v2887 = vld [vmem:[%s2599 + $0x8f0] sm:%s2592]
                  %2888 = vst [vmem:[%s2600 + $0x23c] sm:%s2592] %v2887
                  %v2889 = vld [vmem:[%s2599 + $0x900] sm:%s2592]
                  %2890 = vst [vmem:[%s2600 + $0x240] sm:%s2592] %v2889
                  %v2891 = vld [vmem:[%s2599 + $0x910] sm:%s2592]
                  %2892 = vst [vmem:[%s2600 + $0x244] sm:%s2592] %v2891
                  %v2893 = vld [vmem:[%s2599 + $0x920] sm:%s2592]
                  %2894 = vst [vmem:[%s2600 + $0x248] sm:%s2592] %v2893
                  %v2895 = vld [vmem:[%s2599 + $0x930] sm:%s2592]
                  %2896 = vst [vmem:[%s2600 + $0x24c] sm:%s2592] %v2895
                  %v2897 = vld [vmem:[%s2599 + $0x940] sm:%s2592]
                  %2898 = vst [vmem:[%s2600 + $0x250] sm:%s2592] %v2897
                  %v2899 = vld [vmem:[%s2599 + $0x950] sm:%s2592]
                  %2900 = vst [vmem:[%s2600 + $0x254] sm:%s2592] %v2899
                  %v2901 = vld [vmem:[%s2599 + $0x960] sm:%s2592]
                  %2902 = vst [vmem:[%s2600 + $0x258] sm:%s2592] %v2901
                  %v2903 = vld [vmem:[%s2599 + $0x970] sm:%s2592]
                  %2904 = vst [vmem:[%s2600 + $0x25c] sm:%s2592] %v2903
                  %v2905 = vld [vmem:[%s2599 + $0x980] sm:%s2592]
                  %2906 = vst [vmem:[%s2600 + $0x260] sm:%s2592] %v2905
                  %v2907 = vld [vmem:[%s2599 + $0x990] sm:%s2592]
                  %2908 = vst [vmem:[%s2600 + $0x264] sm:%s2592] %v2907
                  %v2909 = vld [vmem:[%s2599 + $0x9a0] sm:%s2592]
                  %2910 = vst [vmem:[%s2600 + $0x268] sm:%s2592] %v2909
                  %v2911 = vld [vmem:[%s2599 + $0x9b0] sm:%s2592]
                  %2912 = vst [vmem:[%s2600 + $0x26c] sm:%s2592] %v2911
                  %v2913 = vld [vmem:[%s2599 + $0x9c0] sm:%s2592]
                  %2914 = vst [vmem:[%s2600 + $0x270] sm:%s2592] %v2913
                  %v2915 = vld [vmem:[%s2599 + $0x9d0] sm:%s2592]
                  %2916 = vst [vmem:[%s2600 + $0x274] sm:%s2592] %v2915
                  %v2917 = vld [vmem:[%s2599 + $0x9e0] sm:%s2592]
                  %2918 = vst [vmem:[%s2600 + $0x278] sm:%s2592] %v2917
                  %v2919 = vld [vmem:[%s2599 + $0x9f0] sm:%s2592]
                  %2920 = vst [vmem:[%s2600 + $0x27c] sm:%s2592] %v2919
                  %v2921 = vld [vmem:[%s2599 + $0xa00] sm:%s2592]
                  %2922 = vst [vmem:[%s2600 + $0x280] sm:%s2592] %v2921
                  %v2923 = vld [vmem:[%s2599 + $0xa10] sm:%s2592]
                  %2924 = vst [vmem:[%s2600 + $0x284] sm:%s2592] %v2923
                  %v2925 = vld [vmem:[%s2599 + $0xa20] sm:%s2592]
                  %2926 = vst [vmem:[%s2600 + $0x288] sm:%s2592] %v2925
                  %v2927 = vld [vmem:[%s2599 + $0xa30] sm:%s2592]
                  %2928 = vst [vmem:[%s2600 + $0x28c] sm:%s2592] %v2927
                  %v2929 = vld [vmem:[%s2599 + $0xa40] sm:%s2592]
                  %2930 = vst [vmem:[%s2600 + $0x290] sm:%s2592] %v2929
                  %v2931 = vld [vmem:[%s2599 + $0xa50] sm:%s2592]
                  %2932 = vst [vmem:[%s2600 + $0x294] sm:%s2592] %v2931
                  %v2933 = vld [vmem:[%s2599 + $0xa60] sm:%s2592]
                  %2934 = vst [vmem:[%s2600 + $0x298] sm:%s2592] %v2933
                  %v2935 = vld [vmem:[%s2599 + $0xa70] sm:%s2592]
                  %2936 = vst [vmem:[%s2600 + $0x29c] sm:%s2592] %v2935
                  %v2937 = vld [vmem:[%s2599 + $0xa80] sm:%s2592]
                  %2938 = vst [vmem:[%s2600 + $0x2a0] sm:%s2592] %v2937
                  %v2939 = vld [vmem:[%s2599 + $0xa90] sm:%s2592]
                  %2940 = vst [vmem:[%s2600 + $0x2a4] sm:%s2592] %v2939
                  %v2941 = vld [vmem:[%s2599 + $0xaa0] sm:%s2592]
                  %2942 = vst [vmem:[%s2600 + $0x2a8] sm:%s2592] %v2941
                  %v2943 = vld [vmem:[%s2599 + $0xab0] sm:%s2592]
                  %2944 = vst [vmem:[%s2600 + $0x2ac] sm:%s2592] %v2943
                  %v2945 = vld [vmem:[%s2599 + $0xac0] sm:%s2592]
                  %2946 = vst [vmem:[%s2600 + $0x2b0] sm:%s2592] %v2945
                  %v2947 = vld [vmem:[%s2599 + $0xad0] sm:%s2592]
                  %2948 = vst [vmem:[%s2600 + $0x2b4] sm:%s2592] %v2947
                  %v2949 = vld [vmem:[%s2599 + $0xae0] sm:%s2592]
                  %2950 = vst [vmem:[%s2600 + $0x2b8] sm:%s2592] %v2949
                  %v2951 = vld [vmem:[%s2599 + $0xaf0] sm:%s2592]
                  %2952 = vst [vmem:[%s2600 + $0x2bc] sm:%s2592] %v2951
                  %v2953 = vld [vmem:[%s2599 + $0xb00] sm:%s2592]
                  %2954 = vst [vmem:[%s2600 + $0x2c0] sm:%s2592] %v2953
                  %v2955 = vld [vmem:[%s2599 + $0xb10] sm:%s2592]
                  %2956 = vst [vmem:[%s2600 + $0x2c4] sm:%s2592] %v2955
                  %v2957 = vld [vmem:[%s2599 + $0xb20] sm:%s2592]
                  %2958 = vst [vmem:[%s2600 + $0x2c8] sm:%s2592] %v2957
                  %v2959 = vld [vmem:[%s2599 + $0xb30] sm:%s2592]
                  %2960 = vst [vmem:[%s2600 + $0x2cc] sm:%s2592] %v2959
                  %v2961 = vld [vmem:[%s2599 + $0xb40] sm:%s2592]
                  %2962 = vst [vmem:[%s2600 + $0x2d0] sm:%s2592] %v2961
                  %v2963 = vld [vmem:[%s2599 + $0xb50] sm:%s2592]
                  %2964 = vst [vmem:[%s2600 + $0x2d4] sm:%s2592] %v2963
                  %v2965 = vld [vmem:[%s2599 + $0xb60] sm:%s2592]
                  %2966 = vst [vmem:[%s2600 + $0x2d8] sm:%s2592] %v2965
                  %v2967 = vld [vmem:[%s2599 + $0xb70] sm:%s2592]
                  %2968 = vst [vmem:[%s2600 + $0x2dc] sm:%s2592] %v2967
                  %v2969 = vld [vmem:[%s2599 + $0xb80] sm:%s2592]
                  %2970 = vst [vmem:[%s2600 + $0x2e0] sm:%s2592] %v2969
                  %v2971 = vld [vmem:[%s2599 + $0xb90] sm:%s2592]
                  %2972 = vst [vmem:[%s2600 + $0x2e4] sm:%s2592] %v2971
                  %v2973 = vld [vmem:[%s2599 + $0xba0] sm:%s2592]
                  %2974 = vst [vmem:[%s2600 + $0x2e8] sm:%s2592] %v2973
                  %v2975 = vld [vmem:[%s2599 + $0xbb0] sm:%s2592]
                  %2976 = vst [vmem:[%s2600 + $0x2ec] sm:%s2592] %v2975
                  %v2977 = vld [vmem:[%s2599 + $0xbc0] sm:%s2592]
                  %2978 = vst [vmem:[%s2600 + $0x2f0] sm:%s2592] %v2977
                  %v2979 = vld [vmem:[%s2599 + $0xbd0] sm:%s2592]
                  %2980 = vst [vmem:[%s2600 + $0x2f4] sm:%s2592] %v2979
                  %v2981 = vld [vmem:[%s2599 + $0xbe0] sm:%s2592]
                  %2982 = vst [vmem:[%s2600 + $0x2f8] sm:%s2592] %v2981
                  %v2983 = vld [vmem:[%s2599 + $0xbf0] sm:%s2592]
                  %2984 = vst [vmem:[%s2600 + $0x2fc] sm:%s2592] %v2983
                  %v2985 = vld [vmem:[%s2599 + $0xc00] sm:%s2592]
                  %2986 = vst [vmem:[%s2600 + $0x300] sm:%s2592] %v2985
                  %v2987 = vld [vmem:[%s2599 + $0xc10] sm:%s2592]
                  %2988 = vst [vmem:[%s2600 + $0x304] sm:%s2592] %v2987
                  %v2989 = vld [vmem:[%s2599 + $0xc20] sm:%s2592]
                  %2990 = vst [vmem:[%s2600 + $0x308] sm:%s2592] %v2989
                  %v2991 = vld [vmem:[%s2599 + $0xc30] sm:%s2592]
                  %2992 = vst [vmem:[%s2600 + $0x30c] sm:%s2592] %v2991
                  %v2993 = vld [vmem:[%s2599 + $0xc40] sm:%s2592]
                  %2994 = vst [vmem:[%s2600 + $0x310] sm:%s2592] %v2993
                  %v2995 = vld [vmem:[%s2599 + $0xc50] sm:%s2592]
                  %2996 = vst [vmem:[%s2600 + $0x314] sm:%s2592] %v2995
                  %v2997 = vld [vmem:[%s2599 + $0xc60] sm:%s2592]
                  %2998 = vst [vmem:[%s2600 + $0x318] sm:%s2592] %v2997
                  %v2999 = vld [vmem:[%s2599 + $0xc70] sm:%s2592]
                  %3000 = vst [vmem:[%s2600 + $0x31c] sm:%s2592] %v2999
                  %v3001 = vld [vmem:[%s2599 + $0xc80] sm:%s2592]
                  %3002 = vst [vmem:[%s2600 + $0x320] sm:%s2592] %v3001
                  %v3003 = vld [vmem:[%s2599 + $0xc90] sm:%s2592]
                  %3004 = vst [vmem:[%s2600 + $0x324] sm:%s2592] %v3003
                  %v3005 = vld [vmem:[%s2599 + $0xca0] sm:%s2592]
                  %3006 = vst [vmem:[%s2600 + $0x328] sm:%s2592] %v3005
                  %v3007 = vld [vmem:[%s2599 + $0xcb0] sm:%s2592]
                  %3008 = vst [vmem:[%s2600 + $0x32c] sm:%s2592] %v3007
                  %v3009 = vld [vmem:[%s2599 + $0xcc0] sm:%s2592]
                  %3010 = vst [vmem:[%s2600 + $0x330] sm:%s2592] %v3009
                  %v3011 = vld [vmem:[%s2599 + $0xcd0] sm:%s2592]
                  %3012 = vst [vmem:[%s2600 + $0x334] sm:%s2592] %v3011
                  %v3013 = vld [vmem:[%s2599 + $0xce0] sm:%s2592]
                  %3014 = vst [vmem:[%s2600 + $0x338] sm:%s2592] %v3013
                  %v3015 = vld [vmem:[%s2599 + $0xcf0] sm:%s2592]
                  %3016 = vst [vmem:[%s2600 + $0x33c] sm:%s2592] %v3015
                  %v3017 = vld [vmem:[%s2599 + $0xd00] sm:%s2592]
                  %3018 = vst [vmem:[%s2600 + $0x340] sm:%s2592] %v3017
                  %v3019 = vld [vmem:[%s2599 + $0xd10] sm:%s2592]
                  %3020 = vst [vmem:[%s2600 + $0x344] sm:%s2592] %v3019
                  %v3021 = vld [vmem:[%s2599 + $0xd20] sm:%s2592]
                  %3022 = vst [vmem:[%s2600 + $0x348] sm:%s2592] %v3021
                  %v3023 = vld [vmem:[%s2599 + $0xd30] sm:%s2592]
                  %3024 = vst [vmem:[%s2600 + $0x34c] sm:%s2592] %v3023
                  %v3025 = vld [vmem:[%s2599 + $0xd40] sm:%s2592]
                  %3026 = vst [vmem:[%s2600 + $0x350] sm:%s2592] %v3025
                  %v3027 = vld [vmem:[%s2599 + $0xd50] sm:%s2592]
                  %3028 = vst [vmem:[%s2600 + $0x354] sm:%s2592] %v3027
                  %v3029 = vld [vmem:[%s2599 + $0xd60] sm:%s2592]
                  %3030 = vst [vmem:[%s2600 + $0x358] sm:%s2592] %v3029
                  %v3031 = vld [vmem:[%s2599 + $0xd70] sm:%s2592]
                  %3032 = vst [vmem:[%s2600 + $0x35c] sm:%s2592] %v3031
                  %v3033 = vld [vmem:[%s2599 + $0xd80] sm:%s2592]
                  %3034 = vst [vmem:[%s2600 + $0x360] sm:%s2592] %v3033
                  %v3035 = vld [vmem:[%s2599 + $0xd90] sm:%s2592]
                  %3036 = vst [vmem:[%s2600 + $0x364] sm:%s2592] %v3035
                  %v3037 = vld [vmem:[%s2599 + $0xda0] sm:%s2592]
                  %3038 = vst [vmem:[%s2600 + $0x368] sm:%s2592] %v3037
                  %v3039 = vld [vmem:[%s2599 + $0xdb0] sm:%s2592]
                  %3040 = vst [vmem:[%s2600 + $0x36c] sm:%s2592] %v3039
                  %v3041 = vld [vmem:[%s2599 + $0xdc0] sm:%s2592]
                  %3042 = vst [vmem:[%s2600 + $0x370] sm:%s2592] %v3041
                  %v3043 = vld [vmem:[%s2599 + $0xdd0] sm:%s2592]
                  %3044 = vst [vmem:[%s2600 + $0x374] sm:%s2592] %v3043
                  %v3045 = vld [vmem:[%s2599 + $0xde0] sm:%s2592]
                  %3046 = vst [vmem:[%s2600 + $0x378] sm:%s2592] %v3045
                  %v3047 = vld [vmem:[%s2599 + $0xdf0] sm:%s2592]
                  %3048 = vst [vmem:[%s2600 + $0x37c] sm:%s2592] %v3047
                  %v3049 = vld [vmem:[%s2599 + $0xe00] sm:%s2592]
                  %3050 = vst [vmem:[%s2600 + $0x380] sm:%s2592] %v3049
                  %v3051 = vld [vmem:[%s2599 + $0xe10] sm:%s2592]
                  %3052 = vst [vmem:[%s2600 + $0x384] sm:%s2592] %v3051
                  %v3053 = vld [vmem:[%s2599 + $0xe20] sm:%s2592]
                  %3054 = vst [vmem:[%s2600 + $0x388] sm:%s2592] %v3053
                  %v3055 = vld [vmem:[%s2599 + $0xe30] sm:%s2592]
                  %3056 = vst [vmem:[%s2600 + $0x38c] sm:%s2592] %v3055
                  %v3057 = vld [vmem:[%s2599 + $0xe40] sm:%s2592]
                  %3058 = vst [vmem:[%s2600 + $0x390] sm:%s2592] %v3057
                  %v3059 = vld [vmem:[%s2599 + $0xe50] sm:%s2592]
                  %3060 = vst [vmem:[%s2600 + $0x394] sm:%s2592] %v3059
                  %v3061 = vld [vmem:[%s2599 + $0xe60] sm:%s2592]
                  %3062 = vst [vmem:[%s2600 + $0x398] sm:%s2592] %v3061
                  %v3063 = vld [vmem:[%s2599 + $0xe70] sm:%s2592]
                  %3064 = vst [vmem:[%s2600 + $0x39c] sm:%s2592] %v3063
                  %v3065 = vld [vmem:[%s2599 + $0xe80] sm:%s2592]
                  %3066 = vst [vmem:[%s2600 + $0x3a0] sm:%s2592] %v3065
                  %v3067 = vld [vmem:[%s2599 + $0xe90] sm:%s2592]
                  %3068 = vst [vmem:[%s2600 + $0x3a4] sm:%s2592] %v3067
                  %v3069 = vld [vmem:[%s2599 + $0xea0] sm:%s2592]
                  %3070 = vst [vmem:[%s2600 + $0x3a8] sm:%s2592] %v3069
                  %v3071 = vld [vmem:[%s2599 + $0xeb0] sm:%s2592]
                  %3072 = vst [vmem:[%s2600 + $0x3ac] sm:%s2592] %v3071
                  %v3073 = vld [vmem:[%s2599 + $0xec0] sm:%s2592]
                  %3074 = vst [vmem:[%s2600 + $0x3b0] sm:%s2592] %v3073
                  %v3075 = vld [vmem:[%s2599 + $0xed0] sm:%s2592]
                  %3076 = vst [vmem:[%s2600 + $0x3b4] sm:%s2592] %v3075
                  %v3077 = vld [vmem:[%s2599 + $0xee0] sm:%s2592]
                  %3078 = vst [vmem:[%s2600 + $0x3b8] sm:%s2592] %v3077
                  %v3079 = vld [vmem:[%s2599 + $0xef0] sm:%s2592]
                  %3080 = vst [vmem:[%s2600 + $0x3bc] sm:%s2592] %v3079
                  %v3081 = vld [vmem:[%s2599 + $0xf00] sm:%s2592]
                  %3082 = vst [vmem:[%s2600 + $0x3c0] sm:%s2592] %v3081
                  %v3083 = vld [vmem:[%s2599 + $0xf10] sm:%s2592]
                  %3084 = vst [vmem:[%s2600 + $0x3c4] sm:%s2592] %v3083
                  %v3085 = vld [vmem:[%s2599 + $0xf20] sm:%s2592]
                  %3086 = vst [vmem:[%s2600 + $0x3c8] sm:%s2592] %v3085
                  %v3087 = vld [vmem:[%s2599 + $0xf30] sm:%s2592]
                  %3088 = vst [vmem:[%s2600 + $0x3cc] sm:%s2592] %v3087
                  %v3089 = vld [vmem:[%s2599 + $0xf40] sm:%s2592]
                  %3090 = vst [vmem:[%s2600 + $0x3d0] sm:%s2592] %v3089
                  %v3091 = vld [vmem:[%s2599 + $0xf50] sm:%s2592]
                  %3092 = vst [vmem:[%s2600 + $0x3d4] sm:%s2592] %v3091
                  %v3093 = vld [vmem:[%s2599 + $0xf60] sm:%s2592]
                  %3094 = vst [vmem:[%s2600 + $0x3d8] sm:%s2592] %v3093
                  %v3095 = vld [vmem:[%s2599 + $0xf70] sm:%s2592]
                  %3096 = vst [vmem:[%s2600 + $0x3dc] sm:%s2592] %v3095
                  %v3097 = vld [vmem:[%s2599 + $0xf80] sm:%s2592]
                  %3098 = vst [vmem:[%s2600 + $0x3e0] sm:%s2592] %v3097
                  %v3099 = vld [vmem:[%s2599 + $0xf90] sm:%s2592]
                  %3100 = vst [vmem:[%s2600 + $0x3e4] sm:%s2592] %v3099
                  %v3101 = vld [vmem:[%s2599 + $0xfa0] sm:%s2592]
                  %3102 = vst [vmem:[%s2600 + $0x3e8] sm:%s2592] %v3101
                  %v3103 = vld [vmem:[%s2599 + $0xfb0] sm:%s2592]
                  %3104 = vst [vmem:[%s2600 + $0x3ec] sm:%s2592] %v3103
                  %v3105 = vld [vmem:[%s2599 + $0xfc0] sm:%s2592]
                  %3106 = vst [vmem:[%s2600 + $0x3f0] sm:%s2592] %v3105
                  %v3107 = vld [vmem:[%s2599 + $0xfd0] sm:%s2592]
                  %3108 = vst [vmem:[%s2600 + $0x3f4] sm:%s2592] %v3107
                  %v3109 = vld [vmem:[%s2599 + $0xfe0] sm:%s2592]
                  %3110 = vst [vmem:[%s2600 + $0x3f8] sm:%s2592] %v3109
                  %v3111 = vld [vmem:[%s2599 + $0xff0] sm:%s2592]
                  %3112 = vst [vmem:[%s2600 + $0x3fc] sm:%s2592] %v3111
                  %v3113 = vld [vmem:[%s2599 + $0x1000] sm:%s2592]
                  %3114 = vst [vmem:[%s2600 + $0x400] sm:%s2592] %v3113
                  %v3115 = vld [vmem:[%s2599 + $0x1010] sm:%s2592]
                  %3116 = vst [vmem:[%s2600 + $0x404] sm:%s2592] %v3115
                  %v3117 = vld [vmem:[%s2599 + $0x1020] sm:%s2592]
                  %3118 = vst [vmem:[%s2600 + $0x408] sm:%s2592] %v3117
                  %v3119 = vld [vmem:[%s2599 + $0x1030] sm:%s2592]
                  %3120 = vst [vmem:[%s2600 + $0x40c] sm:%s2592] %v3119
                  %v3121 = vld [vmem:[%s2599 + $0x1040] sm:%s2592]
                  %3122 = vst [vmem:[%s2600 + $0x410] sm:%s2592] %v3121
                  %v3123 = vld [vmem:[%s2599 + $0x1050] sm:%s2592]
                  %3124 = vst [vmem:[%s2600 + $0x414] sm:%s2592] %v3123
                  %v3125 = vld [vmem:[%s2599 + $0x1060] sm:%s2592]
                  %3126 = vst [vmem:[%s2600 + $0x418] sm:%s2592] %v3125
                  %v3127 = vld [vmem:[%s2599 + $0x1070] sm:%s2592]
                  %3128 = vst [vmem:[%s2600 + $0x41c] sm:%s2592] %v3127
                  %v3129 = vld [vmem:[%s2599 + $0x1080] sm:%s2592]
                  %3130 = vst [vmem:[%s2600 + $0x420] sm:%s2592] %v3129
                  %v3131 = vld [vmem:[%s2599 + $0x1090] sm:%s2592]
                  %3132 = vst [vmem:[%s2600 + $0x424] sm:%s2592] %v3131
                  %v3133 = vld [vmem:[%s2599 + $0x10a0] sm:%s2592]
                  %3134 = vst [vmem:[%s2600 + $0x428] sm:%s2592] %v3133
                  %v3135 = vld [vmem:[%s2599 + $0x10b0] sm:%s2592]
                  %3136 = vst [vmem:[%s2600 + $0x42c] sm:%s2592] %v3135
                  %v3137 = vld [vmem:[%s2599 + $0x10c0] sm:%s2592]
                  %3138 = vst [vmem:[%s2600 + $0x430] sm:%s2592] %v3137
                  %v3139 = vld [vmem:[%s2599 + $0x10d0] sm:%s2592]
                  %3140 = vst [vmem:[%s2600 + $0x434] sm:%s2592] %v3139
                  %v3141 = vld [vmem:[%s2599 + $0x10e0] sm:%s2592]
                  %3142 = vst [vmem:[%s2600 + $0x438] sm:%s2592] %v3141
                  %v3143 = vld [vmem:[%s2599 + $0x10f0] sm:%s2592]
                  %3144 = vst [vmem:[%s2600 + $0x43c] sm:%s2592] %v3143
                  %v3145 = vld [vmem:[%s2599 + $0x1100] sm:%s2592]
                  %3146 = vst [vmem:[%s2600 + $0x440] sm:%s2592] %v3145
                  %v3147 = vld [vmem:[%s2599 + $0x1110] sm:%s2592]
                  %3148 = vst [vmem:[%s2600 + $0x444] sm:%s2592] %v3147
                  %v3149 = vld [vmem:[%s2599 + $0x1120] sm:%s2592]
                  %3150 = vst [vmem:[%s2600 + $0x448] sm:%s2592] %v3149
                  %v3151 = vld [vmem:[%s2599 + $0x1130] sm:%s2592]
                  %3152 = vst [vmem:[%s2600 + $0x44c] sm:%s2592] %v3151
                  %v3153 = vld [vmem:[%s2599 + $0x1140] sm:%s2592]
                  %3154 = vst [vmem:[%s2600 + $0x450] sm:%s2592] %v3153
                  %v3155 = vld [vmem:[%s2599 + $0x1150] sm:%s2592]
                  %3156 = vst [vmem:[%s2600 + $0x454] sm:%s2592] %v3155
                  %v3157 = vld [vmem:[%s2599 + $0x1160] sm:%s2592]
                  %3158 = vst [vmem:[%s2600 + $0x458] sm:%s2592] %v3157
                  %v3159 = vld [vmem:[%s2599 + $0x1170] sm:%s2592]
                  %3160 = vst [vmem:[%s2600 + $0x45c] sm:%s2592] %v3159
                  %v3161 = vld [vmem:[%s2599 + $0x1180] sm:%s2592]
                  %3162 = vst [vmem:[%s2600 + $0x460] sm:%s2592] %v3161
                  %v3163 = vld [vmem:[%s2599 + $0x1190] sm:%s2592]
                  %3164 = vst [vmem:[%s2600 + $0x464] sm:%s2592] %v3163
                  %v3165 = vld [vmem:[%s2599 + $0x11a0] sm:%s2592]
                  %3166 = vst [vmem:[%s2600 + $0x468] sm:%s2592] %v3165
                  %v3167 = vld [vmem:[%s2599 + $0x11b0] sm:%s2592]
                  %3168 = vst [vmem:[%s2600 + $0x46c] sm:%s2592] %v3167
                  %v3169 = vld [vmem:[%s2599 + $0x11c0] sm:%s2592]
                  %3170 = vst [vmem:[%s2600 + $0x470] sm:%s2592] %v3169
                  %v3171 = vld [vmem:[%s2599 + $0x11d0] sm:%s2592]
                  %3172 = vst [vmem:[%s2600 + $0x474] sm:%s2592] %v3171
                  %v3173 = vld [vmem:[%s2599 + $0x11e0] sm:%s2592]
                  %3174 = vst [vmem:[%s2600 + $0x478] sm:%s2592] %v3173
                  %v3175 = vld [vmem:[%s2599 + $0x11f0] sm:%s2592]
                  %3176 = vst [vmem:[%s2600 + $0x47c] sm:%s2592] %v3175
                  %v3177 = vld [vmem:[%s2599 + $0x1200] sm:%s2592]
                  %3178 = vst [vmem:[%s2600 + $0x480] sm:%s2592] %v3177
                  %v3179 = vld [vmem:[%s2599 + $0x1210] sm:%s2592]
                  %3180 = vst [vmem:[%s2600 + $0x484] sm:%s2592] %v3179
                  %v3181 = vld [vmem:[%s2599 + $0x1220] sm:%s2592]
                  %3182 = vst [vmem:[%s2600 + $0x488] sm:%s2592] %v3181
                  %v3183 = vld [vmem:[%s2599 + $0x1230] sm:%s2592]
                  %3184 = vst [vmem:[%s2600 + $0x48c] sm:%s2592] %v3183
                  %v3185 = vld [vmem:[%s2599 + $0x1240] sm:%s2592]
                  %3186 = vst [vmem:[%s2600 + $0x490] sm:%s2592] %v3185
                  %v3187 = vld [vmem:[%s2599 + $0x1250] sm:%s2592]
                  %3188 = vst [vmem:[%s2600 + $0x494] sm:%s2592] %v3187
                  %v3189 = vld [vmem:[%s2599 + $0x1260] sm:%s2592]
                  %3190 = vst [vmem:[%s2600 + $0x498] sm:%s2592] %v3189
                  %v3191 = vld [vmem:[%s2599 + $0x1270] sm:%s2592]
                  %3192 = vst [vmem:[%s2600 + $0x49c] sm:%s2592] %v3191
                  %v3193 = vld [vmem:[%s2599 + $0x1280] sm:%s2592]
                  %3194 = vst [vmem:[%s2600 + $0x4a0] sm:%s2592] %v3193
                  %v3195 = vld [vmem:[%s2599 + $0x1290] sm:%s2592]
                  %3196 = vst [vmem:[%s2600 + $0x4a4] sm:%s2592] %v3195
                  %v3197 = vld [vmem:[%s2599 + $0x12a0] sm:%s2592]
                  %3198 = vst [vmem:[%s2600 + $0x4a8] sm:%s2592] %v3197
                  %v3199 = vld [vmem:[%s2599 + $0x12b0] sm:%s2592]
                  %3200 = vst [vmem:[%s2600 + $0x4ac] sm:%s2592] %v3199
                  %v3201 = vld [vmem:[%s2599 + $0x12c0] sm:%s2592]
                  %3202 = vst [vmem:[%s2600 + $0x4b0] sm:%s2592] %v3201
                  %v3203 = vld [vmem:[%s2599 + $0x12d0] sm:%s2592]
                  %3204 = vst [vmem:[%s2600 + $0x4b4] sm:%s2592] %v3203
                  %v3205 = vld [vmem:[%s2599 + $0x12e0] sm:%s2592]
                  %3206 = vst [vmem:[%s2600 + $0x4b8] sm:%s2592] %v3205
                  %v3207 = vld [vmem:[%s2599 + $0x12f0] sm:%s2592]
                  %3208 = vst [vmem:[%s2600 + $0x4bc] sm:%s2592] %v3207
                  %v3209 = vld [vmem:[%s2599 + $0x1300] sm:%s2592]
                  %3210 = vst [vmem:[%s2600 + $0x4c0] sm:%s2592] %v3209
                  %v3211 = vld [vmem:[%s2599 + $0x1310] sm:%s2592]
                  %3212 = vst [vmem:[%s2600 + $0x4c4] sm:%s2592] %v3211
                  %v3213 = vld [vmem:[%s2599 + $0x1320] sm:%s2592]
                  %3214 = vst [vmem:[%s2600 + $0x4c8] sm:%s2592] %v3213
                  %v3215 = vld [vmem:[%s2599 + $0x1330] sm:%s2592]
                  %3216 = vst [vmem:[%s2600 + $0x4cc] sm:%s2592] %v3215
                  %v3217 = vld [vmem:[%s2599 + $0x1340] sm:%s2592]
                  %3218 = vst [vmem:[%s2600 + $0x4d0] sm:%s2592] %v3217
                  %v3219 = vld [vmem:[%s2599 + $0x1350] sm:%s2592]
                  %3220 = vst [vmem:[%s2600 + $0x4d4] sm:%s2592] %v3219
                  %v3221 = vld [vmem:[%s2599 + $0x1360] sm:%s2592]
                  %3222 = vst [vmem:[%s2600 + $0x4d8] sm:%s2592] %v3221
                  %v3223 = vld [vmem:[%s2599 + $0x1370] sm:%s2592]
                  %3224 = vst [vmem:[%s2600 + $0x4dc] sm:%s2592] %v3223
                  %v3225 = vld [vmem:[%s2599 + $0x1380] sm:%s2592]
                  %3226 = vst [vmem:[%s2600 + $0x4e0] sm:%s2592] %v3225
                  %v3227 = vld [vmem:[%s2599 + $0x1390] sm:%s2592]
                  %3228 = vst [vmem:[%s2600 + $0x4e4] sm:%s2592] %v3227
                  %v3229 = vld [vmem:[%s2599 + $0x13a0] sm:%s2592]
                  %3230 = vst [vmem:[%s2600 + $0x4e8] sm:%s2592] %v3229
                  %v3231 = vld [vmem:[%s2599 + $0x13b0] sm:%s2592]
                  %3232 = vst [vmem:[%s2600 + $0x4ec] sm:%s2592] %v3231
                  %v3233 = vld [vmem:[%s2599 + $0x13c0] sm:%s2592]
                  %3234 = vst [vmem:[%s2600 + $0x4f0] sm:%s2592] %v3233
                  %v3235 = vld [vmem:[%s2599 + $0x13d0] sm:%s2592]
                  %3236 = vst [vmem:[%s2600 + $0x4f4] sm:%s2592] %v3235
                  %v3237 = vld [vmem:[%s2599 + $0x13e0] sm:%s2592]
                  %3238 = vst [vmem:[%s2600 + $0x4f8] sm:%s2592] %v3237
                  %v3239 = vld [vmem:[%s2599 + $0x13f0] sm:%s2592]
                  %3240 = vst [vmem:[%s2600 + $0x4fc] sm:%s2592] %v3239
                  %v3241 = vld [vmem:[%s2599 + $0x1400] sm:%s2592]
                  %3242 = vst [vmem:[%s2600 + $0x500] sm:%s2592] %v3241
                  %v3243 = vld [vmem:[%s2599 + $0x1410] sm:%s2592]
                  %3244 = vst [vmem:[%s2600 + $0x504] sm:%s2592] %v3243
                  %v3245 = vld [vmem:[%s2599 + $0x1420] sm:%s2592]
                  %3246 = vst [vmem:[%s2600 + $0x508] sm:%s2592] %v3245
                  %v3247 = vld [vmem:[%s2599 + $0x1430] sm:%s2592]
                  %3248 = vst [vmem:[%s2600 + $0x50c] sm:%s2592] %v3247
                  %v3249 = vld [vmem:[%s2599 + $0x1440] sm:%s2592]
                  %3250 = vst [vmem:[%s2600 + $0x510] sm:%s2592] %v3249
                  %v3251 = vld [vmem:[%s2599 + $0x1450] sm:%s2592]
                  %3252 = vst [vmem:[%s2600 + $0x514] sm:%s2592] %v3251
                  %v3253 = vld [vmem:[%s2599 + $0x1460] sm:%s2592]
                  %3254 = vst [vmem:[%s2600 + $0x518] sm:%s2592] %v3253
                  %v3255 = vld [vmem:[%s2599 + $0x1470] sm:%s2592]
                  %3256 = vst [vmem:[%s2600 + $0x51c] sm:%s2592] %v3255
                  %v3257 = vld [vmem:[%s2599 + $0x1480] sm:%s2592]
                  %3258 = vst [vmem:[%s2600 + $0x520] sm:%s2592] %v3257
                  %v3259 = vld [vmem:[%s2599 + $0x1490] sm:%s2592]
                  %3260 = vst [vmem:[%s2600 + $0x524] sm:%s2592] %v3259
                  %v3261 = vld [vmem:[%s2599 + $0x14a0] sm:%s2592]
                  %3262 = vst [vmem:[%s2600 + $0x528] sm:%s2592] %v3261
                  %v3263 = vld [vmem:[%s2599 + $0x14b0] sm:%s2592]
                  %3264 = vst [vmem:[%s2600 + $0x52c] sm:%s2592] %v3263
                  %v3265 = vld [vmem:[%s2599 + $0x14c0] sm:%s2592]
                  %3266 = vst [vmem:[%s2600 + $0x530] sm:%s2592] %v3265
                  %v3267 = vld [vmem:[%s2599 + $0x14d0] sm:%s2592]
                  %3268 = vst [vmem:[%s2600 + $0x534] sm:%s2592] %v3267
                  %v3269 = vld [vmem:[%s2599 + $0x14e0] sm:%s2592]
                  %3270 = vst [vmem:[%s2600 + $0x538] sm:%s2592] %v3269
                  %v3271 = vld [vmem:[%s2599 + $0x14f0] sm:%s2592]
                  %3272 = vst [vmem:[%s2600 + $0x53c] sm:%s2592] %v3271
                  %v3273 = vld [vmem:[%s2599 + $0x1500] sm:%s2592]
                  %3274 = vst [vmem:[%s2600 + $0x540] sm:%s2592] %v3273
                  %v3275 = vld [vmem:[%s2599 + $0x1510] sm:%s2592]
                  %3276 = vst [vmem:[%s2600 + $0x544] sm:%s2592] %v3275
                  %v3277 = vld [vmem:[%s2599 + $0x1520] sm:%s2592]
                  %3278 = vst [vmem:[%s2600 + $0x548] sm:%s2592] %v3277
                  %v3279 = vld [vmem:[%s2599 + $0x1530] sm:%s2592]
                  %3280 = vst [vmem:[%s2600 + $0x54c] sm:%s2592] %v3279
                  %v3281 = vld [vmem:[%s2599 + $0x1540] sm:%s2592]
                  %3282 = vst [vmem:[%s2600 + $0x550] sm:%s2592] %v3281
                  %v3283 = vld [vmem:[%s2599 + $0x1550] sm:%s2592]
                  %3284 = vst [vmem:[%s2600 + $0x554] sm:%s2592] %v3283
                  %v3285 = vld [vmem:[%s2599 + $0x1560] sm:%s2592]
                  %3286 = vst [vmem:[%s2600 + $0x558] sm:%s2592] %v3285
                  %v3287 = vld [vmem:[%s2599 + $0x1570] sm:%s2592]
                  %3288 = vst [vmem:[%s2600 + $0x55c] sm:%s2592] %v3287
                  %v3289 = vld [vmem:[%s2599 + $0x1580] sm:%s2592]
                  %3290 = vst [vmem:[%s2600 + $0x560] sm:%s2592] %v3289
                  %v3291 = vld [vmem:[%s2599 + $0x1590] sm:%s2592]
                  %3292 = vst [vmem:[%s2600 + $0x564] sm:%s2592] %v3291
                  %v3293 = vld [vmem:[%s2599 + $0x15a0] sm:%s2592]
                  %3294 = vst [vmem:[%s2600 + $0x568] sm:%s2592] %v3293
                  %v3295 = vld [vmem:[%s2599 + $0x15b0] sm:%s2592]
                  %3296 = vst [vmem:[%s2600 + $0x56c] sm:%s2592] %v3295
                  %v3297 = vld [vmem:[%s2599 + $0x15c0] sm:%s2592]
                  %3298 = vst [vmem:[%s2600 + $0x570] sm:%s2592] %v3297
                  %v3299 = vld [vmem:[%s2599 + $0x15d0] sm:%s2592]
                  %3300 = vst [vmem:[%s2600 + $0x574] sm:%s2592] %v3299
                  %v3301 = vld [vmem:[%s2599 + $0x15e0] sm:%s2592]
                  %3302 = vst [vmem:[%s2600 + $0x578] sm:%s2592] %v3301
                  %v3303 = vld [vmem:[%s2599 + $0x15f0] sm:%s2592]
                  %3304 = vst [vmem:[%s2600 + $0x57c] sm:%s2592] %v3303
                  %v3305 = vld [vmem:[%s2599 + $0x1600] sm:%s2592]
                  %3306 = vst [vmem:[%s2600 + $0x580] sm:%s2592] %v3305
                  %v3307 = vld [vmem:[%s2599 + $0x1610] sm:%s2592]
                  %3308 = vst [vmem:[%s2600 + $0x584] sm:%s2592] %v3307
                  %v3309 = vld [vmem:[%s2599 + $0x1620] sm:%s2592]
                  %3310 = vst [vmem:[%s2600 + $0x588] sm:%s2592] %v3309
                  %v3311 = vld [vmem:[%s2599 + $0x1630] sm:%s2592]
                  %3312 = vst [vmem:[%s2600 + $0x58c] sm:%s2592] %v3311
                  %v3313 = vld [vmem:[%s2599 + $0x1640] sm:%s2592]
                  %3314 = vst [vmem:[%s2600 + $0x590] sm:%s2592] %v3313
                  %v3315 = vld [vmem:[%s2599 + $0x1650] sm:%s2592]
                  %3316 = vst [vmem:[%s2600 + $0x594] sm:%s2592] %v3315
                  %v3317 = vld [vmem:[%s2599 + $0x1660] sm:%s2592]
                  %3318 = vst [vmem:[%s2600 + $0x598] sm:%s2592] %v3317
                  %v3319 = vld [vmem:[%s2599 + $0x1670] sm:%s2592]
                  %3320 = vst [vmem:[%s2600 + $0x59c] sm:%s2592] %v3319
                  %v3321 = vld [vmem:[%s2599 + $0x1680] sm:%s2592]
                  %3322 = vst [vmem:[%s2600 + $0x5a0] sm:%s2592] %v3321
                  %v3323 = vld [vmem:[%s2599 + $0x1690] sm:%s2592]
                  %3324 = vst [vmem:[%s2600 + $0x5a4] sm:%s2592] %v3323
                  %v3325 = vld [vmem:[%s2599 + $0x16a0] sm:%s2592]
                  %3326 = vst [vmem:[%s2600 + $0x5a8] sm:%s2592] %v3325
                  %v3327 = vld [vmem:[%s2599 + $0x16b0] sm:%s2592]
                  %3328 = vst [vmem:[%s2600 + $0x5ac] sm:%s2592] %v3327
                  %v3329 = vld [vmem:[%s2599 + $0x16c0] sm:%s2592]
                  %3330 = vst [vmem:[%s2600 + $0x5b0] sm:%s2592] %v3329
                  %v3331 = vld [vmem:[%s2599 + $0x16d0] sm:%s2592]
                  %3332 = vst [vmem:[%s2600 + $0x5b4] sm:%s2592] %v3331
                  %v3333 = vld [vmem:[%s2599 + $0x16e0] sm:%s2592]
                  %3334 = vst [vmem:[%s2600 + $0x5b8] sm:%s2592] %v3333
                  %v3335 = vld [vmem:[%s2599 + $0x16f0] sm:%s2592]
                  %3336 = vst [vmem:[%s2600 + $0x5bc] sm:%s2592] %v3335
                  %v3337 = vld [vmem:[%s2599 + $0x1700] sm:%s2592]
                  %3338 = vst [vmem:[%s2600 + $0x5c0] sm:%s2592] %v3337
                  %v3339 = vld [vmem:[%s2599 + $0x1710] sm:%s2592]
                  %3340 = vst [vmem:[%s2600 + $0x5c4] sm:%s2592] %v3339
                  %v3341 = vld [vmem:[%s2599 + $0x1720] sm:%s2592]
                  %3342 = vst [vmem:[%s2600 + $0x5c8] sm:%s2592] %v3341
                  %v3343 = vld [vmem:[%s2599 + $0x1730] sm:%s2592]
                  %3344 = vst [vmem:[%s2600 + $0x5cc] sm:%s2592] %v3343
                  %v3345 = vld [vmem:[%s2599 + $0x1740] sm:%s2592]
                  %3346 = vst [vmem:[%s2600 + $0x5d0] sm:%s2592] %v3345
                  %v3347 = vld [vmem:[%s2599 + $0x1750] sm:%s2592]
                  %3348 = vst [vmem:[%s2600 + $0x5d4] sm:%s2592] %v3347
                  %v3349 = vld [vmem:[%s2599 + $0x1760] sm:%s2592]
                  %3350 = vst [vmem:[%s2600 + $0x5d8] sm:%s2592] %v3349
                  %v3351 = vld [vmem:[%s2599 + $0x1770] sm:%s2592]
                  %3352 = vst [vmem:[%s2600 + $0x5dc] sm:%s2592] %v3351
                  %v3353 = vld [vmem:[%s2599 + $0x1780] sm:%s2592]
                  %3354 = vst [vmem:[%s2600 + $0x5e0] sm:%s2592] %v3353
                  %v3355 = vld [vmem:[%s2599 + $0x1790] sm:%s2592]
                  %3356 = vst [vmem:[%s2600 + $0x5e4] sm:%s2592] %v3355
                  %v3357 = vld [vmem:[%s2599 + $0x17a0] sm:%s2592]
                  %3358 = vst [vmem:[%s2600 + $0x5e8] sm:%s2592] %v3357
                  %v3359 = vld [vmem:[%s2599 + $0x17b0] sm:%s2592]
                  %3360 = vst [vmem:[%s2600 + $0x5ec] sm:%s2592] %v3359
                  %v3361 = vld [vmem:[%s2599 + $0x17c0] sm:%s2592]
                  %3362 = vst [vmem:[%s2600 + $0x5f0] sm:%s2592] %v3361
                  %v3363 = vld [vmem:[%s2599 + $0x17d0] sm:%s2592]
                  %3364 = vst [vmem:[%s2600 + $0x5f4] sm:%s2592] %v3363
                  %v3365 = vld [vmem:[%s2599 + $0x17e0] sm:%s2592]
                  %3366 = vst [vmem:[%s2600 + $0x5f8] sm:%s2592] %v3365
                  %v3367 = vld [vmem:[%s2599 + $0x17f0] sm:%s2592]
                  %3368 = vst [vmem:[%s2600 + $0x5fc] sm:%s2592] %v3367
                  %v3369 = vld [vmem:[%s2599 + $0x1800] sm:%s2592]
                  %3370 = vst [vmem:[%s2600 + $0x600] sm:%s2592] %v3369
                  %v3371 = vld [vmem:[%s2599 + $0x1810] sm:%s2592]
                  %3372 = vst [vmem:[%s2600 + $0x604] sm:%s2592] %v3371
                  %v3373 = vld [vmem:[%s2599 + $0x1820] sm:%s2592]
                  %3374 = vst [vmem:[%s2600 + $0x608] sm:%s2592] %v3373
                  %v3375 = vld [vmem:[%s2599 + $0x1830] sm:%s2592]
                  %3376 = vst [vmem:[%s2600 + $0x60c] sm:%s2592] %v3375
                  %v3377 = vld [vmem:[%s2599 + $0x1840] sm:%s2592]
                  %3378 = vst [vmem:[%s2600 + $0x610] sm:%s2592] %v3377
                  %v3379 = vld [vmem:[%s2599 + $0x1850] sm:%s2592]
                  %3380 = vst [vmem:[%s2600 + $0x614] sm:%s2592] %v3379
                  %v3381 = vld [vmem:[%s2599 + $0x1860] sm:%s2592]
                  %3382 = vst [vmem:[%s2600 + $0x618] sm:%s2592] %v3381
                  %v3383 = vld [vmem:[%s2599 + $0x1870] sm:%s2592]
                  %3384 = vst [vmem:[%s2600 + $0x61c] sm:%s2592] %v3383
                $region74: #{forward.7} parent=61 // loop_footer
                  %s2598 = sadd.s32 1, %s2594
                $region75: #{forward.7} parent=61 // loop_footer_branch
                  %2593 = sbr.rel target = $region71
                $region76: #{forward.7} parent=61 // loop_exit
                  _
              $region62: #{forward.7} parent=35 // pred_fallthru
                _
            $region36: #{forward.7} parent=31 // pred_fallthru
              _
            // Predicated region
            $region37: #{forward.7} parent=31 // pred_check
              _
            $region38: #{forward.7} parent=31 // pred_check_branch
              %192 = sbr.rel (0) target = $region40
            $region39: #{forward.7} parent=31 // pred_region
              %s194 = ssub.s32 16, 1
              loop: start=0, step=1, limit=1
              $region41: #{forward.7} parent=39 // loop_pre_header
                _
              $region42: #{forward.7} parent=39 // loop_header
                %s196 = sphi 0, %s200
                %p197 = scmp.ge.s32.totalorder %s196, 1
                %s201 = sphi %s186, %s186
                %s202 = sphi %s184, %s184
              $region43: #{forward.7} parent=39 // loop_header_branch
                %199 = sbr.rel (%p197) target = $region47
              $region44: #{forward.7} parent=39 // loop_body
                %v203 = vld [vmem:[%s201] sm:%s194]
                %204 = vst [vmem:[%s202] sm:%s194] %v203
                %v205 = vld [vmem:[%s201 + $0x10] sm:%s194]
                %206 = vst [vmem:[%s202 + $0x4] sm:%s194] %v205
                %v207 = vld [vmem:[%s201 + $0x20] sm:%s194]
                %208 = vst [vmem:[%s202 + $0x8] sm:%s194] %v207
                %v209 = vld [vmem:[%s201 + $0x30] sm:%s194]
                %210 = vst [vmem:[%s202 + $0xc] sm:%s194] %v209
                %v211 = vld [vmem:[%s201 + $0x40] sm:%s194]
                %212 = vst [vmem:[%s202 + $0x10] sm:%s194] %v211
                %v213 = vld [vmem:[%s201 + $0x50] sm:%s194]
                %214 = vst [vmem:[%s202 + $0x14] sm:%s194] %v213
                %v215 = vld [vmem:[%s201 + $0x60] sm:%s194]
                %216 = vst [vmem:[%s202 + $0x18] sm:%s194] %v215
                %v217 = vld [vmem:[%s201 + $0x70] sm:%s194]
                %218 = vst [vmem:[%s202 + $0x1c] sm:%s194] %v217
                %v219 = vld [vmem:[%s201 + $0x80] sm:%s194]
                %220 = vst [vmem:[%s202 + $0x20] sm:%s194] %v219
                %v221 = vld [vmem:[%s201 + $0x90] sm:%s194]
                %222 = vst [vmem:[%s202 + $0x24] sm:%s194] %v221
                %v223 = vld [vmem:[%s201 + $0xa0] sm:%s194]
                %224 = vst [vmem:[%s202 + $0x28] sm:%s194] %v223
                %v225 = vld [vmem:[%s201 + $0xb0] sm:%s194]
                %226 = vst [vmem:[%s202 + $0x2c] sm:%s194] %v225
                %v227 = vld [vmem:[%s201 + $0xc0] sm:%s194]
                %228 = vst [vmem:[%s202 + $0x30] sm:%s194] %v227
                %v229 = vld [vmem:[%s201 + $0xd0] sm:%s194]
                %230 = vst [vmem:[%s202 + $0x34] sm:%s194] %v229
                %v231 = vld [vmem:[%s201 + $0xe0] sm:%s194]
                %232 = vst [vmem:[%s202 + $0x38] sm:%s194] %v231
                %v233 = vld [vmem:[%s201 + $0xf0] sm:%s194]
                %234 = vst [vmem:[%s202 + $0x3c] sm:%s194] %v233
                %v235 = vld [vmem:[%s201 + $0x100] sm:%s194]
                %236 = vst [vmem:[%s202 + $0x40] sm:%s194] %v235
                %v237 = vld [vmem:[%s201 + $0x110] sm:%s194]
                %238 = vst [vmem:[%s202 + $0x44] sm:%s194] %v237
                %v239 = vld [vmem:[%s201 + $0x120] sm:%s194]
                %240 = vst [vmem:[%s202 + $0x48] sm:%s194] %v239
                %v241 = vld [vmem:[%s201 + $0x130] sm:%s194]
                %242 = vst [vmem:[%s202 + $0x4c] sm:%s194] %v241
                %v243 = vld [vmem:[%s201 + $0x140] sm:%s194]
                %244 = vst [vmem:[%s202 + $0x50] sm:%s194] %v243
                %v245 = vld [vmem:[%s201 + $0x150] sm:%s194]
                %246 = vst [vmem:[%s202 + $0x54] sm:%s194] %v245
                %v247 = vld [vmem:[%s201 + $0x160] sm:%s194]
                %248 = vst [vmem:[%s202 + $0x58] sm:%s194] %v247
                %v249 = vld [vmem:[%s201 + $0x170] sm:%s194]
                %250 = vst [vmem:[%s202 + $0x5c] sm:%s194] %v249
                %v251 = vld [vmem:[%s201 + $0x180] sm:%s194]
                %252 = vst [vmem:[%s202 + $0x60] sm:%s194] %v251
                %v253 = vld [vmem:[%s201 + $0x190] sm:%s194]
                %254 = vst [vmem:[%s202 + $0x64] sm:%s194] %v253
                %v255 = vld [vmem:[%s201 + $0x1a0] sm:%s194]
                %256 = vst [vmem:[%s202 + $0x68] sm:%s194] %v255
                %v257 = vld [vmem:[%s201 + $0x1b0] sm:%s194]
                %258 = vst [vmem:[%s202 + $0x6c] sm:%s194] %v257
                %v259 = vld [vmem:[%s201 + $0x1c0] sm:%s194]
                %260 = vst [vmem:[%s202 + $0x70] sm:%s194] %v259
                %v261 = vld [vmem:[%s201 + $0x1d0] sm:%s194]
                %262 = vst [vmem:[%s202 + $0x74] sm:%s194] %v261
                %v263 = vld [vmem:[%s201 + $0x1e0] sm:%s194]
                %264 = vst [vmem:[%s202 + $0x78] sm:%s194] %v263
                %v265 = vld [vmem:[%s201 + $0x1f0] sm:%s194]
                %266 = vst [vmem:[%s202 + $0x7c] sm:%s194] %v265
                %v267 = vld [vmem:[%s201 + $0x200] sm:%s194]
                %268 = vst [vmem:[%s202 + $0x80] sm:%s194] %v267
                %v269 = vld [vmem:[%s201 + $0x210] sm:%s194]
                %270 = vst [vmem:[%s202 + $0x84] sm:%s194] %v269
                %v271 = vld [vmem:[%s201 + $0x220] sm:%s194]
                %272 = vst [vmem:[%s202 + $0x88] sm:%s194] %v271
                %v273 = vld [vmem:[%s201 + $0x230] sm:%s194]
                %274 = vst [vmem:[%s202 + $0x8c] sm:%s194] %v273
                %v275 = vld [vmem:[%s201 + $0x240] sm:%s194]
                %276 = vst [vmem:[%s202 + $0x90] sm:%s194] %v275
                %v277 = vld [vmem:[%s201 + $0x250] sm:%s194]
                %278 = vst [vmem:[%s202 + $0x94] sm:%s194] %v277
                %v279 = vld [vmem:[%s201 + $0x260] sm:%s194]
                %280 = vst [vmem:[%s202 + $0x98] sm:%s194] %v279
                %v281 = vld [vmem:[%s201 + $0x270] sm:%s194]
                %282 = vst [vmem:[%s202 + $0x9c] sm:%s194] %v281
                %v283 = vld [vmem:[%s201 + $0x280] sm:%s194]
                %284 = vst [vmem:[%s202 + $0xa0] sm:%s194] %v283
                %v285 = vld [vmem:[%s201 + $0x290] sm:%s194]
                %286 = vst [vmem:[%s202 + $0xa4] sm:%s194] %v285
                %v287 = vld [vmem:[%s201 + $0x2a0] sm:%s194]
                %288 = vst [vmem:[%s202 + $0xa8] sm:%s194] %v287
                %v289 = vld [vmem:[%s201 + $0x2b0] sm:%s194]
                %290 = vst [vmem:[%s202 + $0xac] sm:%s194] %v289
                %v291 = vld [vmem:[%s201 + $0x2c0] sm:%s194]
                %292 = vst [vmem:[%s202 + $0xb0] sm:%s194] %v291
                %v293 = vld [vmem:[%s201 + $0x2d0] sm:%s194]
                %294 = vst [vmem:[%s202 + $0xb4] sm:%s194] %v293
                %v295 = vld [vmem:[%s201 + $0x2e0] sm:%s194]
                %296 = vst [vmem:[%s202 + $0xb8] sm:%s194] %v295
                %v297 = vld [vmem:[%s201 + $0x2f0] sm:%s194]
                %298 = vst [vmem:[%s202 + $0xbc] sm:%s194] %v297
                %v299 = vld [vmem:[%s201 + $0x300] sm:%s194]
                %300 = vst [vmem:[%s202 + $0xc0] sm:%s194] %v299
                %v301 = vld [vmem:[%s201 + $0x310] sm:%s194]
                %302 = vst [vmem:[%s202 + $0xc4] sm:%s194] %v301
                %v303 = vld [vmem:[%s201 + $0x320] sm:%s194]
                %304 = vst [vmem:[%s202 + $0xc8] sm:%s194] %v303
                %v305 = vld [vmem:[%s201 + $0x330] sm:%s194]
                %306 = vst [vmem:[%s202 + $0xcc] sm:%s194] %v305
                %v307 = vld [vmem:[%s201 + $0x340] sm:%s194]
                %308 = vst [vmem:[%s202 + $0xd0] sm:%s194] %v307
                %v309 = vld [vmem:[%s201 + $0x350] sm:%s194]
                %310 = vst [vmem:[%s202 + $0xd4] sm:%s194] %v309
                %v311 = vld [vmem:[%s201 + $0x360] sm:%s194]
                %312 = vst [vmem:[%s202 + $0xd8] sm:%s194] %v311
                %v313 = vld [vmem:[%s201 + $0x370] sm:%s194]
                %314 = vst [vmem:[%s202 + $0xdc] sm:%s194] %v313
                %v315 = vld [vmem:[%s201 + $0x380] sm:%s194]
                %316 = vst [vmem:[%s202 + $0xe0] sm:%s194] %v315
                %v317 = vld [vmem:[%s201 + $0x390] sm:%s194]
                %318 = vst [vmem:[%s202 + $0xe4] sm:%s194] %v317
                %v319 = vld [vmem:[%s201 + $0x3a0] sm:%s194]
                %320 = vst [vmem:[%s202 + $0xe8] sm:%s194] %v319
                %v321 = vld [vmem:[%s201 + $0x3b0] sm:%s194]
                %322 = vst [vmem:[%s202 + $0xec] sm:%s194] %v321
                %v323 = vld [vmem:[%s201 + $0x3c0] sm:%s194]
                %324 = vst [vmem:[%s202 + $0xf0] sm:%s194] %v323
                %v325 = vld [vmem:[%s201 + $0x3d0] sm:%s194]
                %326 = vst [vmem:[%s202 + $0xf4] sm:%s194] %v325
                %v327 = vld [vmem:[%s201 + $0x3e0] sm:%s194]
                %328 = vst [vmem:[%s202 + $0xf8] sm:%s194] %v327
                %v329 = vld [vmem:[%s201 + $0x3f0] sm:%s194]
                %330 = vst [vmem:[%s202 + $0xfc] sm:%s194] %v329
                %v331 = vld [vmem:[%s201 + $0x400] sm:%s194]
                %332 = vst [vmem:[%s202 + $0x100] sm:%s194] %v331
                %v333 = vld [vmem:[%s201 + $0x410] sm:%s194]
                %334 = vst [vmem:[%s202 + $0x104] sm:%s194] %v333
                %v335 = vld [vmem:[%s201 + $0x420] sm:%s194]
                %336 = vst [vmem:[%s202 + $0x108] sm:%s194] %v335
                %v337 = vld [vmem:[%s201 + $0x430] sm:%s194]
                %338 = vst [vmem:[%s202 + $0x10c] sm:%s194] %v337
                %v339 = vld [vmem:[%s201 + $0x440] sm:%s194]
                %340 = vst [vmem:[%s202 + $0x110] sm:%s194] %v339
                %v341 = vld [vmem:[%s201 + $0x450] sm:%s194]
                %342 = vst [vmem:[%s202 + $0x114] sm:%s194] %v341
                %v343 = vld [vmem:[%s201 + $0x460] sm:%s194]
                %344 = vst [vmem:[%s202 + $0x118] sm:%s194] %v343
                %v345 = vld [vmem:[%s201 + $0x470] sm:%s194]
                %346 = vst [vmem:[%s202 + $0x11c] sm:%s194] %v345
                %v347 = vld [vmem:[%s201 + $0x480] sm:%s194]
                %348 = vst [vmem:[%s202 + $0x120] sm:%s194] %v347
                %v349 = vld [vmem:[%s201 + $0x490] sm:%s194]
                %350 = vst [vmem:[%s202 + $0x124] sm:%s194] %v349
                %v351 = vld [vmem:[%s201 + $0x4a0] sm:%s194]
                %352 = vst [vmem:[%s202 + $0x128] sm:%s194] %v351
                %v353 = vld [vmem:[%s201 + $0x4b0] sm:%s194]
                %354 = vst [vmem:[%s202 + $0x12c] sm:%s194] %v353
                %v355 = vld [vmem:[%s201 + $0x4c0] sm:%s194]
                %356 = vst [vmem:[%s202 + $0x130] sm:%s194] %v355
                %v357 = vld [vmem:[%s201 + $0x4d0] sm:%s194]
                %358 = vst [vmem:[%s202 + $0x134] sm:%s194] %v357
                %v359 = vld [vmem:[%s201 + $0x4e0] sm:%s194]
                %360 = vst [vmem:[%s202 + $0x138] sm:%s194] %v359
                %v361 = vld [vmem:[%s201 + $0x4f0] sm:%s194]
                %362 = vst [vmem:[%s202 + $0x13c] sm:%s194] %v361
                %v363 = vld [vmem:[%s201 + $0x500] sm:%s194]
                %364 = vst [vmem:[%s202 + $0x140] sm:%s194] %v363
                %v365 = vld [vmem:[%s201 + $0x510] sm:%s194]
                %366 = vst [vmem:[%s202 + $0x144] sm:%s194] %v365
                %v367 = vld [vmem:[%s201 + $0x520] sm:%s194]
                %368 = vst [vmem:[%s202 + $0x148] sm:%s194] %v367
                %v369 = vld [vmem:[%s201 + $0x530] sm:%s194]
                %370 = vst [vmem:[%s202 + $0x14c] sm:%s194] %v369
                %v371 = vld [vmem:[%s201 + $0x540] sm:%s194]
                %372 = vst [vmem:[%s202 + $0x150] sm:%s194] %v371
                %v373 = vld [vmem:[%s201 + $0x550] sm:%s194]
                %374 = vst [vmem:[%s202 + $0x154] sm:%s194] %v373
                %v375 = vld [vmem:[%s201 + $0x560] sm:%s194]
                %376 = vst [vmem:[%s202 + $0x158] sm:%s194] %v375
                %v377 = vld [vmem:[%s201 + $0x570] sm:%s194]
                %378 = vst [vmem:[%s202 + $0x15c] sm:%s194] %v377
                %v379 = vld [vmem:[%s201 + $0x580] sm:%s194]
                %380 = vst [vmem:[%s202 + $0x160] sm:%s194] %v379
                %v381 = vld [vmem:[%s201 + $0x590] sm:%s194]
                %382 = vst [vmem:[%s202 + $0x164] sm:%s194] %v381
                %v383 = vld [vmem:[%s201 + $0x5a0] sm:%s194]
                %384 = vst [vmem:[%s202 + $0x168] sm:%s194] %v383
                %v385 = vld [vmem:[%s201 + $0x5b0] sm:%s194]
                %386 = vst [vmem:[%s202 + $0x16c] sm:%s194] %v385
                %v387 = vld [vmem:[%s201 + $0x5c0] sm:%s194]
                %388 = vst [vmem:[%s202 + $0x170] sm:%s194] %v387
                %v389 = vld [vmem:[%s201 + $0x5d0] sm:%s194]
                %390 = vst [vmem:[%s202 + $0x174] sm:%s194] %v389
                %v391 = vld [vmem:[%s201 + $0x5e0] sm:%s194]
                %392 = vst [vmem:[%s202 + $0x178] sm:%s194] %v391
                %v393 = vld [vmem:[%s201 + $0x5f0] sm:%s194]
                %394 = vst [vmem:[%s202 + $0x17c] sm:%s194] %v393
                %v395 = vld [vmem:[%s201 + $0x600] sm:%s194]
                %396 = vst [vmem:[%s202 + $0x180] sm:%s194] %v395
                %v397 = vld [vmem:[%s201 + $0x610] sm:%s194]
                %398 = vst [vmem:[%s202 + $0x184] sm:%s194] %v397
                %v399 = vld [vmem:[%s201 + $0x620] sm:%s194]
                %400 = vst [vmem:[%s202 + $0x188] sm:%s194] %v399
                %v401 = vld [vmem:[%s201 + $0x630] sm:%s194]
                %402 = vst [vmem:[%s202 + $0x18c] sm:%s194] %v401
                %v403 = vld [vmem:[%s201 + $0x640] sm:%s194]
                %404 = vst [vmem:[%s202 + $0x190] sm:%s194] %v403
                %v405 = vld [vmem:[%s201 + $0x650] sm:%s194]
                %406 = vst [vmem:[%s202 + $0x194] sm:%s194] %v405
                %v407 = vld [vmem:[%s201 + $0x660] sm:%s194]
                %408 = vst [vmem:[%s202 + $0x198] sm:%s194] %v407
                %v409 = vld [vmem:[%s201 + $0x670] sm:%s194]
                %410 = vst [vmem:[%s202 + $0x19c] sm:%s194] %v409
                %v411 = vld [vmem:[%s201 + $0x680] sm:%s194]
                %412 = vst [vmem:[%s202 + $0x1a0] sm:%s194] %v411
                %v413 = vld [vmem:[%s201 + $0x690] sm:%s194]
                %414 = vst [vmem:[%s202 + $0x1a4] sm:%s194] %v413
                %v415 = vld [vmem:[%s201 + $0x6a0] sm:%s194]
                %416 = vst [vmem:[%s202 + $0x1a8] sm:%s194] %v415
                %v417 = vld [vmem:[%s201 + $0x6b0] sm:%s194]
                %418 = vst [vmem:[%s202 + $0x1ac] sm:%s194] %v417
                %v419 = vld [vmem:[%s201 + $0x6c0] sm:%s194]
                %420 = vst [vmem:[%s202 + $0x1b0] sm:%s194] %v419
                %v421 = vld [vmem:[%s201 + $0x6d0] sm:%s194]
                %422 = vst [vmem:[%s202 + $0x1b4] sm:%s194] %v421
                %v423 = vld [vmem:[%s201 + $0x6e0] sm:%s194]
                %424 = vst [vmem:[%s202 + $0x1b8] sm:%s194] %v423
                %v425 = vld [vmem:[%s201 + $0x6f0] sm:%s194]
                %426 = vst [vmem:[%s202 + $0x1bc] sm:%s194] %v425
                %v427 = vld [vmem:[%s201 + $0x700] sm:%s194]
                %428 = vst [vmem:[%s202 + $0x1c0] sm:%s194] %v427
                %v429 = vld [vmem:[%s201 + $0x710] sm:%s194]
                %430 = vst [vmem:[%s202 + $0x1c4] sm:%s194] %v429
                %v431 = vld [vmem:[%s201 + $0x720] sm:%s194]
                %432 = vst [vmem:[%s202 + $0x1c8] sm:%s194] %v431
                %v433 = vld [vmem:[%s201 + $0x730] sm:%s194]
                %434 = vst [vmem:[%s202 + $0x1cc] sm:%s194] %v433
                %v435 = vld [vmem:[%s201 + $0x740] sm:%s194]
                %436 = vst [vmem:[%s202 + $0x1d0] sm:%s194] %v435
                %v437 = vld [vmem:[%s201 + $0x750] sm:%s194]
                %438 = vst [vmem:[%s202 + $0x1d4] sm:%s194] %v437
                %v439 = vld [vmem:[%s201 + $0x760] sm:%s194]
                %440 = vst [vmem:[%s202 + $0x1d8] sm:%s194] %v439
                %v441 = vld [vmem:[%s201 + $0x770] sm:%s194]
                %442 = vst [vmem:[%s202 + $0x1dc] sm:%s194] %v441
                %v443 = vld [vmem:[%s201 + $0x780] sm:%s194]
                %444 = vst [vmem:[%s202 + $0x1e0] sm:%s194] %v443
                %v445 = vld [vmem:[%s201 + $0x790] sm:%s194]
                %446 = vst [vmem:[%s202 + $0x1e4] sm:%s194] %v445
                %v447 = vld [vmem:[%s201 + $0x7a0] sm:%s194]
                %448 = vst [vmem:[%s202 + $0x1e8] sm:%s194] %v447
                %v449 = vld [vmem:[%s201 + $0x7b0] sm:%s194]
                %450 = vst [vmem:[%s202 + $0x1ec] sm:%s194] %v449
                %v451 = vld [vmem:[%s201 + $0x7c0] sm:%s194]
                %452 = vst [vmem:[%s202 + $0x1f0] sm:%s194] %v451
                %v453 = vld [vmem:[%s201 + $0x7d0] sm:%s194]
                %454 = vst [vmem:[%s202 + $0x1f4] sm:%s194] %v453
                %v455 = vld [vmem:[%s201 + $0x7e0] sm:%s194]
                %456 = vst [vmem:[%s202 + $0x1f8] sm:%s194] %v455
                %v457 = vld [vmem:[%s201 + $0x7f0] sm:%s194]
                %458 = vst [vmem:[%s202 + $0x1fc] sm:%s194] %v457
                %v459 = vld [vmem:[%s201 + $0x800] sm:%s194]
                %460 = vst [vmem:[%s202 + $0x200] sm:%s194] %v459
                %v461 = vld [vmem:[%s201 + $0x810] sm:%s194]
                %462 = vst [vmem:[%s202 + $0x204] sm:%s194] %v461
                %v463 = vld [vmem:[%s201 + $0x820] sm:%s194]
                %464 = vst [vmem:[%s202 + $0x208] sm:%s194] %v463
                %v465 = vld [vmem:[%s201 + $0x830] sm:%s194]
                %466 = vst [vmem:[%s202 + $0x20c] sm:%s194] %v465
                %v467 = vld [vmem:[%s201 + $0x840] sm:%s194]
                %468 = vst [vmem:[%s202 + $0x210] sm:%s194] %v467
                %v469 = vld [vmem:[%s201 + $0x850] sm:%s194]
                %470 = vst [vmem:[%s202 + $0x214] sm:%s194] %v469
                %v471 = vld [vmem:[%s201 + $0x860] sm:%s194]
                %472 = vst [vmem:[%s202 + $0x218] sm:%s194] %v471
                %v473 = vld [vmem:[%s201 + $0x870] sm:%s194]
                %474 = vst [vmem:[%s202 + $0x21c] sm:%s194] %v473
                %v475 = vld [vmem:[%s201 + $0x880] sm:%s194]
                %476 = vst [vmem:[%s202 + $0x220] sm:%s194] %v475
                %v477 = vld [vmem:[%s201 + $0x890] sm:%s194]
                %478 = vst [vmem:[%s202 + $0x224] sm:%s194] %v477
                %v479 = vld [vmem:[%s201 + $0x8a0] sm:%s194]
                %480 = vst [vmem:[%s202 + $0x228] sm:%s194] %v479
                %v481 = vld [vmem:[%s201 + $0x8b0] sm:%s194]
                %482 = vst [vmem:[%s202 + $0x22c] sm:%s194] %v481
                %v483 = vld [vmem:[%s201 + $0x8c0] sm:%s194]
                %484 = vst [vmem:[%s202 + $0x230] sm:%s194] %v483
                %v485 = vld [vmem:[%s201 + $0x8d0] sm:%s194]
                %486 = vst [vmem:[%s202 + $0x234] sm:%s194] %v485
                %v487 = vld [vmem:[%s201 + $0x8e0] sm:%s194]
                %488 = vst [vmem:[%s202 + $0x238] sm:%s194] %v487
                %v489 = vld [vmem:[%s201 + $0x8f0] sm:%s194]
                %490 = vst [vmem:[%s202 + $0x23c] sm:%s194] %v489
                %v491 = vld [vmem:[%s201 + $0x900] sm:%s194]
                %492 = vst [vmem:[%s202 + $0x240] sm:%s194] %v491
                %v493 = vld [vmem:[%s201 + $0x910] sm:%s194]
                %494 = vst [vmem:[%s202 + $0x244] sm:%s194] %v493
                %v495 = vld [vmem:[%s201 + $0x920] sm:%s194]
                %496 = vst [vmem:[%s202 + $0x248] sm:%s194] %v495
                %v497 = vld [vmem:[%s201 + $0x930] sm:%s194]
                %498 = vst [vmem:[%s202 + $0x24c] sm:%s194] %v497
                %v499 = vld [vmem:[%s201 + $0x940] sm:%s194]
                %500 = vst [vmem:[%s202 + $0x250] sm:%s194] %v499
                %v501 = vld [vmem:[%s201 + $0x950] sm:%s194]
                %502 = vst [vmem:[%s202 + $0x254] sm:%s194] %v501
                %v503 = vld [vmem:[%s201 + $0x960] sm:%s194]
                %504 = vst [vmem:[%s202 + $0x258] sm:%s194] %v503
                %v505 = vld [vmem:[%s201 + $0x970] sm:%s194]
                %506 = vst [vmem:[%s202 + $0x25c] sm:%s194] %v505
                %v507 = vld [vmem:[%s201 + $0x980] sm:%s194]
                %508 = vst [vmem:[%s202 + $0x260] sm:%s194] %v507
                %v509 = vld [vmem:[%s201 + $0x990] sm:%s194]
                %510 = vst [vmem:[%s202 + $0x264] sm:%s194] %v509
                %v511 = vld [vmem:[%s201 + $0x9a0] sm:%s194]
                %512 = vst [vmem:[%s202 + $0x268] sm:%s194] %v511
                %v513 = vld [vmem:[%s201 + $0x9b0] sm:%s194]
                %514 = vst [vmem:[%s202 + $0x26c] sm:%s194] %v513
                %v515 = vld [vmem:[%s201 + $0x9c0] sm:%s194]
                %516 = vst [vmem:[%s202 + $0x270] sm:%s194] %v515
                %v517 = vld [vmem:[%s201 + $0x9d0] sm:%s194]
                %518 = vst [vmem:[%s202 + $0x274] sm:%s194] %v517
                %v519 = vld [vmem:[%s201 + $0x9e0] sm:%s194]
                %520 = vst [vmem:[%s202 + $0x278] sm:%s194] %v519
                %v521 = vld [vmem:[%s201 + $0x9f0] sm:%s194]
                %522 = vst [vmem:[%s202 + $0x27c] sm:%s194] %v521
                %v523 = vld [vmem:[%s201 + $0xa00] sm:%s194]
                %524 = vst [vmem:[%s202 + $0x280] sm:%s194] %v523
                %v525 = vld [vmem:[%s201 + $0xa10] sm:%s194]
                %526 = vst [vmem:[%s202 + $0x284] sm:%s194] %v525
                %v527 = vld [vmem:[%s201 + $0xa20] sm:%s194]
                %528 = vst [vmem:[%s202 + $0x288] sm:%s194] %v527
                %v529 = vld [vmem:[%s201 + $0xa30] sm:%s194]
                %530 = vst [vmem:[%s202 + $0x28c] sm:%s194] %v529
                %v531 = vld [vmem:[%s201 + $0xa40] sm:%s194]
                %532 = vst [vmem:[%s202 + $0x290] sm:%s194] %v531
                %v533 = vld [vmem:[%s201 + $0xa50] sm:%s194]
                %534 = vst [vmem:[%s202 + $0x294] sm:%s194] %v533
                %v535 = vld [vmem:[%s201 + $0xa60] sm:%s194]
                %536 = vst [vmem:[%s202 + $0x298] sm:%s194] %v535
                %v537 = vld [vmem:[%s201 + $0xa70] sm:%s194]
                %538 = vst [vmem:[%s202 + $0x29c] sm:%s194] %v537
                %v539 = vld [vmem:[%s201 + $0xa80] sm:%s194]
                %540 = vst [vmem:[%s202 + $0x2a0] sm:%s194] %v539
                %v541 = vld [vmem:[%s201 + $0xa90] sm:%s194]
                %542 = vst [vmem:[%s202 + $0x2a4] sm:%s194] %v541
                %v543 = vld [vmem:[%s201 + $0xaa0] sm:%s194]
                %544 = vst [vmem:[%s202 + $0x2a8] sm:%s194] %v543
                %v545 = vld [vmem:[%s201 + $0xab0] sm:%s194]
                %546 = vst [vmem:[%s202 + $0x2ac] sm:%s194] %v545
                %v547 = vld [vmem:[%s201 + $0xac0] sm:%s194]
                %548 = vst [vmem:[%s202 + $0x2b0] sm:%s194] %v547
                %v549 = vld [vmem:[%s201 + $0xad0] sm:%s194]
                %550 = vst [vmem:[%s202 + $0x2b4] sm:%s194] %v549
                %v551 = vld [vmem:[%s201 + $0xae0] sm:%s194]
                %552 = vst [vmem:[%s202 + $0x2b8] sm:%s194] %v551
                %v553 = vld [vmem:[%s201 + $0xaf0] sm:%s194]
                %554 = vst [vmem:[%s202 + $0x2bc] sm:%s194] %v553
                %v555 = vld [vmem:[%s201 + $0xb00] sm:%s194]
                %556 = vst [vmem:[%s202 + $0x2c0] sm:%s194] %v555
                %v557 = vld [vmem:[%s201 + $0xb10] sm:%s194]
                %558 = vst [vmem:[%s202 + $0x2c4] sm:%s194] %v557
                %v559 = vld [vmem:[%s201 + $0xb20] sm:%s194]
                %560 = vst [vmem:[%s202 + $0x2c8] sm:%s194] %v559
                %v561 = vld [vmem:[%s201 + $0xb30] sm:%s194]
                %562 = vst [vmem:[%s202 + $0x2cc] sm:%s194] %v561
                %v563 = vld [vmem:[%s201 + $0xb40] sm:%s194]
                %564 = vst [vmem:[%s202 + $0x2d0] sm:%s194] %v563
                %v565 = vld [vmem:[%s201 + $0xb50] sm:%s194]
                %566 = vst [vmem:[%s202 + $0x2d4] sm:%s194] %v565
                %v567 = vld [vmem:[%s201 + $0xb60] sm:%s194]
                %568 = vst [vmem:[%s202 + $0x2d8] sm:%s194] %v567
                %v569 = vld [vmem:[%s201 + $0xb70] sm:%s194]
                %570 = vst [vmem:[%s202 + $0x2dc] sm:%s194] %v569
                %v571 = vld [vmem:[%s201 + $0xb80] sm:%s194]
                %572 = vst [vmem:[%s202 + $0x2e0] sm:%s194] %v571
                %v573 = vld [vmem:[%s201 + $0xb90] sm:%s194]
                %574 = vst [vmem:[%s202 + $0x2e4] sm:%s194] %v573
                %v575 = vld [vmem:[%s201 + $0xba0] sm:%s194]
                %576 = vst [vmem:[%s202 + $0x2e8] sm:%s194] %v575
                %v577 = vld [vmem:[%s201 + $0xbb0] sm:%s194]
                %578 = vst [vmem:[%s202 + $0x2ec] sm:%s194] %v577
                %v579 = vld [vmem:[%s201 + $0xbc0] sm:%s194]
                %580 = vst [vmem:[%s202 + $0x2f0] sm:%s194] %v579
                %v581 = vld [vmem:[%s201 + $0xbd0] sm:%s194]
                %582 = vst [vmem:[%s202 + $0x2f4] sm:%s194] %v581
                %v583 = vld [vmem:[%s201 + $0xbe0] sm:%s194]
                %584 = vst [vmem:[%s202 + $0x2f8] sm:%s194] %v583
                %v585 = vld [vmem:[%s201 + $0xbf0] sm:%s194]
                %586 = vst [vmem:[%s202 + $0x2fc] sm:%s194] %v585
                %v587 = vld [vmem:[%s201 + $0xc00] sm:%s194]
                %588 = vst [vmem:[%s202 + $0x300] sm:%s194] %v587
                %v589 = vld [vmem:[%s201 + $0xc10] sm:%s194]
                %590 = vst [vmem:[%s202 + $0x304] sm:%s194] %v589
                %v591 = vld [vmem:[%s201 + $0xc20] sm:%s194]
                %592 = vst [vmem:[%s202 + $0x308] sm:%s194] %v591
                %v593 = vld [vmem:[%s201 + $0xc30] sm:%s194]
                %594 = vst [vmem:[%s202 + $0x30c] sm:%s194] %v593
                %v595 = vld [vmem:[%s201 + $0xc40] sm:%s194]
                %596 = vst [vmem:[%s202 + $0x310] sm:%s194] %v595
                %v597 = vld [vmem:[%s201 + $0xc50] sm:%s194]
                %598 = vst [vmem:[%s202 + $0x314] sm:%s194] %v597
                %v599 = vld [vmem:[%s201 + $0xc60] sm:%s194]
                %600 = vst [vmem:[%s202 + $0x318] sm:%s194] %v599
                %v601 = vld [vmem:[%s201 + $0xc70] sm:%s194]
                %602 = vst [vmem:[%s202 + $0x31c] sm:%s194] %v601
                %v603 = vld [vmem:[%s201 + $0xc80] sm:%s194]
                %604 = vst [vmem:[%s202 + $0x320] sm:%s194] %v603
                %v605 = vld [vmem:[%s201 + $0xc90] sm:%s194]
                %606 = vst [vmem:[%s202 + $0x324] sm:%s194] %v605
                %v607 = vld [vmem:[%s201 + $0xca0] sm:%s194]
                %608 = vst [vmem:[%s202 + $0x328] sm:%s194] %v607
                %v609 = vld [vmem:[%s201 + $0xcb0] sm:%s194]
                %610 = vst [vmem:[%s202 + $0x32c] sm:%s194] %v609
                %v611 = vld [vmem:[%s201 + $0xcc0] sm:%s194]
                %612 = vst [vmem:[%s202 + $0x330] sm:%s194] %v611
                %v613 = vld [vmem:[%s201 + $0xcd0] sm:%s194]
                %614 = vst [vmem:[%s202 + $0x334] sm:%s194] %v613
                %v615 = vld [vmem:[%s201 + $0xce0] sm:%s194]
                %616 = vst [vmem:[%s202 + $0x338] sm:%s194] %v615
                %v617 = vld [vmem:[%s201 + $0xcf0] sm:%s194]
                %618 = vst [vmem:[%s202 + $0x33c] sm:%s194] %v617
                %v619 = vld [vmem:[%s201 + $0xd00] sm:%s194]
                %620 = vst [vmem:[%s202 + $0x340] sm:%s194] %v619
                %v621 = vld [vmem:[%s201 + $0xd10] sm:%s194]
                %622 = vst [vmem:[%s202 + $0x344] sm:%s194] %v621
                %v623 = vld [vmem:[%s201 + $0xd20] sm:%s194]
                %624 = vst [vmem:[%s202 + $0x348] sm:%s194] %v623
                %v625 = vld [vmem:[%s201 + $0xd30] sm:%s194]
                %626 = vst [vmem:[%s202 + $0x34c] sm:%s194] %v625
                %v627 = vld [vmem:[%s201 + $0xd40] sm:%s194]
                %628 = vst [vmem:[%s202 + $0x350] sm:%s194] %v627
                %v629 = vld [vmem:[%s201 + $0xd50] sm:%s194]
                %630 = vst [vmem:[%s202 + $0x354] sm:%s194] %v629
                %v631 = vld [vmem:[%s201 + $0xd60] sm:%s194]
                %632 = vst [vmem:[%s202 + $0x358] sm:%s194] %v631
                %v633 = vld [vmem:[%s201 + $0xd70] sm:%s194]
                %634 = vst [vmem:[%s202 + $0x35c] sm:%s194] %v633
                %v635 = vld [vmem:[%s201 + $0xd80] sm:%s194]
                %636 = vst [vmem:[%s202 + $0x360] sm:%s194] %v635
                %v637 = vld [vmem:[%s201 + $0xd90] sm:%s194]
                %638 = vst [vmem:[%s202 + $0x364] sm:%s194] %v637
                %v639 = vld [vmem:[%s201 + $0xda0] sm:%s194]
                %640 = vst [vmem:[%s202 + $0x368] sm:%s194] %v639
                %v641 = vld [vmem:[%s201 + $0xdb0] sm:%s194]
                %642 = vst [vmem:[%s202 + $0x36c] sm:%s194] %v641
                %v643 = vld [vmem:[%s201 + $0xdc0] sm:%s194]
                %644 = vst [vmem:[%s202 + $0x370] sm:%s194] %v643
                %v645 = vld [vmem:[%s201 + $0xdd0] sm:%s194]
                %646 = vst [vmem:[%s202 + $0x374] sm:%s194] %v645
                %v647 = vld [vmem:[%s201 + $0xde0] sm:%s194]
                %648 = vst [vmem:[%s202 + $0x378] sm:%s194] %v647
                %v649 = vld [vmem:[%s201 + $0xdf0] sm:%s194]
                %650 = vst [vmem:[%s202 + $0x37c] sm:%s194] %v649
                %v651 = vld [vmem:[%s201 + $0xe00] sm:%s194]
                %652 = vst [vmem:[%s202 + $0x380] sm:%s194] %v651
                %v653 = vld [vmem:[%s201 + $0xe10] sm:%s194]
                %654 = vst [vmem:[%s202 + $0x384] sm:%s194] %v653
                %v655 = vld [vmem:[%s201 + $0xe20] sm:%s194]
                %656 = vst [vmem:[%s202 + $0x388] sm:%s194] %v655
                %v657 = vld [vmem:[%s201 + $0xe30] sm:%s194]
                %658 = vst [vmem:[%s202 + $0x38c] sm:%s194] %v657
                %v659 = vld [vmem:[%s201 + $0xe40] sm:%s194]
                %660 = vst [vmem:[%s202 + $0x390] sm:%s194] %v659
                %v661 = vld [vmem:[%s201 + $0xe50] sm:%s194]
                %662 = vst [vmem:[%s202 + $0x394] sm:%s194] %v661
                %v663 = vld [vmem:[%s201 + $0xe60] sm:%s194]
                %664 = vst [vmem:[%s202 + $0x398] sm:%s194] %v663
                %v665 = vld [vmem:[%s201 + $0xe70] sm:%s194]
                %666 = vst [vmem:[%s202 + $0x39c] sm:%s194] %v665
                %v667 = vld [vmem:[%s201 + $0xe80] sm:%s194]
                %668 = vst [vmem:[%s202 + $0x3a0] sm:%s194] %v667
                %v669 = vld [vmem:[%s201 + $0xe90] sm:%s194]
                %670 = vst [vmem:[%s202 + $0x3a4] sm:%s194] %v669
                %v671 = vld [vmem:[%s201 + $0xea0] sm:%s194]
                %672 = vst [vmem:[%s202 + $0x3a8] sm:%s194] %v671
                %v673 = vld [vmem:[%s201 + $0xeb0] sm:%s194]
                %674 = vst [vmem:[%s202 + $0x3ac] sm:%s194] %v673
                %v675 = vld [vmem:[%s201 + $0xec0] sm:%s194]
                %676 = vst [vmem:[%s202 + $0x3b0] sm:%s194] %v675
                %v677 = vld [vmem:[%s201 + $0xed0] sm:%s194]
                %678 = vst [vmem:[%s202 + $0x3b4] sm:%s194] %v677
                %v679 = vld [vmem:[%s201 + $0xee0] sm:%s194]
                %680 = vst [vmem:[%s202 + $0x3b8] sm:%s194] %v679
                %v681 = vld [vmem:[%s201 + $0xef0] sm:%s194]
                %682 = vst [vmem:[%s202 + $0x3bc] sm:%s194] %v681
                %v683 = vld [vmem:[%s201 + $0xf00] sm:%s194]
                %684 = vst [vmem:[%s202 + $0x3c0] sm:%s194] %v683
                %v685 = vld [vmem:[%s201 + $0xf10] sm:%s194]
                %686 = vst [vmem:[%s202 + $0x3c4] sm:%s194] %v685
                %v687 = vld [vmem:[%s201 + $0xf20] sm:%s194]
                %688 = vst [vmem:[%s202 + $0x3c8] sm:%s194] %v687
                %v689 = vld [vmem:[%s201 + $0xf30] sm:%s194]
                %690 = vst [vmem:[%s202 + $0x3cc] sm:%s194] %v689
                %v691 = vld [vmem:[%s201 + $0xf40] sm:%s194]
                %692 = vst [vmem:[%s202 + $0x3d0] sm:%s194] %v691
                %v693 = vld [vmem:[%s201 + $0xf50] sm:%s194]
                %694 = vst [vmem:[%s202 + $0x3d4] sm:%s194] %v693
                %v695 = vld [vmem:[%s201 + $0xf60] sm:%s194]
                %696 = vst [vmem:[%s202 + $0x3d8] sm:%s194] %v695
                %v697 = vld [vmem:[%s201 + $0xf70] sm:%s194]
                %698 = vst [vmem:[%s202 + $0x3dc] sm:%s194] %v697
                %v699 = vld [vmem:[%s201 + $0xf80] sm:%s194]
                %700 = vst [vmem:[%s202 + $0x3e0] sm:%s194] %v699
                %v701 = vld [vmem:[%s201 + $0xf90] sm:%s194]
                %702 = vst [vmem:[%s202 + $0x3e4] sm:%s194] %v701
                %v703 = vld [vmem:[%s201 + $0xfa0] sm:%s194]
                %704 = vst [vmem:[%s202 + $0x3e8] sm:%s194] %v703
                %v705 = vld [vmem:[%s201 + $0xfb0] sm:%s194]
                %706 = vst [vmem:[%s202 + $0x3ec] sm:%s194] %v705
                %v707 = vld [vmem:[%s201 + $0xfc0] sm:%s194]
                %708 = vst [vmem:[%s202 + $0x3f0] sm:%s194] %v707
                %v709 = vld [vmem:[%s201 + $0xfd0] sm:%s194]
                %710 = vst [vmem:[%s202 + $0x3f4] sm:%s194] %v709
                %v711 = vld [vmem:[%s201 + $0xfe0] sm:%s194]
                %712 = vst [vmem:[%s202 + $0x3f8] sm:%s194] %v711
                %v713 = vld [vmem:[%s201 + $0xff0] sm:%s194]
                %714 = vst [vmem:[%s202 + $0x3fc] sm:%s194] %v713
                %v715 = vld [vmem:[%s201 + $0x1000] sm:%s194]
                %716 = vst [vmem:[%s202 + $0x400] sm:%s194] %v715
                %v717 = vld [vmem:[%s201 + $0x1010] sm:%s194]
                %718 = vst [vmem:[%s202 + $0x404] sm:%s194] %v717
                %v719 = vld [vmem:[%s201 + $0x1020] sm:%s194]
                %720 = vst [vmem:[%s202 + $0x408] sm:%s194] %v719
                %v721 = vld [vmem:[%s201 + $0x1030] sm:%s194]
                %722 = vst [vmem:[%s202 + $0x40c] sm:%s194] %v721
                %v723 = vld [vmem:[%s201 + $0x1040] sm:%s194]
                %724 = vst [vmem:[%s202 + $0x410] sm:%s194] %v723
                %v725 = vld [vmem:[%s201 + $0x1050] sm:%s194]
                %726 = vst [vmem:[%s202 + $0x414] sm:%s194] %v725
                %v727 = vld [vmem:[%s201 + $0x1060] sm:%s194]
                %728 = vst [vmem:[%s202 + $0x418] sm:%s194] %v727
                %v729 = vld [vmem:[%s201 + $0x1070] sm:%s194]
                %730 = vst [vmem:[%s202 + $0x41c] sm:%s194] %v729
                %v731 = vld [vmem:[%s201 + $0x1080] sm:%s194]
                %732 = vst [vmem:[%s202 + $0x420] sm:%s194] %v731
                %v733 = vld [vmem:[%s201 + $0x1090] sm:%s194]
                %734 = vst [vmem:[%s202 + $0x424] sm:%s194] %v733
                %v735 = vld [vmem:[%s201 + $0x10a0] sm:%s194]
                %736 = vst [vmem:[%s202 + $0x428] sm:%s194] %v735
                %v737 = vld [vmem:[%s201 + $0x10b0] sm:%s194]
                %738 = vst [vmem:[%s202 + $0x42c] sm:%s194] %v737
                %v739 = vld [vmem:[%s201 + $0x10c0] sm:%s194]
                %740 = vst [vmem:[%s202 + $0x430] sm:%s194] %v739
                %v741 = vld [vmem:[%s201 + $0x10d0] sm:%s194]
                %742 = vst [vmem:[%s202 + $0x434] sm:%s194] %v741
                %v743 = vld [vmem:[%s201 + $0x10e0] sm:%s194]
                %744 = vst [vmem:[%s202 + $0x438] sm:%s194] %v743
                %v745 = vld [vmem:[%s201 + $0x10f0] sm:%s194]
                %746 = vst [vmem:[%s202 + $0x43c] sm:%s194] %v745
                %v747 = vld [vmem:[%s201 + $0x1100] sm:%s194]
                %748 = vst [vmem:[%s202 + $0x440] sm:%s194] %v747
                %v749 = vld [vmem:[%s201 + $0x1110] sm:%s194]
                %750 = vst [vmem:[%s202 + $0x444] sm:%s194] %v749
                %v751 = vld [vmem:[%s201 + $0x1120] sm:%s194]
                %752 = vst [vmem:[%s202 + $0x448] sm:%s194] %v751
                %v753 = vld [vmem:[%s201 + $0x1130] sm:%s194]
                %754 = vst [vmem:[%s202 + $0x44c] sm:%s194] %v753
                %v755 = vld [vmem:[%s201 + $0x1140] sm:%s194]
                %756 = vst [vmem:[%s202 + $0x450] sm:%s194] %v755
                %v757 = vld [vmem:[%s201 + $0x1150] sm:%s194]
                %758 = vst [vmem:[%s202 + $0x454] sm:%s194] %v757
                %v759 = vld [vmem:[%s201 + $0x1160] sm:%s194]
                %760 = vst [vmem:[%s202 + $0x458] sm:%s194] %v759
                %v761 = vld [vmem:[%s201 + $0x1170] sm:%s194]
                %762 = vst [vmem:[%s202 + $0x45c] sm:%s194] %v761
                %v763 = vld [vmem:[%s201 + $0x1180] sm:%s194]
                %764 = vst [vmem:[%s202 + $0x460] sm:%s194] %v763
                %v765 = vld [vmem:[%s201 + $0x1190] sm:%s194]
                %766 = vst [vmem:[%s202 + $0x464] sm:%s194] %v765
                %v767 = vld [vmem:[%s201 + $0x11a0] sm:%s194]
                %768 = vst [vmem:[%s202 + $0x468] sm:%s194] %v767
                %v769 = vld [vmem:[%s201 + $0x11b0] sm:%s194]
                %770 = vst [vmem:[%s202 + $0x46c] sm:%s194] %v769
                %v771 = vld [vmem:[%s201 + $0x11c0] sm:%s194]
                %772 = vst [vmem:[%s202 + $0x470] sm:%s194] %v771
                %v773 = vld [vmem:[%s201 + $0x11d0] sm:%s194]
                %774 = vst [vmem:[%s202 + $0x474] sm:%s194] %v773
                %v775 = vld [vmem:[%s201 + $0x11e0] sm:%s194]
                %776 = vst [vmem:[%s202 + $0x478] sm:%s194] %v775
                %v777 = vld [vmem:[%s201 + $0x11f0] sm:%s194]
                %778 = vst [vmem:[%s202 + $0x47c] sm:%s194] %v777
                %v779 = vld [vmem:[%s201 + $0x1200] sm:%s194]
                %780 = vst [vmem:[%s202 + $0x480] sm:%s194] %v779
                %v781 = vld [vmem:[%s201 + $0x1210] sm:%s194]
                %782 = vst [vmem:[%s202 + $0x484] sm:%s194] %v781
                %v783 = vld [vmem:[%s201 + $0x1220] sm:%s194]
                %784 = vst [vmem:[%s202 + $0x488] sm:%s194] %v783
                %v785 = vld [vmem:[%s201 + $0x1230] sm:%s194]
                %786 = vst [vmem:[%s202 + $0x48c] sm:%s194] %v785
                %v787 = vld [vmem:[%s201 + $0x1240] sm:%s194]
                %788 = vst [vmem:[%s202 + $0x490] sm:%s194] %v787
                %v789 = vld [vmem:[%s201 + $0x1250] sm:%s194]
                %790 = vst [vmem:[%s202 + $0x494] sm:%s194] %v789
                %v791 = vld [vmem:[%s201 + $0x1260] sm:%s194]
                %792 = vst [vmem:[%s202 + $0x498] sm:%s194] %v791
                %v793 = vld [vmem:[%s201 + $0x1270] sm:%s194]
                %794 = vst [vmem:[%s202 + $0x49c] sm:%s194] %v793
                %v795 = vld [vmem:[%s201 + $0x1280] sm:%s194]
                %796 = vst [vmem:[%s202 + $0x4a0] sm:%s194] %v795
                %v797 = vld [vmem:[%s201 + $0x1290] sm:%s194]
                %798 = vst [vmem:[%s202 + $0x4a4] sm:%s194] %v797
                %v799 = vld [vmem:[%s201 + $0x12a0] sm:%s194]
                %800 = vst [vmem:[%s202 + $0x4a8] sm:%s194] %v799
                %v801 = vld [vmem:[%s201 + $0x12b0] sm:%s194]
                %802 = vst [vmem:[%s202 + $0x4ac] sm:%s194] %v801
                %v803 = vld [vmem:[%s201 + $0x12c0] sm:%s194]
                %804 = vst [vmem:[%s202 + $0x4b0] sm:%s194] %v803
                %v805 = vld [vmem:[%s201 + $0x12d0] sm:%s194]
                %806 = vst [vmem:[%s202 + $0x4b4] sm:%s194] %v805
                %v807 = vld [vmem:[%s201 + $0x12e0] sm:%s194]
                %808 = vst [vmem:[%s202 + $0x4b8] sm:%s194] %v807
                %v809 = vld [vmem:[%s201 + $0x12f0] sm:%s194]
                %810 = vst [vmem:[%s202 + $0x4bc] sm:%s194] %v809
                %v811 = vld [vmem:[%s201 + $0x1300] sm:%s194]
                %812 = vst [vmem:[%s202 + $0x4c0] sm:%s194] %v811
                %v813 = vld [vmem:[%s201 + $0x1310] sm:%s194]
                %814 = vst [vmem:[%s202 + $0x4c4] sm:%s194] %v813
                %v815 = vld [vmem:[%s201 + $0x1320] sm:%s194]
                %816 = vst [vmem:[%s202 + $0x4c8] sm:%s194] %v815
                %v817 = vld [vmem:[%s201 + $0x1330] sm:%s194]
                %818 = vst [vmem:[%s202 + $0x4cc] sm:%s194] %v817
                %v819 = vld [vmem:[%s201 + $0x1340] sm:%s194]
                %820 = vst [vmem:[%s202 + $0x4d0] sm:%s194] %v819
                %v821 = vld [vmem:[%s201 + $0x1350] sm:%s194]
                %822 = vst [vmem:[%s202 + $0x4d4] sm:%s194] %v821
                %v823 = vld [vmem:[%s201 + $0x1360] sm:%s194]
                %824 = vst [vmem:[%s202 + $0x4d8] sm:%s194] %v823
                %v825 = vld [vmem:[%s201 + $0x1370] sm:%s194]
                %826 = vst [vmem:[%s202 + $0x4dc] sm:%s194] %v825
                %v827 = vld [vmem:[%s201 + $0x1380] sm:%s194]
                %828 = vst [vmem:[%s202 + $0x4e0] sm:%s194] %v827
                %v829 = vld [vmem:[%s201 + $0x1390] sm:%s194]
                %830 = vst [vmem:[%s202 + $0x4e4] sm:%s194] %v829
                %v831 = vld [vmem:[%s201 + $0x13a0] sm:%s194]
                %832 = vst [vmem:[%s202 + $0x4e8] sm:%s194] %v831
                %v833 = vld [vmem:[%s201 + $0x13b0] sm:%s194]
                %834 = vst [vmem:[%s202 + $0x4ec] sm:%s194] %v833
                %v835 = vld [vmem:[%s201 + $0x13c0] sm:%s194]
                %836 = vst [vmem:[%s202 + $0x4f0] sm:%s194] %v835
                %v837 = vld [vmem:[%s201 + $0x13d0] sm:%s194]
                %838 = vst [vmem:[%s202 + $0x4f4] sm:%s194] %v837
                %v839 = vld [vmem:[%s201 + $0x13e0] sm:%s194]
                %840 = vst [vmem:[%s202 + $0x4f8] sm:%s194] %v839
                %v841 = vld [vmem:[%s201 + $0x13f0] sm:%s194]
                %842 = vst [vmem:[%s202 + $0x4fc] sm:%s194] %v841
                %v843 = vld [vmem:[%s201 + $0x1400] sm:%s194]
                %844 = vst [vmem:[%s202 + $0x500] sm:%s194] %v843
                %v845 = vld [vmem:[%s201 + $0x1410] sm:%s194]
                %846 = vst [vmem:[%s202 + $0x504] sm:%s194] %v845
                %v847 = vld [vmem:[%s201 + $0x1420] sm:%s194]
                %848 = vst [vmem:[%s202 + $0x508] sm:%s194] %v847
                %v849 = vld [vmem:[%s201 + $0x1430] sm:%s194]
                %850 = vst [vmem:[%s202 + $0x50c] sm:%s194] %v849
                %v851 = vld [vmem:[%s201 + $0x1440] sm:%s194]
                %852 = vst [vmem:[%s202 + $0x510] sm:%s194] %v851
                %v853 = vld [vmem:[%s201 + $0x1450] sm:%s194]
                %854 = vst [vmem:[%s202 + $0x514] sm:%s194] %v853
                %v855 = vld [vmem:[%s201 + $0x1460] sm:%s194]
                %856 = vst [vmem:[%s202 + $0x518] sm:%s194] %v855
                %v857 = vld [vmem:[%s201 + $0x1470] sm:%s194]
                %858 = vst [vmem:[%s202 + $0x51c] sm:%s194] %v857
                %v859 = vld [vmem:[%s201 + $0x1480] sm:%s194]
                %860 = vst [vmem:[%s202 + $0x520] sm:%s194] %v859
                %v861 = vld [vmem:[%s201 + $0x1490] sm:%s194]
                %862 = vst [vmem:[%s202 + $0x524] sm:%s194] %v861
                %v863 = vld [vmem:[%s201 + $0x14a0] sm:%s194]
                %864 = vst [vmem:[%s202 + $0x528] sm:%s194] %v863
                %v865 = vld [vmem:[%s201 + $0x14b0] sm:%s194]
                %866 = vst [vmem:[%s202 + $0x52c] sm:%s194] %v865
                %v867 = vld [vmem:[%s201 + $0x14c0] sm:%s194]
                %868 = vst [vmem:[%s202 + $0x530] sm:%s194] %v867
                %v869 = vld [vmem:[%s201 + $0x14d0] sm:%s194]
                %870 = vst [vmem:[%s202 + $0x534] sm:%s194] %v869
                %v871 = vld [vmem:[%s201 + $0x14e0] sm:%s194]
                %872 = vst [vmem:[%s202 + $0x538] sm:%s194] %v871
                %v873 = vld [vmem:[%s201 + $0x14f0] sm:%s194]
                %874 = vst [vmem:[%s202 + $0x53c] sm:%s194] %v873
                %v875 = vld [vmem:[%s201 + $0x1500] sm:%s194]
                %876 = vst [vmem:[%s202 + $0x540] sm:%s194] %v875
                %v877 = vld [vmem:[%s201 + $0x1510] sm:%s194]
                %878 = vst [vmem:[%s202 + $0x544] sm:%s194] %v877
                %v879 = vld [vmem:[%s201 + $0x1520] sm:%s194]
                %880 = vst [vmem:[%s202 + $0x548] sm:%s194] %v879
                %v881 = vld [vmem:[%s201 + $0x1530] sm:%s194]
                %882 = vst [vmem:[%s202 + $0x54c] sm:%s194] %v881
                %v883 = vld [vmem:[%s201 + $0x1540] sm:%s194]
                %884 = vst [vmem:[%s202 + $0x550] sm:%s194] %v883
                %v885 = vld [vmem:[%s201 + $0x1550] sm:%s194]
                %886 = vst [vmem:[%s202 + $0x554] sm:%s194] %v885
                %v887 = vld [vmem:[%s201 + $0x1560] sm:%s194]
                %888 = vst [vmem:[%s202 + $0x558] sm:%s194] %v887
                %v889 = vld [vmem:[%s201 + $0x1570] sm:%s194]
                %890 = vst [vmem:[%s202 + $0x55c] sm:%s194] %v889
                %v891 = vld [vmem:[%s201 + $0x1580] sm:%s194]
                %892 = vst [vmem:[%s202 + $0x560] sm:%s194] %v891
                %v893 = vld [vmem:[%s201 + $0x1590] sm:%s194]
                %894 = vst [vmem:[%s202 + $0x564] sm:%s194] %v893
                %v895 = vld [vmem:[%s201 + $0x15a0] sm:%s194]
                %896 = vst [vmem:[%s202 + $0x568] sm:%s194] %v895
                %v897 = vld [vmem:[%s201 + $0x15b0] sm:%s194]
                %898 = vst [vmem:[%s202 + $0x56c] sm:%s194] %v897
                %v899 = vld [vmem:[%s201 + $0x15c0] sm:%s194]
                %900 = vst [vmem:[%s202 + $0x570] sm:%s194] %v899
                %v901 = vld [vmem:[%s201 + $0x15d0] sm:%s194]
                %902 = vst [vmem:[%s202 + $0x574] sm:%s194] %v901
                %v903 = vld [vmem:[%s201 + $0x15e0] sm:%s194]
                %904 = vst [vmem:[%s202 + $0x578] sm:%s194] %v903
                %v905 = vld [vmem:[%s201 + $0x15f0] sm:%s194]
                %906 = vst [vmem:[%s202 + $0x57c] sm:%s194] %v905
                %v907 = vld [vmem:[%s201 + $0x1600] sm:%s194]
                %908 = vst [vmem:[%s202 + $0x580] sm:%s194] %v907
                %v909 = vld [vmem:[%s201 + $0x1610] sm:%s194]
                %910 = vst [vmem:[%s202 + $0x584] sm:%s194] %v909
                %v911 = vld [vmem:[%s201 + $0x1620] sm:%s194]
                %912 = vst [vmem:[%s202 + $0x588] sm:%s194] %v911
                %v913 = vld [vmem:[%s201 + $0x1630] sm:%s194]
                %914 = vst [vmem:[%s202 + $0x58c] sm:%s194] %v913
                %v915 = vld [vmem:[%s201 + $0x1640] sm:%s194]
                %916 = vst [vmem:[%s202 + $0x590] sm:%s194] %v915
                %v917 = vld [vmem:[%s201 + $0x1650] sm:%s194]
                %918 = vst [vmem:[%s202 + $0x594] sm:%s194] %v917
                %v919 = vld [vmem:[%s201 + $0x1660] sm:%s194]
                %920 = vst [vmem:[%s202 + $0x598] sm:%s194] %v919
                %v921 = vld [vmem:[%s201 + $0x1670] sm:%s194]
                %922 = vst [vmem:[%s202 + $0x59c] sm:%s194] %v921
                %v923 = vld [vmem:[%s201 + $0x1680] sm:%s194]
                %924 = vst [vmem:[%s202 + $0x5a0] sm:%s194] %v923
                %v925 = vld [vmem:[%s201 + $0x1690] sm:%s194]
                %926 = vst [vmem:[%s202 + $0x5a4] sm:%s194] %v925
                %v927 = vld [vmem:[%s201 + $0x16a0] sm:%s194]
                %928 = vst [vmem:[%s202 + $0x5a8] sm:%s194] %v927
                %v929 = vld [vmem:[%s201 + $0x16b0] sm:%s194]
                %930 = vst [vmem:[%s202 + $0x5ac] sm:%s194] %v929
                %v931 = vld [vmem:[%s201 + $0x16c0] sm:%s194]
                %932 = vst [vmem:[%s202 + $0x5b0] sm:%s194] %v931
                %v933 = vld [vmem:[%s201 + $0x16d0] sm:%s194]
                %934 = vst [vmem:[%s202 + $0x5b4] sm:%s194] %v933
                %v935 = vld [vmem:[%s201 + $0x16e0] sm:%s194]
                %936 = vst [vmem:[%s202 + $0x5b8] sm:%s194] %v935
                %v937 = vld [vmem:[%s201 + $0x16f0] sm:%s194]
                %938 = vst [vmem:[%s202 + $0x5bc] sm:%s194] %v937
                %v939 = vld [vmem:[%s201 + $0x1700] sm:%s194]
                %940 = vst [vmem:[%s202 + $0x5c0] sm:%s194] %v939
                %v941 = vld [vmem:[%s201 + $0x1710] sm:%s194]
                %942 = vst [vmem:[%s202 + $0x5c4] sm:%s194] %v941
                %v943 = vld [vmem:[%s201 + $0x1720] sm:%s194]
                %944 = vst [vmem:[%s202 + $0x5c8] sm:%s194] %v943
                %v945 = vld [vmem:[%s201 + $0x1730] sm:%s194]
                %946 = vst [vmem:[%s202 + $0x5cc] sm:%s194] %v945
                %v947 = vld [vmem:[%s201 + $0x1740] sm:%s194]
                %948 = vst [vmem:[%s202 + $0x5d0] sm:%s194] %v947
                %v949 = vld [vmem:[%s201 + $0x1750] sm:%s194]
                %950 = vst [vmem:[%s202 + $0x5d4] sm:%s194] %v949
                %v951 = vld [vmem:[%s201 + $0x1760] sm:%s194]
                %952 = vst [vmem:[%s202 + $0x5d8] sm:%s194] %v951
                %v953 = vld [vmem:[%s201 + $0x1770] sm:%s194]
                %954 = vst [vmem:[%s202 + $0x5dc] sm:%s194] %v953
                %v955 = vld [vmem:[%s201 + $0x1780] sm:%s194]
                %956 = vst [vmem:[%s202 + $0x5e0] sm:%s194] %v955
                %v957 = vld [vmem:[%s201 + $0x1790] sm:%s194]
                %958 = vst [vmem:[%s202 + $0x5e4] sm:%s194] %v957
                %v959 = vld [vmem:[%s201 + $0x17a0] sm:%s194]
                %960 = vst [vmem:[%s202 + $0x5e8] sm:%s194] %v959
                %v961 = vld [vmem:[%s201 + $0x17b0] sm:%s194]
                %962 = vst [vmem:[%s202 + $0x5ec] sm:%s194] %v961
                %v963 = vld [vmem:[%s201 + $0x17c0] sm:%s194]
                %964 = vst [vmem:[%s202 + $0x5f0] sm:%s194] %v963
                %v965 = vld [vmem:[%s201 + $0x17d0] sm:%s194]
                %966 = vst [vmem:[%s202 + $0x5f4] sm:%s194] %v965
                %v967 = vld [vmem:[%s201 + $0x17e0] sm:%s194]
                %968 = vst [vmem:[%s202 + $0x5f8] sm:%s194] %v967
                %v969 = vld [vmem:[%s201 + $0x17f0] sm:%s194]
                %970 = vst [vmem:[%s202 + $0x5fc] sm:%s194] %v969
                %v971 = vld [vmem:[%s201 + $0x1800] sm:%s194]
                %972 = vst [vmem:[%s202 + $0x600] sm:%s194] %v971
                %v973 = vld [vmem:[%s201 + $0x1810] sm:%s194]
                %974 = vst [vmem:[%s202 + $0x604] sm:%s194] %v973
                %v975 = vld [vmem:[%s201 + $0x1820] sm:%s194]
                %976 = vst [vmem:[%s202 + $0x608] sm:%s194] %v975
                %v977 = vld [vmem:[%s201 + $0x1830] sm:%s194]
                %978 = vst [vmem:[%s202 + $0x60c] sm:%s194] %v977
                %v979 = vld [vmem:[%s201 + $0x1840] sm:%s194]
                %980 = vst [vmem:[%s202 + $0x610] sm:%s194] %v979
                %v981 = vld [vmem:[%s201 + $0x1850] sm:%s194]
                %982 = vst [vmem:[%s202 + $0x614] sm:%s194] %v981
                %v983 = vld [vmem:[%s201 + $0x1860] sm:%s194]
                %984 = vst [vmem:[%s202 + $0x618] sm:%s194] %v983
                %v985 = vld [vmem:[%s201 + $0x1870] sm:%s194]
                %986 = vst [vmem:[%s202 + $0x61c] sm:%s194] %v985
              $region45: #{forward.7} parent=39 // loop_footer
                %s200 = sadd.s32 1, %s196
              $region46: #{forward.7} parent=39 // loop_footer_branch
                %195 = sbr.rel target = $region42
              $region47: #{forward.7} parent=39 // loop_exit
                _
            $region40: #{forward.7} parent=31 // pred_fallthru
              _
          $region32: #{forward.7} parent=27 // pred_fallthru
            _
          %3385 = vnop
        $region28: #{forward.7} parent=23 // pred_fallthru
          _
        // Predicated region
        $region77: #{forward.7} parent=23 // pred_check
          %p3386 = pneg %p79
        $region78: #{forward.7} parent=23 // pred_check_branch
          %3388 = sbr.rel (%p3386) target = $region80
        $region79: #{forward.7} parent=23 // pred_region
          %p3389 = scmp.lt.s32.totalorder %s12, 3
          %s3390 = scalar_select %p3389, %s12, 3
          %s3391 = scalar_lea.vmem %s2, %s3390
        $region80: #{forward.7} parent=23 // pred_fallthru
          _
        // Predicated region
        $region81: #{forward.7} parent=23 // pred_check
          %p3392 = pneg %p105
        $region82: #{forward.7} parent=23 // pred_check_branch
          %3394 = sbr.rel (%p3392) target = $region84
        $region83: #{forward.7} parent=23 // pred_region
          %s3395 = smul.u32 16, %s12
          %p3396 = scmp.lt.s32.totalorder %s3395, 63
          %s3397 = scalar_select %p3396, %s3395, 63
          %s3398 = smul.addr %s3397, 4
          %s3399 = scalar_lea.vmem %s3, %s3398
          %s3400 = smul.u32 16, %s12
        $region84: #{forward.7} parent=23 // pred_fallthru
          _
      $region24: #{forward.7} parent=5 // pred_fallthru
        _
      %p3401 = scmp.le.s32.totalorder 1, %s12
      %p3402 = scmp.lt.s32.totalorder %s12, 5
      %p3403 = pnand %p3401, %p3402
      %p3404 = pneg %p3403
      // Predicated region
      $region85: #{forward.7} parent=5 // pred_check
        _
      $region86: #{forward.7} parent=5 // pred_check_branch
        %3406 = sbr.rel (%p3403) target = $region88
      $region87: #{forward.7} parent=5 // pred_region
        %s3407 = ssub.s32 %s12, 1
        %s3408 = sand.u32 %s46, 1
        %s3409 = sand.u32 %s46, 1
        %s3410 = smul.addr %s3409, 1568
        %s3411 = scalar_lea.vmem [#allocation2], %s3410
        // Predicated region
        $region89: #{forward.7} parent=87 // pred_check
          %p3412 = pneg %p59
        $region90: #{forward.7} parent=87 // pred_check_branch
          %3414 = sbr.rel (%p3412) target = $region92
        $region91: #{forward.7} parent=87 // pred_region
          _
        $region92: #{forward.7} parent=87 // pred_fallthru
          _
        %p3415 = pneg %p33
        %p3416 = pneg %p30
        %s3417 = sand.u32 %s46, 1
        %s3418 = sand.u32 %s46, 1
        %s3419 = smul.addr %s3418, 1568
        %s3420 = scalar_lea.vmem [#allocation2], %s3419
        %p3421 = pneg %p59
        %p3422 = pneg %p56
        %p3423 = scmp.lt.s32.totalorder %s17, 3
        %s3424 = scalar_select %p3423, %s17, 3
        %s3425 = scalar_lea.vmem %s2, %s3424
        %p3426 = pneg %p85
        %p3427 = pneg %p82
        %s3428 = smul.u32 16, %s17
        %p3429 = scmp.lt.s32.totalorder %s3428, 63
        %s3430 = scalar_select %p3429, %s3428, 63
        %s3431 = smul.addr %s3430, 4
        %s3432 = scalar_lea.vmem %s3, %s3431
        %p3433 = pneg %p111
        %p3434 = pneg %p108
        %p3435 = pneg %p132
        %p3436 = pneg %p129
        %p3437 = pneg %p153
        %p3438 = pneg %p150
        %p3439 = scmp.lt.s32.totalorder %s17, 3
        %s3440 = scalar_select %p3439, %s17, 3
        %s3441 = scalar_lea.vmem %s2, %s3440
        %s3442 = smul.u32 16, %s17
        %p3443 = scmp.lt.s32.totalorder %s3442, 63
        %s3444 = scalar_select %p3443, %s3442, 63
        %s3445 = smul.addr %s3444, 4
        %s3446 = scalar_lea.vmem %s3, %s3445
        %s3447 = smul.u32 16, %s17
        %p3449 = scmp.eq.s32.totalorder %s17, 0
        // Predicated region
        $region93: #{forward.7} parent=87 // pred_check
          %p3450 = pneg %p3449
        $region94: #{forward.7} parent=87 // pred_check_branch
          %3452 = sbr.rel (%p3450) target = $region96
        $region95: #{forward.7} parent=87 // pred_region
          %vm3453 = vcmask 9216
          %3454 = vst.msk [vmem:[#allocation3] sm:$0x3] %vm3453, 0.0
        $region96: #{forward.7} parent=87 // pred_fallthru
          _
        %v3455 = vld [vmem:[%s0] sm:$0xff]
        %v3456 = vld [vmem:[%s0 + $0x8] sm:$0xff]
        %v3457 = vld [vmem:[%s0 + $0x10] sm:$0xff]
        %v3458 = vld [vmem:[%s0 + $0x18] sm:$0x1]
        %v3459 = vld [vmem:[%s3411] sm:$0xf]
        %v3460 = vld [vmem:[%s3411 + $0x4] sm:$0xf]
        %v3461 = vld [vmem:[%s3411 + $0x8] sm:$0xf]
        %v3462 = vld [vmem:[%s3411 + $0xc] sm:$0xf]
        %v3463 = vld [vmem:[%s3411 + $0x10] sm:$0xf]
        %v3464 = vld [vmem:[%s3411 + $0x14] sm:$0xf]
        %v3465 = vld [vmem:[%s3411 + $0x18] sm:$0xf]
        %v3466 = vld [vmem:[%s3411 + $0x1c] sm:$0xf]
        %v3467 = vld [vmem:[%s3411 + $0x20] sm:$0xf]
        %v3468 = vld [vmem:[%s3411 + $0x24] sm:$0xf]
        %v3469 = vld [vmem:[%s3411 + $0x28] sm:$0xf]
        %v3470 = vld [vmem:[%s3411 + $0x2c] sm:$0xf]
        %v3471 = vld [vmem:[%s3411 + $0x30] sm:$0xf]
        %v3472 = vld [vmem:[%s3411 + $0x34] sm:$0xf]
        %v3473 = vld [vmem:[%s3411 + $0x38] sm:$0xf]
        %v3474 = vld [vmem:[%s3411 + $0x3c] sm:$0xf]
        %v3475 = vld [vmem:[%s3411 + $0x40] sm:$0xf]
        %v3476 = vld [vmem:[%s3411 + $0x44] sm:$0xf]
        %v3477 = vld [vmem:[%s3411 + $0x48] sm:$0xf]
        %v3478 = vld [vmem:[%s3411 + $0x4c] sm:$0xf]
        %v3479 = vld [vmem:[%s3411 + $0x50] sm:$0xf]
        %v3480 = vld [vmem:[%s3411 + $0x54] sm:$0xf]
        %v3481 = vld [vmem:[%s3411 + $0x58] sm:$0xf]
        %v3482 = vld [vmem:[%s3411 + $0x5c] sm:$0xf]
        %v3483 = vld [vmem:[%s3411 + $0x60] sm:$0xf]
        %v3484 = vld [vmem:[%s3411 + $0x64] sm:$0xf]
        %v3485 = vld [vmem:[%s3411 + $0x68] sm:$0xf]
        %v3486 = vld [vmem:[%s3411 + $0x6c] sm:$0xf]
        %v3487 = vld [vmem:[%s3411 + $0x70] sm:$0xf]
        %v3488 = vld [vmem:[%s3411 + $0x74] sm:$0xf]
        %v3489 = vld [vmem:[%s3411 + $0x78] sm:$0xf]
        %v3490 = vld [vmem:[%s3411 + $0x7c] sm:$0xf]
        %v3491 = vld [vmem:[%s3411 + $0x80] sm:$0xf]
        %v3492 = vld [vmem:[%s3411 + $0x84] sm:$0xf]
        %v3493 = vld [vmem:[%s3411 + $0x88] sm:$0xf]
        %v3494 = vld [vmem:[%s3411 + $0x8c] sm:$0xf]
        %v3495 = vld [vmem:[%s3411 + $0x90] sm:$0xf]
        %v3496 = vld [vmem:[%s3411 + $0x94] sm:$0xf]
        %v3497 = vld [vmem:[%s3411 + $0x98] sm:$0xf]
        %v3498 = vld [vmem:[%s3411 + $0x9c] sm:$0xf]
        %v3499 = vld [vmem:[%s3411 + $0xa0] sm:$0xf]
        %v3500 = vld [vmem:[%s3411 + $0xa4] sm:$0xf]
        %v3501 = vld [vmem:[%s3411 + $0xa8] sm:$0xf]
        %v3502 = vld [vmem:[%s3411 + $0xac] sm:$0xf]
        %v3503 = vld [vmem:[%s3411 + $0xb0] sm:$0xf]
        %v3504 = vld [vmem:[%s3411 + $0xb4] sm:$0xf]
        %v3505 = vld [vmem:[%s3411 + $0xb8] sm:$0xf]
        %v3506 = vld [vmem:[%s3411 + $0xbc] sm:$0xf]
        %v3507 = vld [vmem:[%s3411 + $0xc0] sm:$0xf]
        %v3508 = vld [vmem:[%s3411 + $0xc4] sm:$0xf]
        %v3509 = vld [vmem:[%s3411 + $0xc8] sm:$0xf]
        %v3510 = vld [vmem:[%s3411 + $0xcc] sm:$0xf]
        %v3511 = vld [vmem:[%s3411 + $0xd0] sm:$0xf]
        %v3512 = vld [vmem:[%s3411 + $0xd4] sm:$0xf]
        %v3513 = vld [vmem:[%s3411 + $0xd8] sm:$0xf]
        %v3514 = vld [vmem:[%s3411 + $0xdc] sm:$0xf]
        %v3515 = vld [vmem:[%s3411 + $0xe0] sm:$0xf]
        %v3516 = vld [vmem:[%s3411 + $0xe4] sm:$0xf]
        %v3517 = vld [vmem:[%s3411 + $0xe8] sm:$0xf]
        %v3518 = vld [vmem:[%s3411 + $0xec] sm:$0xf]
        %v3519 = vld [vmem:[%s3411 + $0xf0] sm:$0xf]
        %v3520 = vld [vmem:[%s3411 + $0xf4] sm:$0xf]
        %v3521 = vld [vmem:[%s3411 + $0xf8] sm:$0xf]
        %v3522 = vld [vmem:[%s3411 + $0xfc] sm:$0xf]
        %v3523 = vld [vmem:[%s3411 + $0x100] sm:$0xf]
        %v3524 = vld [vmem:[%s3411 + $0x104] sm:$0xf]
        %v3525 = vld [vmem:[%s3411 + $0x108] sm:$0xf]
        %v3526 = vld [vmem:[%s3411 + $0x10c] sm:$0xf]
        %v3527 = vld [vmem:[%s3411 + $0x110] sm:$0xf]
        %v3528 = vld [vmem:[%s3411 + $0x114] sm:$0xf]
        %v3529 = vld [vmem:[%s3411 + $0x118] sm:$0xf]
        %v3530 = vld [vmem:[%s3411 + $0x11c] sm:$0xf]
        %v3531 = vld [vmem:[%s3411 + $0x120] sm:$0xf]
        %v3532 = vld [vmem:[%s3411 + $0x124] sm:$0xf]
        %v3533 = vld [vmem:[%s3411 + $0x128] sm:$0xf]
        %v3534 = vld [vmem:[%s3411 + $0x12c] sm:$0xf]
        %v3535 = vld [vmem:[%s3411 + $0x130] sm:$0xf]
        %v3536 = vld [vmem:[%s3411 + $0x134] sm:$0xf]
        %v3537 = vld [vmem:[%s3411 + $0x138] sm:$0xf]
        %v3538 = vld [vmem:[%s3411 + $0x13c] sm:$0xf]
        %v3539 = vld [vmem:[%s3411 + $0x140] sm:$0xf]
        %v3540 = vld [vmem:[%s3411 + $0x144] sm:$0xf]
        %v3541 = vld [vmem:[%s3411 + $0x148] sm:$0xf]
        %v3542 = vld [vmem:[%s3411 + $0x14c] sm:$0xf]
        %v3543 = vld [vmem:[%s3411 + $0x150] sm:$0xf]
        %v3544 = vld [vmem:[%s3411 + $0x154] sm:$0xf]
        %v3545 = vld [vmem:[%s3411 + $0x158] sm:$0xf]
        %v3546 = vld [vmem:[%s3411 + $0x15c] sm:$0xf]
        %v3547 = vld [vmem:[%s3411 + $0x160] sm:$0xf]
        %v3548 = vld [vmem:[%s3411 + $0x164] sm:$0xf]
        %v3549 = vld [vmem:[%s3411 + $0x168] sm:$0xf]
        %v3550 = vld [vmem:[%s3411 + $0x16c] sm:$0xf]
        %v3551 = vld [vmem:[%s3411 + $0x170] sm:$0xf]
        %v3552 = vld [vmem:[%s3411 + $0x174] sm:$0xf]
        %v3553 = vld [vmem:[%s3411 + $0x178] sm:$0xf]
        %v3554 = vld [vmem:[%s3411 + $0x17c] sm:$0xf]
        %v3555 = vld [vmem:[%s3411 + $0x180] sm:$0xf]
        %v3556 = vld [vmem:[%s3411 + $0x184] sm:$0xf]
        %v3557 = vld [vmem:[%s3411 + $0x188] sm:$0xf]
        %v3558 = vld [vmem:[%s3411 + $0x18c] sm:$0xf]
        %v3559 = vld [vmem:[%s3411 + $0x190] sm:$0xf]
        %v3560 = vld [vmem:[%s3411 + $0x194] sm:$0xf]
        %v3561 = vld [vmem:[%s3411 + $0x198] sm:$0xf]
        %v3562 = vld [vmem:[%s3411 + $0x19c] sm:$0xf]
        %v3563 = vld [vmem:[%s3411 + $0x1a0] sm:$0xf]
        %v3564 = vld [vmem:[%s3411 + $0x1a4] sm:$0xf]
        %v3565 = vld [vmem:[%s3411 + $0x1a8] sm:$0xf]
        %v3566 = vld [vmem:[%s3411 + $0x1ac] sm:$0xf]
        %v3567 = vld [vmem:[%s3411 + $0x1b0] sm:$0xf]
        %v3568 = vld [vmem:[%s3411 + $0x1b4] sm:$0xf]
        %v3569 = vld [vmem:[%s3411 + $0x1b8] sm:$0xf]
        %v3570 = vld [vmem:[%s3411 + $0x1bc] sm:$0xf]
        %v3571 = vld [vmem:[%s3411 + $0x1c0] sm:$0xf]
        %v3572 = vld [vmem:[%s3411 + $0x1c4] sm:$0xf]
        %v3573 = vld [vmem:[%s3411 + $0x1c8] sm:$0xf]
        %v3574 = vld [vmem:[%s3411 + $0x1cc] sm:$0xf]
        %v3575 = vld [vmem:[%s3411 + $0x1d0] sm:$0xf]
        %v3576 = vld [vmem:[%s3411 + $0x1d4] sm:$0xf]
        %v3577 = vld [vmem:[%s3411 + $0x1d8] sm:$0xf]
        %v3578 = vld [vmem:[%s3411 + $0x1dc] sm:$0xf]
        %v3579 = vld [vmem:[%s3411 + $0x1e0] sm:$0xf]
        %v3580 = vld [vmem:[%s3411 + $0x1e4] sm:$0xf]
        %v3581 = vld [vmem:[%s3411 + $0x1e8] sm:$0xf]
        %v3582 = vld [vmem:[%s3411 + $0x1ec] sm:$0xf]
        %v3583 = vld [vmem:[%s3411 + $0x1f0] sm:$0xf]
        %v3584 = vld [vmem:[%s3411 + $0x1f4] sm:$0xf]
        %v3585 = vld [vmem:[%s3411 + $0x1f8] sm:$0xf]
        %v3586 = vld [vmem:[%s3411 + $0x1fc] sm:$0xf]
        %v3587 = vld [vmem:[%s3411 + $0x200] sm:$0xf]
        %v3588 = vld [vmem:[%s3411 + $0x204] sm:$0xf]
        %v3589 = vld [vmem:[%s3411 + $0x208] sm:$0xf]
        %v3590 = vld [vmem:[%s3411 + $0x20c] sm:$0xf]
        %v3591 = vld [vmem:[%s3411 + $0x210] sm:$0xf]
        %v3592 = vld [vmem:[%s3411 + $0x214] sm:$0xf]
        %v3593 = vld [vmem:[%s3411 + $0x218] sm:$0xf]
        %v3594 = vld [vmem:[%s3411 + $0x21c] sm:$0xf]
        %v3595 = vld [vmem:[%s3411 + $0x220] sm:$0xf]
        %v3596 = vld [vmem:[%s3411 + $0x224] sm:$0xf]
        %v3597 = vld [vmem:[%s3411 + $0x228] sm:$0xf]
        %v3598 = vld [vmem:[%s3411 + $0x22c] sm:$0xf]
        %v3599 = vld [vmem:[%s3411 + $0x230] sm:$0xf]
        %v3600 = vld [vmem:[%s3411 + $0x234] sm:$0xf]
        %v3601 = vld [vmem:[%s3411 + $0x238] sm:$0xf]
        %v3602 = vld [vmem:[%s3411 + $0x23c] sm:$0xf]
        %v3603 = vld [vmem:[%s3411 + $0x240] sm:$0xf]
        %v3604 = vld [vmem:[%s3411 + $0x244] sm:$0xf]
        %v3605 = vld [vmem:[%s3411 + $0x248] sm:$0xf]
        %v3606 = vld [vmem:[%s3411 + $0x24c] sm:$0xf]
        %v3607 = vld [vmem:[%s3411 + $0x250] sm:$0xf]
        %v3608 = vld [vmem:[%s3411 + $0x254] sm:$0xf]
        %v3609 = vld [vmem:[%s3411 + $0x258] sm:$0xf]
        %v3610 = vld [vmem:[%s3411 + $0x25c] sm:$0xf]
        %v3611 = vld [vmem:[%s3411 + $0x260] sm:$0xf]
        %v3612 = vld [vmem:[%s3411 + $0x264] sm:$0xf]
        %v3613 = vld [vmem:[%s3411 + $0x268] sm:$0xf]
        %v3614 = vld [vmem:[%s3411 + $0x26c] sm:$0xf]
        %v3615 = vld [vmem:[%s3411 + $0x270] sm:$0xf]
        %v3616 = vld [vmem:[%s3411 + $0x274] sm:$0xf]
        %v3617 = vld [vmem:[%s3411 + $0x278] sm:$0xf]
        %v3618 = vld [vmem:[%s3411 + $0x27c] sm:$0xf]
        %v3619 = vld [vmem:[%s3411 + $0x280] sm:$0xf]
        %v3620 = vld [vmem:[%s3411 + $0x284] sm:$0xf]
        %v3621 = vld [vmem:[%s3411 + $0x288] sm:$0xf]
        %v3622 = vld [vmem:[%s3411 + $0x28c] sm:$0xf]
        %v3623 = vld [vmem:[%s3411 + $0x290] sm:$0xf]
        %v3624 = vld [vmem:[%s3411 + $0x294] sm:$0xf]
        %v3625 = vld [vmem:[%s3411 + $0x298] sm:$0xf]
        %v3626 = vld [vmem:[%s3411 + $0x29c] sm:$0xf]
        %v3627 = vld [vmem:[%s3411 + $0x2a0] sm:$0xf]
        %v3628 = vld [vmem:[%s3411 + $0x2a4] sm:$0xf]
        %v3629 = vld [vmem:[%s3411 + $0x2a8] sm:$0xf]
        %v3630 = vld [vmem:[%s3411 + $0x2ac] sm:$0xf]
        %v3631 = vld [vmem:[%s3411 + $0x2b0] sm:$0xf]
        %v3632 = vld [vmem:[%s3411 + $0x2b4] sm:$0xf]
        %v3633 = vld [vmem:[%s3411 + $0x2b8] sm:$0xf]
        %v3634 = vld [vmem:[%s3411 + $0x2bc] sm:$0xf]
        %v3635 = vld [vmem:[%s3411 + $0x2c0] sm:$0xf]
        %v3636 = vld [vmem:[%s3411 + $0x2c4] sm:$0xf]
        %v3637 = vld [vmem:[%s3411 + $0x2c8] sm:$0xf]
        %v3638 = vld [vmem:[%s3411 + $0x2cc] sm:$0xf]
        %v3639 = vld [vmem:[%s3411 + $0x2d0] sm:$0xf]
        %v3640 = vld [vmem:[%s3411 + $0x2d4] sm:$0xf]
        %v3641 = vld [vmem:[%s3411 + $0x2d8] sm:$0xf]
        %v3642 = vld [vmem:[%s3411 + $0x2dc] sm:$0xf]
        %v3643 = vld [vmem:[%s3411 + $0x2e0] sm:$0xf]
        %v3644 = vld [vmem:[%s3411 + $0x2e4] sm:$0xf]
        %v3645 = vld [vmem:[%s3411 + $0x2e8] sm:$0xf]
        %v3646 = vld [vmem:[%s3411 + $0x2ec] sm:$0xf]
        %v3647 = vld [vmem:[%s3411 + $0x2f0] sm:$0xf]
        %v3648 = vld [vmem:[%s3411 + $0x2f4] sm:$0xf]
        %v3649 = vld [vmem:[%s3411 + $0x2f8] sm:$0xf]
        %v3650 = vld [vmem:[%s3411 + $0x2fc] sm:$0xf]
        %v3651 = vld [vmem:[%s3411 + $0x300] sm:$0xf]
        %v3652 = vld [vmem:[%s3411 + $0x304] sm:$0xf]
        %v3653 = vld [vmem:[%s3411 + $0x308] sm:$0xf]
        %v3654 = vld [vmem:[%s3411 + $0x30c] sm:$0xf]
        %v3655 = vld [vmem:[%s3411 + $0x310] sm:$0xf]
        %v3656 = vld [vmem:[%s3411 + $0x314] sm:$0xf]
        %v3657 = vld [vmem:[%s3411 + $0x318] sm:$0xf]
        %v3658 = vld [vmem:[%s3411 + $0x31c] sm:$0xf]
        %v3659 = vld [vmem:[%s3411 + $0x320] sm:$0xf]
        %v3660 = vld [vmem:[%s3411 + $0x324] sm:$0xf]
        %v3661 = vld [vmem:[%s3411 + $0x328] sm:$0xf]
        %v3662 = vld [vmem:[%s3411 + $0x32c] sm:$0xf]
        %v3663 = vld [vmem:[%s3411 + $0x330] sm:$0xf]
        %v3664 = vld [vmem:[%s3411 + $0x334] sm:$0xf]
        %v3665 = vld [vmem:[%s3411 + $0x338] sm:$0xf]
        %v3666 = vld [vmem:[%s3411 + $0x33c] sm:$0xf]
        %v3667 = vld [vmem:[%s3411 + $0x340] sm:$0xf]
        %v3668 = vld [vmem:[%s3411 + $0x344] sm:$0xf]
        %v3669 = vld [vmem:[%s3411 + $0x348] sm:$0xf]
        %v3670 = vld [vmem:[%s3411 + $0x34c] sm:$0xf]
        %v3671 = vld [vmem:[%s3411 + $0x350] sm:$0xf]
        %v3672 = vld [vmem:[%s3411 + $0x354] sm:$0xf]
        %v3673 = vld [vmem:[%s3411 + $0x358] sm:$0xf]
        %v3674 = vld [vmem:[%s3411 + $0x35c] sm:$0xf]
        %v3675 = vld [vmem:[%s3411 + $0x360] sm:$0xf]
        %v3676 = vld [vmem:[%s3411 + $0x364] sm:$0xf]
        %v3677 = vld [vmem:[%s3411 + $0x368] sm:$0xf]
        %v3678 = vld [vmem:[%s3411 + $0x36c] sm:$0xf]
        %v3679 = vld [vmem:[%s3411 + $0x370] sm:$0xf]
        %v3680 = vld [vmem:[%s3411 + $0x374] sm:$0xf]
        %v3681 = vld [vmem:[%s3411 + $0x378] sm:$0xf]
        %v3682 = vld [vmem:[%s3411 + $0x37c] sm:$0xf]
        %v3683 = vld [vmem:[%s3411 + $0x380] sm:$0xf]
        %v3684 = vld [vmem:[%s3411 + $0x384] sm:$0xf]
        %v3685 = vld [vmem:[%s3411 + $0x388] sm:$0xf]
        %v3686 = vld [vmem:[%s3411 + $0x38c] sm:$0xf]
        %v3687 = vld [vmem:[%s3411 + $0x390] sm:$0xf]
        %v3688 = vld [vmem:[%s3411 + $0x394] sm:$0xf]
        %v3689 = vld [vmem:[%s3411 + $0x398] sm:$0xf]
        %v3690 = vld [vmem:[%s3411 + $0x39c] sm:$0xf]
        %v3691 = vld [vmem:[%s3411 + $0x3a0] sm:$0xf]
        %v3692 = vld [vmem:[%s3411 + $0x3a4] sm:$0xf]
        %v3693 = vld [vmem:[%s3411 + $0x3a8] sm:$0xf]
        %v3694 = vld [vmem:[%s3411 + $0x3ac] sm:$0xf]
        %v3695 = vld [vmem:[%s3411 + $0x3b0] sm:$0xf]
        %v3696 = vld [vmem:[%s3411 + $0x3b4] sm:$0xf]
        %v3697 = vld [vmem:[%s3411 + $0x3b8] sm:$0xf]
        %v3698 = vld [vmem:[%s3411 + $0x3bc] sm:$0xf]
        %v3699 = vld [vmem:[%s3411 + $0x3c0] sm:$0xf]
        %v3700 = vld [vmem:[%s3411 + $0x3c4] sm:$0xf]
        %v3701 = vld [vmem:[%s3411 + $0x3c8] sm:$0xf]
        %v3702 = vld [vmem:[%s3411 + $0x3cc] sm:$0xf]
        %v3703 = vld [vmem:[%s3411 + $0x3d0] sm:$0xf]
        %v3704 = vld [vmem:[%s3411 + $0x3d4] sm:$0xf]
        %v3705 = vld [vmem:[%s3411 + $0x3d8] sm:$0xf]
        %v3706 = vld [vmem:[%s3411 + $0x3dc] sm:$0xf]
        %v3707 = vld [vmem:[%s3411 + $0x3e0] sm:$0xf]
        %v3708 = vld [vmem:[%s3411 + $0x3e4] sm:$0xf]
        %v3709 = vld [vmem:[%s3411 + $0x3e8] sm:$0xf]
        %v3710 = vld [vmem:[%s3411 + $0x3ec] sm:$0xf]
        %v3711 = vld [vmem:[%s3411 + $0x3f0] sm:$0xf]
        %v3712 = vld [vmem:[%s3411 + $0x3f4] sm:$0xf]
        %v3713 = vld [vmem:[%s3411 + $0x3f8] sm:$0xf]
        %v3714 = vld [vmem:[%s3411 + $0x3fc] sm:$0xf]
        %v3715 = vld [vmem:[%s3411 + $0x400] sm:$0xf]
        %v3716 = vld [vmem:[%s3411 + $0x404] sm:$0xf]
        %v3717 = vld [vmem:[%s3411 + $0x408] sm:$0xf]
        %v3718 = vld [vmem:[%s3411 + $0x40c] sm:$0xf]
        %v3719 = vld [vmem:[%s3411 + $0x410] sm:$0xf]
        %v3720 = vld [vmem:[%s3411 + $0x414] sm:$0xf]
        %v3721 = vld [vmem:[%s3411 + $0x418] sm:$0xf]
        %v3722 = vld [vmem:[%s3411 + $0x41c] sm:$0xf]
        %v3723 = vld [vmem:[%s3411 + $0x420] sm:$0xf]
        %v3724 = vld [vmem:[%s3411 + $0x424] sm:$0xf]
        %v3725 = vld [vmem:[%s3411 + $0x428] sm:$0xf]
        %v3726 = vld [vmem:[%s3411 + $0x42c] sm:$0xf]
        %v3727 = vld [vmem:[%s3411 + $0x430] sm:$0xf]
        %v3728 = vld [vmem:[%s3411 + $0x434] sm:$0xf]
        %v3729 = vld [vmem:[%s3411 + $0x438] sm:$0xf]
        %v3730 = vld [vmem:[%s3411 + $0x43c] sm:$0xf]
        %v3731 = vld [vmem:[%s3411 + $0x440] sm:$0xf]
        %v3732 = vld [vmem:[%s3411 + $0x444] sm:$0xf]
        %v3733 = vld [vmem:[%s3411 + $0x448] sm:$0xf]
        %v3734 = vld [vmem:[%s3411 + $0x44c] sm:$0xf]
        %v3735 = vld [vmem:[%s3411 + $0x450] sm:$0xf]
        %v3736 = vld [vmem:[%s3411 + $0x454] sm:$0xf]
        %v3737 = vld [vmem:[%s3411 + $0x458] sm:$0xf]
        %v3738 = vld [vmem:[%s3411 + $0x45c] sm:$0xf]
        %v3739 = vld [vmem:[%s3411 + $0x460] sm:$0xf]
        %v3740 = vld [vmem:[%s3411 + $0x464] sm:$0xf]
        %v3741 = vld [vmem:[%s3411 + $0x468] sm:$0xf]
        %v3742 = vld [vmem:[%s3411 + $0x46c] sm:$0xf]
        %v3743 = vld [vmem:[%s3411 + $0x470] sm:$0xf]
        %v3744 = vld [vmem:[%s3411 + $0x474] sm:$0xf]
        %v3745 = vld [vmem:[%s3411 + $0x478] sm:$0xf]
        %v3746 = vld [vmem:[%s3411 + $0x47c] sm:$0xf]
        %v3747 = vld [vmem:[%s3411 + $0x480] sm:$0xf]
        %v3748 = vld [vmem:[%s3411 + $0x484] sm:$0xf]
        %v3749 = vld [vmem:[%s3411 + $0x488] sm:$0xf]
        %v3750 = vld [vmem:[%s3411 + $0x48c] sm:$0xf]
        %v3751 = vld [vmem:[%s3411 + $0x490] sm:$0xf]
        %v3752 = vld [vmem:[%s3411 + $0x494] sm:$0xf]
        %v3753 = vld [vmem:[%s3411 + $0x498] sm:$0xf]
        %v3754 = vld [vmem:[%s3411 + $0x49c] sm:$0xf]
        %v3755 = vld [vmem:[%s3411 + $0x4a0] sm:$0xf]
        %v3756 = vld [vmem:[%s3411 + $0x4a4] sm:$0xf]
        %v3757 = vld [vmem:[%s3411 + $0x4a8] sm:$0xf]
        %v3758 = vld [vmem:[%s3411 + $0x4ac] sm:$0xf]
        %v3759 = vld [vmem:[%s3411 + $0x4b0] sm:$0xf]
        %v3760 = vld [vmem:[%s3411 + $0x4b4] sm:$0xf]
        %v3761 = vld [vmem:[%s3411 + $0x4b8] sm:$0xf]
        %v3762 = vld [vmem:[%s3411 + $0x4bc] sm:$0xf]
        %v3763 = vld [vmem:[%s3411 + $0x4c0] sm:$0xf]
        %v3764 = vld [vmem:[%s3411 + $0x4c4] sm:$0xf]
        %v3765 = vld [vmem:[%s3411 + $0x4c8] sm:$0xf]
        %v3766 = vld [vmem:[%s3411 + $0x4cc] sm:$0xf]
        %v3767 = vld [vmem:[%s3411 + $0x4d0] sm:$0xf]
        %v3768 = vld [vmem:[%s3411 + $0x4d4] sm:$0xf]
        %v3769 = vld [vmem:[%s3411 + $0x4d8] sm:$0xf]
        %v3770 = vld [vmem:[%s3411 + $0x4dc] sm:$0xf]
        %v3771 = vld [vmem:[%s3411 + $0x4e0] sm:$0xf]
        %v3772 = vld [vmem:[%s3411 + $0x4e4] sm:$0xf]
        %v3773 = vld [vmem:[%s3411 + $0x4e8] sm:$0xf]
        %v3774 = vld [vmem:[%s3411 + $0x4ec] sm:$0xf]
        %v3775 = vld [vmem:[%s3411 + $0x4f0] sm:$0xf]
        %v3776 = vld [vmem:[%s3411 + $0x4f4] sm:$0xf]
        %v3777 = vld [vmem:[%s3411 + $0x4f8] sm:$0xf]
        %v3778 = vld [vmem:[%s3411 + $0x4fc] sm:$0xf]
        %v3779 = vld [vmem:[%s3411 + $0x500] sm:$0xf]
        %v3780 = vld [vmem:[%s3411 + $0x504] sm:$0xf]
        %v3781 = vld [vmem:[%s3411 + $0x508] sm:$0xf]
        %v3782 = vld [vmem:[%s3411 + $0x50c] sm:$0xf]
        %v3783 = vld [vmem:[%s3411 + $0x510] sm:$0xf]
        %v3784 = vld [vmem:[%s3411 + $0x514] sm:$0xf]
        %v3785 = vld [vmem:[%s3411 + $0x518] sm:$0xf]
        %v3786 = vld [vmem:[%s3411 + $0x51c] sm:$0xf]
        %v3787 = vld [vmem:[%s3411 + $0x520] sm:$0xf]
        %v3788 = vld [vmem:[%s3411 + $0x524] sm:$0xf]
        %v3789 = vld [vmem:[%s3411 + $0x528] sm:$0xf]
        %v3790 = vld [vmem:[%s3411 + $0x52c] sm:$0xf]
        %v3791 = vld [vmem:[%s3411 + $0x530] sm:$0xf]
        %v3792 = vld [vmem:[%s3411 + $0x534] sm:$0xf]
        %v3793 = vld [vmem:[%s3411 + $0x538] sm:$0xf]
        %v3794 = vld [vmem:[%s3411 + $0x53c] sm:$0xf]
        %v3795 = vld [vmem:[%s3411 + $0x540] sm:$0xf]
        %v3796 = vld [vmem:[%s3411 + $0x544] sm:$0xf]
        %v3797 = vld [vmem:[%s3411 + $0x548] sm:$0xf]
        %v3798 = vld [vmem:[%s3411 + $0x54c] sm:$0xf]
        %v3799 = vld [vmem:[%s3411 + $0x550] sm:$0xf]
        %v3800 = vld [vmem:[%s3411 + $0x554] sm:$0xf]
        %v3801 = vld [vmem:[%s3411 + $0x558] sm:$0xf]
        %v3802 = vld [vmem:[%s3411 + $0x55c] sm:$0xf]
        %v3803 = vld [vmem:[%s3411 + $0x560] sm:$0xf]
        %v3804 = vld [vmem:[%s3411 + $0x564] sm:$0xf]
        %v3805 = vld [vmem:[%s3411 + $0x568] sm:$0xf]
        %v3806 = vld [vmem:[%s3411 + $0x56c] sm:$0xf]
        %v3807 = vld [vmem:[%s3411 + $0x570] sm:$0xf]
        %v3808 = vld [vmem:[%s3411 + $0x574] sm:$0xf]
        %v3809 = vld [vmem:[%s3411 + $0x578] sm:$0xf]
        %v3810 = vld [vmem:[%s3411 + $0x57c] sm:$0xf]
        %v3811 = vld [vmem:[%s3411 + $0x580] sm:$0xf]
        %v3812 = vld [vmem:[%s3411 + $0x584] sm:$0xf]
        %v3813 = vld [vmem:[%s3411 + $0x588] sm:$0xf]
        %v3814 = vld [vmem:[%s3411 + $0x58c] sm:$0xf]
        %v3815 = vld [vmem:[%s3411 + $0x590] sm:$0xf]
        %v3816 = vld [vmem:[%s3411 + $0x594] sm:$0xf]
        %v3817 = vld [vmem:[%s3411 + $0x598] sm:$0xf]
        %v3818 = vld [vmem:[%s3411 + $0x59c] sm:$0xf]
        %v3819 = vld [vmem:[%s3411 + $0x5a0] sm:$0xf]
        %v3820 = vld [vmem:[%s3411 + $0x5a4] sm:$0xf]
        %v3821 = vld [vmem:[%s3411 + $0x5a8] sm:$0xf]
        %v3822 = vld [vmem:[%s3411 + $0x5ac] sm:$0xf]
        %v3823 = vld [vmem:[%s3411 + $0x5b0] sm:$0xf]
        %v3824 = vld [vmem:[%s3411 + $0x5b4] sm:$0xf]
        %v3825 = vld [vmem:[%s3411 + $0x5b8] sm:$0xf]
        %v3826 = vld [vmem:[%s3411 + $0x5bc] sm:$0xf]
        %v3827 = vld [vmem:[%s3411 + $0x5c0] sm:$0xf]
        %v3828 = vld [vmem:[%s3411 + $0x5c4] sm:$0xf]
        %v3829 = vld [vmem:[%s3411 + $0x5c8] sm:$0xf]
        %v3830 = vld [vmem:[%s3411 + $0x5cc] sm:$0xf]
        %v3831 = vld [vmem:[%s3411 + $0x5d0] sm:$0xf]
        %v3832 = vld [vmem:[%s3411 + $0x5d4] sm:$0xf]
        %v3833 = vld [vmem:[%s3411 + $0x5d8] sm:$0xf]
        %v3834 = vld [vmem:[%s3411 + $0x5dc] sm:$0xf]
        %v3835 = vld [vmem:[%s3411 + $0x5e0] sm:$0xf]
        %v3836 = vld [vmem:[%s3411 + $0x5e4] sm:$0xf]
        %v3837 = vld [vmem:[%s3411 + $0x5e8] sm:$0xf]
        %v3838 = vld [vmem:[%s3411 + $0x5ec] sm:$0xf]
        %v3839 = vld [vmem:[%s3411 + $0x5f0] sm:$0xf]
        %v3840 = vld [vmem:[%s3411 + $0x5f4] sm:$0xf]
        %v3841 = vld [vmem:[%s3411 + $0x5f8] sm:$0xf]
        %v3842 = vld [vmem:[%s3411 + $0x5fc] sm:$0xf]
        %v3843 = vld [vmem:[%s3411 + $0x600] sm:$0xf]
        %v3844 = vld [vmem:[%s3411 + $0x604] sm:$0xf]
        %v3845 = vld [vmem:[%s3411 + $0x608] sm:$0xf]
        %v3846 = vld [vmem:[%s3411 + $0x60c] sm:$0xf]
        %v3847 = vld [vmem:[%s3411 + $0x610] sm:$0xf]
        %v3848 = vld [vmem:[%s3411 + $0x614] sm:$0xf]
        %v3849 = vld [vmem:[%s3411 + $0x618] sm:$0xf]
        %v3850 = vld [vmem:[%s3411 + $0x61c] sm:$0xf]
        %v3851 = vld [vmem:[%s3441] sm:$0x1]
        %v3853 = vperm.slane %v3851, 0
        %3856 = vst [vmem:[#allocation1] ss:$9 sm:$0xff] %v3455
        %v3857 = vld [vmem:[#allocation1] sm:$0xff]
        %v3858 = vld [vmem:[#allocation1 + $0x9] sm:$0xff]
        %v3859 = vld [vmem:[#allocation1 + $0x12] sm:$0xff]
        %v3860 = vld [vmem:[#allocation1 + $0x1b] sm:$0xff]
        %v3861 = vld [vmem:[#allocation1 + $0x24] sm:$0xff]
        %v3862 = vld [vmem:[#allocation1 + $0x2d] sm:$0xff]
        %v3863 = vld [vmem:[#allocation1 + $0x36] sm:$0xff]
        %v3864 = vld [vmem:[#allocation1 + $0x3f] sm:$0xff]
        %3866 = vst [vmem:[#allocation1] ss:$9 sm:$0xff] %v3456
        %v3867 = vld [vmem:[#allocation1] sm:$0xff]
        %v3868 = vld [vmem:[#allocation1 + $0x9] sm:$0xff]
        %v3869 = vld [vmem:[#allocation1 + $0x12] sm:$0xff]
        %v3870 = vld [vmem:[#allocation1 + $0x1b] sm:$0xff]
        %v3871 = vld [vmem:[#allocation1 + $0x24] sm:$0xff]
        %v3872 = vld [vmem:[#allocation1 + $0x2d] sm:$0xff]
        %v3873 = vld [vmem:[#allocation1 + $0x36] sm:$0xff]
        %v3874 = vld [vmem:[#allocation1 + $0x3f] sm:$0xff]
        %3876 = vst [vmem:[#allocation1] ss:$9 sm:$0xff] %v3457
        %v3877 = vld [vmem:[#allocation1] sm:$0xff]
        %v3878 = vld [vmem:[#allocation1 + $0x9] sm:$0xff]
        %v3879 = vld [vmem:[#allocation1 + $0x12] sm:$0xff]
        %v3880 = vld [vmem:[#allocation1 + $0x1b] sm:$0xff]
        %v3881 = vld [vmem:[#allocation1 + $0x24] sm:$0xff]
        %v3882 = vld [vmem:[#allocation1 + $0x2d] sm:$0xff]
        %v3883 = vld [vmem:[#allocation1 + $0x36] sm:$0xff]
        %v3884 = vld [vmem:[#allocation1 + $0x3f] sm:$0xff]
        %3886 = vst [vmem:[#allocation1] ss:$9 sm:$0xff] %v3458
        %v3887 = vld [vmem:[#allocation1] sm:$0xff]
        %v4304 = vunpack.c.l.b16 %v3459
        %v4305 = vunpack.c.l.b16 %v3460
        %v4306 = vunpack.c.l.b16 %v3461
        %v4307 = vunpack.c.l.b16 %v3462
        %v4308 = vunpack.c.l.b16 %v3463
        %v4309 = vunpack.c.l.b16 %v3464
        %v4310 = vunpack.c.l.b16 %v3465
        %v4311 = vunpack.c.l.b16 %v3466
        %v4312 = vunpack.c.l.b16 %v3467
        %v4313 = vunpack.c.l.b16 %v3468
        %v4314 = vunpack.c.l.b16 %v3469
        %v4315 = vunpack.c.l.b16 %v3470
        %v4316 = vunpack.c.l.b16 %v3471
        %v4317 = vunpack.c.l.b16 %v3472
        %v4318 = vunpack.c.l.b16 %v3473
        %v4319 = vunpack.c.l.b16 %v3474
        %v4320 = vunpack.c.l.b16 %v3475
        %v4321 = vunpack.c.l.b16 %v3476
        %v4322 = vunpack.c.l.b16 %v3477
        %v4323 = vunpack.c.l.b16 %v3478
        %v4324 = vunpack.c.l.b16 %v3479
        %v4325 = vunpack.c.l.b16 %v3480
        %v4326 = vunpack.c.l.b16 %v3481
        %v4327 = vunpack.c.l.b16 %v3482
        %v4328 = vunpack.c.l.b16 %v3483
        %v4329 = vunpack.c.l.b16 %v3484
        %v4330 = vunpack.c.l.b16 %v3485
        %v4331 = vunpack.c.l.b16 %v3486
        %v4332 = vunpack.c.l.b16 %v3487
        %v4333 = vunpack.c.l.b16 %v3488
        %v4334 = vunpack.c.l.b16 %v3489
        %v4335 = vunpack.c.l.b16 %v3490
        %v4336 = vunpack.c.l.b16 %v3491
        %v4337 = vunpack.c.l.b16 %v3492
        %v4338 = vunpack.c.l.b16 %v3493
        %v4339 = vunpack.c.l.b16 %v3494
        %v4340 = vunpack.c.l.b16 %v3495
        %v4341 = vunpack.c.l.b16 %v3496
        %v4342 = vunpack.c.l.b16 %v3497
        %v4343 = vunpack.c.l.b16 %v3498
        %v4344 = vunpack.c.l.b16 %v3499
        %v4345 = vunpack.c.l.b16 %v3500
        %v4346 = vunpack.c.l.b16 %v3501
        %v4347 = vunpack.c.l.b16 %v3502
        %v4348 = vunpack.c.l.b16 %v3503
        %v4349 = vunpack.c.l.b16 %v3504
        %v4350 = vunpack.c.l.b16 %v3505
        %v4351 = vunpack.c.l.b16 %v3506
        %v4352 = vunpack.c.l.b16 %v3507
        %v4353 = vunpack.c.l.b16 %v3508
        %v4354 = vunpack.c.l.b16 %v3509
        %v4355 = vunpack.c.l.b16 %v3510
        %v4356 = vunpack.c.l.b16 %v3511
        %v4357 = vunpack.c.l.b16 %v3512
        %v4358 = vunpack.c.l.b16 %v3513
        %v4359 = vunpack.c.l.b16 %v3514
        %v4360 = vunpack.c.l.b16 %v3515
        %v4361 = vunpack.c.l.b16 %v3516
        %v4362 = vunpack.c.l.b16 %v3517
        %v4363 = vunpack.c.l.b16 %v3518
        %v4364 = vunpack.c.l.b16 %v3519
        %v4365 = vunpack.c.l.b16 %v3520
        %v4366 = vunpack.c.l.b16 %v3521
        %v4367 = vunpack.c.l.b16 %v3522
        %v4368 = vunpack.c.l.b16 %v3523
        %v4369 = vunpack.c.l.b16 %v3524
        %v4370 = vunpack.c.l.b16 %v3525
        %v4371 = vunpack.c.l.b16 %v3526
        %v4372 = vunpack.c.l.b16 %v3527
        %v4373 = vunpack.c.l.b16 %v3528
        %v4374 = vunpack.c.l.b16 %v3529
        %v4375 = vunpack.c.l.b16 %v3530
        %v4376 = vunpack.c.l.b16 %v3531
        %v4377 = vunpack.c.l.b16 %v3532
        %v4378 = vunpack.c.l.b16 %v3533
        %v4379 = vunpack.c.l.b16 %v3534
        %v4380 = vunpack.c.l.b16 %v3535
        %v4381 = vunpack.c.l.b16 %v3536
        %v4382 = vunpack.c.l.b16 %v3537
        %v4383 = vunpack.c.l.b16 %v3538
        %v4384 = vunpack.c.l.b16 %v3539
        %v4385 = vunpack.c.l.b16 %v3540
        %v4386 = vunpack.c.l.b16 %v3541
        %v4387 = vunpack.c.l.b16 %v3542
        %v4388 = vunpack.c.l.b16 %v3543
        %v4389 = vunpack.c.l.b16 %v3544
        %v4390 = vunpack.c.l.b16 %v3545
        %v4391 = vunpack.c.l.b16 %v3546
        %v4392 = vunpack.c.l.b16 %v3547
        %v4393 = vunpack.c.l.b16 %v3548
        %v4394 = vunpack.c.l.b16 %v3549
        %v4395 = vunpack.c.l.b16 %v3550
        %v4396 = vunpack.c.l.b16 %v3551
        %v4397 = vunpack.c.l.b16 %v3552
        %v4398 = vunpack.c.l.b16 %v3553
        %v4399 = vunpack.c.l.b16 %v3554
        %v4400 = vunpack.c.l.b16 %v3555
        %v4401 = vunpack.c.l.b16 %v3556
        %v4402 = vunpack.c.l.b16 %v3557
        %v4403 = vunpack.c.l.b16 %v3558
        %v4404 = vunpack.c.l.b16 %v3559
        %v4405 = vunpack.c.l.b16 %v3560
        %v4406 = vunpack.c.l.b16 %v3561
        %v4407 = vunpack.c.l.b16 %v3562
        %v4408 = vunpack.c.l.b16 %v3563
        %v4409 = vunpack.c.l.b16 %v3564
        %v4410 = vunpack.c.l.b16 %v3565
        %v4411 = vunpack.c.l.b16 %v3566
        %v4412 = vunpack.c.l.b16 %v3567
        %v4413 = vunpack.c.l.b16 %v3568
        %v4414 = vunpack.c.l.b16 %v3569
        %v4415 = vunpack.c.l.b16 %v3570
        %v4416 = vunpack.c.l.b16 %v3571
        %v4417 = vunpack.c.l.b16 %v3572
        %v4418 = vunpack.c.l.b16 %v3573
        %v4419 = vunpack.c.l.b16 %v3574
        %v4420 = vunpack.c.l.b16 %v3575
        %v4421 = vunpack.c.l.b16 %v3576
        %v4422 = vunpack.c.l.b16 %v3577
        %v4423 = vunpack.c.l.b16 %v3578
        %v4424 = vunpack.c.l.b16 %v3579
        %v4425 = vunpack.c.l.b16 %v3580
        %v4426 = vunpack.c.l.b16 %v3581
        %v4427 = vunpack.c.l.b16 %v3582
        %v4428 = vunpack.c.l.b16 %v3583
        %v4429 = vunpack.c.l.b16 %v3584
        %v4430 = vunpack.c.l.b16 %v3585
        %v4431 = vunpack.c.l.b16 %v3586
        %v4432 = vunpack.c.l.b16 %v3587
        %v4433 = vunpack.c.l.b16 %v3588
        %v4434 = vunpack.c.l.b16 %v3589
        %v4435 = vunpack.c.l.b16 %v3590
        %v4436 = vunpack.c.l.b16 %v3591
        %v4437 = vunpack.c.l.b16 %v3592
        %v4438 = vunpack.c.l.b16 %v3593
        %v4439 = vunpack.c.l.b16 %v3594
        %v4440 = vunpack.c.l.b16 %v3595
        %v4441 = vunpack.c.l.b16 %v3596
        %v4442 = vunpack.c.l.b16 %v3597
        %v4443 = vunpack.c.l.b16 %v3598
        %v4444 = vunpack.c.l.b16 %v3599
        %v4445 = vunpack.c.l.b16 %v3600
        %v4446 = vunpack.c.l.b16 %v3601
        %v4447 = vunpack.c.l.b16 %v3602
        %v4448 = vunpack.c.l.b16 %v3603
        %v4449 = vunpack.c.l.b16 %v3604
        %v4450 = vunpack.c.l.b16 %v3605
        %v4451 = vunpack.c.l.b16 %v3606
        %v4452 = vunpack.c.l.b16 %v3607
        %v4453 = vunpack.c.l.b16 %v3608
        %v4454 = vunpack.c.l.b16 %v3609
        %v4455 = vunpack.c.l.b16 %v3610
        %v4456 = vunpack.c.l.b16 %v3611
        %v4457 = vunpack.c.l.b16 %v3612
        %v4458 = vunpack.c.l.b16 %v3613
        %v4459 = vunpack.c.l.b16 %v3614
        %v4460 = vunpack.c.l.b16 %v3615
        %v4461 = vunpack.c.l.b16 %v3616
        %v4462 = vunpack.c.l.b16 %v3617
        %v4463 = vunpack.c.l.b16 %v3618
        %v4464 = vunpack.c.l.b16 %v3619
        %v4465 = vunpack.c.l.b16 %v3620
        %v4466 = vunpack.c.l.b16 %v3621
        %v4467 = vunpack.c.l.b16 %v3622
        %v4468 = vunpack.c.l.b16 %v3623
        %v4469 = vunpack.c.l.b16 %v3624
        %v4470 = vunpack.c.l.b16 %v3625
        %v4471 = vunpack.c.l.b16 %v3626
        %v4472 = vunpack.c.l.b16 %v3627
        %v4473 = vunpack.c.l.b16 %v3628
        %v4474 = vunpack.c.l.b16 %v3629
        %v4475 = vunpack.c.l.b16 %v3630
        %v4476 = vunpack.c.l.b16 %v3631
        %v4477 = vunpack.c.l.b16 %v3632
        %v4478 = vunpack.c.l.b16 %v3633
        %v4479 = vunpack.c.l.b16 %v3634
        %v4480 = vunpack.c.l.b16 %v3635
        %v4481 = vunpack.c.l.b16 %v3636
        %v4482 = vunpack.c.l.b16 %v3637
        %v4483 = vunpack.c.l.b16 %v3638
        %v4484 = vunpack.c.l.b16 %v3639
        %v4485 = vunpack.c.l.b16 %v3640
        %v4486 = vunpack.c.l.b16 %v3641
        %v4487 = vunpack.c.l.b16 %v3642
        %v4488 = vunpack.c.l.b16 %v3643
        %v4489 = vunpack.c.l.b16 %v3644
        %v4490 = vunpack.c.l.b16 %v3645
        %v4491 = vunpack.c.l.b16 %v3646
        %v4492 = vunpack.c.l.b16 %v3647
        %v4493 = vunpack.c.l.b16 %v3648
        %v4494 = vunpack.c.l.b16 %v3649
        %v4495 = vunpack.c.l.b16 %v3650
        %v4496 = vunpack.c.l.b16 %v3651
        %v4497 = vunpack.c.l.b16 %v3652
        %v4498 = vunpack.c.l.b16 %v3653
        %v4499 = vunpack.c.l.b16 %v3654
        %v4500 = vunpack.c.l.b16 %v3655
        %v4501 = vunpack.c.l.b16 %v3656
        %v4502 = vunpack.c.l.b16 %v3657
        %v4503 = vunpack.c.l.b16 %v3658
        %v4504 = vunpack.c.l.b16 %v3659
        %v4505 = vunpack.c.l.b16 %v3660
        %v4506 = vunpack.c.l.b16 %v3661
        %v4507 = vunpack.c.l.b16 %v3662
        %v4508 = vunpack.c.l.b16 %v3663
        %v4509 = vunpack.c.l.b16 %v3664
        %v4510 = vunpack.c.l.b16 %v3665
        %v4511 = vunpack.c.l.b16 %v3666
        %v4512 = vunpack.c.l.b16 %v3667
        %v4513 = vunpack.c.l.b16 %v3668
        %v4514 = vunpack.c.l.b16 %v3669
        %v4515 = vunpack.c.l.b16 %v3670
        %v4516 = vunpack.c.l.b16 %v3671
        %v4517 = vunpack.c.l.b16 %v3672
        %v4518 = vunpack.c.l.b16 %v3673
        %v4519 = vunpack.c.l.b16 %v3674
        %v4520 = vunpack.c.l.b16 %v3675
        %v4521 = vunpack.c.l.b16 %v3676
        %v4522 = vunpack.c.l.b16 %v3677
        %v4523 = vunpack.c.l.b16 %v3678
        %v4524 = vunpack.c.l.b16 %v3679
        %v4525 = vunpack.c.l.b16 %v3680
        %v4526 = vunpack.c.l.b16 %v3681
        %v4527 = vunpack.c.l.b16 %v3682
        %v4528 = vunpack.c.l.b16 %v3683
        %v4529 = vunpack.c.l.b16 %v3684
        %v4530 = vunpack.c.l.b16 %v3685
        %v4531 = vunpack.c.l.b16 %v3686
        %v4532 = vunpack.c.l.b16 %v3687
        %v4533 = vunpack.c.l.b16 %v3688
        %v4534 = vunpack.c.l.b16 %v3689
        %v4535 = vunpack.c.l.b16 %v3690
        %v4536 = vunpack.c.l.b16 %v3691
        %v4537 = vunpack.c.l.b16 %v3692
        %v4538 = vunpack.c.l.b16 %v3693
        %v4539 = vunpack.c.l.b16 %v3694
        %v4540 = vunpack.c.l.b16 %v3695
        %v4541 = vunpack.c.l.b16 %v3696
        %v4542 = vunpack.c.l.b16 %v3697
        %v4543 = vunpack.c.l.b16 %v3698
        %v4544 = vunpack.c.l.b16 %v3699
        %v4545 = vunpack.c.l.b16 %v3700
        %v4546 = vunpack.c.l.b16 %v3701
        %v4547 = vunpack.c.l.b16 %v3702
        %v4548 = vunpack.c.l.b16 %v3703
        %v4549 = vunpack.c.l.b16 %v3704
        %v4550 = vunpack.c.l.b16 %v3705
        %v4551 = vunpack.c.l.b16 %v3706
        %v4552 = vunpack.c.l.b16 %v3707
        %v4553 = vunpack.c.l.b16 %v3708
        %v4554 = vunpack.c.l.b16 %v3709
        %v4555 = vunpack.c.l.b16 %v3710
        %v4556 = vunpack.c.l.b16 %v3711
        %v4557 = vunpack.c.l.b16 %v3712
        %v4558 = vunpack.c.l.b16 %v3713
        %v4559 = vunpack.c.l.b16 %v3714
        %v4560 = vunpack.c.l.b16 %v3715
        %v4561 = vunpack.c.l.b16 %v3716
        %v4562 = vunpack.c.l.b16 %v3717
        %v4563 = vunpack.c.l.b16 %v3718
        %v4564 = vunpack.c.l.b16 %v3719
        %v4565 = vunpack.c.l.b16 %v3720
        %v4566 = vunpack.c.l.b16 %v3721
        %v4567 = vunpack.c.l.b16 %v3722
        %v4568 = vunpack.c.l.b16 %v3723
        %v4569 = vunpack.c.l.b16 %v3724
        %v4570 = vunpack.c.l.b16 %v3725
        %v4571 = vunpack.c.l.b16 %v3726
        %v4572 = vunpack.c.l.b16 %v3727
        %v4573 = vunpack.c.l.b16 %v3728
        %v4574 = vunpack.c.l.b16 %v3729
        %v4575 = vunpack.c.l.b16 %v3730
        %v4576 = vunpack.c.l.b16 %v3731
        %v4577 = vunpack.c.l.b16 %v3732
        %v4578 = vunpack.c.l.b16 %v3733
        %v4579 = vunpack.c.l.b16 %v3734
        %v4580 = vunpack.c.l.b16 %v3735
        %v4581 = vunpack.c.l.b16 %v3736
        %v4582 = vunpack.c.l.b16 %v3737
        %v4583 = vunpack.c.l.b16 %v3738
        %v4584 = vunpack.c.l.b16 %v3739
        %v4585 = vunpack.c.l.b16 %v3740
        %v4586 = vunpack.c.l.b16 %v3741
        %v4587 = vunpack.c.l.b16 %v3742
        %v4588 = vunpack.c.l.b16 %v3743
        %v4589 = vunpack.c.l.b16 %v3744
        %v4590 = vunpack.c.l.b16 %v3745
        %v4591 = vunpack.c.l.b16 %v3746
        %v4592 = vunpack.c.l.b16 %v3747
        %v4593 = vunpack.c.l.b16 %v3748
        %v4594 = vunpack.c.l.b16 %v3749
        %v4595 = vunpack.c.l.b16 %v3750
        %v4596 = vunpack.c.l.b16 %v3751
        %v4597 = vunpack.c.l.b16 %v3752
        %v4598 = vunpack.c.l.b16 %v3753
        %v4599 = vunpack.c.l.b16 %v3754
        %v4600 = vunpack.c.l.b16 %v3755
        %v4601 = vunpack.c.l.b16 %v3756
        %v4602 = vunpack.c.l.b16 %v3757
        %v4603 = vunpack.c.l.b16 %v3758
        %v4604 = vunpack.c.l.b16 %v3759
        %v4605 = vunpack.c.l.b16 %v3760
        %v4606 = vunpack.c.l.b16 %v3761
        %v4607 = vunpack.c.l.b16 %v3762
        %v4608 = vunpack.c.l.b16 %v3763
        %v4609 = vunpack.c.l.b16 %v3764
        %v4610 = vunpack.c.l.b16 %v3765
        %v4611 = vunpack.c.l.b16 %v3766
        %v4612 = vunpack.c.l.b16 %v3767
        %v4613 = vunpack.c.l.b16 %v3768
        %v4614 = vunpack.c.l.b16 %v3769
        %v4615 = vunpack.c.l.b16 %v3770
        %v4616 = vunpack.c.l.b16 %v3771
        %v4617 = vunpack.c.l.b16 %v3772
        %v4618 = vunpack.c.l.b16 %v3773
        %v4619 = vunpack.c.l.b16 %v3774
        %v4620 = vunpack.c.l.b16 %v3775
        %v4621 = vunpack.c.l.b16 %v3776
        %v4622 = vunpack.c.l.b16 %v3777
        %v4623 = vunpack.c.l.b16 %v3778
        %v4624 = vunpack.c.l.b16 %v3779
        %v4625 = vunpack.c.l.b16 %v3780
        %v4626 = vunpack.c.l.b16 %v3781
        %v4627 = vunpack.c.l.b16 %v3782
        %v4628 = vunpack.c.l.b16 %v3783
        %v4629 = vunpack.c.l.b16 %v3784
        %v4630 = vunpack.c.l.b16 %v3785
        %v4631 = vunpack.c.l.b16 %v3786
        %v4632 = vunpack.c.l.b16 %v3787
        %v4633 = vunpack.c.l.b16 %v3788
        %v4634 = vunpack.c.l.b16 %v3789
        %v4635 = vunpack.c.l.b16 %v3790
        %v4636 = vunpack.c.l.b16 %v3791
        %v4637 = vunpack.c.l.b16 %v3792
        %v4638 = vunpack.c.l.b16 %v3793
        %v4639 = vunpack.c.l.b16 %v3794
        %v4640 = vunpack.c.l.b16 %v3795
        %v4641 = vunpack.c.l.b16 %v3796
        %v4642 = vunpack.c.l.b16 %v3797
        %v4643 = vunpack.c.l.b16 %v3798
        %v4644 = vunpack.c.l.b16 %v3799
        %v4645 = vunpack.c.l.b16 %v3800
        %v4646 = vunpack.c.l.b16 %v3801
        %v4647 = vunpack.c.l.b16 %v3802
        %v4648 = vunpack.c.l.b16 %v3803
        %v4649 = vunpack.c.l.b16 %v3804
        %v4650 = vunpack.c.l.b16 %v3805
        %v4651 = vunpack.c.l.b16 %v3806
        %v4652 = vunpack.c.l.b16 %v3807
        %v4653 = vunpack.c.l.b16 %v3808
        %v4654 = vunpack.c.l.b16 %v3809
        %v4655 = vunpack.c.l.b16 %v3810
        %v4656 = vunpack.c.l.b16 %v3811
        %v4657 = vunpack.c.l.b16 %v3812
        %v4658 = vunpack.c.l.b16 %v3813
        %v4659 = vunpack.c.l.b16 %v3814
        %v4660 = vunpack.c.l.b16 %v3815
        %v4661 = vunpack.c.l.b16 %v3816
        %v4662 = vunpack.c.l.b16 %v3817
        %v4663 = vunpack.c.l.b16 %v3818
        %v4664 = vunpack.c.l.b16 %v3819
        %v4665 = vunpack.c.l.b16 %v3820
        %v4666 = vunpack.c.l.b16 %v3821
        %v4667 = vunpack.c.l.b16 %v3822
        %v4668 = vunpack.c.l.b16 %v3823
        %v4669 = vunpack.c.l.b16 %v3824
        %v4670 = vunpack.c.l.b16 %v3825
        %v4671 = vunpack.c.l.b16 %v3826
        %v4672 = vunpack.c.l.b16 %v3827
        %v4673 = vunpack.c.l.b16 %v3828
        %v4674 = vunpack.c.l.b16 %v3829
        %v4675 = vunpack.c.l.b16 %v3830
        %v4676 = vunpack.c.l.b16 %v3831
        %v4677 = vunpack.c.l.b16 %v3832
        %v4678 = vunpack.c.l.b16 %v3833
        %v4679 = vunpack.c.l.b16 %v3834
        %v4680 = vunpack.c.l.b16 %v3835
        %v4681 = vunpack.c.l.b16 %v3836
        %v4682 = vunpack.c.l.b16 %v3837
        %v4683 = vunpack.c.l.b16 %v3838
        %v4684 = vunpack.c.l.b16 %v3839
        %v4685 = vunpack.c.l.b16 %v3840
        %v4686 = vunpack.c.l.b16 %v3841
        %v4687 = vunpack.c.l.b16 %v3842
        %v4688 = vunpack.c.l.b16 %v3843
        %v4689 = vunpack.c.l.b16 %v3844
        %v4690 = vunpack.c.l.b16 %v3845
        %v4691 = vunpack.c.l.b16 %v3846
        %v4692 = vunpack.c.l.b16 %v3847
        %v4693 = vunpack.c.l.b16 %v3848
        %v4694 = vunpack.c.l.b16 %v3849
        %v4695 = vunpack.c.l.b16 %v3850
        %v4696 = vpack.c.b16 %v4305, %v4304
        %v4697 = vpack.c.b16 %v4307, %v4306
        %v4698 = vpack.c.b16 %v4309, %v4308
        %v4699 = vpack.c.b16 %v4311, %v4310
        %v4700 = vpack.c.b16 %v4313, %v4312
        %v4701 = vpack.c.b16 %v4315, %v4314
        %v4702 = vpack.c.b16 %v4317, %v4316
        %v4703 = vpack.c.b16 %v4319, %v4318
        %v4704 = vpack.c.b16 %v4321, %v4320
        %v4705 = vpack.c.b16 %v4323, %v4322
        %v4706 = vpack.c.b16 %v4325, %v4324
        %v4707 = vpack.c.b16 %v4327, %v4326
        %v4708 = vpack.c.b16 %v4329, %v4328
        %v4709 = vpack.c.b16 %v4331, %v4330
        %v4710 = vpack.c.b16 %v4333, %v4332
        %v4711 = vpack.c.b16 %v4335, %v4334
        %v4712 = vpack.c.b16 %v4337, %v4336
        %v4713 = vpack.c.b16 %v4339, %v4338
        %v4714 = vpack.c.b16 %v4341, %v4340
        %v4715 = vpack.c.b16 %v4343, %v4342
        %v4716 = vpack.c.b16 %v4345, %v4344
        %v4717 = vpack.c.b16 %v4347, %v4346
        %v4718 = vpack.c.b16 %v4349, %v4348
        %v4719 = vpack.c.b16 %v4351, %v4350
        %v4720 = vpack.c.b16 %v4353, %v4352
        %v4721 = vpack.c.b16 %v4355, %v4354
        %v4722 = vpack.c.b16 %v4357, %v4356
        %v4723 = vpack.c.b16 %v4359, %v4358
        %v4724 = vpack.c.b16 %v4361, %v4360
        %v4725 = vpack.c.b16 %v4363, %v4362
        %v4726 = vpack.c.b16 %v4365, %v4364
        %v4727 = vpack.c.b16 %v4367, %v4366
        %v4728 = vpack.c.b16 %v4369, %v4368
        %v4729 = vpack.c.b16 %v4371, %v4370
        %v4730 = vpack.c.b16 %v4373, %v4372
        %v4731 = vpack.c.b16 %v4375, %v4374
        %v4732 = vpack.c.b16 %v4377, %v4376
        %v4733 = vpack.c.b16 %v4379, %v4378
        %v4734 = vpack.c.b16 %v4381, %v4380
        %v4735 = vpack.c.b16 %v4383, %v4382
        %v4736 = vpack.c.b16 %v4385, %v4384
        %v4737 = vpack.c.b16 %v4387, %v4386
        %v4738 = vpack.c.b16 %v4389, %v4388
        %v4739 = vpack.c.b16 %v4391, %v4390
        %v4740 = vpack.c.b16 %v4393, %v4392
        %v4741 = vpack.c.b16 %v4395, %v4394
        %v4742 = vpack.c.b16 %v4397, %v4396
        %v4743 = vpack.c.b16 %v4399, %v4398
        %v4744 = vpack.c.b16 %v4401, %v4400
        %v4745 = vpack.c.b16 %v4403, %v4402
        %v4746 = vpack.c.b16 %v4405, %v4404
        %v4747 = vpack.c.b16 %v4407, %v4406
        %v4748 = vpack.c.b16 %v4409, %v4408
        %v4749 = vpack.c.b16 %v4411, %v4410
        %v4750 = vpack.c.b16 %v4413, %v4412
        %v4751 = vpack.c.b16 %v4415, %v4414
        %v4752 = vpack.c.b16 %v4417, %v4416
        %v4753 = vpack.c.b16 %v4419, %v4418
        %v4754 = vpack.c.b16 %v4421, %v4420
        %v4755 = vpack.c.b16 %v4423, %v4422
        %v4756 = vpack.c.b16 %v4425, %v4424
        %v4757 = vpack.c.b16 %v4427, %v4426
        %v4758 = vpack.c.b16 %v4429, %v4428
        %v4759 = vpack.c.b16 %v4431, %v4430
        %v4760 = vpack.c.b16 %v4433, %v4432
        %v4761 = vpack.c.b16 %v4435, %v4434
        %v4762 = vpack.c.b16 %v4437, %v4436
        %v4763 = vpack.c.b16 %v4439, %v4438
        %v4764 = vpack.c.b16 %v4441, %v4440
        %v4765 = vpack.c.b16 %v4443, %v4442
        %v4766 = vpack.c.b16 %v4445, %v4444
        %v4767 = vpack.c.b16 %v4447, %v4446
        %v4768 = vpack.c.b16 %v4449, %v4448
        %v4769 = vpack.c.b16 %v4451, %v4450
        %v4770 = vpack.c.b16 %v4453, %v4452
        %v4771 = vpack.c.b16 %v4455, %v4454
        %v4772 = vpack.c.b16 %v4457, %v4456
        %v4773 = vpack.c.b16 %v4459, %v4458
        %v4774 = vpack.c.b16 %v4461, %v4460
        %v4775 = vpack.c.b16 %v4463, %v4462
        %v4776 = vpack.c.b16 %v4465, %v4464
        %v4777 = vpack.c.b16 %v4467, %v4466
        %v4778 = vpack.c.b16 %v4469, %v4468
        %v4779 = vpack.c.b16 %v4471, %v4470
        %v4780 = vpack.c.b16 %v4473, %v4472
        %v4781 = vpack.c.b16 %v4475, %v4474
        %v4782 = vpack.c.b16 %v4477, %v4476
        %v4783 = vpack.c.b16 %v4479, %v4478
        %v4784 = vpack.c.b16 %v4481, %v4480
        %v4785 = vpack.c.b16 %v4483, %v4482
        %v4786 = vpack.c.b16 %v4485, %v4484
        %v4787 = vpack.c.b16 %v4487, %v4486
        %v4788 = vpack.c.b16 %v4489, %v4488
        %v4789 = vpack.c.b16 %v4491, %v4490
        %v4790 = vpack.c.b16 %v4493, %v4492
        %v4791 = vpack.c.b16 %v4495, %v4494
        %v4792 = vpack.c.b16 %v4497, %v4496
        %v4793 = vpack.c.b16 %v4499, %v4498
        %v4794 = vpack.c.b16 %v4501, %v4500
        %v4795 = vpack.c.b16 %v4503, %v4502
        %v4796 = vpack.c.b16 %v4505, %v4504
        %v4797 = vpack.c.b16 %v4507, %v4506
        %v4798 = vpack.c.b16 %v4509, %v4508
        %v4799 = vpack.c.b16 %v4511, %v4510
        %v4800 = vpack.c.b16 %v4513, %v4512
        %v4801 = vpack.c.b16 %v4515, %v4514
        %v4802 = vpack.c.b16 %v4517, %v4516
        %v4803 = vpack.c.b16 %v4519, %v4518
        %v4804 = vpack.c.b16 %v4521, %v4520
        %v4805 = vpack.c.b16 %v4523, %v4522
        %v4806 = vpack.c.b16 %v4525, %v4524
        %v4807 = vpack.c.b16 %v4527, %v4526
        %v4808 = vpack.c.b16 %v4529, %v4528
        %v4809 = vpack.c.b16 %v4531, %v4530
        %v4810 = vpack.c.b16 %v4533, %v4532
        %v4811 = vpack.c.b16 %v4535, %v4534
        %v4812 = vpack.c.b16 %v4537, %v4536
        %v4813 = vpack.c.b16 %v4539, %v4538
        %v4814 = vpack.c.b16 %v4541, %v4540
        %v4815 = vpack.c.b16 %v4543, %v4542
        %v4816 = vpack.c.b16 %v4545, %v4544
        %v4817 = vpack.c.b16 %v4547, %v4546
        %v4818 = vpack.c.b16 %v4549, %v4548
        %v4819 = vpack.c.b16 %v4551, %v4550
        %v4820 = vpack.c.b16 %v4553, %v4552
        %v4821 = vpack.c.b16 %v4555, %v4554
        %v4822 = vpack.c.b16 %v4557, %v4556
        %v4823 = vpack.c.b16 %v4559, %v4558
        %v4824 = vpack.c.b16 %v4561, %v4560
        %v4825 = vpack.c.b16 %v4563, %v4562
        %v4826 = vpack.c.b16 %v4565, %v4564
        %v4827 = vpack.c.b16 %v4567, %v4566
        %v4828 = vpack.c.b16 %v4569, %v4568
        %v4829 = vpack.c.b16 %v4571, %v4570
        %v4830 = vpack.c.b16 %v4573, %v4572
        %v4831 = vpack.c.b16 %v4575, %v4574
        %v4832 = vpack.c.b16 %v4577, %v4576
        %v4833 = vpack.c.b16 %v4579, %v4578
        %v4834 = vpack.c.b16 %v4581, %v4580
        %v4835 = vpack.c.b16 %v4583, %v4582
        %v4836 = vpack.c.b16 %v4585, %v4584
        %v4837 = vpack.c.b16 %v4587, %v4586
        %v4838 = vpack.c.b16 %v4589, %v4588
        %v4839 = vpack.c.b16 %v4591, %v4590
        %v4840 = vpack.c.b16 %v4593, %v4592
        %v4841 = vpack.c.b16 %v4595, %v4594
        %v4842 = vpack.c.b16 %v4597, %v4596
        %v4843 = vpack.c.b16 %v4599, %v4598
        %v4844 = vpack.c.b16 %v4601, %v4600
        %v4845 = vpack.c.b16 %v4603, %v4602
        %v4846 = vpack.c.b16 %v4605, %v4604
        %v4847 = vpack.c.b16 %v4607, %v4606
        %v4848 = vpack.c.b16 %v4609, %v4608
        %v4849 = vpack.c.b16 %v4611, %v4610
        %v4850 = vpack.c.b16 %v4613, %v4612
        %v4851 = vpack.c.b16 %v4615, %v4614
        %v4852 = vpack.c.b16 %v4617, %v4616
        %v4853 = vpack.c.b16 %v4619, %v4618
        %v4854 = vpack.c.b16 %v4621, %v4620
        %v4855 = vpack.c.b16 %v4623, %v4622
        %v4856 = vpack.c.b16 %v4625, %v4624
        %v4857 = vpack.c.b16 %v4627, %v4626
        %v4858 = vpack.c.b16 %v4629, %v4628
        %v4859 = vpack.c.b16 %v4631, %v4630
        %v4860 = vpack.c.b16 %v4633, %v4632
        %v4861 = vpack.c.b16 %v4635, %v4634
        %v4862 = vpack.c.b16 %v4637, %v4636
        %v4863 = vpack.c.b16 %v4639, %v4638
        %v4864 = vpack.c.b16 %v4641, %v4640
        %v4865 = vpack.c.b16 %v4643, %v4642
        %v4866 = vpack.c.b16 %v4645, %v4644
        %v4867 = vpack.c.b16 %v4647, %v4646
        %v4868 = vpack.c.b16 %v4649, %v4648
        %v4869 = vpack.c.b16 %v4651, %v4650
        %v4870 = vpack.c.b16 %v4653, %v4652
        %v4871 = vpack.c.b16 %v4655, %v4654
        %v4872 = vpack.c.b16 %v4657, %v4656
        %v4873 = vpack.c.b16 %v4659, %v4658
        %v4874 = vpack.c.b16 %v4661, %v4660
        %v4875 = vpack.c.b16 %v4663, %v4662
        %v4876 = vpack.c.b16 %v4665, %v4664
        %v4877 = vpack.c.b16 %v4667, %v4666
        %v4878 = vpack.c.b16 %v4669, %v4668
        %v4879 = vpack.c.b16 %v4671, %v4670
        %v4880 = vpack.c.b16 %v4673, %v4672
        %v4881 = vpack.c.b16 %v4675, %v4674
        %v4882 = vpack.c.b16 %v4677, %v4676
        %v4883 = vpack.c.b16 %v4679, %v4678
        %v4884 = vpack.c.b16 %v4681, %v4680
        %v4885 = vpack.c.b16 %v4683, %v4682
        %v4886 = vpack.c.b16 %v4685, %v4684
        %v4887 = vpack.c.b16 %v4687, %v4686
        %v4888 = vpack.c.b16 %v4689, %v4688
        %v4889 = vpack.c.b16 %v4691, %v4690
        %v4890 = vpack.c.b16 %v4693, %v4692
        %v4891 = vpack.c.b16 %v4695, %v4694
        %vm5088 = vcmask 523264
        %v5089 = vsel %vm5088, %v3887, 0
        %5091 = vmatpush.bf16.msra.mxu0 %v4703
        %5092 = vmatpush.bf16.msra.mxu0 %v4702
        %5093 = vmatpush.bf16.msra.mxu0 %v4701
        %5094 = vmatpush.bf16.msra.mxu0 %v4700
        %5095 = vmatpush.bf16.msra.mxu0 %v4699
        %5096 = vmatpush.bf16.msra.mxu0 %v4698
        %5097 = vmatpush.bf16.msra.mxu0 %v4697
        %5098 = vmatpush.bf16.msra.mxu0 %v4696
        %5099 = vmatmul.bf16.gmra.mxu0 %v3857
        %v5100 = vpop.f32.mrf.mxu0
        %v5101 = vadd.f32 %v3853, %v5100
        %v5102 = vpop.f32.mrf.mxu0
        %5103 = vdwg.mxu0
        %5104 = vmatpush.bf16.msra.mxu0 %v4711
        %5105 = vmatpush.bf16.msra.mxu0 %v4710
        %5106 = vmatpush.bf16.msra.mxu0 %v4709
        %5107 = vmatpush.bf16.msra.mxu0 %v4708
        %5108 = vmatpush.bf16.msra.mxu0 %v4707
        %5109 = vmatpush.bf16.msra.mxu0 %v4706
        %5110 = vmatpush.bf16.msra.mxu0 %v4705
        %5111 = vmatpush.bf16.msra.mxu0 %v4704
        %5112 = vmatmul.bf16.gmra.mxu0 %v3858
        %v5113 = vpop.f32.mrf.mxu0
        %v5114 = vadd.f32 %v5101, %v5113
        %v5115 = vpop.f32.mrf.mxu0
        %5116 = vdwg.mxu0
        %5117 = vmatpush.bf16.msra.mxu0 %v4719
        %5118 = vmatpush.bf16.msra.mxu0 %v4718
        %5119 = vmatpush.bf16.msra.mxu0 %v4717
        %5120 = vmatpush.bf16.msra.mxu0 %v4716
        %5121 = vmatpush.bf16.msra.mxu0 %v4715
        %5122 = vmatpush.bf16.msra.mxu0 %v4714
        %5123 = vmatpush.bf16.msra.mxu0 %v4713
        %5124 = vmatpush.bf16.msra.mxu0 %v4712
        %5125 = vmatmul.bf16.gmra.mxu0 %v3859
        %v5126 = vpop.f32.mrf.mxu0
        %v5127 = vadd.f32 %v5114, %v5126
        %v5128 = vpop.f32.mrf.mxu0
        %5129 = vdwg.mxu0
        %5130 = vmatpush.bf16.msra.mxu0 %v4727
        %5131 = vmatpush.bf16.msra.mxu0 %v4726
        %5132 = vmatpush.bf16.msra.mxu0 %v4725
        %5133 = vmatpush.bf16.msra.mxu0 %v4724
        %5134 = vmatpush.bf16.msra.mxu0 %v4723
        %5135 = vmatpush.bf16.msra.mxu0 %v4722
        %5136 = vmatpush.bf16.msra.mxu0 %v4721
        %5137 = vmatpush.bf16.msra.mxu0 %v4720
        %5138 = vmatmul.bf16.gmra.mxu0 %v3860
        %v5139 = vpop.f32.mrf.mxu0
        %v5140 = vadd.f32 %v5127, %v5139
        %v5141 = vpop.f32.mrf.mxu0
        %5142 = vdwg.mxu0
        %5143 = vmatpush.bf16.msra.mxu0 %v4735
        %5144 = vmatpush.bf16.msra.mxu0 %v4734
        %5145 = vmatpush.bf16.msra.mxu0 %v4733
        %5146 = vmatpush.bf16.msra.mxu0 %v4732
        %5147 = vmatpush.bf16.msra.mxu0 %v4731
        %5148 = vmatpush.bf16.msra.mxu0 %v4730
        %5149 = vmatpush.bf16.msra.mxu0 %v4729
        %5150 = vmatpush.bf16.msra.mxu0 %v4728
        %5151 = vmatmul.bf16.gmra.mxu0 %v3861
        %v5152 = vpop.f32.mrf.mxu0
        %v5153 = vadd.f32 %v5140, %v5152
        %v5154 = vpop.f32.mrf.mxu0
        %5155 = vdwg.mxu0
        %5156 = vmatpush.bf16.msra.mxu0 %v4743
        %5157 = vmatpush.bf16.msra.mxu0 %v4742
        %5158 = vmatpush.bf16.msra.mxu0 %v4741
        %5159 = vmatpush.bf16.msra.mxu0 %v4740
        %5160 = vmatpush.bf16.msra.mxu0 %v4739
        %5161 = vmatpush.bf16.msra.mxu0 %v4738
        %5162 = vmatpush.bf16.msra.mxu0 %v4737
        %5163 = vmatpush.bf16.msra.mxu0 %v4736
        %5164 = vmatmul.bf16.gmra.mxu0 %v3862
        %v5165 = vpop.f32.mrf.mxu0
        %v5166 = vadd.f32 %v5153, %v5165
        %v5167 = vpop.f32.mrf.mxu0
        %5168 = vdwg.mxu0
        %5169 = vmatpush.bf16.msra.mxu0 %v4751
        %5170 = vmatpush.bf16.msra.mxu0 %v4750
        %5171 = vmatpush.bf16.msra.mxu0 %v4749
        %5172 = vmatpush.bf16.msra.mxu0 %v4748
        %5173 = vmatpush.bf16.msra.mxu0 %v4747
        %5174 = vmatpush.bf16.msra.mxu0 %v4746
        %5175 = vmatpush.bf16.msra.mxu0 %v4745
        %5176 = vmatpush.bf16.msra.mxu0 %v4744
        %5177 = vmatmul.bf16.gmra.mxu0 %v3863
        %v5178 = vpop.f32.mrf.mxu0
        %v5179 = vadd.f32 %v5166, %v5178
        %v5180 = vpop.f32.mrf.mxu0
        %5181 = vdwg.mxu0
        %5182 = vmatpush.bf16.msra.mxu0 %v4759
        %5183 = vmatpush.bf16.msra.mxu0 %v4758
        %5184 = vmatpush.bf16.msra.mxu0 %v4757
        %5185 = vmatpush.bf16.msra.mxu0 %v4756
        %5186 = vmatpush.bf16.msra.mxu0 %v4755
        %5187 = vmatpush.bf16.msra.mxu0 %v4754
        %5188 = vmatpush.bf16.msra.mxu0 %v4753
        %5189 = vmatpush.bf16.msra.mxu0 %v4752
        %5190 = vmatmul.bf16.gmra.mxu0 %v3864
        %v5191 = vpop.f32.mrf.mxu0
        %v5192 = vadd.f32 %v5179, %v5191
        %v5193 = vpop.f32.mrf.mxu0
        %5194 = vdwg.mxu0
        %5195 = vmatpush.bf16.msra.mxu0 %v4767
        %5196 = vmatpush.bf16.msra.mxu0 %v4766
        %5197 = vmatpush.bf16.msra.mxu0 %v4765
        %5198 = vmatpush.bf16.msra.mxu0 %v4764
        %5199 = vmatpush.bf16.msra.mxu0 %v4763
        %5200 = vmatpush.bf16.msra.mxu0 %v4762
        %5201 = vmatpush.bf16.msra.mxu0 %v4761
        %5202 = vmatpush.bf16.msra.mxu0 %v4760
        %5203 = vmatmul.bf16.gmra.mxu0 %v3867
        %v5204 = vpop.f32.mrf.mxu0
        %v5205 = vadd.f32 %v5192, %v5204
        %v5206 = vpop.f32.mrf.mxu0
        %5207 = vdwg.mxu0
        %5208 = vmatpush.bf16.msra.mxu0 %v4775
        %5209 = vmatpush.bf16.msra.mxu0 %v4774
        %5210 = vmatpush.bf16.msra.mxu0 %v4773
        %5211 = vmatpush.bf16.msra.mxu0 %v4772
        %5212 = vmatpush.bf16.msra.mxu0 %v4771
        %5213 = vmatpush.bf16.msra.mxu0 %v4770
        %5214 = vmatpush.bf16.msra.mxu0 %v4769
        %5215 = vmatpush.bf16.msra.mxu0 %v4768
        %5216 = vmatmul.bf16.gmra.mxu0 %v3868
        %v5217 = vpop.f32.mrf.mxu0
        %v5218 = vadd.f32 %v5205, %v5217
        %v5219 = vpop.f32.mrf.mxu0
        %5220 = vdwg.mxu0
        %5221 = vmatpush.bf16.msra.mxu0 %v4783
        %5222 = vmatpush.bf16.msra.mxu0 %v4782
        %5223 = vmatpush.bf16.msra.mxu0 %v4781
        %5224 = vmatpush.bf16.msra.mxu0 %v4780
        %5225 = vmatpush.bf16.msra.mxu0 %v4779
        %5226 = vmatpush.bf16.msra.mxu0 %v4778
        %5227 = vmatpush.bf16.msra.mxu0 %v4777
        %5228 = vmatpush.bf16.msra.mxu0 %v4776
        %5229 = vmatmul.bf16.gmra.mxu0 %v3869
        %v5230 = vpop.f32.mrf.mxu0
        %v5231 = vadd.f32 %v5218, %v5230
        %v5232 = vpop.f32.mrf.mxu0
        %5233 = vdwg.mxu0
        %5234 = vmatpush.bf16.msra.mxu0 %v4791
        %5235 = vmatpush.bf16.msra.mxu0 %v4790
        %5236 = vmatpush.bf16.msra.mxu0 %v4789
        %5237 = vmatpush.bf16.msra.mxu0 %v4788
        %5238 = vmatpush.bf16.msra.mxu0 %v4787
        %5239 = vmatpush.bf16.msra.mxu0 %v4786
        %5240 = vmatpush.bf16.msra.mxu0 %v4785
        %5241 = vmatpush.bf16.msra.mxu0 %v4784
        %5242 = vmatmul.bf16.gmra.mxu0 %v3870
        %v5243 = vpop.f32.mrf.mxu0
        %v5244 = vadd.f32 %v5231, %v5243
        %v5245 = vpop.f32.mrf.mxu0
        %5246 = vdwg.mxu0
        %5247 = vmatpush.bf16.msra.mxu0 %v4799
        %5248 = vmatpush.bf16.msra.mxu0 %v4798
        %5249 = vmatpush.bf16.msra.mxu0 %v4797
        %5250 = vmatpush.bf16.msra.mxu0 %v4796
        %5251 = vmatpush.bf16.msra.mxu0 %v4795
        %5252 = vmatpush.bf16.msra.mxu0 %v4794
        %5253 = vmatpush.bf16.msra.mxu0 %v4793
        %5254 = vmatpush.bf16.msra.mxu0 %v4792
        %5255 = vmatmul.bf16.gmra.mxu0 %v3871
        %v5256 = vpop.f32.mrf.mxu0
        %v5257 = vadd.f32 %v5244, %v5256
        %v5258 = vpop.f32.mrf.mxu0
        %5259 = vdwg.mxu0
        %5260 = vmatpush.bf16.msra.mxu0 %v4807
        %5261 = vmatpush.bf16.msra.mxu0 %v4806
        %5262 = vmatpush.bf16.msra.mxu0 %v4805
        %5263 = vmatpush.bf16.msra.mxu0 %v4804
        %5264 = vmatpush.bf16.msra.mxu0 %v4803
        %5265 = vmatpush.bf16.msra.mxu0 %v4802
        %5266 = vmatpush.bf16.msra.mxu0 %v4801
        %5267 = vmatpush.bf16.msra.mxu0 %v4800
        %5268 = vmatmul.bf16.gmra.mxu0 %v3872
        %v5269 = vpop.f32.mrf.mxu0
        %v5270 = vadd.f32 %v5257, %v5269
        %v5271 = vpop.f32.mrf.mxu0
        %5272 = vdwg.mxu0
        %5273 = vmatpush.bf16.msra.mxu0 %v4815
        %5274 = vmatpush.bf16.msra.mxu0 %v4814
        %5275 = vmatpush.bf16.msra.mxu0 %v4813
        %5276 = vmatpush.bf16.msra.mxu0 %v4812
        %5277 = vmatpush.bf16.msra.mxu0 %v4811
        %5278 = vmatpush.bf16.msra.mxu0 %v4810
        %5279 = vmatpush.bf16.msra.mxu0 %v4809
        %5280 = vmatpush.bf16.msra.mxu0 %v4808
        %5281 = vmatmul.bf16.gmra.mxu0 %v3873
        %v5282 = vpop.f32.mrf.mxu0
        %v5283 = vadd.f32 %v5270, %v5282
        %v5284 = vpop.f32.mrf.mxu0
        %5285 = vdwg.mxu0
        %5286 = vmatpush.bf16.msra.mxu0 %v4823
        %5287 = vmatpush.bf16.msra.mxu0 %v4822
        %5288 = vmatpush.bf16.msra.mxu0 %v4821
        %5289 = vmatpush.bf16.msra.mxu0 %v4820
        %5290 = vmatpush.bf16.msra.mxu0 %v4819
        %5291 = vmatpush.bf16.msra.mxu0 %v4818
        %5292 = vmatpush.bf16.msra.mxu0 %v4817
        %5293 = vmatpush.bf16.msra.mxu0 %v4816
        %5294 = vmatmul.bf16.gmra.mxu0 %v3874
        %v5295 = vpop.f32.mrf.mxu0
        %v5296 = vadd.f32 %v5283, %v5295
        %v5297 = vpop.f32.mrf.mxu0
        %5298 = vdwg.mxu0
        %5299 = vmatpush.bf16.msra.mxu0 %v4831
        %5300 = vmatpush.bf16.msra.mxu0 %v4830
        %5301 = vmatpush.bf16.msra.mxu0 %v4829
        %5302 = vmatpush.bf16.msra.mxu0 %v4828
        %5303 = vmatpush.bf16.msra.mxu0 %v4827
        %5304 = vmatpush.bf16.msra.mxu0 %v4826
        %5305 = vmatpush.bf16.msra.mxu0 %v4825
        %5306 = vmatpush.bf16.msra.mxu0 %v4824
        %5307 = vmatmul.bf16.gmra.mxu0 %v3877
        %v5308 = vpop.f32.mrf.mxu0
        %v5309 = vadd.f32 %v5296, %v5308
        %v5310 = vpop.f32.mrf.mxu0
        %5311 = vdwg.mxu0
        %5312 = vmatpush.bf16.msra.mxu0 %v4839
        %5313 = vmatpush.bf16.msra.mxu0 %v4838
        %5314 = vmatpush.bf16.msra.mxu0 %v4837
        %5315 = vmatpush.bf16.msra.mxu0 %v4836
        %5316 = vmatpush.bf16.msra.mxu0 %v4835
        %5317 = vmatpush.bf16.msra.mxu0 %v4834
        %5318 = vmatpush.bf16.msra.mxu0 %v4833
        %5319 = vmatpush.bf16.msra.mxu0 %v4832
        %5320 = vmatmul.bf16.gmra.mxu0 %v3878
        %v5321 = vpop.f32.mrf.mxu0
        %v5322 = vadd.f32 %v5309, %v5321
        %v5323 = vpop.f32.mrf.mxu0
        %5324 = vdwg.mxu0
        %5325 = vmatpush.bf16.msra.mxu0 %v4847
        %5326 = vmatpush.bf16.msra.mxu0 %v4846
        %5327 = vmatpush.bf16.msra.mxu0 %v4845
        %5328 = vmatpush.bf16.msra.mxu0 %v4844
        %5329 = vmatpush.bf16.msra.mxu0 %v4843
        %5330 = vmatpush.bf16.msra.mxu0 %v4842
        %5331 = vmatpush.bf16.msra.mxu0 %v4841
        %5332 = vmatpush.bf16.msra.mxu0 %v4840
        %5333 = vmatmul.bf16.gmra.mxu0 %v3879
        %v5334 = vpop.f32.mrf.mxu0
        %v5335 = vadd.f32 %v5322, %v5334
        %v5336 = vpop.f32.mrf.mxu0
        %5337 = vdwg.mxu0
        %5338 = vmatpush.bf16.msra.mxu0 %v4855
        %5339 = vmatpush.bf16.msra.mxu0 %v4854
        %5340 = vmatpush.bf16.msra.mxu0 %v4853
        %5341 = vmatpush.bf16.msra.mxu0 %v4852
        %5342 = vmatpush.bf16.msra.mxu0 %v4851
        %5343 = vmatpush.bf16.msra.mxu0 %v4850
        %5344 = vmatpush.bf16.msra.mxu0 %v4849
        %5345 = vmatpush.bf16.msra.mxu0 %v4848
        %5346 = vmatmul.bf16.gmra.mxu0 %v3880
        %v5347 = vpop.f32.mrf.mxu0
        %v5348 = vadd.f32 %v5335, %v5347
        %v5349 = vpop.f32.mrf.mxu0
        %5350 = vdwg.mxu0
        %5351 = vmatpush.bf16.msra.mxu0 %v4863
        %5352 = vmatpush.bf16.msra.mxu0 %v4862
        %5353 = vmatpush.bf16.msra.mxu0 %v4861
        %5354 = vmatpush.bf16.msra.mxu0 %v4860
        %5355 = vmatpush.bf16.msra.mxu0 %v4859
        %5356 = vmatpush.bf16.msra.mxu0 %v4858
        %5357 = vmatpush.bf16.msra.mxu0 %v4857
        %5358 = vmatpush.bf16.msra.mxu0 %v4856
        %5359 = vmatmul.bf16.gmra.mxu0 %v3881
        %v5360 = vpop.f32.mrf.mxu0
        %v5361 = vadd.f32 %v5348, %v5360
        %v5362 = vpop.f32.mrf.mxu0
        %5363 = vdwg.mxu0
        %5364 = vmatpush.bf16.msra.mxu0 %v4871
        %5365 = vmatpush.bf16.msra.mxu0 %v4870
        %5366 = vmatpush.bf16.msra.mxu0 %v4869
        %5367 = vmatpush.bf16.msra.mxu0 %v4868
        %5368 = vmatpush.bf16.msra.mxu0 %v4867
        %5369 = vmatpush.bf16.msra.mxu0 %v4866
        %5370 = vmatpush.bf16.msra.mxu0 %v4865
        %5371 = vmatpush.bf16.msra.mxu0 %v4864
        %5372 = vmatmul.bf16.gmra.mxu0 %v3882
        %v5373 = vpop.f32.mrf.mxu0
        %v5374 = vadd.f32 %v5361, %v5373
        %v5375 = vpop.f32.mrf.mxu0
        %5376 = vdwg.mxu0
        %5377 = vmatpush.bf16.msra.mxu0 %v4879
        %5378 = vmatpush.bf16.msra.mxu0 %v4878
        %5379 = vmatpush.bf16.msra.mxu0 %v4877
        %5380 = vmatpush.bf16.msra.mxu0 %v4876
        %5381 = vmatpush.bf16.msra.mxu0 %v4875
        %5382 = vmatpush.bf16.msra.mxu0 %v4874
        %5383 = vmatpush.bf16.msra.mxu0 %v4873
        %5384 = vmatpush.bf16.msra.mxu0 %v4872
        %5385 = vmatmul.bf16.gmra.mxu0 %v3883
        %v5386 = vpop.f32.mrf.mxu0
        %v5387 = vadd.f32 %v5374, %v5386
        %v5388 = vpop.f32.mrf.mxu0
        %5389 = vdwg.mxu0
        %5390 = vmatpush.bf16.msra.mxu0 %v4887
        %5391 = vmatpush.bf16.msra.mxu0 %v4886
        %5392 = vmatpush.bf16.msra.mxu0 %v4885
        %5393 = vmatpush.bf16.msra.mxu0 %v4884
        %5394 = vmatpush.bf16.msra.mxu0 %v4883
        %5395 = vmatpush.bf16.msra.mxu0 %v4882
        %5396 = vmatpush.bf16.msra.mxu0 %v4881
        %5397 = vmatpush.bf16.msra.mxu0 %v4880
        %5398 = vmatmul.bf16.gmra.mxu0 %v3884
        %v5399 = vpop.f32.mrf.mxu0
        %v5400 = vadd.f32 %v5387, %v5399
        %v5401 = vpop.f32.mrf.mxu0
        %5402 = vdwg.mxu0
        %5403 = vmatpush.bf16.msra.mxu0 0
        %5404 = vmatpush.bf16.msra.mxu0 0
        %5405 = vmatpush.bf16.msra.mxu0 0
        %5406 = vmatpush.bf16.msra.mxu0 0
        %5407 = vmatpush.bf16.msra.mxu0 %v4891
        %5408 = vmatpush.bf16.msra.mxu0 %v4890
        %5409 = vmatpush.bf16.msra.mxu0 %v4889
        %5410 = vmatpush.bf16.msra.mxu0 %v4888
        %5411 = vmatmul.bf16.gmra.mxu0 %v5089
        %v5412 = vpop.f32.mrf.mxu0
        %v5413 = vadd.f32 %v5400, %v5412
        %v5414 = vpop.f32.mrf.mxu0
        %5415 = vdwg.mxu0
        %v5416 = vmax.f32 %v5413, 0.0
        %v5417 = vld [vmem:[#allocation3] sm:$0x3]
        %v5418 = vpack.c.bf16 %v5416, %v5416
        %v5419 = vld [vmem:[%s3446] sm:$0xf]
        %v5420 = vld [vmem:[%s3446 + $0x4] sm:$0xf]
        %v5421 = vld [vmem:[%s3446 + $0x8] sm:$0xf]
        %v5422 = vld [vmem:[%s3446 + $0xc] sm:$0xf]
        %v5423 = vld [vmem:[%s3446 + $0x10] sm:$0xf]
        %v5424 = vld [vmem:[%s3446 + $0x14] sm:$0xf]
        %v5425 = vld [vmem:[%s3446 + $0x18] sm:$0xf]
        %v5426 = vld [vmem:[%s3446 + $0x1c] sm:$0xf]
        %v5427 = vld [vmem:[%s3446 + $0x20] sm:$0xf]
        %v5428 = vld [vmem:[%s3446 + $0x24] sm:$0xf]
        %v5429 = vld [vmem:[%s3446 + $0x28] sm:$0xf]
        %v5430 = vld [vmem:[%s3446 + $0x2c] sm:$0xf]
        %v5431 = vld [vmem:[%s3446 + $0x30] sm:$0xf]
        %v5432 = vld [vmem:[%s3446 + $0x34] sm:$0xf]
        %v5433 = vld [vmem:[%s3446 + $0x38] sm:$0xf]
        %v5434 = vld [vmem:[%s3446 + $0x3c] sm:$0xf]
        %v5451 = vunpack.c.l.b16 %v5419
        %v5452 = vunpack.c.l.b16 %v5420
        %v5453 = vunpack.c.l.b16 %v5421
        %v5454 = vunpack.c.l.b16 %v5422
        %v5455 = vunpack.c.l.b16 %v5423
        %v5456 = vunpack.c.l.b16 %v5424
        %v5457 = vunpack.c.l.b16 %v5425
        %v5458 = vunpack.c.l.b16 %v5426
        %v5459 = vunpack.c.l.b16 %v5427
        %v5460 = vunpack.c.l.b16 %v5428
        %v5461 = vunpack.c.l.b16 %v5429
        %v5462 = vunpack.c.l.b16 %v5430
        %v5463 = vunpack.c.l.b16 %v5431
        %v5464 = vunpack.c.l.b16 %v5432
        %v5465 = vunpack.c.l.b16 %v5433
        %v5466 = vunpack.c.l.b16 %v5434
        %v5467 = vpack.c.b16 %v5452, %v5451
        %v5468 = vpack.c.b16 %v5454, %v5453
        %v5469 = vpack.c.b16 %v5456, %v5455
        %v5470 = vpack.c.b16 %v5458, %v5457
        %v5471 = vpack.c.b16 %v5460, %v5459
        %v5472 = vpack.c.b16 %v5462, %v5461
        %v5473 = vpack.c.b16 %v5464, %v5463
        %v5474 = vpack.c.b16 %v5466, %v5465
        %5483 = vmatpush.bf16.msra.mxu0 %v5474
        %5484 = vmatpush.bf16.msra.mxu0 %v5473
        %5485 = vmatpush.bf16.msra.mxu0 %v5472
        %5486 = vmatpush.bf16.msra.mxu0 %v5471
        %5487 = vmatpush.bf16.msra.mxu0 %v5470
        %5488 = vmatpush.bf16.msra.mxu0 %v5469
        %5489 = vmatpush.bf16.msra.mxu0 %v5468
        %5490 = vmatpush.bf16.msra.mxu0 %v5467
        %5491 = vmatmul.bf16.gmra.mxu0 %v5418
        %v5492 = vpop.f32.mrf.mxu0
        %v5493 = vadd.f32 0.0, %v5492
        %v5494 = vpop.f32.mrf.mxu0
        %5495 = vdwg.mxu0
        %v5496 = vadd.f32 %v5417, %v5493
        %vm5497 = vcmask 9216
        %5498 = vst.msk [vmem:[#allocation3] sm:$0x3] %vm5497, %v5496
        %p5499 = scmp.eq.s32.totalorder %s17, 3
        // Predicated region
        $region97: #{forward.7} parent=87 // pred_check
          %p5500 = pneg %p5499
        $region98: #{forward.7} parent=87 // pred_check_branch
          %5502 = sbr.rel (%p5500) target = $region100
        $region99: #{forward.7} parent=87 // pred_region
          %v5503 = vld [vmem:[#allocation3] sm:$0x3]
          %v5504 = vld [vmem:[%s4] sm:$0x1]
          %v5506 = vperm.slane %v5504, 0
          %v5508 = vadd.f32 %v5503, %v5506
          %5509 = vst.msk [vmem:[#allocation3] sm:$0x3] %vm5497, %v5508
        $region100: #{forward.7} parent=87 // pred_fallthru
          _
        // Predicated region
        $region101: #{forward.7} parent=87 // pred_check
          %p5510 = pneg %p150
        $region102: #{forward.7} parent=87 // pred_check_branch
          %5512 = sbr.rel (%p5510) target = $region104
        $region103: #{forward.7} parent=87 // pred_region
          %5514 = vsyncadd [#allocation4], 0
          %s5516 = sshll.u32 [#allocation3], 4
          %s5517 = int_to_ptr.vmem [resolvable:$true] %s5516
          %s5518 = sshll.u32 %s5, 4
          %s5519 = int_to_ptr.hbm [resolvable:$true] %s5518
          %5521 = dma.vmem_to_hbm [thread:$0]  %s5517, 32, %s5519, [#allocation4]
        $region104: #{forward.7} parent=87 // pred_fallthru
          _
        // Predicated region
        $region105: #{forward.7} parent=87 // pred_check
          %p5522 = pneg %p150
        $region106: #{forward.7} parent=87 // pred_check_branch
          %5524 = sbr.rel (%p5522) target = $region108
        $region107: #{forward.7} parent=87 // pred_region
          %5526 = dma.done [#allocation4], 32
        $region108: #{forward.7} parent=87 // pred_fallthru
          _
      $region88: #{forward.7} parent=5 // pred_fallthru
        _
      %p5527 = scmp.le.s32.totalorder 2, %s12
      // Predicated region
      $region109: #{forward.7} parent=5 // pred_check
        %p5528 = pneg %p5527
      $region110: #{forward.7} parent=5 // pred_check_branch
        %5530 = sbr.rel (%p5528) target = $region112
      $region111: #{forward.7} parent=5 // pred_region
        %s5531 = ssub.s32 %s12, 2
      $region112: #{forward.7} parent=5 // pred_fallthru
        _
    $region6: #{forward.7} parent=1 // loop_footer
      %s16 = sadd.s32 1, %s12
    $region7: #{forward.7} parent=1 // loop_footer_branch
      %11 = sbr.rel target = $region3
    $region8: #{forward.7} parent=1 // loop_exit
      _
    %5532 = vsyncpa [#allocation4], 1
    %s5533 = scalar_lea.sflag [#allocation4], 1
    %5534 = vsyncpa %s5533, 1

</llo_original>
